<compile_context>
chip_gen: v7x
topology: tpu7x:2x2x1
jax: 0.10.0
libtpu: 0.0.40
codegen_flags: <defaults>
</compile_context>

<pallas_src>
import jax
import jax.numpy as jnp
from jax.experimental import pallas as pl
from jax.experimental.pallas import tpu as pltpu


def _round_up(x, m):
    return (x + m - 1) // m * m


def _leaky_relu(x):
    return jnp.where(x > 0, x, 0.2 * x)


def _default_vmem_limit():
    """Generation-aware VMEM budget: ~40 MiB on v7x (64 MiB/TC), ~80 MiB on v5e/v6e."""
    try:
        cap = pltpu.get_tpu_info().vmem_capacity_bytes
    except Exception:
        cap = 64 * 1024 * 1024
    return int(min(cap * 5 // 8, 96 * 1024 * 1024))


# ------------------------------- JAX glue -------------------------------------
def bilinear_align_corners(x_nhwc, out_h, out_w):
    """PyTorch F.interpolate(mode='bilinear', align_corners=True) in NHWC."""
    N, H, W, C = x_nhwc.shape

    def coords(in_size, out_size):
        if out_size == 1:
            src = jnp.zeros((1,), jnp.float32)
        else:
            src = jnp.arange(out_size, dtype=jnp.float32) * (
                (in_size - 1) / (out_size - 1))
        i0 = jnp.clip(jnp.floor(src).astype(jnp.int32), 0, in_size - 1)
        i1 = jnp.clip(i0 + 1, 0, in_size - 1)
        frac = src - i0.astype(jnp.float32)
        return i0, i1, frac

    y0, y1, wy = coords(H, out_h)
    x0, x1, wx = coords(W, out_w)

    rows = (x_nhwc[:, y0, :, :] * (1.0 - wy)[None, :, None, None]
            + x_nhwc[:, y1, :, :] * wy[None, :, None, None])
    out = (rows[:, :, x0, :] * (1.0 - wx)[None, None, :, None]
           + rows[:, :, x1, :] * wx[None, None, :, None])
    return out


# ----------------------------- Pallas kernel ---------------------------------
def up_convblock(concat_nhwc, w1, b1, w2, b2):
    """Fused ConvBlock (conv3x3+LReLU -> conv3x3+LReLU), NHWC f32 in, NHWC bf16 out.

    concat_nhwc: (N, H, W, Cin) f32
    w1: (3,3,Cin,Cout)  b1: (Cout,)  w2: (3,3,Cout,Cout)  b2: (Cout,)
    returns (N, H, W, Cout) bf16
    """
    N, H, W, Cin = concat_nhwc.shape
    Cout = w1.shape[-1]

    # Computed column extents rounded to multiples of 8 so the
    # (rows, width, C) -> (rows*width, C) flattens are sublane-aligned.
    W2 = _round_up(W, 8)        # conv2 computed output columns (>= W)
    W1 = _round_up(W2 + 2, 8)   # conv1 computed columns (needs >= W2 + 2)
    He = H + 2                  # conv1 computed rows (1-ring halo for conv2)
    Hs, Ws = H + 4, W1 + 2      # input slab with 2-px zero border (covers both pads)
    # TODO(synk): for large H*W that doesn't fit a per-image VMEM block, re-add
    # H tiling with a manually double-buffered halo DMA.

    # Single fused producer: bf16 cast + 2-px spatial zero halo. Channels are
    # kept at the real Cin (no 128-lane padding of the HBM input).
    xp = jnp.pad(concat_nhwc.astype(jnp.bfloat16),
                 ((0, 0), (2, 2), (2, Ws - W - 2), (0, 0)))

    w1p = w1.reshape(9, Cin, Cout).astype(jnp.bfloat16)
    w2p = w2.reshape(9, Cout, Cout).astype(jnp.bfloat16)
    b1p = b1.reshape(1, Cout).astype(jnp.float32)
    b2p = b2.reshape(1, Cout).astype(jnp.float32)

    def kernel(x_ref, w1_ref, b1_ref, w2_ref, b2_ref, o_ref):
        xslab = x_ref[0]                                    # (Hs, Ws, Cin) bf16

        # ---- conv1 (3x3, pad=1) + LeakyReLU(0.2) over the extended (He, W1)
        # region: 9 shifted windows, each a bf16 matmul accumulated in f32.
        acc1 = jnp.zeros((He * W1, Cout), jnp.float32)
        for t in range(9):
            kh, kw = divmod(t, 3)
            win = xslab[kh:kh + He, kw:kw + W1, :].reshape(He * W1, Cin)
            acc1 = acc1 + jnp.dot(win, w1_ref[t],
                                  preferred_element_type=jnp.float32)
        acc1 = acc1 + b1_ref[...]
        acc1 = jnp.where(acc1 > 0, acc1, 0.2 * acc1)
        h1 = acc1.reshape(He, W1, Cout).astype(jnp.bfloat16)

        # Positions outside the real HxW image act as conv2's zero padding
        # (they must be 0, not conv1-of-zero-padding). Mask applied in bf16.
        er = jax.lax.broadcasted_iota(jnp.int32, (He, W1, 1), 0)
        ec = jax.lax.broadcasted_iota(jnp.int32, (He, W1, 1), 1)
        inside = (er >= 1) & (er <= H) & (ec >= 1) & (ec <= W)
        h1 = h1 * inside.astype(jnp.bfloat16)

        # ---- conv2 (3x3, pad=1) + LeakyReLU(0.2), consuming conv1's output
        # directly from VMEM (intermediate never written to HBM).
        acc2 = jnp.zeros((H * W2, Cout), jnp.float32)
        for t in range(9):
            kh, kw = divmod(t, 3)
            win = h1[kh:kh + H, kw:kw + W2, :].reshape(H * W2, Cout)
            acc2 = acc2 + jnp.dot(win, w2_ref[t],
                                  preferred_element_type=jnp.float32)
        acc2 = acc2 + b2_ref[...]
        acc2 = jnp.where(acc2 > 0, acc2, 0.2 * acc2)
        out = acc2.reshape(H, W2, Cout)[:, :W, :]
        o_ref[0] = out.astype(o_ref.dtype)   # bf16, no H/C padding in HBM

    flops = 2 * 9 * N * (He * W1 * Cin * Cout + H * W2 * Cout * Cout)
    bytes_accessed = (xp.size * 2 + w1p.size * 2 + w2p.size * 2
                      + (b1p.size + b2p.size) * 4 + N * H * W * Cout * 2)

    out = pl.pallas_call(
        kernel,
        out_shape=jax.ShapeDtypeStruct((N, H, W, Cout), jnp.bfloat16),
        grid_spec=pltpu.PrefetchScalarGridSpec(
            num_scalar_prefetch=0,
            grid=(N,),                                       # full image per step
            in_specs=[
                pl.BlockSpec((1, Hs, Ws, Cin), lambda n: (n, 0, 0, 0)),  # auto double-buffered
                pl.BlockSpec((9, Cin, Cout), lambda n: (0, 0, 0)),       # w1 (resident)
                pl.BlockSpec((1, Cout), lambda n: (0, 0)),               # b1 (resident)
                pl.BlockSpec((9, Cout, Cout), lambda n: (0, 0, 0)),      # w2 (resident)
                pl.BlockSpec((1, Cout), lambda n: (0, 0)),               # b2 (resident)
            ],
            out_specs=pl.BlockSpec((1, H, W, Cout), lambda n: (n, 0, 0, 0)),
        ),
        compiler_params=pltpu.CompilerParams(
            dimension_semantics=("parallel",),               # N>=2 keeps both v7x TCs busy
            vmem_limit_bytes=_default_vmem_limit()),
        cost_estimate=pl.CostEstimate(flops=flops, transcendentals=0,
                                      bytes_accessed=bytes_accessed),
    )(xp, w1p, b1p, w2p, b2p)

    return out


# ------------------------------- Module wrapper --------------------------------
class UpPallas:
    """Pallas port of the PyTorch `Up` module (forward path only)."""

    def __init__(self, in_channels, out_channels, key):
        k1, k2, k3, k4 = jax.random.split(key, 4)
        cin1 = in_channels * 2
        self.out_channels = out_channels
        # HWIO weights
        self.w1 = 0.1 * jax.random.normal(k1, (3, 3, cin1, out_channels), jnp.float32)
        self.b1 = 0.1 * jax.random.normal(k2, (out_channels,), jnp.float32)
        self.w2 = 0.1 * jax.random.normal(k3, (3, 3, out_channels, out_channels), jnp.float32)
        self.b2 = 0.1 * jax.random.normal(k4, (out_channels,), jnp.float32)
        # TODO(synk): self.up (ConvTranspose2d) is defined in the PyTorch __init__ but
        # never used in forward(); intentionally not implemented.

    def _preprocess(self, inp_nchw, concat_with_nchw):
        inp = jnp.transpose(inp_nchw, (0, 2, 3, 1))
        cat = jnp.transpose(concat_with_nchw, (0, 2, 3, 1))
        inter = bilinear_align_corners(inp, cat.shape[1], cat.shape[2])
        # TODO(synk): resize/concat/transposes stay as cheap XLA glue; folding the
        # align_corners resize into the kernel (scalar-prefetched row indices +
        # lerp during the block copy) is left for a follow-up.
        return jnp.concatenate([inter, cat], axis=-1)

    def __call__(self, inp_nchw, concat_with_nchw):
        concat = self._preprocess(inp_nchw, concat_with_nchw)
        out = up_convblock(concat, self.w1, self.b1, self.w2, self.b2)
        # back to NCHW; f32 cast fuses with the transpose
        return jnp.transpose(out, (0, 3, 1, 2)).astype(jnp.float32)

    def reference(self, inp_nchw, concat_with_nchw):
        """Pure-JAX f32 reference for correctness checking."""
        x = self._preprocess(inp_nchw, concat_with_nchw)

        def conv(x, w, b):
            y = jax.lax.conv_general_dilated(
                x, w, window_strides=(1, 1), padding="SAME",
                dimension_numbers=("NHWC", "HWIO", "NHWC"))
            return _leaky_relu(y + b)

        h = conv(x, self.w1, self.b1)
        h = conv(h, self.w2, self.b2)
        return jnp.transpose(h, (0, 3, 1, 2))


if __name__ == "__main__":
    key = jax.random.PRNGKey(0)
    k_in, k_cat, k_param = jax.random.split(key, 3)

    N, C_in, C_out = 2, 4, 8
    # `input` is at lower resolution; `concat_with` defines the target spatial size.
    x = jax.random.normal(k_in, (N, C_in, 8, 8), jnp.float32)
    concat_with = jax.random.normal(k_cat, (N, C_in, 16, 16), jnp.float32)

    model = UpPallas(C_in, C_out, k_param)

    fwd = jax.jit(lambda a, b: model(a, b))
    out = jax.block_until_ready(fwd(x, concat_with))
    assert out.shape == (N, C_out, 16, 16), out.shape

    # Loose-tolerance check vs. a pure-JAX f32 reference (kernel uses bf16 matmuls
    # and a bf16 output store, accumulation in f32).
    ref = jax.block_until_ready(jax.jit(model.reference)(x, concat_with))
    err = float(jnp.max(jnp.abs(out - ref)))
    assert err < 0.1, f"max abs error vs f32 reference: {err}"

    print("KERNEL_OK")
</pallas_src>

<mosaic_0001>
module attributes {stable_mosaic.version = 11 : i64} {
  func.func @kernel(%arg0: i32, %arg1: memref<1x20x26x8xbf16, #tpu.memory_space<vmem>>, %arg2: memref<9x8x8xbf16, #tpu.memory_space<vmem>>, %arg3: memref<1x8xf32, #tpu.memory_space<vmem>>, %arg4: memref<9x8x8xbf16, #tpu.memory_space<vmem>>, %arg5: memref<1x8xf32, #tpu.memory_space<vmem>>, %arg6: memref<1x16x16x8xbf16, #tpu.memory_space<vmem>>) attributes {dimension_semantics = [#tpu.dimension_semantics<parallel>], iteration_bounds = array<i64: 2>, scalar_prefetch = 0 : i64, scratch_operands = 0 : i64, tpu.core_type = #tpu.core_type<tc>, window_params = [{transform_indices = @transform_0, window_bounds = array<i64: 1, 20, 26, 8>}, {pipeline_mode = #tpu.pipeline_mode<synchronous>, transform_indices = @transform_1, window_bounds = array<i64: 9, 8, 8>}, {pipeline_mode = #tpu.pipeline_mode<synchronous>, transform_indices = @transform_2, window_bounds = array<i64: 1, 8>}, {pipeline_mode = #tpu.pipeline_mode<synchronous>, transform_indices = @transform_3, window_bounds = array<i64: 9, 8, 8>}, {pipeline_mode = #tpu.pipeline_mode<synchronous>, transform_indices = @transform_4, window_bounds = array<i64: 1, 8>}, {transform_indices = @transform_5, window_bounds = array<i64: 1, 16, 16, 8>}]} {
    %c0 = arith.constant 0 : index
    %c0_0 = arith.constant 0 : index
    %c0_1 = arith.constant 0 : index
    %c0_2 = arith.constant 0 : index
    %0 = vector.load %arg1[%c0, %c0_0, %c0_1, %c0_2] : memref<1x20x26x8xbf16, #tpu.memory_space<vmem>>, vector<1x20x26x8xbf16>
    %1 = vector.shape_cast %0 : vector<1x20x26x8xbf16> to vector<20x26x8xbf16>
    %cst = arith.constant 0.000000e+00 : f32
    %2 = vector.broadcast %cst : f32 to vector<432x8xf32>
    %3 = vector.extract_strided_slice %1 {offsets = [0, 0, 0], sizes = [18, 24, 8], strides = [1, 1, 1]} : vector<20x26x8xbf16> to vector<18x24x8xbf16>
    %4 = vector.shape_cast %3 : vector<18x24x8xbf16> to vector<432x8xbf16>
    %c0_3 = arith.constant 0 : index
    %c0_4 = arith.constant 0 : index
    %c0_5 = arith.constant 0 : index
    %5 = vector.load %arg2[%c0_3, %c0_4, %c0_5] : memref<9x8x8xbf16, #tpu.memory_space<vmem>>, vector<1x8x8xbf16>
    %6 = vector.shape_cast %5 : vector<1x8x8xbf16> to vector<8x8xbf16>
    %cst_6 = arith.constant dense<0.000000e+00> : vector<432x8xf32>
    %7 = tpu.matmul %4, %6, %cst_6 {dimension_numbers = #tpu.dot_dimension_numbers<[1], [0], [0], [1], [0, 0, 1, 1], [], []>} : vector<432x8xbf16>, vector<8x8xbf16>, vector<432x8xf32> -> vector<432x8xf32>
    %8 = arith.addf %2, %7 : vector<432x8xf32>
    %9 = vector.extract_strided_slice %1 {offsets = [0, 1, 0], sizes = [18, 24, 8], strides = [1, 1, 1]} : vector<20x26x8xbf16> to vector<18x24x8xbf16>
    %10 = vector.shape_cast %9 : vector<18x24x8xbf16> to vector<432x8xbf16>
    %c1 = arith.constant 1 : index
    %c0_7 = arith.constant 0 : index
    %c0_8 = arith.constant 0 : index
    %11 = vector.load %arg2[%c1, %c0_7, %c0_8] : memref<9x8x8xbf16, #tpu.memory_space<vmem>>, vector<1x8x8xbf16>
    %12 = vector.shape_cast %11 : vector<1x8x8xbf16> to vector<8x8xbf16>
    %cst_9 = arith.constant dense<0.000000e+00> : vector<432x8xf32>
    %13 = tpu.matmul %10, %12, %cst_9 {dimension_numbers = #tpu.dot_dimension_numbers<[1], [0], [0], [1], [0, 0, 1, 1], [], []>} : vector<432x8xbf16>, vector<8x8xbf16>, vector<432x8xf32> -> vector<432x8xf32>
    %14 = arith.addf %8, %13 : vector<432x8xf32>
    %15 = vector.extract_strided_slice %1 {offsets = [0, 2, 0], sizes = [18, 24, 8], strides = [1, 1, 1]} : vector<20x26x8xbf16> to vector<18x24x8xbf16>
    %16 = vector.shape_cast %15 : vector<18x24x8xbf16> to vector<432x8xbf16>
    %c2 = arith.constant 2 : index
    %c0_10 = arith.constant 0 : index
    %c0_11 = arith.constant 0 : index
    %17 = vector.load %arg2[%c2, %c0_10, %c0_11] : memref<9x8x8xbf16, #tpu.memory_space<vmem>>, vector<1x8x8xbf16>
    %18 = vector.shape_cast %17 : vector<1x8x8xbf16> to vector<8x8xbf16>
    %cst_12 = arith.constant dense<0.000000e+00> : vector<432x8xf32>
    %19 = tpu.matmul %16, %18, %cst_12 {dimension_numbers = #tpu.dot_dimension_numbers<[1], [0], [0], [1], [0, 0, 1, 1], [], []>} : vector<432x8xbf16>, vector<8x8xbf16>, vector<432x8xf32> -> vector<432x8xf32>
    %20 = arith.addf %14, %19 : vector<432x8xf32>
    %21 = vector.extract_strided_slice %1 {offsets = [1, 0, 0], sizes = [18, 24, 8], strides = [1, 1, 1]} : vector<20x26x8xbf16> to vector<18x24x8xbf16>
    %22 = vector.shape_cast %21 : vector<18x24x8xbf16> to vector<432x8xbf16>
    %c3 = arith.constant 3 : index
    %c0_13 = arith.constant 0 : index
    %c0_14 = arith.constant 0 : index
    %23 = vector.load %arg2[%c3, %c0_13, %c0_14] : memref<9x8x8xbf16, #tpu.memory_space<vmem>>, vector<1x8x8xbf16>
    %24 = vector.shape_cast %23 : vector<1x8x8xbf16> to vector<8x8xbf16>
    %cst_15 = arith.constant dense<0.000000e+00> : vector<432x8xf32>
    %25 = tpu.matmul %22, %24, %cst_15 {dimension_numbers = #tpu.dot_dimension_numbers<[1], [0], [0], [1], [0, 0, 1, 1], [], []>} : vector<432x8xbf16>, vector<8x8xbf16>, vector<432x8xf32> -> vector<432x8xf32>
    %26 = arith.addf %20, %25 : vector<432x8xf32>
    %27 = vector.extract_strided_slice %1 {offsets = [1, 1, 0], sizes = [18, 24, 8], strides = [1, 1, 1]} : vector<20x26x8xbf16> to vector<18x24x8xbf16>
    %28 = vector.shape_cast %27 : vector<18x24x8xbf16> to vector<432x8xbf16>
    %c4 = arith.constant 4 : index
    %c0_16 = arith.constant 0 : index
    %c0_17 = arith.constant 0 : index
    %29 = vector.load %arg2[%c4, %c0_16, %c0_17] : memref<9x8x8xbf16, #tpu.memory_space<vmem>>, vector<1x8x8xbf16>
    %30 = vector.shape_cast %29 : vector<1x8x8xbf16> to vector<8x8xbf16>
    %cst_18 = arith.constant dense<0.000000e+00> : vector<432x8xf32>
    %31 = tpu.matmul %28, %30, %cst_18 {dimension_numbers = #tpu.dot_dimension_numbers<[1], [0], [0], [1], [0, 0, 1, 1], [], []>} : vector<432x8xbf16>, vector<8x8xbf16>, vector<432x8xf32> -> vector<432x8xf32>
    %32 = arith.addf %26, %31 : vector<432x8xf32>
    %33 = vector.extract_strided_slice %1 {offsets = [1, 2, 0], sizes = [18, 24, 8], strides = [1, 1, 1]} : vector<20x26x8xbf16> to vector<18x24x8xbf16>
    %34 = vector.shape_cast %33 : vector<18x24x8xbf16> to vector<432x8xbf16>
    %c5 = arith.constant 5 : index
    %c0_19 = arith.constant 0 : index
    %c0_20 = arith.constant 0 : index
    %35 = vector.load %arg2[%c5, %c0_19, %c0_20] : memref<9x8x8xbf16, #tpu.memory_space<vmem>>, vector<1x8x8xbf16>
    %36 = vector.shape_cast %35 : vector<1x8x8xbf16> to vector<8x8xbf16>
    %cst_21 = arith.constant dense<0.000000e+00> : vector<432x8xf32>
    %37 = tpu.matmul %34, %36, %cst_21 {dimension_numbers = #tpu.dot_dimension_numbers<[1], [0], [0], [1], [0, 0, 1, 1], [], []>} : vector<432x8xbf16>, vector<8x8xbf16>, vector<432x8xf32> -> vector<432x8xf32>
    %38 = arith.addf %32, %37 : vector<432x8xf32>
    %39 = vector.extract_strided_slice %1 {offsets = [2, 0, 0], sizes = [18, 24, 8], strides = [1, 1, 1]} : vector<20x26x8xbf16> to vector<18x24x8xbf16>
    %40 = vector.shape_cast %39 : vector<18x24x8xbf16> to vector<432x8xbf16>
    %c6 = arith.constant 6 : index
    %c0_22 = arith.constant 0 : index
    %c0_23 = arith.constant 0 : index
    %41 = vector.load %arg2[%c6, %c0_22, %c0_23] : memref<9x8x8xbf16, #tpu.memory_space<vmem>>, vector<1x8x8xbf16>
    %42 = vector.shape_cast %41 : vector<1x8x8xbf16> to vector<8x8xbf16>
    %cst_24 = arith.constant dense<0.000000e+00> : vector<432x8xf32>
    %43 = tpu.matmul %40, %42, %cst_24 {dimension_numbers = #tpu.dot_dimension_numbers<[1], [0], [0], [1], [0, 0, 1, 1], [], []>} : vector<432x8xbf16>, vector<8x8xbf16>, vector<432x8xf32> -> vector<432x8xf32>
    %44 = arith.addf %38, %43 : vector<432x8xf32>
    %45 = vector.extract_strided_slice %1 {offsets = [2, 1, 0], sizes = [18, 24, 8], strides = [1, 1, 1]} : vector<20x26x8xbf16> to vector<18x24x8xbf16>
    %46 = vector.shape_cast %45 : vector<18x24x8xbf16> to vector<432x8xbf16>
    %c7 = arith.constant 7 : index
    %c0_25 = arith.constant 0 : index
    %c0_26 = arith.constant 0 : index
    %47 = vector.load %arg2[%c7, %c0_25, %c0_26] : memref<9x8x8xbf16, #tpu.memory_space<vmem>>, vector<1x8x8xbf16>
    %48 = vector.shape_cast %47 : vector<1x8x8xbf16> to vector<8x8xbf16>
    %cst_27 = arith.constant dense<0.000000e+00> : vector<432x8xf32>
    %49 = tpu.matmul %46, %48, %cst_27 {dimension_numbers = #tpu.dot_dimension_numbers<[1], [0], [0], [1], [0, 0, 1, 1], [], []>} : vector<432x8xbf16>, vector<8x8xbf16>, vector<432x8xf32> -> vector<432x8xf32>
    %50 = arith.addf %44, %49 : vector<432x8xf32>
    %51 = vector.extract_strided_slice %1 {offsets = [2, 2, 0], sizes = [18, 24, 8], strides = [1, 1, 1]} : vector<20x26x8xbf16> to vector<18x24x8xbf16>
    %52 = vector.shape_cast %51 : vector<18x24x8xbf16> to vector<432x8xbf16>
    %c8 = arith.constant 8 : index
    %c0_28 = arith.constant 0 : index
    %c0_29 = arith.constant 0 : index
    %53 = vector.load %arg2[%c8, %c0_28, %c0_29] : memref<9x8x8xbf16, #tpu.memory_space<vmem>>, vector<1x8x8xbf16>
    %54 = vector.shape_cast %53 : vector<1x8x8xbf16> to vector<8x8xbf16>
    %cst_30 = arith.constant dense<0.000000e+00> : vector<432x8xf32>
    %55 = tpu.matmul %52, %54, %cst_30 {dimension_numbers = #tpu.dot_dimension_numbers<[1], [0], [0], [1], [0, 0, 1, 1], [], []>} : vector<432x8xbf16>, vector<8x8xbf16>, vector<432x8xf32> -> vector<432x8xf32>
    %56 = arith.addf %50, %55 : vector<432x8xf32>
    %c0_31 = arith.constant 0 : index
    %c0_32 = arith.constant 0 : index
    %57 = vector.load %arg3[%c0_31, %c0_32] : memref<1x8xf32, #tpu.memory_space<vmem>>, vector<1x8xf32>
    %58 = vector.broadcast %57 : vector<1x8xf32> to vector<432x8xf32>
    %59 = arith.addf %56, %58 : vector<432x8xf32>
    %cst_33 = arith.constant 0.000000e+00 : f32
    %60 = vector.broadcast %cst_33 : f32 to vector<432x8xf32>
    %61 = arith.cmpf ogt, %59, %60 : vector<432x8xf32>
    %cst_34 = arith.constant 2.000000e-01 : f32
    %62 = vector.broadcast %cst_34 : f32 to vector<432x8xf32>
    %63 = arith.mulf %62, %59 : vector<432x8xf32>
    %64 = arith.select %61, %59, %63 : vector<432x8xi1>, vector<432x8xf32>
    %65 = vector.shape_cast %64 : vector<432x8xf32> to vector<18x24x8xf32>
    %66 = arith.truncf %65 : vector<18x24x8xf32> to vector<18x24x8xbf16>
    %67 = tpu.iota {dimensions = array<i32: 0>} : vector<18x24x1xi32>
    %68 = tpu.iota {dimensions = array<i32: 1>} : vector<18x24x1xi32>
    %c1_i32 = arith.constant 1 : i32
    %69 = vector.broadcast %c1_i32 : i32 to vector<18x24x1xi32>
    %70 = arith.cmpi sge, %67, %69 : vector<18x24x1xi32>
    %c16_i32 = arith.constant 16 : i32
    %71 = vector.broadcast %c16_i32 : i32 to vector<18x24x1xi32>
    %72 = arith.cmpi sle, %67, %71 : vector<18x24x1xi32>
    %73 = arith.andi %70, %72 : vector<18x24x1xi1>
    %c1_i32_35 = arith.constant 1 : i32
    %74 = vector.broadcast %c1_i32_35 : i32 to vector<18x24x1xi32>
    %75 = arith.cmpi sge, %68, %74 : vector<18x24x1xi32>
    %76 = arith.andi %73, %75 : vector<18x24x1xi1>
    %c16_i32_36 = arith.constant 16 : i32
    %77 = vector.broadcast %c16_i32_36 : i32 to vector<18x24x1xi32>
    %78 = arith.cmpi sle, %68, %77 : vector<18x24x1xi32>
    %79 = arith.andi %76, %78 : vector<18x24x1xi1>
    %80 = arith.extui %79 : vector<18x24x1xi1> to vector<18x24x1xi32>
    %81 = arith.sitofp %80 : vector<18x24x1xi32> to vector<18x24x1xf32>
    %82 = arith.truncf %81 : vector<18x24x1xf32> to vector<18x24x1xbf16>
    %83 = vector.broadcast %82 : vector<18x24x1xbf16> to vector<18x24x8xbf16>
    %84 = arith.mulf %66, %83 : vector<18x24x8xbf16>
    %cst_37 = arith.constant 0.000000e+00 : f32
    %85 = vector.broadcast %cst_37 : f32 to vector<256x8xf32>
    %86 = vector.extract_strided_slice %84 {offsets = [0, 0, 0], sizes = [16, 16, 8], strides = [1, 1, 1]} : vector<18x24x8xbf16> to vector<16x16x8xbf16>
    %87 = vector.shape_cast %86 : vector<16x16x8xbf16> to vector<256x8xbf16>
    %c0_38 = arith.constant 0 : index
    %c0_39 = arith.constant 0 : index
    %c0_40 = arith.constant 0 : index
    %88 = vector.load %arg4[%c0_38, %c0_39, %c0_40] : memref<9x8x8xbf16, #tpu.memory_space<vmem>>, vector<1x8x8xbf16>
    %89 = vector.shape_cast %88 : vector<1x8x8xbf16> to vector<8x8xbf16>
    %cst_41 = arith.constant dense<0.000000e+00> : vector<256x8xf32>
    %90 = tpu.matmul %87, %89, %cst_41 {dimension_numbers = #tpu.dot_dimension_numbers<[1], [0], [0], [1], [0, 0, 1, 1], [], []>} : vector<256x8xbf16>, vector<8x8xbf16>, vector<256x8xf32> -> vector<256x8xf32>
    %91 = arith.addf %85, %90 : vector<256x8xf32>
    %92 = vector.extract_strided_slice %84 {offsets = [0, 1, 0], sizes = [16, 16, 8], strides = [1, 1, 1]} : vector<18x24x8xbf16> to vector<16x16x8xbf16>
    %93 = vector.shape_cast %92 : vector<16x16x8xbf16> to vector<256x8xbf16>
    %c1_42 = arith.constant 1 : index
    %c0_43 = arith.constant 0 : index
    %c0_44 = arith.constant 0 : index
    %94 = vector.load %arg4[%c1_42, %c0_43, %c0_44] : memref<9x8x8xbf16, #tpu.memory_space<vmem>>, vector<1x8x8xbf16>
    %95 = vector.shape_cast %94 : vector<1x8x8xbf16> to vector<8x8xbf16>
    %cst_45 = arith.constant dense<0.000000e+00> : vector<256x8xf32>
    %96 = tpu.matmul %93, %95, %cst_45 {dimension_numbers = #tpu.dot_dimension_numbers<[1], [0], [0], [1], [0, 0, 1, 1], [], []>} : vector<256x8xbf16>, vector<8x8xbf16>, vector<256x8xf32> -> vector<256x8xf32>
    %97 = arith.addf %91, %96 : vector<256x8xf32>
    %98 = vector.extract_strided_slice %84 {offsets = [0, 2, 0], sizes = [16, 16, 8], strides = [1, 1, 1]} : vector<18x24x8xbf16> to vector<16x16x8xbf16>
    %99 = vector.shape_cast %98 : vector<16x16x8xbf16> to vector<256x8xbf16>
    %c2_46 = arith.constant 2 : index
    %c0_47 = arith.constant 0 : index
    %c0_48 = arith.constant 0 : index
    %100 = vector.load %arg4[%c2_46, %c0_47, %c0_48] : memref<9x8x8xbf16, #tpu.memory_space<vmem>>, vector<1x8x8xbf16>
    %101 = vector.shape_cast %100 : vector<1x8x8xbf16> to vector<8x8xbf16>
    %cst_49 = arith.constant dense<0.000000e+00> : vector<256x8xf32>
    %102 = tpu.matmul %99, %101, %cst_49 {dimension_numbers = #tpu.dot_dimension_numbers<[1], [0], [0], [1], [0, 0, 1, 1], [], []>} : vector<256x8xbf16>, vector<8x8xbf16>, vector<256x8xf32> -> vector<256x8xf32>
    %103 = arith.addf %97, %102 : vector<256x8xf32>
    %104 = vector.extract_strided_slice %84 {offsets = [1, 0, 0], sizes = [16, 16, 8], strides = [1, 1, 1]} : vector<18x24x8xbf16> to vector<16x16x8xbf16>
    %105 = vector.shape_cast %104 : vector<16x16x8xbf16> to vector<256x8xbf16>
    %c3_50 = arith.constant 3 : index
    %c0_51 = arith.constant 0 : index
    %c0_52 = arith.constant 0 : index
    %106 = vector.load %arg4[%c3_50, %c0_51, %c0_52] : memref<9x8x8xbf16, #tpu.memory_space<vmem>>, vector<1x8x8xbf16>
    %107 = vector.shape_cast %106 : vector<1x8x8xbf16> to vector<8x8xbf16>
    %cst_53 = arith.constant dense<0.000000e+00> : vector<256x8xf32>
    %108 = tpu.matmul %105, %107, %cst_53 {dimension_numbers = #tpu.dot_dimension_numbers<[1], [0], [0], [1], [0, 0, 1, 1], [], []>} : vector<256x8xbf16>, vector<8x8xbf16>, vector<256x8xf32> -> vector<256x8xf32>
    %109 = arith.addf %103, %108 : vector<256x8xf32>
    %110 = vector.extract_strided_slice %84 {offsets = [1, 1, 0], sizes = [16, 16, 8], strides = [1, 1, 1]} : vector<18x24x8xbf16> to vector<16x16x8xbf16>
    %111 = vector.shape_cast %110 : vector<16x16x8xbf16> to vector<256x8xbf16>
    %c4_54 = arith.constant 4 : index
    %c0_55 = arith.constant 0 : index
    %c0_56 = arith.constant 0 : index
    %112 = vector.load %arg4[%c4_54, %c0_55, %c0_56] : memref<9x8x8xbf16, #tpu.memory_space<vmem>>, vector<1x8x8xbf16>
    %113 = vector.shape_cast %112 : vector<1x8x8xbf16> to vector<8x8xbf16>
    %cst_57 = arith.constant dense<0.000000e+00> : vector<256x8xf32>
    %114 = tpu.matmul %111, %113, %cst_57 {dimension_numbers = #tpu.dot_dimension_numbers<[1], [0], [0], [1], [0, 0, 1, 1], [], []>} : vector<256x8xbf16>, vector<8x8xbf16>, vector<256x8xf32> -> vector<256x8xf32>
    %115 = arith.addf %109, %114 : vector<256x8xf32>
    %116 = vector.extract_strided_slice %84 {offsets = [1, 2, 0], sizes = [16, 16, 8], strides = [1, 1, 1]} : vector<18x24x8xbf16> to vector<16x16x8xbf16>
    %117 = vector.shape_cast %116 : vector<16x16x8xbf16> to vector<256x8xbf16>
    %c5_58 = arith.constant 5 : index
    %c0_59 = arith.constant 0 : index
    %c0_60 = arith.constant 0 : index
    %118 = vector.load %arg4[%c5_58, %c0_59, %c0_60] : memref<9x8x8xbf16, #tpu.memory_space<vmem>>, vector<1x8x8xbf16>
    %119 = vector.shape_cast %118 : vector<1x8x8xbf16> to vector<8x8xbf16>
    %cst_61 = arith.constant dense<0.000000e+00> : vector<256x8xf32>
    %120 = tpu.matmul %117, %119, %cst_61 {dimension_numbers = #tpu.dot_dimension_numbers<[1], [0], [0], [1], [0, 0, 1, 1], [], []>} : vector<256x8xbf16>, vector<8x8xbf16>, vector<256x8xf32> -> vector<256x8xf32>
    %121 = arith.addf %115, %120 : vector<256x8xf32>
    %122 = vector.extract_strided_slice %84 {offsets = [2, 0, 0], sizes = [16, 16, 8], strides = [1, 1, 1]} : vector<18x24x8xbf16> to vector<16x16x8xbf16>
    %123 = vector.shape_cast %122 : vector<16x16x8xbf16> to vector<256x8xbf16>
    %c6_62 = arith.constant 6 : index
    %c0_63 = arith.constant 0 : index
    %c0_64 = arith.constant 0 : index
    %124 = vector.load %arg4[%c6_62, %c0_63, %c0_64] : memref<9x8x8xbf16, #tpu.memory_space<vmem>>, vector<1x8x8xbf16>
    %125 = vector.shape_cast %124 : vector<1x8x8xbf16> to vector<8x8xbf16>
    %cst_65 = arith.constant dense<0.000000e+00> : vector<256x8xf32>
    %126 = tpu.matmul %123, %125, %cst_65 {dimension_numbers = #tpu.dot_dimension_numbers<[1], [0], [0], [1], [0, 0, 1, 1], [], []>} : vector<256x8xbf16>, vector<8x8xbf16>, vector<256x8xf32> -> vector<256x8xf32>
    %127 = arith.addf %121, %126 : vector<256x8xf32>
    %128 = vector.extract_strided_slice %84 {offsets = [2, 1, 0], sizes = [16, 16, 8], strides = [1, 1, 1]} : vector<18x24x8xbf16> to vector<16x16x8xbf16>
    %129 = vector.shape_cast %128 : vector<16x16x8xbf16> to vector<256x8xbf16>
    %c7_66 = arith.constant 7 : index
    %c0_67 = arith.constant 0 : index
    %c0_68 = arith.constant 0 : index
    %130 = vector.load %arg4[%c7_66, %c0_67, %c0_68] : memref<9x8x8xbf16, #tpu.memory_space<vmem>>, vector<1x8x8xbf16>
    %131 = vector.shape_cast %130 : vector<1x8x8xbf16> to vector<8x8xbf16>
    %cst_69 = arith.constant dense<0.000000e+00> : vector<256x8xf32>
    %132 = tpu.matmul %129, %131, %cst_69 {dimension_numbers = #tpu.dot_dimension_numbers<[1], [0], [0], [1], [0, 0, 1, 1], [], []>} : vector<256x8xbf16>, vector<8x8xbf16>, vector<256x8xf32> -> vector<256x8xf32>
    %133 = arith.addf %127, %132 : vector<256x8xf32>
    %134 = vector.extract_strided_slice %84 {offsets = [2, 2, 0], sizes = [16, 16, 8], strides = [1, 1, 1]} : vector<18x24x8xbf16> to vector<16x16x8xbf16>
    %135 = vector.shape_cast %134 : vector<16x16x8xbf16> to vector<256x8xbf16>
    %c8_70 = arith.constant 8 : index
    %c0_71 = arith.constant 0 : index
    %c0_72 = arith.constant 0 : index
    %136 = vector.load %arg4[%c8_70, %c0_71, %c0_72] : memref<9x8x8xbf16, #tpu.memory_space<vmem>>, vector<1x8x8xbf16>
    %137 = vector.shape_cast %136 : vector<1x8x8xbf16> to vector<8x8xbf16>
    %cst_73 = arith.constant dense<0.000000e+00> : vector<256x8xf32>
    %138 = tpu.matmul %135, %137, %cst_73 {dimension_numbers = #tpu.dot_dimension_numbers<[1], [0], [0], [1], [0, 0, 1, 1], [], []>} : vector<256x8xbf16>, vector<8x8xbf16>, vector<256x8xf32> -> vector<256x8xf32>
    %139 = arith.addf %133, %138 : vector<256x8xf32>
    %c0_74 = arith.constant 0 : index
    %c0_75 = arith.constant 0 : index
    %140 = vector.load %arg5[%c0_74, %c0_75] : memref<1x8xf32, #tpu.memory_space<vmem>>, vector<1x8xf32>
    %141 = vector.broadcast %140 : vector<1x8xf32> to vector<256x8xf32>
    %142 = arith.addf %139, %141 : vector<256x8xf32>
    %cst_76 = arith.constant 0.000000e+00 : f32
    %143 = vector.broadcast %cst_76 : f32 to vector<256x8xf32>
    %144 = arith.cmpf ogt, %142, %143 : vector<256x8xf32>
    %cst_77 = arith.constant 2.000000e-01 : f32
    %145 = vector.broadcast %cst_77 : f32 to vector<256x8xf32>
    %146 = arith.mulf %145, %142 : vector<256x8xf32>
    %147 = arith.select %144, %142, %146 : vector<256x8xi1>, vector<256x8xf32>
    %148 = vector.shape_cast %147 : vector<256x8xf32> to vector<16x16x8xf32>
    %149 = arith.truncf %148 : vector<16x16x8xf32> to vector<16x16x8xbf16>
    %c0_78 = arith.constant 0 : index
    %c0_79 = arith.constant 0 : index
    %c0_80 = arith.constant 0 : index
    %c0_81 = arith.constant 0 : index
    %150 = vector.load %arg6[%c0_78, %c0_79, %c0_80, %c0_81] : memref<1x16x16x8xbf16, #tpu.memory_space<vmem>>, vector<1x16x16x8xbf16>
    %151 = vector.shape_cast %150 : vector<1x16x16x8xbf16> to vector<16x16x8xbf16>
    %152 = vector.shape_cast %149 : vector<16x16x8xbf16> to vector<1x16x16x8xbf16>
    tpu.vector_store %arg6[%c0_78, %c0_79, %c0_80, %c0_81], %152 {strides = array<i32>} : memref<1x16x16x8xbf16, #tpu.memory_space<vmem>>, vector<1x16x16x8xbf16>,
    return
  }
  func.func @transform_0(%arg0: i32) -> (i32, i32, i32, i32) {
    %c0_i32 = arith.constant 0 : i32
    %c0_i32_0 = arith.constant 0 : i32
    %c0_i32_1 = arith.constant 0 : i32
    %c0_i32_2 = arith.constant 0 : i32
    return %arg0, %c0_i32, %c0_i32_0, %c0_i32_1 : i32, i32, i32, i32
  }
  func.func @transform_1(%arg0: i32) -> (i32, i32, i32) {
    %c0_i32 = arith.constant 0 : i32
    %c0_i32_0 = arith.constant 0 : i32
    %c0_i32_1 = arith.constant 0 : i32
    %c0_i32_2 = arith.constant 0 : i32
    return %c0_i32, %c0_i32_0, %c0_i32_1 : i32, i32, i32
  }
  func.func @transform_2(%arg0: i32) -> (i32, i32) {
    %c0_i32 = arith.constant 0 : i32
    %c0_i32_0 = arith.constant 0 : i32
    %c0_i32_1 = arith.constant 0 : i32
    return %c0_i32, %c0_i32_0 : i32, i32
  }
  func.func @transform_3(%arg0: i32) -> (i32, i32, i32) {
    %c0_i32 = arith.constant 0 : i32
    %c0_i32_0 = arith.constant 0 : i32
    %c0_i32_1 = arith.constant 0 : i32
    %c0_i32_2 = arith.constant 0 : i32
    return %c0_i32, %c0_i32_0, %c0_i32_1 : i32, i32, i32
  }
  func.func @transform_4(%arg0: i32) -> (i32, i32) {
    %c0_i32 = arith.constant 0 : i32
    %c0_i32_0 = arith.constant 0 : i32
    %c0_i32_1 = arith.constant 0 : i32
    return %c0_i32, %c0_i32_0 : i32, i32
  }
  func.func @transform_5(%arg0: i32) -> (i32, i32, i32, i32) {
    %c0_i32 = arith.constant 0 : i32
    %c0_i32_0 = arith.constant 0 : i32
    %c0_i32_1 = arith.constant 0 : i32
    %c0_i32_2 = arith.constant 0 : i32
    return %arg0, %c0_i32, %c0_i32_0, %c0_i32_1 : i32, i32, i32, i32
  }
}

</mosaic_0001>

<llo_original>
// kernel: _lambda_.1
$region0: #{_lambda_.1}
  #allocation0 [shape = 'u32[]', space=smem, size = 0x4, offset = 0x4, fixed_abs, tag = 'smem constant byte address 0x4 - core index']
  #allocation1 [shape = 'u32[144,128]{1,0:T(1,128)}', space=vmem, size = 0x12000, scoped, tag = 'internal scratch']
  %s0 = inlined_call_operand.vmem [shape: bf16[2,20,26,8], index: 0, kind: input, shape index: {}]
  %s1 = inlined_call_operand.vmem [shape: bf16[9,8,8], index: 1, kind: input, shape index: {}]
  %s2 = inlined_call_operand.vmem [shape: f32[1,8], index: 2, kind: input, shape index: {}]
  %s3 = inlined_call_operand.vmem [shape: bf16[9,8,8], index: 3, kind: input, shape index: {}]
  %s4 = inlined_call_operand.vmem [shape: f32[1,8], index: 4, kind: input, shape index: {}]
  %s5 = inlined_call_operand.vmem [shape: bf16[2,16,16,8], index: 5, kind: output, shape index: {}]
  %s6 = sld [smem:[#allocation0]]
  $region53: #{_lambda_.1} parent=0
    _
  %s8 = ssub.s32 1, %s6
  %s9 = scalar_select 0, %s8, %s6
  loop: start=0, step=1, limit=4
  $region2: #{_lambda_.1} parent=0 // loop_pre_header
    _
  $region3: #{_lambda_.1} parent=0 // loop_header
    %s11 = sphi 0, %s15
    %p12 = scmp.ge.s32.totalorder %s11, 4
    %s21 = sphi 0, %s23
    %s24 = sphi 0, %s21
    %s25 = sphi 0, %s24
    %s41 = sphi 0, %s25
    %s45 = sphi 0, %s45
    %s47 = sphi 0, %s45
    %s48 = sphi 0, %s47
    %s62 = sphi 0, %s48
    %s66 = sphi 0, %s66
    %s68 = sphi 0, %s66
    %s69 = sphi 0, %s68
    %s83 = sphi 0, %s69
    %s87 = sphi 0, %s87
    %s89 = sphi 0, %s87
    %s90 = sphi 0, %s89
    %s104 = sphi 0, %s90
    %s108 = sphi 0, %s108
    %s110 = sphi 0, %s108
    %s111 = sphi 0, %s110
    %s125 = sphi 0, %s111
    %s131 = sphi 0, %s133
    %s134 = sphi 0, %s131
    %s135 = sphi 0, %s134
    %s151 = sphi 0, %s135
  $region4: #{_lambda_.1} parent=0 // loop_header_branch
    %14 = sbr.rel (%p12) target = $region8
  $region5: #{_lambda_.1} parent=0 // loop_body
    %s16 = ssub.s32 %s11, 1
    %s17 = ssub.s32 %s11, 2
    %s18 = sadd.s32 %s11, 1
    %s19 = ssub.s32 %s11, %s18
    %p20 = scmp.eq.s32.totalorder %s19, 0
    %s22 = sadd.s32 %s21, 1
    %s23 = scalar_select %p20, %s21, %s22
    %p26 = pneg %p20
    %p27 = scmp.eq.s32.totalorder %s11, 1
    %p28 = por %p26, %p27
    %p29 = scmp.ne.s32.totalorder %s21, %s24
    %p30 = scmp.eq.s32.totalorder %s11, 0
    %p31 = por %p29, %p30
    %p32 = scmp.ne.s32.totalorder %s21, %s24
    %p33 = scmp.eq.s32.totalorder %s16, 1
    %p34 = por %p32, %p33
    %p35 = scmp.ne.s32.totalorder %s24, %s25
    %p36 = scmp.eq.s32.totalorder %s16, 0
    %p37 = por %p35, %p36
    %p38 = scmp.ne.s32.totalorder %s24, %s25
    %p39 = scmp.eq.s32.totalorder %s17, 1
    %p40 = por %p38, %p39
    %p42 = scmp.ne.s32.totalorder %s25, %s41
    %p43 = scmp.eq.s32.totalorder %s17, 0
    %p44 = por %p42, %p43
    %s46 = sadd.s32 %s45, 1
    %p49 = scmp.eq.s32.totalorder %s11, 1
    %p50 = scmp.ne.s32.totalorder %s45, %s47
    %p51 = scmp.eq.s32.totalorder %s11, 0
    %p52 = por %p50, %p51
    %p53 = scmp.ne.s32.totalorder %s45, %s47
    %p54 = scmp.eq.s32.totalorder %s16, 1
    %p55 = por %p53, %p54
    %p56 = scmp.ne.s32.totalorder %s47, %s48
    %p57 = scmp.eq.s32.totalorder %s16, 0
    %p58 = por %p56, %p57
    %p59 = scmp.ne.s32.totalorder %s47, %s48
    %p60 = scmp.eq.s32.totalorder %s17, 1
    %p61 = por %p59, %p60
    %p63 = scmp.ne.s32.totalorder %s48, %s62
    %p64 = scmp.eq.s32.totalorder %s17, 0
    %p65 = por %p63, %p64
    %s67 = sadd.s32 %s66, 1
    %p70 = scmp.eq.s32.totalorder %s11, 1
    %p71 = scmp.ne.s32.totalorder %s66, %s68
    %p72 = scmp.eq.s32.totalorder %s11, 0
    %p73 = por %p71, %p72
    %p74 = scmp.ne.s32.totalorder %s66, %s68
    %p75 = scmp.eq.s32.totalorder %s16, 1
    %p76 = por %p74, %p75
    %p77 = scmp.ne.s32.totalorder %s68, %s69
    %p78 = scmp.eq.s32.totalorder %s16, 0
    %p79 = por %p77, %p78
    %p80 = scmp.ne.s32.totalorder %s68, %s69
    %p81 = scmp.eq.s32.totalorder %s17, 1
    %p82 = por %p80, %p81
    %p84 = scmp.ne.s32.totalorder %s69, %s83
    %p85 = scmp.eq.s32.totalorder %s17, 0
    %p86 = por %p84, %p85
    %s88 = sadd.s32 %s87, 1
    %p91 = scmp.eq.s32.totalorder %s11, 1
    %p92 = scmp.ne.s32.totalorder %s87, %s89
    %p93 = scmp.eq.s32.totalorder %s11, 0
    %p94 = por %p92, %p93
    %p95 = scmp.ne.s32.totalorder %s87, %s89
    %p96 = scmp.eq.s32.totalorder %s16, 1
    %p97 = por %p95, %p96
    %p98 = scmp.ne.s32.totalorder %s89, %s90
    %p99 = scmp.eq.s32.totalorder %s16, 0
    %p100 = por %p98, %p99
    %p101 = scmp.ne.s32.totalorder %s89, %s90
    %p102 = scmp.eq.s32.totalorder %s17, 1
    %p103 = por %p101, %p102
    %p105 = scmp.ne.s32.totalorder %s90, %s104
    %p106 = scmp.eq.s32.totalorder %s17, 0
    %p107 = por %p105, %p106
    %s109 = sadd.s32 %s108, 1
    %p112 = scmp.eq.s32.totalorder %s11, 1
    %p113 = scmp.ne.s32.totalorder %s108, %s110
    %p114 = scmp.eq.s32.totalorder %s11, 0
    %p115 = por %p113, %p114
    %p116 = scmp.ne.s32.totalorder %s108, %s110
    %p117 = scmp.eq.s32.totalorder %s16, 1
    %p118 = por %p116, %p117
    %p119 = scmp.ne.s32.totalorder %s110, %s111
    %p120 = scmp.eq.s32.totalorder %s16, 0
    %p121 = por %p119, %p120
    %p122 = scmp.ne.s32.totalorder %s110, %s111
    %p123 = scmp.eq.s32.totalorder %s17, 1
    %p124 = por %p122, %p123
    %p126 = scmp.ne.s32.totalorder %s111, %s125
    %p127 = scmp.eq.s32.totalorder %s17, 0
    %p128 = por %p126, %p127
    %s129 = ssub.s32 %s11, %s18
    %p130 = scmp.eq.s32.totalorder %s129, 0
    %s132 = sadd.s32 %s131, 1
    %s133 = scalar_select %p130, %s131, %s132
    %p136 = pneg %p130
    %p137 = scmp.eq.s32.totalorder %s11, 1
    %p138 = por %p136, %p137
    %p139 = scmp.ne.s32.totalorder %s131, %s134
    %p140 = scmp.eq.s32.totalorder %s11, 0
    %p141 = por %p139, %p140
    %p142 = scmp.ne.s32.totalorder %s131, %s134
    %p143 = scmp.eq.s32.totalorder %s16, 1
    %p144 = por %p142, %p143
    %p145 = scmp.ne.s32.totalorder %s134, %s135
    %p146 = scmp.eq.s32.totalorder %s16, 0
    %p147 = por %p145, %p146
    %p148 = scmp.ne.s32.totalorder %s134, %s135
    %p149 = scmp.eq.s32.totalorder %s17, 1
    %p150 = por %p148, %p149
    %p152 = scmp.ne.s32.totalorder %s135, %s151
    %p153 = scmp.eq.s32.totalorder %s17, 0
    %p154 = por %p152, %p153
    %p155 = scmp.le.s32.totalorder 1, %s11
    %p156 = scmp.lt.s32.totalorder %s11, 3
    %p157 = pnand %p155, %p156
    %p158 = pneg %p157
    // Predicated region
    $region9: #{_lambda_.1} parent=5 // pred_check
      _
    $region10: #{_lambda_.1} parent=5 // pred_check_branch
      %160 = sbr.rel (%p157) target = $region12
    $region11: #{_lambda_.1} parent=5 // pred_region
      %s161 = ssub.s32 %s11, 1
      // Predicated region
      $region13: #{_lambda_.1} parent=11 // pred_check
        %p162 = pneg %p58
      $region14: #{_lambda_.1} parent=11 // pred_check_branch
        %164 = sbr.rel (%p162) target = $region16
      $region15: #{_lambda_.1} parent=11 // pred_region
        _
      $region16: #{_lambda_.1} parent=11 // pred_fallthru
        _
      // Predicated region
      $region17: #{_lambda_.1} parent=11 // pred_check
        %p165 = pneg %p79
      $region18: #{_lambda_.1} parent=11 // pred_check_branch
        %167 = sbr.rel (%p165) target = $region20
      $region19: #{_lambda_.1} parent=11 // pred_region
        _
      $region20: #{_lambda_.1} parent=11 // pred_fallthru
        _
      // Predicated region
      $region21: #{_lambda_.1} parent=11 // pred_check
        %p168 = pneg %p100
      $region22: #{_lambda_.1} parent=11 // pred_check_branch
        %170 = sbr.rel (%p168) target = $region24
      $region23: #{_lambda_.1} parent=11 // pred_region
        _
      $region24: #{_lambda_.1} parent=11 // pred_fallthru
        _
      // Predicated region
      $region25: #{_lambda_.1} parent=11 // pred_check
        %p171 = pneg %p121
      $region26: #{_lambda_.1} parent=11 // pred_check_branch
        %173 = sbr.rel (%p171) target = $region28
      $region27: #{_lambda_.1} parent=11 // pred_region
        _
      $region28: #{_lambda_.1} parent=11 // pred_fallthru
        _
    $region12: #{_lambda_.1} parent=5 // pred_fallthru
      _
    %p174 = scmp.lt.s32.totalorder %s11, 2
    // Predicated region
    $region29: #{_lambda_.1} parent=5 // pred_check
      %p175 = pneg %p174
    $region30: #{_lambda_.1} parent=5 // pred_check_branch
      %177 = sbr.rel (%p175) target = $region32
    $region31: #{_lambda_.1} parent=5 // pred_region
      // Predicated region
      $region33: #{_lambda_.1} parent=31 // pred_check
        %p178 = pneg %p31
      $region34: #{_lambda_.1} parent=31 // pred_check_branch
        %180 = sbr.rel (%p178) target = $region36
      $region35: #{_lambda_.1} parent=31 // pred_region
        %p181 = scmp.lt.s32.totalorder %s11, 1
        %s182 = scalar_select %p181, %s11, 1
        %s183 = smul.addr %s182, 80
        %s184 = smul.addr %s183, 4
        %s185 = scalar_lea.vmem %s0, %s184
      $region36: #{_lambda_.1} parent=31 // pred_fallthru
        _
    $region32: #{_lambda_.1} parent=5 // pred_fallthru
      _
    %p186 = scmp.le.s32.totalorder 1, %s11
    %p187 = scmp.lt.s32.totalorder %s11, 3
    %p188 = pnand %p186, %p187
    %p189 = pneg %p188
    // Predicated region
    $region37: #{_lambda_.1} parent=5 // pred_check
      _
    $region38: #{_lambda_.1} parent=5 // pred_check_branch
      %191 = sbr.rel (%p188) target = $region40
    $region39: #{_lambda_.1} parent=5 // pred_region
      %s192 = ssub.s32 %s11, 1
      %p193 = scmp.lt.s32.totalorder %s16, 1
      %s194 = scalar_select %p193, %s16, 1
      %s195 = smul.addr %s194, 80
      %s196 = smul.addr %s195, 4
      %s197 = scalar_lea.vmem %s0, %s196
      %p198 = pneg %p37
      %p199 = pneg %p34
      %p200 = pneg %p58
      %p201 = pneg %p55
      %p202 = pneg %p79
      %p203 = pneg %p76
      %p204 = pneg %p100
      %p205 = pneg %p97
      %p206 = pneg %p121
      %p207 = pneg %p118
      %p208 = pneg %p147
      %p209 = pneg %p144
      %p210 = scmp.lt.s32.totalorder %s16, 1
      %s211 = scalar_select %p210, %s16, 1
      %s212 = smul.addr %s211, 32
      %s213 = smul.addr %s212, 4
      %s214 = scalar_lea.vmem %s5, %s213
      %p215 = scmp.lt.s32.totalorder %s16, 1
      %s216 = scalar_select %p215, %s16, 1
      %s217 = smul.addr %s216, 80
      %s218 = smul.addr %s217, 4
      %s219 = scalar_lea.vmem %s0, %s218
      %p220 = scmp.lt.s32.totalorder %s16, 1
      %s221 = scalar_select %p220, %s16, 1
      %s222 = smul.addr %s221, 32
      %s223 = smul.addr %s222, 4
      %s224 = scalar_lea.vmem %s5, %s223
      %v226 = vld [vmem:[%s219] sm:$0xf]
      %v227 = vld [vmem:[%s219 + $0x4] sm:$0xf]
      %v228 = vld [vmem:[%s219 + $0x8] sm:$0xf]
      %v229 = vld [vmem:[%s219 + $0xc] sm:$0x1]
      %v230 = vld [vmem:[%s219 + $0x10] sm:$0xf]
      %v231 = vld [vmem:[%s219 + $0x14] sm:$0xf]
      %v232 = vld [vmem:[%s219 + $0x18] sm:$0xf]
      %v233 = vld [vmem:[%s219 + $0x1c] sm:$0x1]
      %v234 = vld [vmem:[%s219 + $0x20] sm:$0xf]
      %v235 = vld [vmem:[%s219 + $0x24] sm:$0xf]
      %v236 = vld [vmem:[%s219 + $0x28] sm:$0xf]
      %v237 = vld [vmem:[%s219 + $0x2c] sm:$0x1]
      %v238 = vld [vmem:[%s219 + $0x30] sm:$0xf]
      %v239 = vld [vmem:[%s219 + $0x34] sm:$0xf]
      %v240 = vld [vmem:[%s219 + $0x38] sm:$0xf]
      %v241 = vld [vmem:[%s219 + $0x3c] sm:$0x1]
      %v242 = vld [vmem:[%s219 + $0x40] sm:$0xf]
      %v243 = vld [vmem:[%s219 + $0x44] sm:$0xf]
      %v244 = vld [vmem:[%s219 + $0x48] sm:$0xf]
      %v245 = vld [vmem:[%s219 + $0x4c] sm:$0x1]
      %v246 = vld [vmem:[%s219 + $0x50] sm:$0xf]
      %v247 = vld [vmem:[%s219 + $0x54] sm:$0xf]
      %v248 = vld [vmem:[%s219 + $0x58] sm:$0xf]
      %v249 = vld [vmem:[%s219 + $0x5c] sm:$0x1]
      %v250 = vld [vmem:[%s219 + $0x60] sm:$0xf]
      %v251 = vld [vmem:[%s219 + $0x64] sm:$0xf]
      %v252 = vld [vmem:[%s219 + $0x68] sm:$0xf]
      %v253 = vld [vmem:[%s219 + $0x6c] sm:$0x1]
      %v254 = vld [vmem:[%s219 + $0x70] sm:$0xf]
      %v255 = vld [vmem:[%s219 + $0x74] sm:$0xf]
      %v256 = vld [vmem:[%s219 + $0x78] sm:$0xf]
      %v257 = vld [vmem:[%s219 + $0x7c] sm:$0x1]
      %v258 = vld [vmem:[%s219 + $0x80] sm:$0xf]
      %v259 = vld [vmem:[%s219 + $0x84] sm:$0xf]
      %v260 = vld [vmem:[%s219 + $0x88] sm:$0xf]
      %v261 = vld [vmem:[%s219 + $0x8c] sm:$0x1]
      %v262 = vld [vmem:[%s219 + $0x90] sm:$0xf]
      %v263 = vld [vmem:[%s219 + $0x94] sm:$0xf]
      %v264 = vld [vmem:[%s219 + $0x98] sm:$0xf]
      %v265 = vld [vmem:[%s219 + $0x9c] sm:$0x1]
      %v266 = vld [vmem:[%s219 + $0xa0] sm:$0xf]
      %v267 = vld [vmem:[%s219 + $0xa4] sm:$0xf]
      %v268 = vld [vmem:[%s219 + $0xa8] sm:$0xf]
      %v269 = vld [vmem:[%s219 + $0xac] sm:$0x1]
      %v270 = vld [vmem:[%s219 + $0xb0] sm:$0xf]
      %v271 = vld [vmem:[%s219 + $0xb4] sm:$0xf]
      %v272 = vld [vmem:[%s219 + $0xb8] sm:$0xf]
      %v273 = vld [vmem:[%s219 + $0xbc] sm:$0x1]
      %v274 = vld [vmem:[%s219 + $0xc0] sm:$0xf]
      %v275 = vld [vmem:[%s219 + $0xc4] sm:$0xf]
      %v276 = vld [vmem:[%s219 + $0xc8] sm:$0xf]
      %v277 = vld [vmem:[%s219 + $0xcc] sm:$0x1]
      %v278 = vld [vmem:[%s219 + $0xd0] sm:$0xf]
      %v279 = vld [vmem:[%s219 + $0xd4] sm:$0xf]
      %v280 = vld [vmem:[%s219 + $0xd8] sm:$0xf]
      %v281 = vld [vmem:[%s219 + $0xdc] sm:$0x1]
      %v282 = vld [vmem:[%s219 + $0xe0] sm:$0xf]
      %v283 = vld [vmem:[%s219 + $0xe4] sm:$0xf]
      %v284 = vld [vmem:[%s219 + $0xe8] sm:$0xf]
      %v285 = vld [vmem:[%s219 + $0xec] sm:$0x1]
      %v286 = vld [vmem:[%s219 + $0xf0] sm:$0xf]
      %v287 = vld [vmem:[%s219 + $0xf4] sm:$0xf]
      %v288 = vld [vmem:[%s219 + $0xf8] sm:$0xf]
      %v289 = vld [vmem:[%s219 + $0xfc] sm:$0x1]
      %v290 = vld [vmem:[%s219 + $0x100] sm:$0xf]
      %v291 = vld [vmem:[%s219 + $0x104] sm:$0xf]
      %v292 = vld [vmem:[%s219 + $0x108] sm:$0xf]
      %v293 = vld [vmem:[%s219 + $0x10c] sm:$0x1]
      %v294 = vld [vmem:[%s219 + $0x110] sm:$0xf]
      %v295 = vld [vmem:[%s219 + $0x114] sm:$0xf]
      %v296 = vld [vmem:[%s219 + $0x118] sm:$0xf]
      %v297 = vld [vmem:[%s219 + $0x11c] sm:$0x1]
      %v298 = vld [vmem:[%s219 + $0x120] sm:$0xf]
      %v299 = vld [vmem:[%s219 + $0x124] sm:$0xf]
      %v300 = vld [vmem:[%s219 + $0x128] sm:$0xf]
      %v301 = vld [vmem:[%s219 + $0x12c] sm:$0x1]
      %v302 = vld [vmem:[%s219 + $0x130] sm:$0xf]
      %v303 = vld [vmem:[%s219 + $0x134] sm:$0xf]
      %v304 = vld [vmem:[%s219 + $0x138] sm:$0xf]
      %v305 = vld [vmem:[%s219 + $0x13c] sm:$0x1]
      %v306 = vld [vmem:[%s1] sm:$0xf]
      %vm307 = vsmask.f32 3328
      %vm308 = vsmask.f32 7440
      %vm309 = vmor %vm307, %vm308
      %v311 = vshrl.u32 %v226, 16
      %v313 = vrot.slane %v311, 4
      %v314 = vshll.u32 %v226, 16
      %v316 = vrot.slane %v314, 5
      %v317 = vor.u32 %v313, %v316
      %v318 = vrot.slane %v317, 4
      %v320 = vshll.u32 %v227, 16
      %v322 = vrot.slane %v320, 5
      %v323 = vsel %vm309, %v318, %v322
      %v324 = vshrl.u32 %v227, 16
      %v326 = vrot.slane %v324, 4
      %v327 = vor.u32 %v326, %v322
      %v328 = vrot.slane %v327, 4
      %v330 = vshll.u32 %v228, 16
      %v332 = vrot.slane %v330, 5
      %v333 = vsel %vm309, %v328, %v332
      %v334 = vshrl.u32 %v228, 16
      %v336 = vrot.slane %v334, 4
      %v337 = vor.u32 %v336, %v332
      %v338 = vrot.slane %v337, 4
      %v340 = vshll.u32 %v229, 16
      %v342 = vrot.slane %v340, 5
      %v343 = vsel %vm309, %v338, %v342
      %v345 = vshrl.u32 %v230, 16
      %v347 = vrot.slane %v345, 4
      %v348 = vshll.u32 %v230, 16
      %v350 = vrot.slane %v348, 5
      %v351 = vor.u32 %v347, %v350
      %v352 = vrot.slane %v351, 4
      %v354 = vshll.u32 %v231, 16
      %v356 = vrot.slane %v354, 5
      %v357 = vsel %vm309, %v352, %v356
      %v358 = vshrl.u32 %v231, 16
      %v360 = vrot.slane %v358, 4
      %v361 = vor.u32 %v360, %v356
      %v362 = vrot.slane %v361, 4
      %v364 = vshll.u32 %v232, 16
      %v366 = vrot.slane %v364, 5
      %v367 = vsel %vm309, %v362, %v366
      %v368 = vshrl.u32 %v232, 16
      %v370 = vrot.slane %v368, 4
      %v371 = vor.u32 %v370, %v366
      %v372 = vrot.slane %v371, 4
      %v374 = vshll.u32 %v233, 16
      %v376 = vrot.slane %v374, 5
      %v377 = vsel %vm309, %v372, %v376
      %v379 = vshrl.u32 %v234, 16
      %v381 = vrot.slane %v379, 4
      %v382 = vshll.u32 %v234, 16
      %v384 = vrot.slane %v382, 5
      %v385 = vor.u32 %v381, %v384
      %v386 = vrot.slane %v385, 4
      %v388 = vshll.u32 %v235, 16
      %v390 = vrot.slane %v388, 5
      %v391 = vsel %vm309, %v386, %v390
      %v392 = vshrl.u32 %v235, 16
      %v394 = vrot.slane %v392, 4
      %v395 = vor.u32 %v394, %v390
      %v396 = vrot.slane %v395, 4
      %v398 = vshll.u32 %v236, 16
      %v400 = vrot.slane %v398, 5
      %v401 = vsel %vm309, %v396, %v400
      %v402 = vshrl.u32 %v236, 16
      %v404 = vrot.slane %v402, 4
      %v405 = vor.u32 %v404, %v400
      %v406 = vrot.slane %v405, 4
      %v408 = vshll.u32 %v237, 16
      %v410 = vrot.slane %v408, 5
      %v411 = vsel %vm309, %v406, %v410
      %v413 = vshrl.u32 %v238, 16
      %v415 = vrot.slane %v413, 4
      %v416 = vshll.u32 %v238, 16
      %v418 = vrot.slane %v416, 5
      %v419 = vor.u32 %v415, %v418
      %v420 = vrot.slane %v419, 4
      %v422 = vshll.u32 %v239, 16
      %v424 = vrot.slane %v422, 5
      %v425 = vsel %vm309, %v420, %v424
      %v426 = vshrl.u32 %v239, 16
      %v428 = vrot.slane %v426, 4
      %v429 = vor.u32 %v428, %v424
      %v430 = vrot.slane %v429, 4
      %v432 = vshll.u32 %v240, 16
      %v434 = vrot.slane %v432, 5
      %v435 = vsel %vm309, %v430, %v434
      %v436 = vshrl.u32 %v240, 16
      %v438 = vrot.slane %v436, 4
      %v439 = vor.u32 %v438, %v434
      %v440 = vrot.slane %v439, 4
      %v442 = vshll.u32 %v241, 16
      %v444 = vrot.slane %v442, 5
      %v445 = vsel %vm309, %v440, %v444
      %v447 = vshrl.u32 %v242, 16
      %v449 = vrot.slane %v447, 4
      %v450 = vshll.u32 %v242, 16
      %v452 = vrot.slane %v450, 5
      %v453 = vor.u32 %v449, %v452
      %v454 = vrot.slane %v453, 4
      %v456 = vshll.u32 %v243, 16
      %v458 = vrot.slane %v456, 5
      %v459 = vsel %vm309, %v454, %v458
      %v460 = vshrl.u32 %v243, 16
      %v462 = vrot.slane %v460, 4
      %v463 = vor.u32 %v462, %v458
      %v464 = vrot.slane %v463, 4
      %v466 = vshll.u32 %v244, 16
      %v468 = vrot.slane %v466, 5
      %v469 = vsel %vm309, %v464, %v468
      %v470 = vshrl.u32 %v244, 16
      %v472 = vrot.slane %v470, 4
      %v473 = vor.u32 %v472, %v468
      %v474 = vrot.slane %v473, 4
      %v476 = vshll.u32 %v245, 16
      %v478 = vrot.slane %v476, 5
      %v479 = vsel %vm309, %v474, %v478
      %v481 = vshrl.u32 %v246, 16
      %v483 = vrot.slane %v481, 4
      %v484 = vshll.u32 %v246, 16
      %v486 = vrot.slane %v484, 5
      %v487 = vor.u32 %v483, %v486
      %v488 = vrot.slane %v487, 4
      %v490 = vshll.u32 %v247, 16
      %v492 = vrot.slane %v490, 5
      %v493 = vsel %vm309, %v488, %v492
      %v494 = vshrl.u32 %v247, 16
      %v496 = vrot.slane %v494, 4
      %v497 = vor.u32 %v496, %v492
      %v498 = vrot.slane %v497, 4
      %v500 = vshll.u32 %v248, 16
      %v502 = vrot.slane %v500, 5
      %v503 = vsel %vm309, %v498, %v502
      %v504 = vshrl.u32 %v248, 16
      %v506 = vrot.slane %v504, 4
      %v507 = vor.u32 %v506, %v502
      %v508 = vrot.slane %v507, 4
      %v510 = vshll.u32 %v249, 16
      %v512 = vrot.slane %v510, 5
      %v513 = vsel %vm309, %v508, %v512
      %v515 = vshrl.u32 %v250, 16
      %v517 = vrot.slane %v515, 4
      %v518 = vshll.u32 %v250, 16
      %v520 = vrot.slane %v518, 5
      %v521 = vor.u32 %v517, %v520
      %v522 = vrot.slane %v521, 4
      %v524 = vshll.u32 %v251, 16
      %v526 = vrot.slane %v524, 5
      %v527 = vsel %vm309, %v522, %v526
      %v528 = vshrl.u32 %v251, 16
      %v530 = vrot.slane %v528, 4
      %v531 = vor.u32 %v530, %v526
      %v532 = vrot.slane %v531, 4
      %v534 = vshll.u32 %v252, 16
      %v536 = vrot.slane %v534, 5
      %v537 = vsel %vm309, %v532, %v536
      %v538 = vshrl.u32 %v252, 16
      %v540 = vrot.slane %v538, 4
      %v541 = vor.u32 %v540, %v536
      %v542 = vrot.slane %v541, 4
      %v544 = vshll.u32 %v253, 16
      %v546 = vrot.slane %v544, 5
      %v547 = vsel %vm309, %v542, %v546
      %v549 = vshrl.u32 %v254, 16
      %v551 = vrot.slane %v549, 4
      %v552 = vshll.u32 %v254, 16
      %v554 = vrot.slane %v552, 5
      %v555 = vor.u32 %v551, %v554
      %v556 = vrot.slane %v555, 4
      %v558 = vshll.u32 %v255, 16
      %v560 = vrot.slane %v558, 5
      %v561 = vsel %vm309, %v556, %v560
      %v562 = vshrl.u32 %v255, 16
      %v564 = vrot.slane %v562, 4
      %v565 = vor.u32 %v564, %v560
      %v566 = vrot.slane %v565, 4
      %v568 = vshll.u32 %v256, 16
      %v570 = vrot.slane %v568, 5
      %v571 = vsel %vm309, %v566, %v570
      %v572 = vshrl.u32 %v256, 16
      %v574 = vrot.slane %v572, 4
      %v575 = vor.u32 %v574, %v570
      %v576 = vrot.slane %v575, 4
      %v578 = vshll.u32 %v257, 16
      %v580 = vrot.slane %v578, 5
      %v581 = vsel %vm309, %v576, %v580
      %v583 = vshrl.u32 %v258, 16
      %v585 = vrot.slane %v583, 4
      %v586 = vshll.u32 %v258, 16
      %v588 = vrot.slane %v586, 5
      %v589 = vor.u32 %v585, %v588
      %v590 = vrot.slane %v589, 4
      %v592 = vshll.u32 %v259, 16
      %v594 = vrot.slane %v592, 5
      %v595 = vsel %vm309, %v590, %v594
      %v596 = vshrl.u32 %v259, 16
      %v598 = vrot.slane %v596, 4
      %v599 = vor.u32 %v598, %v594
      %v600 = vrot.slane %v599, 4
      %v602 = vshll.u32 %v260, 16
      %v604 = vrot.slane %v602, 5
      %v605 = vsel %vm309, %v600, %v604
      %v606 = vshrl.u32 %v260, 16
      %v608 = vrot.slane %v606, 4
      %v609 = vor.u32 %v608, %v604
      %v610 = vrot.slane %v609, 4
      %v612 = vshll.u32 %v261, 16
      %v614 = vrot.slane %v612, 5
      %v615 = vsel %vm309, %v610, %v614
      %v617 = vshrl.u32 %v262, 16
      %v619 = vrot.slane %v617, 4
      %v620 = vshll.u32 %v262, 16
      %v622 = vrot.slane %v620, 5
      %v623 = vor.u32 %v619, %v622
      %v624 = vrot.slane %v623, 4
      %v626 = vshll.u32 %v263, 16
      %v628 = vrot.slane %v626, 5
      %v629 = vsel %vm309, %v624, %v628
      %v630 = vshrl.u32 %v263, 16
      %v632 = vrot.slane %v630, 4
      %v633 = vor.u32 %v632, %v628
      %v634 = vrot.slane %v633, 4
      %v636 = vshll.u32 %v264, 16
      %v638 = vrot.slane %v636, 5
      %v639 = vsel %vm309, %v634, %v638
      %v640 = vshrl.u32 %v264, 16
      %v642 = vrot.slane %v640, 4
      %v643 = vor.u32 %v642, %v638
      %v644 = vrot.slane %v643, 4
      %v646 = vshll.u32 %v265, 16
      %v648 = vrot.slane %v646, 5
      %v649 = vsel %vm309, %v644, %v648
      %v651 = vshrl.u32 %v266, 16
      %v653 = vrot.slane %v651, 4
      %v654 = vshll.u32 %v266, 16
      %v656 = vrot.slane %v654, 5
      %v657 = vor.u32 %v653, %v656
      %v658 = vrot.slane %v657, 4
      %v660 = vshll.u32 %v267, 16
      %v662 = vrot.slane %v660, 5
      %v663 = vsel %vm309, %v658, %v662
      %v664 = vshrl.u32 %v267, 16
      %v666 = vrot.slane %v664, 4
      %v667 = vor.u32 %v666, %v662
      %v668 = vrot.slane %v667, 4
      %v670 = vshll.u32 %v268, 16
      %v672 = vrot.slane %v670, 5
      %v673 = vsel %vm309, %v668, %v672
      %v674 = vshrl.u32 %v268, 16
      %v676 = vrot.slane %v674, 4
      %v677 = vor.u32 %v676, %v672
      %v678 = vrot.slane %v677, 4
      %v680 = vshll.u32 %v269, 16
      %v682 = vrot.slane %v680, 5
      %v683 = vsel %vm309, %v678, %v682
      %v685 = vshrl.u32 %v270, 16
      %v687 = vrot.slane %v685, 4
      %v688 = vshll.u32 %v270, 16
      %v690 = vrot.slane %v688, 5
      %v691 = vor.u32 %v687, %v690
      %v692 = vrot.slane %v691, 4
      %v694 = vshll.u32 %v271, 16
      %v696 = vrot.slane %v694, 5
      %v697 = vsel %vm309, %v692, %v696
      %v698 = vshrl.u32 %v271, 16
      %v700 = vrot.slane %v698, 4
      %v701 = vor.u32 %v700, %v696
      %v702 = vrot.slane %v701, 4
      %v704 = vshll.u32 %v272, 16
      %v706 = vrot.slane %v704, 5
      %v707 = vsel %vm309, %v702, %v706
      %v708 = vshrl.u32 %v272, 16
      %v710 = vrot.slane %v708, 4
      %v711 = vor.u32 %v710, %v706
      %v712 = vrot.slane %v711, 4
      %v714 = vshll.u32 %v273, 16
      %v716 = vrot.slane %v714, 5
      %v717 = vsel %vm309, %v712, %v716
      %v719 = vshrl.u32 %v274, 16
      %v721 = vrot.slane %v719, 4
      %v722 = vshll.u32 %v274, 16
      %v724 = vrot.slane %v722, 5
      %v725 = vor.u32 %v721, %v724
      %v726 = vrot.slane %v725, 4
      %v728 = vshll.u32 %v275, 16
      %v730 = vrot.slane %v728, 5
      %v731 = vsel %vm309, %v726, %v730
      %v732 = vshrl.u32 %v275, 16
      %v734 = vrot.slane %v732, 4
      %v735 = vor.u32 %v734, %v730
      %v736 = vrot.slane %v735, 4
      %v738 = vshll.u32 %v276, 16
      %v740 = vrot.slane %v738, 5
      %v741 = vsel %vm309, %v736, %v740
      %v742 = vshrl.u32 %v276, 16
      %v744 = vrot.slane %v742, 4
      %v745 = vor.u32 %v744, %v740
      %v746 = vrot.slane %v745, 4
      %v748 = vshll.u32 %v277, 16
      %v750 = vrot.slane %v748, 5
      %v751 = vsel %vm309, %v746, %v750
      %v753 = vshrl.u32 %v278, 16
      %v755 = vrot.slane %v753, 4
      %v756 = vshll.u32 %v278, 16
      %v758 = vrot.slane %v756, 5
      %v759 = vor.u32 %v755, %v758
      %v760 = vrot.slane %v759, 4
      %v762 = vshll.u32 %v279, 16
      %v764 = vrot.slane %v762, 5
      %v765 = vsel %vm309, %v760, %v764
      %v766 = vshrl.u32 %v279, 16
      %v768 = vrot.slane %v766, 4
      %v769 = vor.u32 %v768, %v764
      %v770 = vrot.slane %v769, 4
      %v772 = vshll.u32 %v280, 16
      %v774 = vrot.slane %v772, 5
      %v775 = vsel %vm309, %v770, %v774
      %v776 = vshrl.u32 %v280, 16
      %v778 = vrot.slane %v776, 4
      %v779 = vor.u32 %v778, %v774
      %v780 = vrot.slane %v779, 4
      %v782 = vshll.u32 %v281, 16
      %v784 = vrot.slane %v782, 5
      %v785 = vsel %vm309, %v780, %v784
      %v787 = vshrl.u32 %v282, 16
      %v789 = vrot.slane %v787, 4
      %v790 = vshll.u32 %v282, 16
      %v792 = vrot.slane %v790, 5
      %v793 = vor.u32 %v789, %v792
      %v794 = vrot.slane %v793, 4
      %v796 = vshll.u32 %v283, 16
      %v798 = vrot.slane %v796, 5
      %v799 = vsel %vm309, %v794, %v798
      %v800 = vshrl.u32 %v283, 16
      %v802 = vrot.slane %v800, 4
      %v803 = vor.u32 %v802, %v798
      %v804 = vrot.slane %v803, 4
      %v806 = vshll.u32 %v284, 16
      %v808 = vrot.slane %v806, 5
      %v809 = vsel %vm309, %v804, %v808
      %v810 = vshrl.u32 %v284, 16
      %v812 = vrot.slane %v810, 4
      %v813 = vor.u32 %v812, %v808
      %v814 = vrot.slane %v813, 4
      %v816 = vshll.u32 %v285, 16
      %v818 = vrot.slane %v816, 5
      %v819 = vsel %vm309, %v814, %v818
      %v821 = vshrl.u32 %v286, 16
      %v823 = vrot.slane %v821, 4
      %v824 = vshll.u32 %v286, 16
      %v826 = vrot.slane %v824, 5
      %v827 = vor.u32 %v823, %v826
      %v828 = vrot.slane %v827, 4
      %v830 = vshll.u32 %v287, 16
      %v832 = vrot.slane %v830, 5
      %v833 = vsel %vm309, %v828, %v832
      %v834 = vshrl.u32 %v287, 16
      %v836 = vrot.slane %v834, 4
      %v837 = vor.u32 %v836, %v832
      %v838 = vrot.slane %v837, 4
      %v840 = vshll.u32 %v288, 16
      %v842 = vrot.slane %v840, 5
      %v843 = vsel %vm309, %v838, %v842
      %v844 = vshrl.u32 %v288, 16
      %v846 = vrot.slane %v844, 4
      %v847 = vor.u32 %v846, %v842
      %v848 = vrot.slane %v847, 4
      %v850 = vshll.u32 %v289, 16
      %v852 = vrot.slane %v850, 5
      %v853 = vsel %vm309, %v848, %v852
      %v855 = vshrl.u32 %v290, 16
      %v857 = vrot.slane %v855, 4
      %v858 = vshll.u32 %v290, 16
      %v860 = vrot.slane %v858, 5
      %v861 = vor.u32 %v857, %v860
      %v862 = vrot.slane %v861, 4
      %v864 = vshll.u32 %v291, 16
      %v866 = vrot.slane %v864, 5
      %v867 = vsel %vm309, %v862, %v866
      %v868 = vshrl.u32 %v291, 16
      %v870 = vrot.slane %v868, 4
      %v871 = vor.u32 %v870, %v866
      %v872 = vrot.slane %v871, 4
      %v874 = vshll.u32 %v292, 16
      %v876 = vrot.slane %v874, 5
      %v877 = vsel %vm309, %v872, %v876
      %v878 = vshrl.u32 %v292, 16
      %v880 = vrot.slane %v878, 4
      %v881 = vor.u32 %v880, %v876
      %v882 = vrot.slane %v881, 4
      %v884 = vshll.u32 %v293, 16
      %v886 = vrot.slane %v884, 5
      %v887 = vsel %vm309, %v882, %v886
      %v889 = vshrl.u32 %v294, 16
      %v891 = vrot.slane %v889, 4
      %v892 = vshll.u32 %v294, 16
      %v894 = vrot.slane %v892, 5
      %v895 = vor.u32 %v891, %v894
      %v896 = vrot.slane %v895, 4
      %v898 = vshll.u32 %v295, 16
      %v900 = vrot.slane %v898, 5
      %v901 = vsel %vm309, %v896, %v900
      %v902 = vshrl.u32 %v295, 16
      %v904 = vrot.slane %v902, 4
      %v905 = vor.u32 %v904, %v900
      %v906 = vrot.slane %v905, 4
      %v908 = vshll.u32 %v296, 16
      %v910 = vrot.slane %v908, 5
      %v911 = vsel %vm309, %v906, %v910
      %v912 = vshrl.u32 %v296, 16
      %v914 = vrot.slane %v912, 4
      %v915 = vor.u32 %v914, %v910
      %v916 = vrot.slane %v915, 4
      %v918 = vshll.u32 %v297, 16
      %v920 = vrot.slane %v918, 5
      %v921 = vsel %vm309, %v916, %v920
      %s922 = scalar_lea.vmem %s1, 4
      %v923 = vld [vmem:[%s922] sm:$0xf]
      %v924 = vunpack.c.l.b16 %v323
      %v925 = vunpack.c.l.b16 %v333
      %v926 = vunpack.c.l.b16 %v343
      %v927 = vunpack.c.l.b16 %v357
      %v928 = vunpack.c.l.b16 %v367
      %v929 = vunpack.c.l.b16 %v377
      %v930 = vunpack.c.l.b16 %v391
      %v931 = vunpack.c.l.b16 %v401
      %v932 = vunpack.c.l.b16 %v411
      %v933 = vunpack.c.l.b16 %v425
      %v934 = vunpack.c.l.b16 %v435
      %v935 = vunpack.c.l.b16 %v445
      %v936 = vunpack.c.l.b16 %v459
      %v937 = vunpack.c.l.b16 %v469
      %v938 = vunpack.c.l.b16 %v479
      %v939 = vunpack.c.l.b16 %v493
      %v940 = vunpack.c.l.b16 %v503
      %v941 = vunpack.c.l.b16 %v513
      %v942 = vunpack.c.l.b16 %v527
      %v943 = vunpack.c.l.b16 %v537
      %v944 = vunpack.c.l.b16 %v547
      %v945 = vunpack.c.l.b16 %v561
      %v946 = vunpack.c.l.b16 %v571
      %v947 = vunpack.c.l.b16 %v581
      %v948 = vunpack.c.l.b16 %v595
      %v949 = vunpack.c.l.b16 %v605
      %v950 = vunpack.c.l.b16 %v615
      %v951 = vunpack.c.l.b16 %v629
      %v952 = vunpack.c.l.b16 %v639
      %v953 = vunpack.c.l.b16 %v649
      %v954 = vunpack.c.l.b16 %v663
      %v955 = vunpack.c.l.b16 %v673
      %v956 = vunpack.c.l.b16 %v683
      %v957 = vunpack.c.l.b16 %v697
      %v958 = vunpack.c.l.b16 %v707
      %v959 = vunpack.c.l.b16 %v717
      %v960 = vunpack.c.l.b16 %v731
      %v961 = vunpack.c.l.b16 %v741
      %v962 = vunpack.c.l.b16 %v751
      %v963 = vunpack.c.l.b16 %v765
      %v964 = vunpack.c.l.b16 %v775
      %v965 = vunpack.c.l.b16 %v785
      %v966 = vunpack.c.l.b16 %v799
      %v967 = vunpack.c.l.b16 %v809
      %v968 = vunpack.c.l.b16 %v819
      %v969 = vunpack.c.l.b16 %v833
      %v970 = vunpack.c.l.b16 %v843
      %v971 = vunpack.c.l.b16 %v853
      %v972 = vunpack.c.l.b16 %v867
      %v973 = vunpack.c.l.b16 %v877
      %v974 = vunpack.c.l.b16 %v887
      %v975 = vunpack.c.l.b16 %v901
      %v976 = vunpack.c.l.b16 %v911
      %v977 = vunpack.c.l.b16 %v921
      %v978 = vpack.c.b16 %v925, %v924
      %v979 = vpack.c.b16 %v927, %v926
      %v980 = vpack.c.b16 %v929, %v928
      %v981 = vpack.c.b16 %v931, %v930
      %v982 = vpack.c.b16 %v933, %v932
      %v983 = vpack.c.b16 %v935, %v934
      %v984 = vpack.c.b16 %v937, %v936
      %v985 = vpack.c.b16 %v939, %v938
      %v986 = vpack.c.b16 %v941, %v940
      %v987 = vpack.c.b16 %v943, %v942
      %v988 = vpack.c.b16 %v945, %v944
      %v989 = vpack.c.b16 %v947, %v946
      %v990 = vpack.c.b16 %v949, %v948
      %v991 = vpack.c.b16 %v951, %v950
      %v992 = vpack.c.b16 %v953, %v952
      %v993 = vpack.c.b16 %v955, %v954
      %v994 = vpack.c.b16 %v957, %v956
      %v995 = vpack.c.b16 %v959, %v958
      %v996 = vpack.c.b16 %v961, %v960
      %v997 = vpack.c.b16 %v963, %v962
      %v998 = vpack.c.b16 %v965, %v964
      %v999 = vpack.c.b16 %v967, %v966
      %v1000 = vpack.c.b16 %v969, %v968
      %v1001 = vpack.c.b16 %v971, %v970
      %v1002 = vpack.c.b16 %v973, %v972
      %v1003 = vpack.c.b16 %v975, %v974
      %v1004 = vpack.c.b16 %v977, %v976
      %vm1005 = vcmask 64512
      %v1007 = vsel %vm1005, %v978, 0
      %v1010 = vsel %vm1005, %v979, 0
      %v1013 = vsel %vm1005, %v980, 0
      %v1016 = vsel %vm1005, %v981, 0
      %v1019 = vsel %vm1005, %v982, 0
      %v1022 = vsel %vm1005, %v983, 0
      %v1025 = vsel %vm1005, %v984, 0
      %v1028 = vsel %vm1005, %v985, 0
      %v1031 = vsel %vm1005, %v986, 0
      %v1034 = vsel %vm1005, %v987, 0
      %v1037 = vsel %vm1005, %v988, 0
      %v1040 = vsel %vm1005, %v989, 0
      %v1043 = vsel %vm1005, %v990, 0
      %v1046 = vsel %vm1005, %v991, 0
      %v1049 = vsel %vm1005, %v992, 0
      %v1052 = vsel %vm1005, %v993, 0
      %v1055 = vsel %vm1005, %v994, 0
      %v1058 = vsel %vm1005, %v995, 0
      %v1061 = vsel %vm1005, %v996, 0
      %v1064 = vsel %vm1005, %v997, 0
      %v1067 = vsel %vm1005, %v998, 0
      %v1070 = vsel %vm1005, %v999, 0
      %v1073 = vsel %vm1005, %v1000, 0
      %v1076 = vsel %vm1005, %v1001, 0
      %v1079 = vsel %vm1005, %v1002, 0
      %v1082 = vsel %vm1005, %v1003, 0
      %v1085 = vsel %vm1005, %v1004, 0
      %vm1087 = vcmask 1043456
      %v1089 = vsel %vm1087, %v923, 0
      %1091 = vmatprep.subr.bf16.mxu0 0
      %1092 = vmatpush1.bf16.msra.mxu0 %v1089
      %1093 = vmatprep.subr.bf16.mxu0 0
      %1094 = vmatpush1.bf16.msra.mxu0 0
      %1095 = vmatprep.subr.bf16.mxu0 0
      %1096 = vmatpush1.bf16.msra.mxu0 0
      %1097 = vmatprep.subr.bf16.mxu0 0
      %1098 = vmatpush1.bf16.msra.mxu0 0
      %1099 = vmatprep.subr.bf16.mxu0 0
      %1100 = vmatpush1.bf16.msra.mxu0 0
      %1101 = vmatprep.subr.bf16.mxu0 0
      %1102 = vmatpush1.bf16.msra.mxu0 0
      %1103 = vmatprep.subr.bf16.mxu0 0
      %1104 = vmatpush1.bf16.msra.mxu0 0
      %1105 = vmatprep.subr.bf16.mxu0 0
      %1106 = vmatpush1.bf16.msra.mxu0 0
      %1107 = vmatprep.subr.bf16.mxu0 0
      %1108 = vmatpush1.bf16.msra.mxu0 0
      %1109 = vmatprep.subr.bf16.mxu0 0
      %1110 = vmatpush1.bf16.msra.mxu0 0
      %1111 = vmatprep.subr.bf16.mxu0 0
      %1112 = vmatpush1.bf16.msra.mxu0 0
      %1113 = vmatprep.subr.bf16.mxu0 0
      %1114 = vmatpush1.bf16.msra.mxu0 0
      %1115 = vmatprep.subr.bf16.mxu0 0
      %1116 = vmatpush1.bf16.msra.mxu0 0
      %1117 = vmatprep.subr.bf16.mxu0 0
      %1118 = vmatpush1.bf16.msra.mxu0 0
      %1119 = vmatprep.subr.bf16.mxu0 0
      %1120 = vmatpush1.bf16.msra.mxu0 0
      %1121 = vmatprep.subr.bf16.mxu0 0
      %1122 = vmatpush1.bf16.msra.mxu0 0
      %1123 = vmatprep.mubr.bf16.mxu0 0
      %1124 = vmatmul.mubr.bf16.gmra.mrb[0].mxu0 %v1007
      %v1125 = vpop.f32.mrb[0].mxu0
      %v1126 = vadd.f32 0.0, %v1125
      %v1127 = vpop.f32.mrb[0].mxu0
      %v1128 = vpop.f32.mrb[0].mxu0
      %v1129 = vadd.f32 0.0, %v1128
      %v1130 = vpop.f32.mrb[0].mxu0
      %1131 = vmatprep.mubr.bf16.mxu0 0
      %1132 = vmatmul.mubr.bf16.gmra.mrb[0].mxu0 %v1010
      %v1133 = vpop.f32.mrb[0].mxu0
      %v1134 = vadd.f32 0.0, %v1133
      %v1135 = vpop.f32.mrb[0].mxu0
      %v1136 = vpop.f32.mrb[0].mxu0
      %v1137 = vadd.f32 0.0, %v1136
      %v1138 = vpop.f32.mrb[0].mxu0
      %1139 = vmatprep.mubr.bf16.mxu0 0
      %1140 = vmatmul.mubr.bf16.gmra.mrb[0].mxu0 %v1013
      %v1141 = vpop.f32.mrb[0].mxu0
      %v1142 = vadd.f32 0.0, %v1141
      %v1143 = vpop.f32.mrb[0].mxu0
      %v1144 = vpop.f32.mrb[0].mxu0
      %v1145 = vadd.f32 0.0, %v1144
      %v1146 = vpop.f32.mrb[0].mxu0
      %1147 = vmatprep.mubr.bf16.mxu0 0
      %1148 = vmatmul.mubr.bf16.gmra.mrb[0].mxu0 %v1016
      %v1149 = vpop.f32.mrb[0].mxu0
      %v1150 = vadd.f32 0.0, %v1149
      %v1151 = vpop.f32.mrb[0].mxu0
      %v1152 = vpop.f32.mrb[0].mxu0
      %v1153 = vadd.f32 0.0, %v1152
      %v1154 = vpop.f32.mrb[0].mxu0
      %1155 = vmatprep.mubr.bf16.mxu0 0
      %1156 = vmatmul.mubr.bf16.gmra.mrb[0].mxu0 %v1019
      %v1157 = vpop.f32.mrb[0].mxu0
      %v1158 = vadd.f32 0.0, %v1157
      %v1159 = vpop.f32.mrb[0].mxu0
      %v1160 = vpop.f32.mrb[0].mxu0
      %v1161 = vadd.f32 0.0, %v1160
      %v1162 = vpop.f32.mrb[0].mxu0
      %1163 = vmatprep.mubr.bf16.mxu0 0
      %1164 = vmatmul.mubr.bf16.gmra.mrb[0].mxu0 %v1022
      %v1165 = vpop.f32.mrb[0].mxu0
      %v1166 = vadd.f32 0.0, %v1165
      %v1167 = vpop.f32.mrb[0].mxu0
      %v1168 = vpop.f32.mrb[0].mxu0
      %v1169 = vadd.f32 0.0, %v1168
      %v1170 = vpop.f32.mrb[0].mxu0
      %1171 = vmatprep.mubr.bf16.mxu0 0
      %1172 = vmatmul.mubr.bf16.gmra.mrb[0].mxu0 %v1025
      %v1173 = vpop.f32.mrb[0].mxu0
      %v1174 = vadd.f32 0.0, %v1173
      %v1175 = vpop.f32.mrb[0].mxu0
      %v1176 = vpop.f32.mrb[0].mxu0
      %v1177 = vadd.f32 0.0, %v1176
      %v1178 = vpop.f32.mrb[0].mxu0
      %1179 = vmatprep.mubr.bf16.mxu0 0
      %1180 = vmatmul.mubr.bf16.gmra.mrb[0].mxu0 %v1028
      %v1181 = vpop.f32.mrb[0].mxu0
      %v1182 = vadd.f32 0.0, %v1181
      %v1183 = vpop.f32.mrb[0].mxu0
      %v1184 = vpop.f32.mrb[0].mxu0
      %v1185 = vadd.f32 0.0, %v1184
      %v1186 = vpop.f32.mrb[0].mxu0
      %1187 = vmatprep.mubr.bf16.mxu0 0
      %1188 = vmatmul.mubr.bf16.gmra.mrb[0].mxu0 %v1031
      %v1189 = vpop.f32.mrb[0].mxu0
      %v1190 = vadd.f32 0.0, %v1189
      %v1191 = vpop.f32.mrb[0].mxu0
      %v1192 = vpop.f32.mrb[0].mxu0
      %v1193 = vadd.f32 0.0, %v1192
      %v1194 = vpop.f32.mrb[0].mxu0
      %1195 = vmatprep.mubr.bf16.mxu0 0
      %1196 = vmatmul.mubr.bf16.gmra.mrb[0].mxu0 %v1034
      %v1197 = vpop.f32.mrb[0].mxu0
      %v1198 = vadd.f32 0.0, %v1197
      %v1199 = vpop.f32.mrb[0].mxu0
      %v1200 = vpop.f32.mrb[0].mxu0
      %v1201 = vadd.f32 0.0, %v1200
      %v1202 = vpop.f32.mrb[0].mxu0
      %1203 = vmatprep.mubr.bf16.mxu0 0
      %1204 = vmatmul.mubr.bf16.gmra.mrb[0].mxu0 %v1037
      %v1205 = vpop.f32.mrb[0].mxu0
      %v1206 = vadd.f32 0.0, %v1205
      %v1207 = vpop.f32.mrb[0].mxu0
      %v1208 = vpop.f32.mrb[0].mxu0
      %v1209 = vadd.f32 0.0, %v1208
      %v1210 = vpop.f32.mrb[0].mxu0
      %1211 = vmatprep.mubr.bf16.mxu0 0
      %1212 = vmatmul.mubr.bf16.gmra.mrb[0].mxu0 %v1040
      %v1213 = vpop.f32.mrb[0].mxu0
      %v1214 = vadd.f32 0.0, %v1213
      %v1215 = vpop.f32.mrb[0].mxu0
      %v1216 = vpop.f32.mrb[0].mxu0
      %v1217 = vadd.f32 0.0, %v1216
      %v1218 = vpop.f32.mrb[0].mxu0
      %1219 = vmatprep.mubr.bf16.mxu0 0
      %1220 = vmatmul.mubr.bf16.gmra.mrb[0].mxu0 %v1043
      %v1221 = vpop.f32.mrb[0].mxu0
      %v1222 = vadd.f32 0.0, %v1221
      %v1223 = vpop.f32.mrb[0].mxu0
      %v1224 = vpop.f32.mrb[0].mxu0
      %v1225 = vadd.f32 0.0, %v1224
      %v1226 = vpop.f32.mrb[0].mxu0
      %1227 = vmatprep.mubr.bf16.mxu0 0
      %1228 = vmatmul.mubr.bf16.gmra.mrb[0].mxu0 %v1046
      %v1229 = vpop.f32.mrb[0].mxu0
      %v1230 = vadd.f32 0.0, %v1229
      %v1231 = vpop.f32.mrb[0].mxu0
      %v1232 = vpop.f32.mrb[0].mxu0
      %v1233 = vadd.f32 0.0, %v1232
      %v1234 = vpop.f32.mrb[0].mxu0
      %1235 = vmatprep.mubr.bf16.mxu0 0
      %1236 = vmatmul.mubr.bf16.gmra.mrb[0].mxu0 %v1049
      %v1237 = vpop.f32.mrb[0].mxu0
      %v1238 = vadd.f32 0.0, %v1237
      %v1239 = vpop.f32.mrb[0].mxu0
      %v1240 = vpop.f32.mrb[0].mxu0
      %v1241 = vadd.f32 0.0, %v1240
      %v1242 = vpop.f32.mrb[0].mxu0
      %1243 = vmatprep.mubr.bf16.mxu0 0
      %1244 = vmatmul.mubr.bf16.gmra.mrb[0].mxu0 %v1052
      %v1245 = vpop.f32.mrb[0].mxu0
      %v1246 = vadd.f32 0.0, %v1245
      %v1247 = vpop.f32.mrb[0].mxu0
      %v1248 = vpop.f32.mrb[0].mxu0
      %v1249 = vadd.f32 0.0, %v1248
      %v1250 = vpop.f32.mrb[0].mxu0
      %1251 = vmatprep.mubr.bf16.mxu0 0
      %1252 = vmatmul.mubr.bf16.gmra.mrb[0].mxu0 %v1055
      %v1253 = vpop.f32.mrb[0].mxu0
      %v1254 = vadd.f32 0.0, %v1253
      %v1255 = vpop.f32.mrb[0].mxu0
      %v1256 = vpop.f32.mrb[0].mxu0
      %v1257 = vadd.f32 0.0, %v1256
      %v1258 = vpop.f32.mrb[0].mxu0
      %1259 = vmatprep.mubr.bf16.mxu0 0
      %1260 = vmatmul.mubr.bf16.gmra.mrb[0].mxu0 %v1058
      %v1261 = vpop.f32.mrb[0].mxu0
      %v1262 = vadd.f32 0.0, %v1261
      %v1263 = vpop.f32.mrb[0].mxu0
      %v1264 = vpop.f32.mrb[0].mxu0
      %v1265 = vadd.f32 0.0, %v1264
      %v1266 = vpop.f32.mrb[0].mxu0
      %1267 = vmatprep.mubr.bf16.mxu0 0
      %1268 = vmatmul.mubr.bf16.gmra.mrb[0].mxu0 %v1061
      %v1269 = vpop.f32.mrb[0].mxu0
      %v1270 = vadd.f32 0.0, %v1269
      %v1271 = vpop.f32.mrb[0].mxu0
      %v1272 = vpop.f32.mrb[0].mxu0
      %v1273 = vadd.f32 0.0, %v1272
      %v1274 = vpop.f32.mrb[0].mxu0
      %1275 = vmatprep.mubr.bf16.mxu0 0
      %1276 = vmatmul.mubr.bf16.gmra.mrb[0].mxu0 %v1064
      %v1277 = vpop.f32.mrb[0].mxu0
      %v1278 = vadd.f32 0.0, %v1277
      %v1279 = vpop.f32.mrb[0].mxu0
      %v1280 = vpop.f32.mrb[0].mxu0
      %v1281 = vadd.f32 0.0, %v1280
      %v1282 = vpop.f32.mrb[0].mxu0
      %1283 = vmatprep.mubr.bf16.mxu0 0
      %1284 = vmatmul.mubr.bf16.gmra.mrb[0].mxu0 %v1067
      %v1285 = vpop.f32.mrb[0].mxu0
      %v1286 = vadd.f32 0.0, %v1285
      %v1287 = vpop.f32.mrb[0].mxu0
      %v1288 = vpop.f32.mrb[0].mxu0
      %v1289 = vadd.f32 0.0, %v1288
      %v1290 = vpop.f32.mrb[0].mxu0
      %1291 = vmatprep.mubr.bf16.mxu0 0
      %1292 = vmatmul.mubr.bf16.gmra.mrb[0].mxu0 %v1070
      %v1293 = vpop.f32.mrb[0].mxu0
      %v1294 = vadd.f32 0.0, %v1293
      %v1295 = vpop.f32.mrb[0].mxu0
      %v1296 = vpop.f32.mrb[0].mxu0
      %v1297 = vadd.f32 0.0, %v1296
      %v1298 = vpop.f32.mrb[0].mxu0
      %1299 = vmatprep.mubr.bf16.mxu0 0
      %1300 = vmatmul.mubr.bf16.gmra.mrb[0].mxu0 %v1073
      %v1301 = vpop.f32.mrb[0].mxu0
      %v1302 = vadd.f32 0.0, %v1301
      %v1303 = vpop.f32.mrb[0].mxu0
      %v1304 = vpop.f32.mrb[0].mxu0
      %v1305 = vadd.f32 0.0, %v1304
      %v1306 = vpop.f32.mrb[0].mxu0
      %1307 = vmatprep.mubr.bf16.mxu0 0
      %1308 = vmatmul.mubr.bf16.gmra.mrb[0].mxu0 %v1076
      %v1309 = vpop.f32.mrb[0].mxu0
      %v1310 = vadd.f32 0.0, %v1309
      %v1311 = vpop.f32.mrb[0].mxu0
      %v1312 = vpop.f32.mrb[0].mxu0
      %v1313 = vadd.f32 0.0, %v1312
      %v1314 = vpop.f32.mrb[0].mxu0
      %1315 = vmatprep.mubr.bf16.mxu0 0
      %1316 = vmatmul.mubr.bf16.gmra.mrb[0].mxu0 %v1079
      %v1317 = vpop.f32.mrb[0].mxu0
      %v1318 = vadd.f32 0.0, %v1317
      %v1319 = vpop.f32.mrb[0].mxu0
      %v1320 = vpop.f32.mrb[0].mxu0
      %v1321 = vadd.f32 0.0, %v1320
      %v1322 = vpop.f32.mrb[0].mxu0
      %1323 = vmatprep.mubr.bf16.mxu0 0
      %1324 = vmatmul.mubr.bf16.gmra.mrb[0].mxu0 %v1082
      %v1325 = vpop.f32.mrb[0].mxu0
      %v1326 = vadd.f32 0.0, %v1325
      %v1327 = vpop.f32.mrb[0].mxu0
      %v1328 = vpop.f32.mrb[0].mxu0
      %v1329 = vadd.f32 0.0, %v1328
      %v1330 = vpop.f32.mrb[0].mxu0
      %1331 = vmatprep.mubr.bf16.mxu0 0
      %1332 = vmatmul.mubr.bf16.gmra.mrb[0].mxu0 %v1085
      %v1333 = vpop.f32.mrb[0].mxu0
      %v1334 = vadd.f32 0.0, %v1333
      %v1335 = vpop.f32.mrb[0].mxu0
      %v1336 = vpop.f32.mrb[0].mxu0
      %v1337 = vadd.f32 0.0, %v1336
      %v1338 = vpop.f32.mrb[0].mxu0
      %1339 = vdwg.mxu0
      %v1394 = vunpack.c.l.b16 %v226
      %v1395 = vunpack.c.l.b16 %v227
      %v1396 = vunpack.c.l.b16 %v228
      %v1397 = vunpack.c.l.b16 %v230
      %v1398 = vunpack.c.l.b16 %v231
      %v1399 = vunpack.c.l.b16 %v232
      %v1400 = vunpack.c.l.b16 %v234
      %v1401 = vunpack.c.l.b16 %v235
      %v1402 = vunpack.c.l.b16 %v236
      %v1403 = vunpack.c.l.b16 %v238
      %v1404 = vunpack.c.l.b16 %v239
      %v1405 = vunpack.c.l.b16 %v240
      %v1406 = vunpack.c.l.b16 %v242
      %v1407 = vunpack.c.l.b16 %v243
      %v1408 = vunpack.c.l.b16 %v244
      %v1409 = vunpack.c.l.b16 %v246
      %v1410 = vunpack.c.l.b16 %v247
      %v1411 = vunpack.c.l.b16 %v248
      %v1412 = vunpack.c.l.b16 %v250
      %v1413 = vunpack.c.l.b16 %v251
      %v1414 = vunpack.c.l.b16 %v252
      %v1415 = vunpack.c.l.b16 %v254
      %v1416 = vunpack.c.l.b16 %v255
      %v1417 = vunpack.c.l.b16 %v256
      %v1418 = vunpack.c.l.b16 %v258
      %v1419 = vunpack.c.l.b16 %v259
      %v1420 = vunpack.c.l.b16 %v260
      %v1421 = vunpack.c.l.b16 %v262
      %v1422 = vunpack.c.l.b16 %v263
      %v1423 = vunpack.c.l.b16 %v264
      %v1424 = vunpack.c.l.b16 %v266
      %v1425 = vunpack.c.l.b16 %v267
      %v1426 = vunpack.c.l.b16 %v268
      %v1427 = vunpack.c.l.b16 %v270
      %v1428 = vunpack.c.l.b16 %v271
      %v1429 = vunpack.c.l.b16 %v272
      %v1430 = vunpack.c.l.b16 %v274
      %v1431 = vunpack.c.l.b16 %v275
      %v1432 = vunpack.c.l.b16 %v276
      %v1433 = vunpack.c.l.b16 %v278
      %v1434 = vunpack.c.l.b16 %v279
      %v1435 = vunpack.c.l.b16 %v280
      %v1436 = vunpack.c.l.b16 %v282
      %v1437 = vunpack.c.l.b16 %v283
      %v1438 = vunpack.c.l.b16 %v284
      %v1439 = vunpack.c.l.b16 %v286
      %v1440 = vunpack.c.l.b16 %v287
      %v1441 = vunpack.c.l.b16 %v288
      %v1442 = vunpack.c.l.b16 %v290
      %v1443 = vunpack.c.l.b16 %v291
      %v1444 = vunpack.c.l.b16 %v292
      %v1445 = vunpack.c.l.b16 %v294
      %v1446 = vunpack.c.l.b16 %v295
      %v1447 = vunpack.c.l.b16 %v296
      %v1448 = vpack.c.b16 %v1395, %v1394
      %v1449 = vpack.c.b16 %v1397, %v1396
      %v1450 = vpack.c.b16 %v1399, %v1398
      %v1451 = vpack.c.b16 %v1401, %v1400
      %v1452 = vpack.c.b16 %v1403, %v1402
      %v1453 = vpack.c.b16 %v1405, %v1404
      %v1454 = vpack.c.b16 %v1407, %v1406
      %v1455 = vpack.c.b16 %v1409, %v1408
      %v1456 = vpack.c.b16 %v1411, %v1410
      %v1457 = vpack.c.b16 %v1413, %v1412
      %v1458 = vpack.c.b16 %v1415, %v1414
      %v1459 = vpack.c.b16 %v1417, %v1416
      %v1460 = vpack.c.b16 %v1419, %v1418
      %v1461 = vpack.c.b16 %v1421, %v1420
      %v1462 = vpack.c.b16 %v1423, %v1422
      %v1463 = vpack.c.b16 %v1425, %v1424
      %v1464 = vpack.c.b16 %v1427, %v1426
      %v1465 = vpack.c.b16 %v1429, %v1428
      %v1466 = vpack.c.b16 %v1431, %v1430
      %v1467 = vpack.c.b16 %v1433, %v1432
      %v1468 = vpack.c.b16 %v1435, %v1434
      %v1469 = vpack.c.b16 %v1437, %v1436
      %v1470 = vpack.c.b16 %v1439, %v1438
      %v1471 = vpack.c.b16 %v1441, %v1440
      %v1472 = vpack.c.b16 %v1443, %v1442
      %v1473 = vpack.c.b16 %v1445, %v1444
      %v1474 = vpack.c.b16 %v1447, %v1446
      %v1476 = vsel %vm1005, %v1448, 0
      %v1479 = vsel %vm1005, %v1449, 0
      %v1482 = vsel %vm1005, %v1450, 0
      %v1485 = vsel %vm1005, %v1451, 0
      %v1488 = vsel %vm1005, %v1452, 0
      %v1491 = vsel %vm1005, %v1453, 0
      %v1494 = vsel %vm1005, %v1454, 0
      %v1497 = vsel %vm1005, %v1455, 0
      %v1500 = vsel %vm1005, %v1456, 0
      %v1503 = vsel %vm1005, %v1457, 0
      %v1506 = vsel %vm1005, %v1458, 0
      %v1509 = vsel %vm1005, %v1459, 0
      %v1512 = vsel %vm1005, %v1460, 0
      %v1515 = vsel %vm1005, %v1461, 0
      %v1518 = vsel %vm1005, %v1462, 0
      %v1521 = vsel %vm1005, %v1463, 0
      %v1524 = vsel %vm1005, %v1464, 0
      %v1527 = vsel %vm1005, %v1465, 0
      %v1530 = vsel %vm1005, %v1466, 0
      %v1533 = vsel %vm1005, %v1467, 0
      %v1536 = vsel %vm1005, %v1468, 0
      %v1539 = vsel %vm1005, %v1469, 0
      %v1542 = vsel %vm1005, %v1470, 0
      %v1545 = vsel %vm1005, %v1471, 0
      %v1548 = vsel %vm1005, %v1472, 0
      %v1551 = vsel %vm1005, %v1473, 0
      %v1554 = vsel %vm1005, %v1474, 0
      %v1557 = vsel %vm1087, %v306, 0
      %1559 = vmatprep.subr.bf16.mxu0 0
      %1560 = vmatpush1.bf16.msra.mxu0 %v1557
      %1561 = vmatprep.subr.bf16.mxu0 0
      %1562 = vmatpush1.bf16.msra.mxu0 0
      %1563 = vmatprep.subr.bf16.mxu0 0
      %1564 = vmatpush1.bf16.msra.mxu0 0
      %1565 = vmatprep.subr.bf16.mxu0 0
      %1566 = vmatpush1.bf16.msra.mxu0 0
      %1567 = vmatprep.subr.bf16.mxu0 0
      %1568 = vmatpush1.bf16.msra.mxu0 0
      %1569 = vmatprep.subr.bf16.mxu0 0
      %1570 = vmatpush1.bf16.msra.mxu0 0
      %1571 = vmatprep.subr.bf16.mxu0 0
      %1572 = vmatpush1.bf16.msra.mxu0 0
      %1573 = vmatprep.subr.bf16.mxu0 0
      %1574 = vmatpush1.bf16.msra.mxu0 0
      %1575 = vmatprep.subr.bf16.mxu0 0
      %1576 = vmatpush1.bf16.msra.mxu0 0
      %1577 = vmatprep.subr.bf16.mxu0 0
      %1578 = vmatpush1.bf16.msra.mxu0 0
      %1579 = vmatprep.subr.bf16.mxu0 0
      %1580 = vmatpush1.bf16.msra.mxu0 0
      %1581 = vmatprep.subr.bf16.mxu0 0
      %1582 = vmatpush1.bf16.msra.mxu0 0
      %1583 = vmatprep.subr.bf16.mxu0 0
      %1584 = vmatpush1.bf16.msra.mxu0 0
      %1585 = vmatprep.subr.bf16.mxu0 0
      %1586 = vmatpush1.bf16.msra.mxu0 0
      %1587 = vmatprep.subr.bf16.mxu0 0
      %1588 = vmatpush1.bf16.msra.mxu0 0
      %1589 = vmatprep.subr.bf16.mxu0 0
      %1590 = vmatpush1.bf16.msra.mxu0 0
      %1591 = vmatprep.mubr.bf16.mxu0 0
      %1592 = vmatmul.mubr.bf16.gmra.mrb[0].mxu0 %v1476
      %v1593 = vpop.f32.mrb[0].mxu0
      %v1594 = vadd.f32 %v1126, %v1593
      %v1595 = vpop.f32.mrb[0].mxu0
      %v1596 = vpop.f32.mrb[0].mxu0
      %v1597 = vadd.f32 %v1129, %v1596
      %v1598 = vpop.f32.mrb[0].mxu0
      %1599 = vmatprep.mubr.bf16.mxu0 0
      %1600 = vmatmul.mubr.bf16.gmra.mrb[0].mxu0 %v1479
      %v1601 = vpop.f32.mrb[0].mxu0
      %v1602 = vadd.f32 %v1134, %v1601
      %v1603 = vpop.f32.mrb[0].mxu0
      %v1604 = vpop.f32.mrb[0].mxu0
      %v1605 = vadd.f32 %v1137, %v1604
      %v1606 = vpop.f32.mrb[0].mxu0
      %1607 = vmatprep.mubr.bf16.mxu0 0
      %1608 = vmatmul.mubr.bf16.gmra.mrb[0].mxu0 %v1482
      %v1609 = vpop.f32.mrb[0].mxu0
      %v1610 = vadd.f32 %v1142, %v1609
      %v1611 = vpop.f32.mrb[0].mxu0
      %v1612 = vpop.f32.mrb[0].mxu0
      %v1613 = vadd.f32 %v1145, %v1612
      %v1614 = vpop.f32.mrb[0].mxu0
      %1615 = vmatprep.mubr.bf16.mxu0 0
      %1616 = vmatmul.mubr.bf16.gmra.mrb[0].mxu0 %v1485
      %v1617 = vpop.f32.mrb[0].mxu0
      %v1618 = vadd.f32 %v1150, %v1617
      %v1619 = vpop.f32.mrb[0].mxu0
      %v1620 = vpop.f32.mrb[0].mxu0
      %v1621 = vadd.f32 %v1153, %v1620
      %v1622 = vpop.f32.mrb[0].mxu0
      %1623 = vmatprep.mubr.bf16.mxu0 0
      %1624 = vmatmul.mubr.bf16.gmra.mrb[0].mxu0 %v1488
      %v1625 = vpop.f32.mrb[0].mxu0
      %v1626 = vadd.f32 %v1158, %v1625
      %v1627 = vpop.f32.mrb[0].mxu0
      %v1628 = vpop.f32.mrb[0].mxu0
      %v1629 = vadd.f32 %v1161, %v1628
      %v1630 = vpop.f32.mrb[0].mxu0
      %1631 = vmatprep.mubr.bf16.mxu0 0
      %1632 = vmatmul.mubr.bf16.gmra.mrb[0].mxu0 %v1491
      %v1633 = vpop.f32.mrb[0].mxu0
      %v1634 = vadd.f32 %v1166, %v1633
      %v1635 = vpop.f32.mrb[0].mxu0
      %v1636 = vpop.f32.mrb[0].mxu0
      %v1637 = vadd.f32 %v1169, %v1636
      %v1638 = vpop.f32.mrb[0].mxu0
      %1639 = vmatprep.mubr.bf16.mxu0 0
      %1640 = vmatmul.mubr.bf16.gmra.mrb[0].mxu0 %v1494
      %v1641 = vpop.f32.mrb[0].mxu0
      %v1642 = vadd.f32 %v1174, %v1641
      %v1643 = vpop.f32.mrb[0].mxu0
      %v1644 = vpop.f32.mrb[0].mxu0
      %v1645 = vadd.f32 %v1177, %v1644
      %v1646 = vpop.f32.mrb[0].mxu0
      %1647 = vmatprep.mubr.bf16.mxu0 0
      %1648 = vmatmul.mubr.bf16.gmra.mrb[0].mxu0 %v1497
      %v1649 = vpop.f32.mrb[0].mxu0
      %v1650 = vadd.f32 %v1182, %v1649
      %v1651 = vpop.f32.mrb[0].mxu0
      %v1652 = vpop.f32.mrb[0].mxu0
      %v1653 = vadd.f32 %v1185, %v1652
      %v1654 = vpop.f32.mrb[0].mxu0
      %1655 = vmatprep.mubr.bf16.mxu0 0
      %1656 = vmatmul.mubr.bf16.gmra.mrb[0].mxu0 %v1500
      %v1657 = vpop.f32.mrb[0].mxu0
      %v1658 = vadd.f32 %v1190, %v1657
      %v1659 = vpop.f32.mrb[0].mxu0
      %v1660 = vpop.f32.mrb[0].mxu0
      %v1661 = vadd.f32 %v1193, %v1660
      %v1662 = vpop.f32.mrb[0].mxu0
      %1663 = vmatprep.mubr.bf16.mxu0 0
      %1664 = vmatmul.mubr.bf16.gmra.mrb[0].mxu0 %v1503
      %v1665 = vpop.f32.mrb[0].mxu0
      %v1666 = vadd.f32 %v1198, %v1665
      %v1667 = vpop.f32.mrb[0].mxu0
      %v1668 = vpop.f32.mrb[0].mxu0
      %v1669 = vadd.f32 %v1201, %v1668
      %v1670 = vpop.f32.mrb[0].mxu0
      %1671 = vmatprep.mubr.bf16.mxu0 0
      %1672 = vmatmul.mubr.bf16.gmra.mrb[0].mxu0 %v1506
      %v1673 = vpop.f32.mrb[0].mxu0
      %v1674 = vadd.f32 %v1206, %v1673
      %v1675 = vpop.f32.mrb[0].mxu0
      %v1676 = vpop.f32.mrb[0].mxu0
      %v1677 = vadd.f32 %v1209, %v1676
      %v1678 = vpop.f32.mrb[0].mxu0
      %1679 = vmatprep.mubr.bf16.mxu0 0
      %1680 = vmatmul.mubr.bf16.gmra.mrb[0].mxu0 %v1509
      %v1681 = vpop.f32.mrb[0].mxu0
      %v1682 = vadd.f32 %v1214, %v1681
      %v1683 = vpop.f32.mrb[0].mxu0
      %v1684 = vpop.f32.mrb[0].mxu0
      %v1685 = vadd.f32 %v1217, %v1684
      %v1686 = vpop.f32.mrb[0].mxu0
      %1687 = vmatprep.mubr.bf16.mxu0 0
      %1688 = vmatmul.mubr.bf16.gmra.mrb[0].mxu0 %v1512
      %v1689 = vpop.f32.mrb[0].mxu0
      %v1690 = vadd.f32 %v1222, %v1689
      %v1691 = vpop.f32.mrb[0].mxu0
      %v1692 = vpop.f32.mrb[0].mxu0
      %v1693 = vadd.f32 %v1225, %v1692
      %v1694 = vpop.f32.mrb[0].mxu0
      %1695 = vmatprep.mubr.bf16.mxu0 0
      %1696 = vmatmul.mubr.bf16.gmra.mrb[0].mxu0 %v1515
      %v1697 = vpop.f32.mrb[0].mxu0
      %v1698 = vadd.f32 %v1230, %v1697
      %v1699 = vpop.f32.mrb[0].mxu0
      %v1700 = vpop.f32.mrb[0].mxu0
      %v1701 = vadd.f32 %v1233, %v1700
      %v1702 = vpop.f32.mrb[0].mxu0
      %1703 = vmatprep.mubr.bf16.mxu0 0
      %1704 = vmatmul.mubr.bf16.gmra.mrb[0].mxu0 %v1518
      %v1705 = vpop.f32.mrb[0].mxu0
      %v1706 = vadd.f32 %v1238, %v1705
      %v1707 = vpop.f32.mrb[0].mxu0
      %v1708 = vpop.f32.mrb[0].mxu0
      %v1709 = vadd.f32 %v1241, %v1708
      %v1710 = vpop.f32.mrb[0].mxu0
      %1711 = vmatprep.mubr.bf16.mxu0 0
      %1712 = vmatmul.mubr.bf16.gmra.mrb[0].mxu0 %v1521
      %v1713 = vpop.f32.mrb[0].mxu0
      %v1714 = vadd.f32 %v1246, %v1713
      %v1715 = vpop.f32.mrb[0].mxu0
      %v1716 = vpop.f32.mrb[0].mxu0
      %v1717 = vadd.f32 %v1249, %v1716
      %v1718 = vpop.f32.mrb[0].mxu0
      %1719 = vmatprep.mubr.bf16.mxu0 0
      %1720 = vmatmul.mubr.bf16.gmra.mrb[0].mxu0 %v1524
      %v1721 = vpop.f32.mrb[0].mxu0
      %v1722 = vadd.f32 %v1254, %v1721
      %v1723 = vpop.f32.mrb[0].mxu0
      %v1724 = vpop.f32.mrb[0].mxu0
      %v1725 = vadd.f32 %v1257, %v1724
      %v1726 = vpop.f32.mrb[0].mxu0
      %1727 = vmatprep.mubr.bf16.mxu0 0
      %1728 = vmatmul.mubr.bf16.gmra.mrb[0].mxu0 %v1527
      %v1729 = vpop.f32.mrb[0].mxu0
      %v1730 = vadd.f32 %v1262, %v1729
      %v1731 = vpop.f32.mrb[0].mxu0
      %v1732 = vpop.f32.mrb[0].mxu0
      %v1733 = vadd.f32 %v1265, %v1732
      %v1734 = vpop.f32.mrb[0].mxu0
      %1735 = vmatprep.mubr.bf16.mxu0 0
      %1736 = vmatmul.mubr.bf16.gmra.mrb[0].mxu0 %v1530
      %v1737 = vpop.f32.mrb[0].mxu0
      %v1738 = vadd.f32 %v1270, %v1737
      %v1739 = vpop.f32.mrb[0].mxu0
      %v1740 = vpop.f32.mrb[0].mxu0
      %v1741 = vadd.f32 %v1273, %v1740
      %v1742 = vpop.f32.mrb[0].mxu0
      %1743 = vmatprep.mubr.bf16.mxu0 0
      %1744 = vmatmul.mubr.bf16.gmra.mrb[0].mxu0 %v1533
      %v1745 = vpop.f32.mrb[0].mxu0
      %v1746 = vadd.f32 %v1278, %v1745
      %v1747 = vpop.f32.mrb[0].mxu0
      %v1748 = vpop.f32.mrb[0].mxu0
      %v1749 = vadd.f32 %v1281, %v1748
      %v1750 = vpop.f32.mrb[0].mxu0
      %1751 = vmatprep.mubr.bf16.mxu0 0
      %1752 = vmatmul.mubr.bf16.gmra.mrb[0].mxu0 %v1536
      %v1753 = vpop.f32.mrb[0].mxu0
      %v1754 = vadd.f32 %v1286, %v1753
      %v1755 = vpop.f32.mrb[0].mxu0
      %v1756 = vpop.f32.mrb[0].mxu0
      %v1757 = vadd.f32 %v1289, %v1756
      %v1758 = vpop.f32.mrb[0].mxu0
      %1759 = vmatprep.mubr.bf16.mxu0 0
      %1760 = vmatmul.mubr.bf16.gmra.mrb[0].mxu0 %v1539
      %v1761 = vpop.f32.mrb[0].mxu0
      %v1762 = vadd.f32 %v1294, %v1761
      %v1763 = vpop.f32.mrb[0].mxu0
      %v1764 = vpop.f32.mrb[0].mxu0
      %v1765 = vadd.f32 %v1297, %v1764
      %v1766 = vpop.f32.mrb[0].mxu0
      %1767 = vmatprep.mubr.bf16.mxu0 0
      %1768 = vmatmul.mubr.bf16.gmra.mrb[0].mxu0 %v1542
      %v1769 = vpop.f32.mrb[0].mxu0
      %v1770 = vadd.f32 %v1302, %v1769
      %v1771 = vpop.f32.mrb[0].mxu0
      %v1772 = vpop.f32.mrb[0].mxu0
      %v1773 = vadd.f32 %v1305, %v1772
      %v1774 = vpop.f32.mrb[0].mxu0
      %1775 = vmatprep.mubr.bf16.mxu0 0
      %1776 = vmatmul.mubr.bf16.gmra.mrb[0].mxu0 %v1545
      %v1777 = vpop.f32.mrb[0].mxu0
      %v1778 = vadd.f32 %v1310, %v1777
      %v1779 = vpop.f32.mrb[0].mxu0
      %v1780 = vpop.f32.mrb[0].mxu0
      %v1781 = vadd.f32 %v1313, %v1780
      %v1782 = vpop.f32.mrb[0].mxu0
      %1783 = vmatprep.mubr.bf16.mxu0 0
      %1784 = vmatmul.mubr.bf16.gmra.mrb[0].mxu0 %v1548
      %v1785 = vpop.f32.mrb[0].mxu0
      %v1786 = vadd.f32 %v1318, %v1785
      %v1787 = vpop.f32.mrb[0].mxu0
      %v1788 = vpop.f32.mrb[0].mxu0
      %v1789 = vadd.f32 %v1321, %v1788
      %v1790 = vpop.f32.mrb[0].mxu0
      %1791 = vmatprep.mubr.bf16.mxu0 0
      %1792 = vmatmul.mubr.bf16.gmra.mrb[0].mxu0 %v1551
      %v1793 = vpop.f32.mrb[0].mxu0
      %v1794 = vadd.f32 %v1326, %v1793
      %v1795 = vpop.f32.mrb[0].mxu0
      %v1796 = vpop.f32.mrb[0].mxu0
      %v1797 = vadd.f32 %v1329, %v1796
      %v1798 = vpop.f32.mrb[0].mxu0
      %1799 = vmatprep.mubr.bf16.mxu0 0
      %1800 = vmatmul.mubr.bf16.gmra.mrb[0].mxu0 %v1554
      %v1801 = vpop.f32.mrb[0].mxu0
      %v1802 = vadd.f32 %v1334, %v1801
      %v1803 = vpop.f32.mrb[0].mxu0
      %v1804 = vpop.f32.mrb[0].mxu0
      %v1805 = vadd.f32 %v1337, %v1804
      %v1806 = vpop.f32.mrb[0].mxu0
      %1807 = vdwg.mxu0
      %vm1826 = vcmask 1042432
      %vm1827 = vcmask 1046532
      %vm1828 = vmor %vm1826, %vm1827
      %v1829 = vrot.slane %v226, 5
      %v1830 = vrot.slane %v1829, 4
      %v1831 = vrot.slane %v227, 5
      %v1832 = vsel %vm1828, %v1830, %v1831
      %v1833 = vrot.slane %v1831, 4
      %v1834 = vrot.slane %v228, 5
      %v1835 = vsel %vm1828, %v1833, %v1834
      %v1836 = vrot.slane %v1834, 4
      %v1837 = vrot.slane %v229, 5
      %v1838 = vsel %vm1828, %v1836, %v1837
      %v1839 = vrot.slane %v230, 5
      %v1840 = vrot.slane %v1839, 4
      %v1841 = vrot.slane %v231, 5
      %v1842 = vsel %vm1828, %v1840, %v1841
      %v1843 = vrot.slane %v1841, 4
      %v1844 = vrot.slane %v232, 5
      %v1845 = vsel %vm1828, %v1843, %v1844
      %v1846 = vrot.slane %v1844, 4
      %v1847 = vrot.slane %v233, 5
      %v1848 = vsel %vm1828, %v1846, %v1847
      %v1849 = vrot.slane %v234, 5
      %v1850 = vrot.slane %v1849, 4
      %v1851 = vrot.slane %v235, 5
      %v1852 = vsel %vm1828, %v1850, %v1851
      %v1853 = vrot.slane %v1851, 4
      %v1854 = vrot.slane %v236, 5
      %v1855 = vsel %vm1828, %v1853, %v1854
      %v1856 = vrot.slane %v1854, 4
      %v1857 = vrot.slane %v237, 5
      %v1858 = vsel %vm1828, %v1856, %v1857
      %v1859 = vrot.slane %v238, 5
      %v1860 = vrot.slane %v1859, 4
      %v1861 = vrot.slane %v239, 5
      %v1862 = vsel %vm1828, %v1860, %v1861
      %v1863 = vrot.slane %v1861, 4
      %v1864 = vrot.slane %v240, 5
      %v1865 = vsel %vm1828, %v1863, %v1864
      %v1866 = vrot.slane %v1864, 4
      %v1867 = vrot.slane %v241, 5
      %v1868 = vsel %vm1828, %v1866, %v1867
      %v1869 = vrot.slane %v242, 5
      %v1870 = vrot.slane %v1869, 4
      %v1871 = vrot.slane %v243, 5
      %v1872 = vsel %vm1828, %v1870, %v1871
      %v1873 = vrot.slane %v1871, 4
      %v1874 = vrot.slane %v244, 5
      %v1875 = vsel %vm1828, %v1873, %v1874
      %v1876 = vrot.slane %v1874, 4
      %v1877 = vrot.slane %v245, 5
      %v1878 = vsel %vm1828, %v1876, %v1877
      %v1879 = vrot.slane %v246, 5
      %v1880 = vrot.slane %v1879, 4
      %v1881 = vrot.slane %v247, 5
      %v1882 = vsel %vm1828, %v1880, %v1881
      %v1883 = vrot.slane %v1881, 4
      %v1884 = vrot.slane %v248, 5
      %v1885 = vsel %vm1828, %v1883, %v1884
      %v1886 = vrot.slane %v1884, 4
      %v1887 = vrot.slane %v249, 5
      %v1888 = vsel %vm1828, %v1886, %v1887
      %v1889 = vrot.slane %v250, 5
      %v1890 = vrot.slane %v1889, 4
      %v1891 = vrot.slane %v251, 5
      %v1892 = vsel %vm1828, %v1890, %v1891
      %v1893 = vrot.slane %v1891, 4
      %v1894 = vrot.slane %v252, 5
      %v1895 = vsel %vm1828, %v1893, %v1894
      %v1896 = vrot.slane %v1894, 4
      %v1897 = vrot.slane %v253, 5
      %v1898 = vsel %vm1828, %v1896, %v1897
      %v1899 = vrot.slane %v254, 5
      %v1900 = vrot.slane %v1899, 4
      %v1901 = vrot.slane %v255, 5
      %v1902 = vsel %vm1828, %v1900, %v1901
      %v1903 = vrot.slane %v1901, 4
      %v1904 = vrot.slane %v256, 5
      %v1905 = vsel %vm1828, %v1903, %v1904
      %v1906 = vrot.slane %v1904, 4
      %v1907 = vrot.slane %v257, 5
      %v1908 = vsel %vm1828, %v1906, %v1907
      %v1909 = vrot.slane %v258, 5
      %v1910 = vrot.slane %v1909, 4
      %v1911 = vrot.slane %v259, 5
      %v1912 = vsel %vm1828, %v1910, %v1911
      %v1913 = vrot.slane %v1911, 4
      %v1914 = vrot.slane %v260, 5
      %v1915 = vsel %vm1828, %v1913, %v1914
      %v1916 = vrot.slane %v1914, 4
      %v1917 = vrot.slane %v261, 5
      %v1918 = vsel %vm1828, %v1916, %v1917
      %v1919 = vrot.slane %v262, 5
      %v1920 = vrot.slane %v1919, 4
      %v1921 = vrot.slane %v263, 5
      %v1922 = vsel %vm1828, %v1920, %v1921
      %v1923 = vrot.slane %v1921, 4
      %v1924 = vrot.slane %v264, 5
      %v1925 = vsel %vm1828, %v1923, %v1924
      %v1926 = vrot.slane %v1924, 4
      %v1927 = vrot.slane %v265, 5
      %v1928 = vsel %vm1828, %v1926, %v1927
      %v1929 = vrot.slane %v266, 5
      %v1930 = vrot.slane %v1929, 4
      %v1931 = vrot.slane %v267, 5
      %v1932 = vsel %vm1828, %v1930, %v1931
      %v1933 = vrot.slane %v1931, 4
      %v1934 = vrot.slane %v268, 5
      %v1935 = vsel %vm1828, %v1933, %v1934
      %v1936 = vrot.slane %v1934, 4
      %v1937 = vrot.slane %v269, 5
      %v1938 = vsel %vm1828, %v1936, %v1937
      %v1939 = vrot.slane %v270, 5
      %v1940 = vrot.slane %v1939, 4
      %v1941 = vrot.slane %v271, 5
      %v1942 = vsel %vm1828, %v1940, %v1941
      %v1943 = vrot.slane %v1941, 4
      %v1944 = vrot.slane %v272, 5
      %v1945 = vsel %vm1828, %v1943, %v1944
      %v1946 = vrot.slane %v1944, 4
      %v1947 = vrot.slane %v273, 5
      %v1948 = vsel %vm1828, %v1946, %v1947
      %v1949 = vrot.slane %v274, 5
      %v1950 = vrot.slane %v1949, 4
      %v1951 = vrot.slane %v275, 5
      %v1952 = vsel %vm1828, %v1950, %v1951
      %v1953 = vrot.slane %v1951, 4
      %v1954 = vrot.slane %v276, 5
      %v1955 = vsel %vm1828, %v1953, %v1954
      %v1956 = vrot.slane %v1954, 4
      %v1957 = vrot.slane %v277, 5
      %v1958 = vsel %vm1828, %v1956, %v1957
      %v1959 = vrot.slane %v278, 5
      %v1960 = vrot.slane %v1959, 4
      %v1961 = vrot.slane %v279, 5
      %v1962 = vsel %vm1828, %v1960, %v1961
      %v1963 = vrot.slane %v1961, 4
      %v1964 = vrot.slane %v280, 5
      %v1965 = vsel %vm1828, %v1963, %v1964
      %v1966 = vrot.slane %v1964, 4
      %v1967 = vrot.slane %v281, 5
      %v1968 = vsel %vm1828, %v1966, %v1967
      %v1969 = vrot.slane %v282, 5
      %v1970 = vrot.slane %v1969, 4
      %v1971 = vrot.slane %v283, 5
      %v1972 = vsel %vm1828, %v1970, %v1971
      %v1973 = vrot.slane %v1971, 4
      %v1974 = vrot.slane %v284, 5
      %v1975 = vsel %vm1828, %v1973, %v1974
      %v1976 = vrot.slane %v1974, 4
      %v1977 = vrot.slane %v285, 5
      %v1978 = vsel %vm1828, %v1976, %v1977
      %v1979 = vrot.slane %v286, 5
      %v1980 = vrot.slane %v1979, 4
      %v1981 = vrot.slane %v287, 5
      %v1982 = vsel %vm1828, %v1980, %v1981
      %v1983 = vrot.slane %v1981, 4
      %v1984 = vrot.slane %v288, 5
      %v1985 = vsel %vm1828, %v1983, %v1984
      %v1986 = vrot.slane %v1984, 4
      %v1987 = vrot.slane %v289, 5
      %v1988 = vsel %vm1828, %v1986, %v1987
      %v1989 = vrot.slane %v290, 5
      %v1990 = vrot.slane %v1989, 4
      %v1991 = vrot.slane %v291, 5
      %v1992 = vsel %vm1828, %v1990, %v1991
      %v1993 = vrot.slane %v1991, 4
      %v1994 = vrot.slane %v292, 5
      %v1995 = vsel %vm1828, %v1993, %v1994
      %v1996 = vrot.slane %v1994, 4
      %v1997 = vrot.slane %v293, 5
      %v1998 = vsel %vm1828, %v1996, %v1997
      %v1999 = vrot.slane %v294, 5
      %v2000 = vrot.slane %v1999, 4
      %v2001 = vrot.slane %v295, 5
      %v2002 = vsel %vm1828, %v2000, %v2001
      %v2003 = vrot.slane %v2001, 4
      %v2004 = vrot.slane %v296, 5
      %v2005 = vsel %vm1828, %v2003, %v2004
      %v2006 = vrot.slane %v2004, 4
      %v2007 = vrot.slane %v297, 5
      %v2008 = vsel %vm1828, %v2006, %v2007
      %s2009 = scalar_lea.vmem %s1, 8
      %v2010 = vld [vmem:[%s2009] sm:$0xf]
      %v2011 = vunpack.c.l.b16 %v1832
      %v2012 = vunpack.c.l.b16 %v1835
      %v2013 = vunpack.c.l.b16 %v1838
      %v2014 = vunpack.c.l.b16 %v1842
      %v2015 = vunpack.c.l.b16 %v1845
      %v2016 = vunpack.c.l.b16 %v1848
      %v2017 = vunpack.c.l.b16 %v1852
      %v2018 = vunpack.c.l.b16 %v1855
      %v2019 = vunpack.c.l.b16 %v1858
      %v2020 = vunpack.c.l.b16 %v1862
      %v2021 = vunpack.c.l.b16 %v1865
      %v2022 = vunpack.c.l.b16 %v1868
      %v2023 = vunpack.c.l.b16 %v1872
      %v2024 = vunpack.c.l.b16 %v1875
      %v2025 = vunpack.c.l.b16 %v1878
      %v2026 = vunpack.c.l.b16 %v1882
      %v2027 = vunpack.c.l.b16 %v1885
      %v2028 = vunpack.c.l.b16 %v1888
      %v2029 = vunpack.c.l.b16 %v1892
      %v2030 = vunpack.c.l.b16 %v1895
      %v2031 = vunpack.c.l.b16 %v1898
      %v2032 = vunpack.c.l.b16 %v1902
      %v2033 = vunpack.c.l.b16 %v1905
      %v2034 = vunpack.c.l.b16 %v1908
      %v2035 = vunpack.c.l.b16 %v1912
      %v2036 = vunpack.c.l.b16 %v1915
      %v2037 = vunpack.c.l.b16 %v1918
      %v2038 = vunpack.c.l.b16 %v1922
      %v2039 = vunpack.c.l.b16 %v1925
      %v2040 = vunpack.c.l.b16 %v1928
      %v2041 = vunpack.c.l.b16 %v1932
      %v2042 = vunpack.c.l.b16 %v1935
      %v2043 = vunpack.c.l.b16 %v1938
      %v2044 = vunpack.c.l.b16 %v1942
      %v2045 = vunpack.c.l.b16 %v1945
      %v2046 = vunpack.c.l.b16 %v1948
      %v2047 = vunpack.c.l.b16 %v1952
      %v2048 = vunpack.c.l.b16 %v1955
      %v2049 = vunpack.c.l.b16 %v1958
      %v2050 = vunpack.c.l.b16 %v1962
      %v2051 = vunpack.c.l.b16 %v1965
      %v2052 = vunpack.c.l.b16 %v1968
      %v2053 = vunpack.c.l.b16 %v1972
      %v2054 = vunpack.c.l.b16 %v1975
      %v2055 = vunpack.c.l.b16 %v1978
      %v2056 = vunpack.c.l.b16 %v1982
      %v2057 = vunpack.c.l.b16 %v1985
      %v2058 = vunpack.c.l.b16 %v1988
      %v2059 = vunpack.c.l.b16 %v1992
      %v2060 = vunpack.c.l.b16 %v1995
      %v2061 = vunpack.c.l.b16 %v1998
      %v2062 = vunpack.c.l.b16 %v2002
      %v2063 = vunpack.c.l.b16 %v2005
      %v2064 = vunpack.c.l.b16 %v2008
      %v2065 = vpack.c.b16 %v2012, %v2011
      %v2066 = vpack.c.b16 %v2014, %v2013
      %v2067 = vpack.c.b16 %v2016, %v2015
      %v2068 = vpack.c.b16 %v2018, %v2017
      %v2069 = vpack.c.b16 %v2020, %v2019
      %v2070 = vpack.c.b16 %v2022, %v2021
      %v2071 = vpack.c.b16 %v2024, %v2023
      %v2072 = vpack.c.b16 %v2026, %v2025
      %v2073 = vpack.c.b16 %v2028, %v2027
      %v2074 = vpack.c.b16 %v2030, %v2029
      %v2075 = vpack.c.b16 %v2032, %v2031
      %v2076 = vpack.c.b16 %v2034, %v2033
      %v2077 = vpack.c.b16 %v2036, %v2035
      %v2078 = vpack.c.b16 %v2038, %v2037
      %v2079 = vpack.c.b16 %v2040, %v2039
      %v2080 = vpack.c.b16 %v2042, %v2041
      %v2081 = vpack.c.b16 %v2044, %v2043
      %v2082 = vpack.c.b16 %v2046, %v2045
      %v2083 = vpack.c.b16 %v2048, %v2047
      %v2084 = vpack.c.b16 %v2050, %v2049
      %v2085 = vpack.c.b16 %v2052, %v2051
      %v2086 = vpack.c.b16 %v2054, %v2053
      %v2087 = vpack.c.b16 %v2056, %v2055
      %v2088 = vpack.c.b16 %v2058, %v2057
      %v2089 = vpack.c.b16 %v2060, %v2059
      %v2090 = vpack.c.b16 %v2062, %v2061
      %v2091 = vpack.c.b16 %v2064, %v2063
      %v2093 = vsel %vm1005, %v2065, 0
      %v2096 = vsel %vm1005, %v2066, 0
      %v2099 = vsel %vm1005, %v2067, 0
      %v2102 = vsel %vm1005, %v2068, 0
      %v2105 = vsel %vm1005, %v2069, 0
      %v2108 = vsel %vm1005, %v2070, 0
      %v2111 = vsel %vm1005, %v2071, 0
      %v2114 = vsel %vm1005, %v2072, 0
      %v2117 = vsel %vm1005, %v2073, 0
      %v2120 = vsel %vm1005, %v2074, 0
      %v2123 = vsel %vm1005, %v2075, 0
      %v2126 = vsel %vm1005, %v2076, 0
      %v2129 = vsel %vm1005, %v2077, 0
      %v2132 = vsel %vm1005, %v2078, 0
      %v2135 = vsel %vm1005, %v2079, 0
      %v2138 = vsel %vm1005, %v2080, 0
      %v2141 = vsel %vm1005, %v2081, 0
      %v2144 = vsel %vm1005, %v2082, 0
      %v2147 = vsel %vm1005, %v2083, 0
      %v2150 = vsel %vm1005, %v2084, 0
      %v2153 = vsel %vm1005, %v2085, 0
      %v2156 = vsel %vm1005, %v2086, 0
      %v2159 = vsel %vm1005, %v2087, 0
      %v2162 = vsel %vm1005, %v2088, 0
      %v2165 = vsel %vm1005, %v2089, 0
      %v2168 = vsel %vm1005, %v2090, 0
      %v2171 = vsel %vm1005, %v2091, 0
      %v2174 = vsel %vm1087, %v2010, 0
      %2176 = vmatprep.subr.bf16.mxu0 0
      %2177 = vmatpush1.bf16.msra.mxu0 %v2174
      %2178 = vmatprep.subr.bf16.mxu0 0
      %2179 = vmatpush1.bf16.msra.mxu0 0
      %2180 = vmatprep.subr.bf16.mxu0 0
      %2181 = vmatpush1.bf16.msra.mxu0 0
      %2182 = vmatprep.subr.bf16.mxu0 0
      %2183 = vmatpush1.bf16.msra.mxu0 0
      %2184 = vmatprep.subr.bf16.mxu0 0
      %2185 = vmatpush1.bf16.msra.mxu0 0
      %2186 = vmatprep.subr.bf16.mxu0 0
      %2187 = vmatpush1.bf16.msra.mxu0 0
      %2188 = vmatprep.subr.bf16.mxu0 0
      %2189 = vmatpush1.bf16.msra.mxu0 0
      %2190 = vmatprep.subr.bf16.mxu0 0
      %2191 = vmatpush1.bf16.msra.mxu0 0
      %2192 = vmatprep.subr.bf16.mxu0 0
      %2193 = vmatpush1.bf16.msra.mxu0 0
      %2194 = vmatprep.subr.bf16.mxu0 0
      %2195 = vmatpush1.bf16.msra.mxu0 0
      %2196 = vmatprep.subr.bf16.mxu0 0
      %2197 = vmatpush1.bf16.msra.mxu0 0
      %2198 = vmatprep.subr.bf16.mxu0 0
      %2199 = vmatpush1.bf16.msra.mxu0 0
      %2200 = vmatprep.subr.bf16.mxu0 0
      %2201 = vmatpush1.bf16.msra.mxu0 0
      %2202 = vmatprep.subr.bf16.mxu0 0
      %2203 = vmatpush1.bf16.msra.mxu0 0
      %2204 = vmatprep.subr.bf16.mxu0 0
      %2205 = vmatpush1.bf16.msra.mxu0 0
      %2206 = vmatprep.subr.bf16.mxu0 0
      %2207 = vmatpush1.bf16.msra.mxu0 0
      %2208 = vmatprep.mubr.bf16.mxu0 0
      %2209 = vmatmul.mubr.bf16.gmra.mrb[0].mxu0 %v2093
      %v2210 = vpop.f32.mrb[0].mxu0
      %v2211 = vadd.f32 0.0, %v2210
      %v2212 = vpop.f32.mrb[0].mxu0
      %v2213 = vpop.f32.mrb[0].mxu0
      %v2214 = vadd.f32 0.0, %v2213
      %v2215 = vpop.f32.mrb[0].mxu0
      %2216 = vmatprep.mubr.bf16.mxu0 0
      %2217 = vmatmul.mubr.bf16.gmra.mrb[0].mxu0 %v2096
      %v2218 = vpop.f32.mrb[0].mxu0
      %v2219 = vadd.f32 0.0, %v2218
      %v2220 = vpop.f32.mrb[0].mxu0
      %v2221 = vpop.f32.mrb[0].mxu0
      %v2222 = vadd.f32 0.0, %v2221
      %v2223 = vpop.f32.mrb[0].mxu0
      %2224 = vmatprep.mubr.bf16.mxu0 0
      %2225 = vmatmul.mubr.bf16.gmra.mrb[0].mxu0 %v2099
      %v2226 = vpop.f32.mrb[0].mxu0
      %v2227 = vadd.f32 0.0, %v2226
      %v2228 = vpop.f32.mrb[0].mxu0
      %v2229 = vpop.f32.mrb[0].mxu0
      %v2230 = vadd.f32 0.0, %v2229
      %v2231 = vpop.f32.mrb[0].mxu0
      %2232 = vmatprep.mubr.bf16.mxu0 0
      %2233 = vmatmul.mubr.bf16.gmra.mrb[0].mxu0 %v2102
      %v2234 = vpop.f32.mrb[0].mxu0
      %v2235 = vadd.f32 0.0, %v2234
      %v2236 = vpop.f32.mrb[0].mxu0
      %v2237 = vpop.f32.mrb[0].mxu0
      %v2238 = vadd.f32 0.0, %v2237
      %v2239 = vpop.f32.mrb[0].mxu0
      %2240 = vmatprep.mubr.bf16.mxu0 0
      %2241 = vmatmul.mubr.bf16.gmra.mrb[0].mxu0 %v2105
      %v2242 = vpop.f32.mrb[0].mxu0
      %v2243 = vadd.f32 0.0, %v2242
      %v2244 = vpop.f32.mrb[0].mxu0
      %v2245 = vpop.f32.mrb[0].mxu0
      %v2246 = vadd.f32 0.0, %v2245
      %v2247 = vpop.f32.mrb[0].mxu0
      %2248 = vmatprep.mubr.bf16.mxu0 0
      %2249 = vmatmul.mubr.bf16.gmra.mrb[0].mxu0 %v2108
      %v2250 = vpop.f32.mrb[0].mxu0
      %v2251 = vadd.f32 0.0, %v2250
      %v2252 = vpop.f32.mrb[0].mxu0
      %v2253 = vpop.f32.mrb[0].mxu0
      %v2254 = vadd.f32 0.0, %v2253
      %v2255 = vpop.f32.mrb[0].mxu0
      %2256 = vmatprep.mubr.bf16.mxu0 0
      %2257 = vmatmul.mubr.bf16.gmra.mrb[0].mxu0 %v2111
      %v2258 = vpop.f32.mrb[0].mxu0
      %v2259 = vadd.f32 0.0, %v2258
      %v2260 = vpop.f32.mrb[0].mxu0
      %v2261 = vpop.f32.mrb[0].mxu0
      %v2262 = vadd.f32 0.0, %v2261
      %v2263 = vpop.f32.mrb[0].mxu0
      %2264 = vmatprep.mubr.bf16.mxu0 0
      %2265 = vmatmul.mubr.bf16.gmra.mrb[0].mxu0 %v2114
      %v2266 = vpop.f32.mrb[0].mxu0
      %v2267 = vadd.f32 0.0, %v2266
      %v2268 = vpop.f32.mrb[0].mxu0
      %v2269 = vpop.f32.mrb[0].mxu0
      %v2270 = vadd.f32 0.0, %v2269
      %v2271 = vpop.f32.mrb[0].mxu0
      %2272 = vmatprep.mubr.bf16.mxu0 0
      %2273 = vmatmul.mubr.bf16.gmra.mrb[0].mxu0 %v2117
      %v2274 = vpop.f32.mrb[0].mxu0
      %v2275 = vadd.f32 0.0, %v2274
      %v2276 = vpop.f32.mrb[0].mxu0
      %v2277 = vpop.f32.mrb[0].mxu0
      %v2278 = vadd.f32 0.0, %v2277
      %v2279 = vpop.f32.mrb[0].mxu0
      %2280 = vmatprep.mubr.bf16.mxu0 0
      %2281 = vmatmul.mubr.bf16.gmra.mrb[0].mxu0 %v2120
      %v2282 = vpop.f32.mrb[0].mxu0
      %v2283 = vadd.f32 0.0, %v2282
      %v2284 = vpop.f32.mrb[0].mxu0
      %v2285 = vpop.f32.mrb[0].mxu0
      %v2286 = vadd.f32 0.0, %v2285
      %v2287 = vpop.f32.mrb[0].mxu0
      %2288 = vmatprep.mubr.bf16.mxu0 0
      %2289 = vmatmul.mubr.bf16.gmra.mrb[0].mxu0 %v2123
      %v2290 = vpop.f32.mrb[0].mxu0
      %v2291 = vadd.f32 0.0, %v2290
      %v2292 = vpop.f32.mrb[0].mxu0
      %v2293 = vpop.f32.mrb[0].mxu0
      %v2294 = vadd.f32 0.0, %v2293
      %v2295 = vpop.f32.mrb[0].mxu0
      %2296 = vmatprep.mubr.bf16.mxu0 0
      %2297 = vmatmul.mubr.bf16.gmra.mrb[0].mxu0 %v2126
      %v2298 = vpop.f32.mrb[0].mxu0
      %v2299 = vadd.f32 0.0, %v2298
      %v2300 = vpop.f32.mrb[0].mxu0
      %v2301 = vpop.f32.mrb[0].mxu0
      %v2302 = vadd.f32 0.0, %v2301
      %v2303 = vpop.f32.mrb[0].mxu0
      %2304 = vmatprep.mubr.bf16.mxu0 0
      %2305 = vmatmul.mubr.bf16.gmra.mrb[0].mxu0 %v2129
      %v2306 = vpop.f32.mrb[0].mxu0
      %v2307 = vadd.f32 0.0, %v2306
      %v2308 = vpop.f32.mrb[0].mxu0
      %v2309 = vpop.f32.mrb[0].mxu0
      %v2310 = vadd.f32 0.0, %v2309
      %v2311 = vpop.f32.mrb[0].mxu0
      %2312 = vmatprep.mubr.bf16.mxu0 0
      %2313 = vmatmul.mubr.bf16.gmra.mrb[0].mxu0 %v2132
      %v2314 = vpop.f32.mrb[0].mxu0
      %v2315 = vadd.f32 0.0, %v2314
      %v2316 = vpop.f32.mrb[0].mxu0
      %v2317 = vpop.f32.mrb[0].mxu0
      %v2318 = vadd.f32 0.0, %v2317
      %v2319 = vpop.f32.mrb[0].mxu0
      %2320 = vmatprep.mubr.bf16.mxu0 0
      %2321 = vmatmul.mubr.bf16.gmra.mrb[0].mxu0 %v2135
      %v2322 = vpop.f32.mrb[0].mxu0
      %v2323 = vadd.f32 0.0, %v2322
      %v2324 = vpop.f32.mrb[0].mxu0
      %v2325 = vpop.f32.mrb[0].mxu0
      %v2326 = vadd.f32 0.0, %v2325
      %v2327 = vpop.f32.mrb[0].mxu0
      %2328 = vmatprep.mubr.bf16.mxu0 0
      %2329 = vmatmul.mubr.bf16.gmra.mrb[0].mxu0 %v2138
      %v2330 = vpop.f32.mrb[0].mxu0
      %v2331 = vadd.f32 0.0, %v2330
      %v2332 = vpop.f32.mrb[0].mxu0
      %v2333 = vpop.f32.mrb[0].mxu0
      %v2334 = vadd.f32 0.0, %v2333
      %v2335 = vpop.f32.mrb[0].mxu0
      %2336 = vmatprep.mubr.bf16.mxu0 0
      %2337 = vmatmul.mubr.bf16.gmra.mrb[0].mxu0 %v2141
      %v2338 = vpop.f32.mrb[0].mxu0
      %v2339 = vadd.f32 0.0, %v2338
      %v2340 = vpop.f32.mrb[0].mxu0
      %v2341 = vpop.f32.mrb[0].mxu0
      %v2342 = vadd.f32 0.0, %v2341
      %v2343 = vpop.f32.mrb[0].mxu0
      %2344 = vmatprep.mubr.bf16.mxu0 0
      %2345 = vmatmul.mubr.bf16.gmra.mrb[0].mxu0 %v2144
      %v2346 = vpop.f32.mrb[0].mxu0
      %v2347 = vadd.f32 0.0, %v2346
      %v2348 = vpop.f32.mrb[0].mxu0
      %v2349 = vpop.f32.mrb[0].mxu0
      %v2350 = vadd.f32 0.0, %v2349
      %v2351 = vpop.f32.mrb[0].mxu0
      %2352 = vmatprep.mubr.bf16.mxu0 0
      %2353 = vmatmul.mubr.bf16.gmra.mrb[0].mxu0 %v2147
      %v2354 = vpop.f32.mrb[0].mxu0
      %v2355 = vadd.f32 0.0, %v2354
      %v2356 = vpop.f32.mrb[0].mxu0
      %v2357 = vpop.f32.mrb[0].mxu0
      %v2358 = vadd.f32 0.0, %v2357
      %v2359 = vpop.f32.mrb[0].mxu0
      %2360 = vmatprep.mubr.bf16.mxu0 0
      %2361 = vmatmul.mubr.bf16.gmra.mrb[0].mxu0 %v2150
      %v2362 = vpop.f32.mrb[0].mxu0
      %v2363 = vadd.f32 0.0, %v2362
      %v2364 = vpop.f32.mrb[0].mxu0
      %v2365 = vpop.f32.mrb[0].mxu0
      %v2366 = vadd.f32 0.0, %v2365
      %v2367 = vpop.f32.mrb[0].mxu0
      %2368 = vmatprep.mubr.bf16.mxu0 0
      %2369 = vmatmul.mubr.bf16.gmra.mrb[0].mxu0 %v2153
      %v2370 = vpop.f32.mrb[0].mxu0
      %v2371 = vadd.f32 0.0, %v2370
      %v2372 = vpop.f32.mrb[0].mxu0
      %v2373 = vpop.f32.mrb[0].mxu0
      %v2374 = vadd.f32 0.0, %v2373
      %v2375 = vpop.f32.mrb[0].mxu0
      %2376 = vmatprep.mubr.bf16.mxu0 0
      %2377 = vmatmul.mubr.bf16.gmra.mrb[0].mxu0 %v2156
      %v2378 = vpop.f32.mrb[0].mxu0
      %v2379 = vadd.f32 0.0, %v2378
      %v2380 = vpop.f32.mrb[0].mxu0
      %v2381 = vpop.f32.mrb[0].mxu0
      %v2382 = vadd.f32 0.0, %v2381
      %v2383 = vpop.f32.mrb[0].mxu0
      %2384 = vmatprep.mubr.bf16.mxu0 0
      %2385 = vmatmul.mubr.bf16.gmra.mrb[0].mxu0 %v2159
      %v2386 = vpop.f32.mrb[0].mxu0
      %v2387 = vadd.f32 0.0, %v2386
      %v2388 = vpop.f32.mrb[0].mxu0
      %v2389 = vpop.f32.mrb[0].mxu0
      %v2390 = vadd.f32 0.0, %v2389
      %v2391 = vpop.f32.mrb[0].mxu0
      %2392 = vmatprep.mubr.bf16.mxu0 0
      %2393 = vmatmul.mubr.bf16.gmra.mrb[0].mxu0 %v2162
      %v2394 = vpop.f32.mrb[0].mxu0
      %v2395 = vadd.f32 0.0, %v2394
      %v2396 = vpop.f32.mrb[0].mxu0
      %v2397 = vpop.f32.mrb[0].mxu0
      %v2398 = vadd.f32 0.0, %v2397
      %v2399 = vpop.f32.mrb[0].mxu0
      %2400 = vmatprep.mubr.bf16.mxu0 0
      %2401 = vmatmul.mubr.bf16.gmra.mrb[0].mxu0 %v2165
      %v2402 = vpop.f32.mrb[0].mxu0
      %v2403 = vadd.f32 0.0, %v2402
      %v2404 = vpop.f32.mrb[0].mxu0
      %v2405 = vpop.f32.mrb[0].mxu0
      %v2406 = vadd.f32 0.0, %v2405
      %v2407 = vpop.f32.mrb[0].mxu0
      %2408 = vmatprep.mubr.bf16.mxu0 0
      %2409 = vmatmul.mubr.bf16.gmra.mrb[0].mxu0 %v2168
      %v2410 = vpop.f32.mrb[0].mxu0
      %v2411 = vadd.f32 0.0, %v2410
      %v2412 = vpop.f32.mrb[0].mxu0
      %v2413 = vpop.f32.mrb[0].mxu0
      %v2414 = vadd.f32 0.0, %v2413
      %v2415 = vpop.f32.mrb[0].mxu0
      %2416 = vmatprep.mubr.bf16.mxu0 0
      %2417 = vmatmul.mubr.bf16.gmra.mrb[0].mxu0 %v2171
      %v2418 = vpop.f32.mrb[0].mxu0
      %v2419 = vadd.f32 0.0, %v2418
      %v2420 = vpop.f32.mrb[0].mxu0
      %v2421 = vpop.f32.mrb[0].mxu0
      %v2422 = vadd.f32 0.0, %v2421
      %v2423 = vpop.f32.mrb[0].mxu0
      %2424 = vdwg.mxu0
      %v2425 = vadd.f32 %v1594, %v2211
      %v2426 = vadd.f32 %v1597, %v2214
      %v2427 = vadd.f32 %v1602, %v2219
      %v2428 = vadd.f32 %v1605, %v2222
      %v2429 = vadd.f32 %v1610, %v2227
      %v2430 = vadd.f32 %v1613, %v2230
      %v2431 = vadd.f32 %v1618, %v2235
      %v2432 = vadd.f32 %v1621, %v2238
      %v2433 = vadd.f32 %v1626, %v2243
      %v2434 = vadd.f32 %v1629, %v2246
      %v2435 = vadd.f32 %v1634, %v2251
      %v2436 = vadd.f32 %v1637, %v2254
      %v2437 = vadd.f32 %v1642, %v2259
      %v2438 = vadd.f32 %v1645, %v2262
      %v2439 = vadd.f32 %v1650, %v2267
      %v2440 = vadd.f32 %v1653, %v2270
      %v2441 = vadd.f32 %v1658, %v2275
      %v2442 = vadd.f32 %v1661, %v2278
      %v2443 = vadd.f32 %v1666, %v2283
      %v2444 = vadd.f32 %v1669, %v2286
      %v2445 = vadd.f32 %v1674, %v2291
      %v2446 = vadd.f32 %v1677, %v2294
      %v2447 = vadd.f32 %v1682, %v2299
      %v2448 = vadd.f32 %v1685, %v2302
      %v2449 = vadd.f32 %v1690, %v2307
      %v2450 = vadd.f32 %v1693, %v2310
      %v2451 = vadd.f32 %v1698, %v2315
      %v2452 = vadd.f32 %v1701, %v2318
      %v2453 = vadd.f32 %v1706, %v2323
      %v2454 = vadd.f32 %v1709, %v2326
      %v2455 = vadd.f32 %v1714, %v2331
      %v2456 = vadd.f32 %v1717, %v2334
      %v2457 = vadd.f32 %v1722, %v2339
      %v2458 = vadd.f32 %v1725, %v2342
      %v2459 = vadd.f32 %v1730, %v2347
      %v2460 = vadd.f32 %v1733, %v2350
      %v2461 = vadd.f32 %v1738, %v2355
      %v2462 = vadd.f32 %v1741, %v2358
      %v2463 = vadd.f32 %v1746, %v2363
      %v2464 = vadd.f32 %v1749, %v2366
      %v2465 = vadd.f32 %v1754, %v2371
      %v2466 = vadd.f32 %v1757, %v2374
      %v2467 = vadd.f32 %v1762, %v2379
      %v2468 = vadd.f32 %v1765, %v2382
      %v2469 = vadd.f32 %v1770, %v2387
      %v2470 = vadd.f32 %v1773, %v2390
      %v2471 = vadd.f32 %v1778, %v2395
      %v2472 = vadd.f32 %v1781, %v2398
      %v2473 = vadd.f32 %v1786, %v2403
      %v2474 = vadd.f32 %v1789, %v2406
      %v2475 = vadd.f32 %v1794, %v2411
      %v2476 = vadd.f32 %v1797, %v2414
      %v2477 = vadd.f32 %v1802, %v2419
      %v2478 = vadd.f32 %v1805, %v2422
      %s2479 = scalar_lea.vmem %s1, 12
      %v2480 = vld [vmem:[%s2479] sm:$0xf]
      %v2484 = vunpack.c.l.b16 %v298
      %v2485 = vunpack.c.l.b16 %v299
      %v2486 = vunpack.c.l.b16 %v300
      %v2487 = vpack.c.b16 %v1398, %v1397
      %v2488 = vpack.c.b16 %v1400, %v1399
      %v2489 = vpack.c.b16 %v1402, %v1401
      %v2490 = vpack.c.b16 %v1404, %v1403
      %v2491 = vpack.c.b16 %v1406, %v1405
      %v2492 = vpack.c.b16 %v1408, %v1407
      %v2493 = vpack.c.b16 %v1410, %v1409
      %v2494 = vpack.c.b16 %v1412, %v1411
      %v2495 = vpack.c.b16 %v1414, %v1413
      %v2496 = vpack.c.b16 %v1416, %v1415
      %v2497 = vpack.c.b16 %v1418, %v1417
      %v2498 = vpack.c.b16 %v1420, %v1419
      %v2499 = vpack.c.b16 %v1422, %v1421
      %v2500 = vpack.c.b16 %v1424, %v1423
      %v2501 = vpack.c.b16 %v1426, %v1425
      %v2502 = vpack.c.b16 %v1428, %v1427
      %v2503 = vpack.c.b16 %v1430, %v1429
      %v2504 = vpack.c.b16 %v1432, %v1431
      %v2505 = vpack.c.b16 %v1434, %v1433
      %v2506 = vpack.c.b16 %v1436, %v1435
      %v2507 = vpack.c.b16 %v1438, %v1437
      %v2508 = vpack.c.b16 %v1440, %v1439
      %v2509 = vpack.c.b16 %v1442, %v1441
      %v2510 = vpack.c.b16 %v1444, %v1443
      %v2511 = vpack.c.b16 %v1446, %v1445
      %v2512 = vpack.c.b16 %v2484, %v1447
      %v2513 = vpack.c.b16 %v2486, %v2485
      %v2515 = vsel %vm1005, %v2487, 0
      %v2518 = vsel %vm1005, %v2488, 0
      %v2521 = vsel %vm1005, %v2489, 0
      %v2524 = vsel %vm1005, %v2490, 0
      %v2527 = vsel %vm1005, %v2491, 0
      %v2530 = vsel %vm1005, %v2492, 0
      %v2533 = vsel %vm1005, %v2493, 0
      %v2536 = vsel %vm1005, %v2494, 0
      %v2539 = vsel %vm1005, %v2495, 0
      %v2542 = vsel %vm1005, %v2496, 0
      %v2545 = vsel %vm1005, %v2497, 0
      %v2548 = vsel %vm1005, %v2498, 0
      %v2551 = vsel %vm1005, %v2499, 0
      %v2554 = vsel %vm1005, %v2500, 0
      %v2557 = vsel %vm1005, %v2501, 0
      %v2560 = vsel %vm1005, %v2502, 0
      %v2563 = vsel %vm1005, %v2503, 0
      %v2566 = vsel %vm1005, %v2504, 0
      %v2569 = vsel %vm1005, %v2505, 0
      %v2572 = vsel %vm1005, %v2506, 0
      %v2575 = vsel %vm1005, %v2507, 0
      %v2578 = vsel %vm1005, %v2508, 0
      %v2581 = vsel %vm1005, %v2509, 0
      %v2584 = vsel %vm1005, %v2510, 0
      %v2587 = vsel %vm1005, %v2511, 0
      %v2590 = vsel %vm1005, %v2512, 0
      %v2593 = vsel %vm1005, %v2513, 0
      %v2596 = vsel %vm1087, %v2480, 0
      %2598 = vmatprep.subr.bf16.mxu0 0
      %2599 = vmatpush1.bf16.msra.mxu0 %v2596
      %2600 = vmatprep.subr.bf16.mxu0 0
      %2601 = vmatpush1.bf16.msra.mxu0 0
      %2602 = vmatprep.subr.bf16.mxu0 0
      %2603 = vmatpush1.bf16.msra.mxu0 0
      %2604 = vmatprep.subr.bf16.mxu0 0
      %2605 = vmatpush1.bf16.msra.mxu0 0
      %2606 = vmatprep.subr.bf16.mxu0 0
      %2607 = vmatpush1.bf16.msra.mxu0 0
      %2608 = vmatprep.subr.bf16.mxu0 0
      %2609 = vmatpush1.bf16.msra.mxu0 0
      %2610 = vmatprep.subr.bf16.mxu0 0
      %2611 = vmatpush1.bf16.msra.mxu0 0
      %2612 = vmatprep.subr.bf16.mxu0 0
      %2613 = vmatpush1.bf16.msra.mxu0 0
      %2614 = vmatprep.subr.bf16.mxu0 0
      %2615 = vmatpush1.bf16.msra.mxu0 0
      %2616 = vmatprep.subr.bf16.mxu0 0
      %2617 = vmatpush1.bf16.msra.mxu0 0
      %2618 = vmatprep.subr.bf16.mxu0 0
      %2619 = vmatpush1.bf16.msra.mxu0 0
      %2620 = vmatprep.subr.bf16.mxu0 0
      %2621 = vmatpush1.bf16.msra.mxu0 0
      %2622 = vmatprep.subr.bf16.mxu0 0
      %2623 = vmatpush1.bf16.msra.mxu0 0
      %2624 = vmatprep.subr.bf16.mxu0 0
      %2625 = vmatpush1.bf16.msra.mxu0 0
      %2626 = vmatprep.subr.bf16.mxu0 0
      %2627 = vmatpush1.bf16.msra.mxu0 0
      %2628 = vmatprep.subr.bf16.mxu0 0
      %2629 = vmatpush1.bf16.msra.mxu0 0
      %2630 = vmatprep.mubr.bf16.mxu0 0
      %2631 = vmatmul.mubr.bf16.gmra.mrb[0].mxu0 %v2515
      %v2632 = vpop.f32.mrb[0].mxu0
      %v2633 = vadd.f32 0.0, %v2632
      %v2634 = vpop.f32.mrb[0].mxu0
      %v2635 = vpop.f32.mrb[0].mxu0
      %v2636 = vadd.f32 0.0, %v2635
      %v2637 = vpop.f32.mrb[0].mxu0
      %2638 = vmatprep.mubr.bf16.mxu0 0
      %2639 = vmatmul.mubr.bf16.gmra.mrb[0].mxu0 %v2518
      %v2640 = vpop.f32.mrb[0].mxu0
      %v2641 = vadd.f32 0.0, %v2640
      %v2642 = vpop.f32.mrb[0].mxu0
      %v2643 = vpop.f32.mrb[0].mxu0
      %v2644 = vadd.f32 0.0, %v2643
      %v2645 = vpop.f32.mrb[0].mxu0
      %2646 = vmatprep.mubr.bf16.mxu0 0
      %2647 = vmatmul.mubr.bf16.gmra.mrb[0].mxu0 %v2521
      %v2648 = vpop.f32.mrb[0].mxu0
      %v2649 = vadd.f32 0.0, %v2648
      %v2650 = vpop.f32.mrb[0].mxu0
      %v2651 = vpop.f32.mrb[0].mxu0
      %v2652 = vadd.f32 0.0, %v2651
      %v2653 = vpop.f32.mrb[0].mxu0
      %2654 = vmatprep.mubr.bf16.mxu0 0
      %2655 = vmatmul.mubr.bf16.gmra.mrb[0].mxu0 %v2524
      %v2656 = vpop.f32.mrb[0].mxu0
      %v2657 = vadd.f32 0.0, %v2656
      %v2658 = vpop.f32.mrb[0].mxu0
      %v2659 = vpop.f32.mrb[0].mxu0
      %v2660 = vadd.f32 0.0, %v2659
      %v2661 = vpop.f32.mrb[0].mxu0
      %2662 = vmatprep.mubr.bf16.mxu0 0
      %2663 = vmatmul.mubr.bf16.gmra.mrb[0].mxu0 %v2527
      %v2664 = vpop.f32.mrb[0].mxu0
      %v2665 = vadd.f32 0.0, %v2664
      %v2666 = vpop.f32.mrb[0].mxu0
      %v2667 = vpop.f32.mrb[0].mxu0
      %v2668 = vadd.f32 0.0, %v2667
      %v2669 = vpop.f32.mrb[0].mxu0
      %2670 = vmatprep.mubr.bf16.mxu0 0
      %2671 = vmatmul.mubr.bf16.gmra.mrb[0].mxu0 %v2530
      %v2672 = vpop.f32.mrb[0].mxu0
      %v2673 = vadd.f32 0.0, %v2672
      %v2674 = vpop.f32.mrb[0].mxu0
      %v2675 = vpop.f32.mrb[0].mxu0
      %v2676 = vadd.f32 0.0, %v2675
      %v2677 = vpop.f32.mrb[0].mxu0
      %2678 = vmatprep.mubr.bf16.mxu0 0
      %2679 = vmatmul.mubr.bf16.gmra.mrb[0].mxu0 %v2533
      %v2680 = vpop.f32.mrb[0].mxu0
      %v2681 = vadd.f32 0.0, %v2680
      %v2682 = vpop.f32.mrb[0].mxu0
      %v2683 = vpop.f32.mrb[0].mxu0
      %v2684 = vadd.f32 0.0, %v2683
      %v2685 = vpop.f32.mrb[0].mxu0
      %2686 = vmatprep.mubr.bf16.mxu0 0
      %2687 = vmatmul.mubr.bf16.gmra.mrb[0].mxu0 %v2536
      %v2688 = vpop.f32.mrb[0].mxu0
      %v2689 = vadd.f32 0.0, %v2688
      %v2690 = vpop.f32.mrb[0].mxu0
      %v2691 = vpop.f32.mrb[0].mxu0
      %v2692 = vadd.f32 0.0, %v2691
      %v2693 = vpop.f32.mrb[0].mxu0
      %2694 = vmatprep.mubr.bf16.mxu0 0
      %2695 = vmatmul.mubr.bf16.gmra.mrb[0].mxu0 %v2539
      %v2696 = vpop.f32.mrb[0].mxu0
      %v2697 = vadd.f32 0.0, %v2696
      %v2698 = vpop.f32.mrb[0].mxu0
      %v2699 = vpop.f32.mrb[0].mxu0
      %v2700 = vadd.f32 0.0, %v2699
      %v2701 = vpop.f32.mrb[0].mxu0
      %2702 = vmatprep.mubr.bf16.mxu0 0
      %2703 = vmatmul.mubr.bf16.gmra.mrb[0].mxu0 %v2542
      %v2704 = vpop.f32.mrb[0].mxu0
      %v2705 = vadd.f32 0.0, %v2704
      %v2706 = vpop.f32.mrb[0].mxu0
      %v2707 = vpop.f32.mrb[0].mxu0
      %v2708 = vadd.f32 0.0, %v2707
      %v2709 = vpop.f32.mrb[0].mxu0
      %2710 = vmatprep.mubr.bf16.mxu0 0
      %2711 = vmatmul.mubr.bf16.gmra.mrb[0].mxu0 %v2545
      %v2712 = vpop.f32.mrb[0].mxu0
      %v2713 = vadd.f32 0.0, %v2712
      %v2714 = vpop.f32.mrb[0].mxu0
      %v2715 = vpop.f32.mrb[0].mxu0
      %v2716 = vadd.f32 0.0, %v2715
      %v2717 = vpop.f32.mrb[0].mxu0
      %2718 = vmatprep.mubr.bf16.mxu0 0
      %2719 = vmatmul.mubr.bf16.gmra.mrb[0].mxu0 %v2548
      %v2720 = vpop.f32.mrb[0].mxu0
      %v2721 = vadd.f32 0.0, %v2720
      %v2722 = vpop.f32.mrb[0].mxu0
      %v2723 = vpop.f32.mrb[0].mxu0
      %v2724 = vadd.f32 0.0, %v2723
      %v2725 = vpop.f32.mrb[0].mxu0
      %2726 = vmatprep.mubr.bf16.mxu0 0
      %2727 = vmatmul.mubr.bf16.gmra.mrb[0].mxu0 %v2551
      %v2728 = vpop.f32.mrb[0].mxu0
      %v2729 = vadd.f32 0.0, %v2728
      %v2730 = vpop.f32.mrb[0].mxu0
      %v2731 = vpop.f32.mrb[0].mxu0
      %v2732 = vadd.f32 0.0, %v2731
      %v2733 = vpop.f32.mrb[0].mxu0
      %2734 = vmatprep.mubr.bf16.mxu0 0
      %2735 = vmatmul.mubr.bf16.gmra.mrb[0].mxu0 %v2554
      %v2736 = vpop.f32.mrb[0].mxu0
      %v2737 = vadd.f32 0.0, %v2736
      %v2738 = vpop.f32.mrb[0].mxu0
      %v2739 = vpop.f32.mrb[0].mxu0
      %v2740 = vadd.f32 0.0, %v2739
      %v2741 = vpop.f32.mrb[0].mxu0
      %2742 = vmatprep.mubr.bf16.mxu0 0
      %2743 = vmatmul.mubr.bf16.gmra.mrb[0].mxu0 %v2557
      %v2744 = vpop.f32.mrb[0].mxu0
      %v2745 = vadd.f32 0.0, %v2744
      %v2746 = vpop.f32.mrb[0].mxu0
      %v2747 = vpop.f32.mrb[0].mxu0
      %v2748 = vadd.f32 0.0, %v2747
      %v2749 = vpop.f32.mrb[0].mxu0
      %2750 = vmatprep.mubr.bf16.mxu0 0
      %2751 = vmatmul.mubr.bf16.gmra.mrb[0].mxu0 %v2560
      %v2752 = vpop.f32.mrb[0].mxu0
      %v2753 = vadd.f32 0.0, %v2752
      %v2754 = vpop.f32.mrb[0].mxu0
      %v2755 = vpop.f32.mrb[0].mxu0
      %v2756 = vadd.f32 0.0, %v2755
      %v2757 = vpop.f32.mrb[0].mxu0
      %2758 = vmatprep.mubr.bf16.mxu0 0
      %2759 = vmatmul.mubr.bf16.gmra.mrb[0].mxu0 %v2563
      %v2760 = vpop.f32.mrb[0].mxu0
      %v2761 = vadd.f32 0.0, %v2760
      %v2762 = vpop.f32.mrb[0].mxu0
      %v2763 = vpop.f32.mrb[0].mxu0
      %v2764 = vadd.f32 0.0, %v2763
      %v2765 = vpop.f32.mrb[0].mxu0
      %2766 = vmatprep.mubr.bf16.mxu0 0
      %2767 = vmatmul.mubr.bf16.gmra.mrb[0].mxu0 %v2566
      %v2768 = vpop.f32.mrb[0].mxu0
      %v2769 = vadd.f32 0.0, %v2768
      %v2770 = vpop.f32.mrb[0].mxu0
      %v2771 = vpop.f32.mrb[0].mxu0
      %v2772 = vadd.f32 0.0, %v2771
      %v2773 = vpop.f32.mrb[0].mxu0
      %2774 = vmatprep.mubr.bf16.mxu0 0
      %2775 = vmatmul.mubr.bf16.gmra.mrb[0].mxu0 %v2569
      %v2776 = vpop.f32.mrb[0].mxu0
      %v2777 = vadd.f32 0.0, %v2776
      %v2778 = vpop.f32.mrb[0].mxu0
      %v2779 = vpop.f32.mrb[0].mxu0
      %v2780 = vadd.f32 0.0, %v2779
      %v2781 = vpop.f32.mrb[0].mxu0
      %2782 = vmatprep.mubr.bf16.mxu0 0
      %2783 = vmatmul.mubr.bf16.gmra.mrb[0].mxu0 %v2572
      %v2784 = vpop.f32.mrb[0].mxu0
      %v2785 = vadd.f32 0.0, %v2784
      %v2786 = vpop.f32.mrb[0].mxu0
      %v2787 = vpop.f32.mrb[0].mxu0
      %v2788 = vadd.f32 0.0, %v2787
      %v2789 = vpop.f32.mrb[0].mxu0
      %2790 = vmatprep.mubr.bf16.mxu0 0
      %2791 = vmatmul.mubr.bf16.gmra.mrb[0].mxu0 %v2575
      %v2792 = vpop.f32.mrb[0].mxu0
      %v2793 = vadd.f32 0.0, %v2792
      %v2794 = vpop.f32.mrb[0].mxu0
      %v2795 = vpop.f32.mrb[0].mxu0
      %v2796 = vadd.f32 0.0, %v2795
      %v2797 = vpop.f32.mrb[0].mxu0
      %2798 = vmatprep.mubr.bf16.mxu0 0
      %2799 = vmatmul.mubr.bf16.gmra.mrb[0].mxu0 %v2578
      %v2800 = vpop.f32.mrb[0].mxu0
      %v2801 = vadd.f32 0.0, %v2800
      %v2802 = vpop.f32.mrb[0].mxu0
      %v2803 = vpop.f32.mrb[0].mxu0
      %v2804 = vadd.f32 0.0, %v2803
      %v2805 = vpop.f32.mrb[0].mxu0
      %2806 = vmatprep.mubr.bf16.mxu0 0
      %2807 = vmatmul.mubr.bf16.gmra.mrb[0].mxu0 %v2581
      %v2808 = vpop.f32.mrb[0].mxu0
      %v2809 = vadd.f32 0.0, %v2808
      %v2810 = vpop.f32.mrb[0].mxu0
      %v2811 = vpop.f32.mrb[0].mxu0
      %v2812 = vadd.f32 0.0, %v2811
      %v2813 = vpop.f32.mrb[0].mxu0
      %2814 = vmatprep.mubr.bf16.mxu0 0
      %2815 = vmatmul.mubr.bf16.gmra.mrb[0].mxu0 %v2584
      %v2816 = vpop.f32.mrb[0].mxu0
      %v2817 = vadd.f32 0.0, %v2816
      %v2818 = vpop.f32.mrb[0].mxu0
      %v2819 = vpop.f32.mrb[0].mxu0
      %v2820 = vadd.f32 0.0, %v2819
      %v2821 = vpop.f32.mrb[0].mxu0
      %2822 = vmatprep.mubr.bf16.mxu0 0
      %2823 = vmatmul.mubr.bf16.gmra.mrb[0].mxu0 %v2587
      %v2824 = vpop.f32.mrb[0].mxu0
      %v2825 = vadd.f32 0.0, %v2824
      %v2826 = vpop.f32.mrb[0].mxu0
      %v2827 = vpop.f32.mrb[0].mxu0
      %v2828 = vadd.f32 0.0, %v2827
      %v2829 = vpop.f32.mrb[0].mxu0
      %2830 = vmatprep.mubr.bf16.mxu0 0
      %2831 = vmatmul.mubr.bf16.gmra.mrb[0].mxu0 %v2590
      %v2832 = vpop.f32.mrb[0].mxu0
      %v2833 = vadd.f32 0.0, %v2832
      %v2834 = vpop.f32.mrb[0].mxu0
      %v2835 = vpop.f32.mrb[0].mxu0
      %v2836 = vadd.f32 0.0, %v2835
      %v2837 = vpop.f32.mrb[0].mxu0
      %2838 = vmatprep.mubr.bf16.mxu0 0
      %2839 = vmatmul.mubr.bf16.gmra.mrb[0].mxu0 %v2593
      %v2840 = vpop.f32.mrb[0].mxu0
      %v2841 = vadd.f32 0.0, %v2840
      %v2842 = vpop.f32.mrb[0].mxu0
      %v2843 = vpop.f32.mrb[0].mxu0
      %v2844 = vadd.f32 0.0, %v2843
      %v2845 = vpop.f32.mrb[0].mxu0
      %2846 = vdwg.mxu0
      %v2847 = vadd.f32 %v2425, %v2633
      %v2848 = vadd.f32 %v2426, %v2636
      %v2849 = vadd.f32 %v2427, %v2641
      %v2850 = vadd.f32 %v2428, %v2644
      %v2851 = vadd.f32 %v2429, %v2649
      %v2852 = vadd.f32 %v2430, %v2652
      %v2853 = vadd.f32 %v2431, %v2657
      %v2854 = vadd.f32 %v2432, %v2660
      %v2855 = vadd.f32 %v2433, %v2665
      %v2856 = vadd.f32 %v2434, %v2668
      %v2857 = vadd.f32 %v2435, %v2673
      %v2858 = vadd.f32 %v2436, %v2676
      %v2859 = vadd.f32 %v2437, %v2681
      %v2860 = vadd.f32 %v2438, %v2684
      %v2861 = vadd.f32 %v2439, %v2689
      %v2862 = vadd.f32 %v2440, %v2692
      %v2863 = vadd.f32 %v2441, %v2697
      %v2864 = vadd.f32 %v2442, %v2700
      %v2865 = vadd.f32 %v2443, %v2705
      %v2866 = vadd.f32 %v2444, %v2708
      %v2867 = vadd.f32 %v2445, %v2713
      %v2868 = vadd.f32 %v2446, %v2716
      %v2869 = vadd.f32 %v2447, %v2721
      %v2870 = vadd.f32 %v2448, %v2724
      %v2871 = vadd.f32 %v2449, %v2729
      %v2872 = vadd.f32 %v2450, %v2732
      %v2873 = vadd.f32 %v2451, %v2737
      %v2874 = vadd.f32 %v2452, %v2740
      %v2875 = vadd.f32 %v2453, %v2745
      %v2876 = vadd.f32 %v2454, %v2748
      %v2877 = vadd.f32 %v2455, %v2753
      %v2878 = vadd.f32 %v2456, %v2756
      %v2879 = vadd.f32 %v2457, %v2761
      %v2880 = vadd.f32 %v2458, %v2764
      %v2881 = vadd.f32 %v2459, %v2769
      %v2882 = vadd.f32 %v2460, %v2772
      %v2883 = vadd.f32 %v2461, %v2777
      %v2884 = vadd.f32 %v2462, %v2780
      %v2885 = vadd.f32 %v2463, %v2785
      %v2886 = vadd.f32 %v2464, %v2788
      %v2887 = vadd.f32 %v2465, %v2793
      %v2888 = vadd.f32 %v2466, %v2796
      %v2889 = vadd.f32 %v2467, %v2801
      %v2890 = vadd.f32 %v2468, %v2804
      %v2891 = vadd.f32 %v2469, %v2809
      %v2892 = vadd.f32 %v2470, %v2812
      %v2893 = vadd.f32 %v2471, %v2817
      %v2894 = vadd.f32 %v2472, %v2820
      %v2895 = vadd.f32 %v2473, %v2825
      %v2896 = vadd.f32 %v2474, %v2828
      %v2897 = vadd.f32 %v2475, %v2833
      %v2898 = vadd.f32 %v2476, %v2836
      %v2899 = vadd.f32 %v2477, %v2841
      %v2900 = vadd.f32 %v2478, %v2844
      %v2902 = vshrl.u32 %v298, 16
      %v2904 = vrot.slane %v2902, 4
      %v2905 = vshll.u32 %v298, 16
      %v2907 = vrot.slane %v2905, 5
      %v2908 = vor.u32 %v2904, %v2907
      %v2909 = vrot.slane %v2908, 4
      %v2911 = vshll.u32 %v299, 16
      %v2913 = vrot.slane %v2911, 5
      %v2914 = vsel %vm309, %v2909, %v2913
      %v2915 = vshrl.u32 %v299, 16
      %v2917 = vrot.slane %v2915, 4
      %v2918 = vor.u32 %v2917, %v2913
      %v2919 = vrot.slane %v2918, 4
      %v2921 = vshll.u32 %v300, 16
      %v2923 = vrot.slane %v2921, 5
      %v2924 = vsel %vm309, %v2919, %v2923
      %v2925 = vshrl.u32 %v300, 16
      %v2927 = vrot.slane %v2925, 4
      %v2928 = vor.u32 %v2927, %v2923
      %v2929 = vrot.slane %v2928, 4
      %v2931 = vshll.u32 %v301, 16
      %v2933 = vrot.slane %v2931, 5
      %v2934 = vsel %vm309, %v2929, %v2933
      %s2935 = scalar_lea.vmem %s1, 16
      %v2936 = vld [vmem:[%s2935] sm:$0xf]
      %v2937 = vunpack.c.l.b16 %v2914
      %v2938 = vunpack.c.l.b16 %v2924
      %v2939 = vunpack.c.l.b16 %v2934
      %v2940 = vpack.c.b16 %v928, %v927
      %v2941 = vpack.c.b16 %v930, %v929
      %v2942 = vpack.c.b16 %v932, %v931
      %v2943 = vpack.c.b16 %v934, %v933
      %v2944 = vpack.c.b16 %v936, %v935
      %v2945 = vpack.c.b16 %v938, %v937
      %v2946 = vpack.c.b16 %v940, %v939
      %v2947 = vpack.c.b16 %v942, %v941
      %v2948 = vpack.c.b16 %v944, %v943
      %v2949 = vpack.c.b16 %v946, %v945
      %v2950 = vpack.c.b16 %v948, %v947
      %v2951 = vpack.c.b16 %v950, %v949
      %v2952 = vpack.c.b16 %v952, %v951
      %v2953 = vpack.c.b16 %v954, %v953
      %v2954 = vpack.c.b16 %v956, %v955
      %v2955 = vpack.c.b16 %v958, %v957
      %v2956 = vpack.c.b16 %v960, %v959
      %v2957 = vpack.c.b16 %v962, %v961
      %v2958 = vpack.c.b16 %v964, %v963
      %v2959 = vpack.c.b16 %v966, %v965
      %v2960 = vpack.c.b16 %v968, %v967
      %v2961 = vpack.c.b16 %v970, %v969
      %v2962 = vpack.c.b16 %v972, %v971
      %v2963 = vpack.c.b16 %v974, %v973
      %v2964 = vpack.c.b16 %v976, %v975
      %v2965 = vpack.c.b16 %v2937, %v977
      %v2966 = vpack.c.b16 %v2939, %v2938
      %v2968 = vsel %vm1005, %v2940, 0
      %v2971 = vsel %vm1005, %v2941, 0
      %v2974 = vsel %vm1005, %v2942, 0
      %v2977 = vsel %vm1005, %v2943, 0
      %v2980 = vsel %vm1005, %v2944, 0
      %v2983 = vsel %vm1005, %v2945, 0
      %v2986 = vsel %vm1005, %v2946, 0
      %v2989 = vsel %vm1005, %v2947, 0
      %v2992 = vsel %vm1005, %v2948, 0
      %v2995 = vsel %vm1005, %v2949, 0
      %v2998 = vsel %vm1005, %v2950, 0
      %v3001 = vsel %vm1005, %v2951, 0
      %v3004 = vsel %vm1005, %v2952, 0
      %v3007 = vsel %vm1005, %v2953, 0
      %v3010 = vsel %vm1005, %v2954, 0
      %v3013 = vsel %vm1005, %v2955, 0
      %v3016 = vsel %vm1005, %v2956, 0
      %v3019 = vsel %vm1005, %v2957, 0
      %v3022 = vsel %vm1005, %v2958, 0
      %v3025 = vsel %vm1005, %v2959, 0
      %v3028 = vsel %vm1005, %v2960, 0
      %v3031 = vsel %vm1005, %v2961, 0
      %v3034 = vsel %vm1005, %v2962, 0
      %v3037 = vsel %vm1005, %v2963, 0
      %v3040 = vsel %vm1005, %v2964, 0
      %v3043 = vsel %vm1005, %v2965, 0
      %v3046 = vsel %vm1005, %v2966, 0
      %v3049 = vsel %vm1087, %v2936, 0
      %3051 = vmatprep.subr.bf16.mxu0 0
      %3052 = vmatpush1.bf16.msra.mxu0 %v3049
      %3053 = vmatprep.subr.bf16.mxu0 0
      %3054 = vmatpush1.bf16.msra.mxu0 0
      %3055 = vmatprep.subr.bf16.mxu0 0
      %3056 = vmatpush1.bf16.msra.mxu0 0
      %3057 = vmatprep.subr.bf16.mxu0 0
      %3058 = vmatpush1.bf16.msra.mxu0 0
      %3059 = vmatprep.subr.bf16.mxu0 0
      %3060 = vmatpush1.bf16.msra.mxu0 0
      %3061 = vmatprep.subr.bf16.mxu0 0
      %3062 = vmatpush1.bf16.msra.mxu0 0
      %3063 = vmatprep.subr.bf16.mxu0 0
      %3064 = vmatpush1.bf16.msra.mxu0 0
      %3065 = vmatprep.subr.bf16.mxu0 0
      %3066 = vmatpush1.bf16.msra.mxu0 0
      %3067 = vmatprep.subr.bf16.mxu0 0
      %3068 = vmatpush1.bf16.msra.mxu0 0
      %3069 = vmatprep.subr.bf16.mxu0 0
      %3070 = vmatpush1.bf16.msra.mxu0 0
      %3071 = vmatprep.subr.bf16.mxu0 0
      %3072 = vmatpush1.bf16.msra.mxu0 0
      %3073 = vmatprep.subr.bf16.mxu0 0
      %3074 = vmatpush1.bf16.msra.mxu0 0
      %3075 = vmatprep.subr.bf16.mxu0 0
      %3076 = vmatpush1.bf16.msra.mxu0 0
      %3077 = vmatprep.subr.bf16.mxu0 0
      %3078 = vmatpush1.bf16.msra.mxu0 0
      %3079 = vmatprep.subr.bf16.mxu0 0
      %3080 = vmatpush1.bf16.msra.mxu0 0
      %3081 = vmatprep.subr.bf16.mxu0 0
      %3082 = vmatpush1.bf16.msra.mxu0 0
      %3083 = vmatprep.mubr.bf16.mxu0 0
      %3084 = vmatmul.mubr.bf16.gmra.mrb[0].mxu0 %v2968
      %v3085 = vpop.f32.mrb[0].mxu0
      %v3086 = vadd.f32 0.0, %v3085
      %v3087 = vpop.f32.mrb[0].mxu0
      %v3088 = vpop.f32.mrb[0].mxu0
      %v3089 = vadd.f32 0.0, %v3088
      %v3090 = vpop.f32.mrb[0].mxu0
      %3091 = vmatprep.mubr.bf16.mxu0 0
      %3092 = vmatmul.mubr.bf16.gmra.mrb[0].mxu0 %v2971
      %v3093 = vpop.f32.mrb[0].mxu0
      %v3094 = vadd.f32 0.0, %v3093
      %v3095 = vpop.f32.mrb[0].mxu0
      %v3096 = vpop.f32.mrb[0].mxu0
      %v3097 = vadd.f32 0.0, %v3096
      %v3098 = vpop.f32.mrb[0].mxu0
      %3099 = vmatprep.mubr.bf16.mxu0 0
      %3100 = vmatmul.mubr.bf16.gmra.mrb[0].mxu0 %v2974
      %v3101 = vpop.f32.mrb[0].mxu0
      %v3102 = vadd.f32 0.0, %v3101
      %v3103 = vpop.f32.mrb[0].mxu0
      %v3104 = vpop.f32.mrb[0].mxu0
      %v3105 = vadd.f32 0.0, %v3104
      %v3106 = vpop.f32.mrb[0].mxu0
      %3107 = vmatprep.mubr.bf16.mxu0 0
      %3108 = vmatmul.mubr.bf16.gmra.mrb[0].mxu0 %v2977
      %v3109 = vpop.f32.mrb[0].mxu0
      %v3110 = vadd.f32 0.0, %v3109
      %v3111 = vpop.f32.mrb[0].mxu0
      %v3112 = vpop.f32.mrb[0].mxu0
      %v3113 = vadd.f32 0.0, %v3112
      %v3114 = vpop.f32.mrb[0].mxu0
      %3115 = vmatprep.mubr.bf16.mxu0 0
      %3116 = vmatmul.mubr.bf16.gmra.mrb[0].mxu0 %v2980
      %v3117 = vpop.f32.mrb[0].mxu0
      %v3118 = vadd.f32 0.0, %v3117
      %v3119 = vpop.f32.mrb[0].mxu0
      %v3120 = vpop.f32.mrb[0].mxu0
      %v3121 = vadd.f32 0.0, %v3120
      %v3122 = vpop.f32.mrb[0].mxu0
      %3123 = vmatprep.mubr.bf16.mxu0 0
      %3124 = vmatmul.mubr.bf16.gmra.mrb[0].mxu0 %v2983
      %v3125 = vpop.f32.mrb[0].mxu0
      %v3126 = vadd.f32 0.0, %v3125
      %v3127 = vpop.f32.mrb[0].mxu0
      %v3128 = vpop.f32.mrb[0].mxu0
      %v3129 = vadd.f32 0.0, %v3128
      %v3130 = vpop.f32.mrb[0].mxu0
      %3131 = vmatprep.mubr.bf16.mxu0 0
      %3132 = vmatmul.mubr.bf16.gmra.mrb[0].mxu0 %v2986
      %v3133 = vpop.f32.mrb[0].mxu0
      %v3134 = vadd.f32 0.0, %v3133
      %v3135 = vpop.f32.mrb[0].mxu0
      %v3136 = vpop.f32.mrb[0].mxu0
      %v3137 = vadd.f32 0.0, %v3136
      %v3138 = vpop.f32.mrb[0].mxu0
      %3139 = vmatprep.mubr.bf16.mxu0 0
      %3140 = vmatmul.mubr.bf16.gmra.mrb[0].mxu0 %v2989
      %v3141 = vpop.f32.mrb[0].mxu0
      %v3142 = vadd.f32 0.0, %v3141
      %v3143 = vpop.f32.mrb[0].mxu0
      %v3144 = vpop.f32.mrb[0].mxu0
      %v3145 = vadd.f32 0.0, %v3144
      %v3146 = vpop.f32.mrb[0].mxu0
      %3147 = vmatprep.mubr.bf16.mxu0 0
      %3148 = vmatmul.mubr.bf16.gmra.mrb[0].mxu0 %v2992
      %v3149 = vpop.f32.mrb[0].mxu0
      %v3150 = vadd.f32 0.0, %v3149
      %v3151 = vpop.f32.mrb[0].mxu0
      %v3152 = vpop.f32.mrb[0].mxu0
      %v3153 = vadd.f32 0.0, %v3152
      %v3154 = vpop.f32.mrb[0].mxu0
      %3155 = vmatprep.mubr.bf16.mxu0 0
      %3156 = vmatmul.mubr.bf16.gmra.mrb[0].mxu0 %v2995
      %v3157 = vpop.f32.mrb[0].mxu0
      %v3158 = vadd.f32 0.0, %v3157
      %v3159 = vpop.f32.mrb[0].mxu0
      %v3160 = vpop.f32.mrb[0].mxu0
      %v3161 = vadd.f32 0.0, %v3160
      %v3162 = vpop.f32.mrb[0].mxu0
      %3163 = vmatprep.mubr.bf16.mxu0 0
      %3164 = vmatmul.mubr.bf16.gmra.mrb[0].mxu0 %v2998
      %v3165 = vpop.f32.mrb[0].mxu0
      %v3166 = vadd.f32 0.0, %v3165
      %v3167 = vpop.f32.mrb[0].mxu0
      %v3168 = vpop.f32.mrb[0].mxu0
      %v3169 = vadd.f32 0.0, %v3168
      %v3170 = vpop.f32.mrb[0].mxu0
      %3171 = vmatprep.mubr.bf16.mxu0 0
      %3172 = vmatmul.mubr.bf16.gmra.mrb[0].mxu0 %v3001
      %v3173 = vpop.f32.mrb[0].mxu0
      %v3174 = vadd.f32 0.0, %v3173
      %v3175 = vpop.f32.mrb[0].mxu0
      %v3176 = vpop.f32.mrb[0].mxu0
      %v3177 = vadd.f32 0.0, %v3176
      %v3178 = vpop.f32.mrb[0].mxu0
      %3179 = vmatprep.mubr.bf16.mxu0 0
      %3180 = vmatmul.mubr.bf16.gmra.mrb[0].mxu0 %v3004
      %v3181 = vpop.f32.mrb[0].mxu0
      %v3182 = vadd.f32 0.0, %v3181
      %v3183 = vpop.f32.mrb[0].mxu0
      %v3184 = vpop.f32.mrb[0].mxu0
      %v3185 = vadd.f32 0.0, %v3184
      %v3186 = vpop.f32.mrb[0].mxu0
      %3187 = vmatprep.mubr.bf16.mxu0 0
      %3188 = vmatmul.mubr.bf16.gmra.mrb[0].mxu0 %v3007
      %v3189 = vpop.f32.mrb[0].mxu0
      %v3190 = vadd.f32 0.0, %v3189
      %v3191 = vpop.f32.mrb[0].mxu0
      %v3192 = vpop.f32.mrb[0].mxu0
      %v3193 = vadd.f32 0.0, %v3192
      %v3194 = vpop.f32.mrb[0].mxu0
      %3195 = vmatprep.mubr.bf16.mxu0 0
      %3196 = vmatmul.mubr.bf16.gmra.mrb[0].mxu0 %v3010
      %v3197 = vpop.f32.mrb[0].mxu0
      %v3198 = vadd.f32 0.0, %v3197
      %v3199 = vpop.f32.mrb[0].mxu0
      %v3200 = vpop.f32.mrb[0].mxu0
      %v3201 = vadd.f32 0.0, %v3200
      %v3202 = vpop.f32.mrb[0].mxu0
      %3203 = vmatprep.mubr.bf16.mxu0 0
      %3204 = vmatmul.mubr.bf16.gmra.mrb[0].mxu0 %v3013
      %v3205 = vpop.f32.mrb[0].mxu0
      %v3206 = vadd.f32 0.0, %v3205
      %v3207 = vpop.f32.mrb[0].mxu0
      %v3208 = vpop.f32.mrb[0].mxu0
      %v3209 = vadd.f32 0.0, %v3208
      %v3210 = vpop.f32.mrb[0].mxu0
      %3211 = vmatprep.mubr.bf16.mxu0 0
      %3212 = vmatmul.mubr.bf16.gmra.mrb[0].mxu0 %v3016
      %v3213 = vpop.f32.mrb[0].mxu0
      %v3214 = vadd.f32 0.0, %v3213
      %v3215 = vpop.f32.mrb[0].mxu0
      %v3216 = vpop.f32.mrb[0].mxu0
      %v3217 = vadd.f32 0.0, %v3216
      %v3218 = vpop.f32.mrb[0].mxu0
      %3219 = vmatprep.mubr.bf16.mxu0 0
      %3220 = vmatmul.mubr.bf16.gmra.mrb[0].mxu0 %v3019
      %v3221 = vpop.f32.mrb[0].mxu0
      %v3222 = vadd.f32 0.0, %v3221
      %v3223 = vpop.f32.mrb[0].mxu0
      %v3224 = vpop.f32.mrb[0].mxu0
      %v3225 = vadd.f32 0.0, %v3224
      %v3226 = vpop.f32.mrb[0].mxu0
      %3227 = vmatprep.mubr.bf16.mxu0 0
      %3228 = vmatmul.mubr.bf16.gmra.mrb[0].mxu0 %v3022
      %v3229 = vpop.f32.mrb[0].mxu0
      %v3230 = vadd.f32 0.0, %v3229
      %v3231 = vpop.f32.mrb[0].mxu0
      %v3232 = vpop.f32.mrb[0].mxu0
      %v3233 = vadd.f32 0.0, %v3232
      %v3234 = vpop.f32.mrb[0].mxu0
      %3235 = vmatprep.mubr.bf16.mxu0 0
      %3236 = vmatmul.mubr.bf16.gmra.mrb[0].mxu0 %v3025
      %v3237 = vpop.f32.mrb[0].mxu0
      %v3238 = vadd.f32 0.0, %v3237
      %v3239 = vpop.f32.mrb[0].mxu0
      %v3240 = vpop.f32.mrb[0].mxu0
      %v3241 = vadd.f32 0.0, %v3240
      %v3242 = vpop.f32.mrb[0].mxu0
      %3243 = vmatprep.mubr.bf16.mxu0 0
      %3244 = vmatmul.mubr.bf16.gmra.mrb[0].mxu0 %v3028
      %v3245 = vpop.f32.mrb[0].mxu0
      %v3246 = vadd.f32 0.0, %v3245
      %v3247 = vpop.f32.mrb[0].mxu0
      %v3248 = vpop.f32.mrb[0].mxu0
      %v3249 = vadd.f32 0.0, %v3248
      %v3250 = vpop.f32.mrb[0].mxu0
      %3251 = vmatprep.mubr.bf16.mxu0 0
      %3252 = vmatmul.mubr.bf16.gmra.mrb[0].mxu0 %v3031
      %v3253 = vpop.f32.mrb[0].mxu0
      %v3254 = vadd.f32 0.0, %v3253
      %v3255 = vpop.f32.mrb[0].mxu0
      %v3256 = vpop.f32.mrb[0].mxu0
      %v3257 = vadd.f32 0.0, %v3256
      %v3258 = vpop.f32.mrb[0].mxu0
      %3259 = vmatprep.mubr.bf16.mxu0 0
      %3260 = vmatmul.mubr.bf16.gmra.mrb[0].mxu0 %v3034
      %v3261 = vpop.f32.mrb[0].mxu0
      %v3262 = vadd.f32 0.0, %v3261
      %v3263 = vpop.f32.mrb[0].mxu0
      %v3264 = vpop.f32.mrb[0].mxu0
      %v3265 = vadd.f32 0.0, %v3264
      %v3266 = vpop.f32.mrb[0].mxu0
      %3267 = vmatprep.mubr.bf16.mxu0 0
      %3268 = vmatmul.mubr.bf16.gmra.mrb[0].mxu0 %v3037
      %v3269 = vpop.f32.mrb[0].mxu0
      %v3270 = vadd.f32 0.0, %v3269
      %v3271 = vpop.f32.mrb[0].mxu0
      %v3272 = vpop.f32.mrb[0].mxu0
      %v3273 = vadd.f32 0.0, %v3272
      %v3274 = vpop.f32.mrb[0].mxu0
      %3275 = vmatprep.mubr.bf16.mxu0 0
      %3276 = vmatmul.mubr.bf16.gmra.mrb[0].mxu0 %v3040
      %v3277 = vpop.f32.mrb[0].mxu0
      %v3278 = vadd.f32 0.0, %v3277
      %v3279 = vpop.f32.mrb[0].mxu0
      %v3280 = vpop.f32.mrb[0].mxu0
      %v3281 = vadd.f32 0.0, %v3280
      %v3282 = vpop.f32.mrb[0].mxu0
      %3283 = vmatprep.mubr.bf16.mxu0 0
      %3284 = vmatmul.mubr.bf16.gmra.mrb[0].mxu0 %v3043
      %v3285 = vpop.f32.mrb[0].mxu0
      %v3286 = vadd.f32 0.0, %v3285
      %v3287 = vpop.f32.mrb[0].mxu0
      %v3288 = vpop.f32.mrb[0].mxu0
      %v3289 = vadd.f32 0.0, %v3288
      %v3290 = vpop.f32.mrb[0].mxu0
      %3291 = vmatprep.mubr.bf16.mxu0 0
      %3292 = vmatmul.mubr.bf16.gmra.mrb[0].mxu0 %v3046
      %v3293 = vpop.f32.mrb[0].mxu0
      %v3294 = vadd.f32 0.0, %v3293
      %v3295 = vpop.f32.mrb[0].mxu0
      %v3296 = vpop.f32.mrb[0].mxu0
      %v3297 = vadd.f32 0.0, %v3296
      %v3298 = vpop.f32.mrb[0].mxu0
      %3299 = vdwg.mxu0
      %v3300 = vadd.f32 %v2847, %v3086
      %v3301 = vadd.f32 %v2848, %v3089
      %v3302 = vadd.f32 %v2849, %v3094
      %v3303 = vadd.f32 %v2850, %v3097
      %v3304 = vadd.f32 %v2851, %v3102
      %v3305 = vadd.f32 %v2852, %v3105
      %v3306 = vadd.f32 %v2853, %v3110
      %v3307 = vadd.f32 %v2854, %v3113
      %v3308 = vadd.f32 %v2855, %v3118
      %v3309 = vadd.f32 %v2856, %v3121
      %v3310 = vadd.f32 %v2857, %v3126
      %v3311 = vadd.f32 %v2858, %v3129
      %v3312 = vadd.f32 %v2859, %v3134
      %v3313 = vadd.f32 %v2860, %v3137
      %v3314 = vadd.f32 %v2861, %v3142
      %v3315 = vadd.f32 %v2862, %v3145
      %v3316 = vadd.f32 %v2863, %v3150
      %v3317 = vadd.f32 %v2864, %v3153
      %v3318 = vadd.f32 %v2865, %v3158
      %v3319 = vadd.f32 %v2866, %v3161
      %v3320 = vadd.f32 %v2867, %v3166
      %v3321 = vadd.f32 %v2868, %v3169
      %v3322 = vadd.f32 %v2869, %v3174
      %v3323 = vadd.f32 %v2870, %v3177
      %v3324 = vadd.f32 %v2871, %v3182
      %v3325 = vadd.f32 %v2872, %v3185
      %v3326 = vadd.f32 %v2873, %v3190
      %v3327 = vadd.f32 %v2874, %v3193
      %v3328 = vadd.f32 %v2875, %v3198
      %v3329 = vadd.f32 %v2876, %v3201
      %v3330 = vadd.f32 %v2877, %v3206
      %v3331 = vadd.f32 %v2878, %v3209
      %v3332 = vadd.f32 %v2879, %v3214
      %v3333 = vadd.f32 %v2880, %v3217
      %v3334 = vadd.f32 %v2881, %v3222
      %v3335 = vadd.f32 %v2882, %v3225
      %v3336 = vadd.f32 %v2883, %v3230
      %v3337 = vadd.f32 %v2884, %v3233
      %v3338 = vadd.f32 %v2885, %v3238
      %v3339 = vadd.f32 %v2886, %v3241
      %v3340 = vadd.f32 %v2887, %v3246
      %v3341 = vadd.f32 %v2888, %v3249
      %v3342 = vadd.f32 %v2889, %v3254
      %v3343 = vadd.f32 %v2890, %v3257
      %v3344 = vadd.f32 %v2891, %v3262
      %v3345 = vadd.f32 %v2892, %v3265
      %v3346 = vadd.f32 %v2893, %v3270
      %v3347 = vadd.f32 %v2894, %v3273
      %v3348 = vadd.f32 %v2895, %v3278
      %v3349 = vadd.f32 %v2896, %v3281
      %v3350 = vadd.f32 %v2897, %v3286
      %v3351 = vadd.f32 %v2898, %v3289
      %v3352 = vadd.f32 %v2899, %v3294
      %v3353 = vadd.f32 %v2900, %v3297
      %v3355 = vrot.slane %v298, 5
      %v3356 = vrot.slane %v3355, 4
      %v3357 = vrot.slane %v299, 5
      %v3358 = vsel %vm1828, %v3356, %v3357
      %v3359 = vrot.slane %v3357, 4
      %v3360 = vrot.slane %v300, 5
      %v3361 = vsel %vm1828, %v3359, %v3360
      %v3362 = vrot.slane %v3360, 4
      %v3363 = vrot.slane %v301, 5
      %v3364 = vsel %vm1828, %v3362, %v3363
      %s3365 = scalar_lea.vmem %s1, 20
      %v3366 = vld [vmem:[%s3365] sm:$0xf]
      %v3367 = vunpack.c.l.b16 %v3358
      %v3368 = vunpack.c.l.b16 %v3361
      %v3369 = vunpack.c.l.b16 %v3364
      %v3370 = vpack.c.b16 %v2015, %v2014
      %v3371 = vpack.c.b16 %v2017, %v2016
      %v3372 = vpack.c.b16 %v2019, %v2018
      %v3373 = vpack.c.b16 %v2021, %v2020
      %v3374 = vpack.c.b16 %v2023, %v2022
      %v3375 = vpack.c.b16 %v2025, %v2024
      %v3376 = vpack.c.b16 %v2027, %v2026
      %v3377 = vpack.c.b16 %v2029, %v2028
      %v3378 = vpack.c.b16 %v2031, %v2030
      %v3379 = vpack.c.b16 %v2033, %v2032
      %v3380 = vpack.c.b16 %v2035, %v2034
      %v3381 = vpack.c.b16 %v2037, %v2036
      %v3382 = vpack.c.b16 %v2039, %v2038
      %v3383 = vpack.c.b16 %v2041, %v2040
      %v3384 = vpack.c.b16 %v2043, %v2042
      %v3385 = vpack.c.b16 %v2045, %v2044
      %v3386 = vpack.c.b16 %v2047, %v2046
      %v3387 = vpack.c.b16 %v2049, %v2048
      %v3388 = vpack.c.b16 %v2051, %v2050
      %v3389 = vpack.c.b16 %v2053, %v2052
      %v3390 = vpack.c.b16 %v2055, %v2054
      %v3391 = vpack.c.b16 %v2057, %v2056
      %v3392 = vpack.c.b16 %v2059, %v2058
      %v3393 = vpack.c.b16 %v2061, %v2060
      %v3394 = vpack.c.b16 %v2063, %v2062
      %v3395 = vpack.c.b16 %v3367, %v2064
      %v3396 = vpack.c.b16 %v3369, %v3368
      %v3398 = vsel %vm1005, %v3370, 0
      %v3401 = vsel %vm1005, %v3371, 0
      %v3404 = vsel %vm1005, %v3372, 0
      %v3407 = vsel %vm1005, %v3373, 0
      %v3410 = vsel %vm1005, %v3374, 0
      %v3413 = vsel %vm1005, %v3375, 0
      %v3416 = vsel %vm1005, %v3376, 0
      %v3419 = vsel %vm1005, %v3377, 0
      %v3422 = vsel %vm1005, %v3378, 0
      %v3425 = vsel %vm1005, %v3379, 0
      %v3428 = vsel %vm1005, %v3380, 0
      %v3431 = vsel %vm1005, %v3381, 0
      %v3434 = vsel %vm1005, %v3382, 0
      %v3437 = vsel %vm1005, %v3383, 0
      %v3440 = vsel %vm1005, %v3384, 0
      %v3443 = vsel %vm1005, %v3385, 0
      %v3446 = vsel %vm1005, %v3386, 0
      %v3449 = vsel %vm1005, %v3387, 0
      %v3452 = vsel %vm1005, %v3388, 0
      %v3455 = vsel %vm1005, %v3389, 0
      %v3458 = vsel %vm1005, %v3390, 0
      %v3461 = vsel %vm1005, %v3391, 0
      %v3464 = vsel %vm1005, %v3392, 0
      %v3467 = vsel %vm1005, %v3393, 0
      %v3470 = vsel %vm1005, %v3394, 0
      %v3473 = vsel %vm1005, %v3395, 0
      %v3476 = vsel %vm1005, %v3396, 0
      %v3479 = vsel %vm1087, %v3366, 0
      %3481 = vmatprep.subr.bf16.mxu0 0
      %3482 = vmatpush1.bf16.msra.mxu0 %v3479
      %3483 = vmatprep.subr.bf16.mxu0 0
      %3484 = vmatpush1.bf16.msra.mxu0 0
      %3485 = vmatprep.subr.bf16.mxu0 0
      %3486 = vmatpush1.bf16.msra.mxu0 0
      %3487 = vmatprep.subr.bf16.mxu0 0
      %3488 = vmatpush1.bf16.msra.mxu0 0
      %3489 = vmatprep.subr.bf16.mxu0 0
      %3490 = vmatpush1.bf16.msra.mxu0 0
      %3491 = vmatprep.subr.bf16.mxu0 0
      %3492 = vmatpush1.bf16.msra.mxu0 0
      %3493 = vmatprep.subr.bf16.mxu0 0
      %3494 = vmatpush1.bf16.msra.mxu0 0
      %3495 = vmatprep.subr.bf16.mxu0 0
      %3496 = vmatpush1.bf16.msra.mxu0 0
      %3497 = vmatprep.subr.bf16.mxu0 0
      %3498 = vmatpush1.bf16.msra.mxu0 0
      %3499 = vmatprep.subr.bf16.mxu0 0
      %3500 = vmatpush1.bf16.msra.mxu0 0
      %3501 = vmatprep.subr.bf16.mxu0 0
      %3502 = vmatpush1.bf16.msra.mxu0 0
      %3503 = vmatprep.subr.bf16.mxu0 0
      %3504 = vmatpush1.bf16.msra.mxu0 0
      %3505 = vmatprep.subr.bf16.mxu0 0
      %3506 = vmatpush1.bf16.msra.mxu0 0
      %3507 = vmatprep.subr.bf16.mxu0 0
      %3508 = vmatpush1.bf16.msra.mxu0 0
      %3509 = vmatprep.subr.bf16.mxu0 0
      %3510 = vmatpush1.bf16.msra.mxu0 0
      %3511 = vmatprep.subr.bf16.mxu0 0
      %3512 = vmatpush1.bf16.msra.mxu0 0
      %3513 = vmatprep.mubr.bf16.mxu0 0
      %3514 = vmatmul.mubr.bf16.gmra.mrb[0].mxu0 %v3398
      %v3515 = vpop.f32.mrb[0].mxu0
      %v3516 = vadd.f32 0.0, %v3515
      %v3517 = vpop.f32.mrb[0].mxu0
      %v3518 = vpop.f32.mrb[0].mxu0
      %v3519 = vadd.f32 0.0, %v3518
      %v3520 = vpop.f32.mrb[0].mxu0
      %3521 = vmatprep.mubr.bf16.mxu0 0
      %3522 = vmatmul.mubr.bf16.gmra.mrb[0].mxu0 %v3401
      %v3523 = vpop.f32.mrb[0].mxu0
      %v3524 = vadd.f32 0.0, %v3523
      %v3525 = vpop.f32.mrb[0].mxu0
      %v3526 = vpop.f32.mrb[0].mxu0
      %v3527 = vadd.f32 0.0, %v3526
      %v3528 = vpop.f32.mrb[0].mxu0
      %3529 = vmatprep.mubr.bf16.mxu0 0
      %3530 = vmatmul.mubr.bf16.gmra.mrb[0].mxu0 %v3404
      %v3531 = vpop.f32.mrb[0].mxu0
      %v3532 = vadd.f32 0.0, %v3531
      %v3533 = vpop.f32.mrb[0].mxu0
      %v3534 = vpop.f32.mrb[0].mxu0
      %v3535 = vadd.f32 0.0, %v3534
      %v3536 = vpop.f32.mrb[0].mxu0
      %3537 = vmatprep.mubr.bf16.mxu0 0
      %3538 = vmatmul.mubr.bf16.gmra.mrb[0].mxu0 %v3407
      %v3539 = vpop.f32.mrb[0].mxu0
      %v3540 = vadd.f32 0.0, %v3539
      %v3541 = vpop.f32.mrb[0].mxu0
      %v3542 = vpop.f32.mrb[0].mxu0
      %v3543 = vadd.f32 0.0, %v3542
      %v3544 = vpop.f32.mrb[0].mxu0
      %3545 = vmatprep.mubr.bf16.mxu0 0
      %3546 = vmatmul.mubr.bf16.gmra.mrb[0].mxu0 %v3410
      %v3547 = vpop.f32.mrb[0].mxu0
      %v3548 = vadd.f32 0.0, %v3547
      %v3549 = vpop.f32.mrb[0].mxu0
      %v3550 = vpop.f32.mrb[0].mxu0
      %v3551 = vadd.f32 0.0, %v3550
      %v3552 = vpop.f32.mrb[0].mxu0
      %3553 = vmatprep.mubr.bf16.mxu0 0
      %3554 = vmatmul.mubr.bf16.gmra.mrb[0].mxu0 %v3413
      %v3555 = vpop.f32.mrb[0].mxu0
      %v3556 = vadd.f32 0.0, %v3555
      %v3557 = vpop.f32.mrb[0].mxu0
      %v3558 = vpop.f32.mrb[0].mxu0
      %v3559 = vadd.f32 0.0, %v3558
      %v3560 = vpop.f32.mrb[0].mxu0
      %3561 = vmatprep.mubr.bf16.mxu0 0
      %3562 = vmatmul.mubr.bf16.gmra.mrb[0].mxu0 %v3416
      %v3563 = vpop.f32.mrb[0].mxu0
      %v3564 = vadd.f32 0.0, %v3563
      %v3565 = vpop.f32.mrb[0].mxu0
      %v3566 = vpop.f32.mrb[0].mxu0
      %v3567 = vadd.f32 0.0, %v3566
      %v3568 = vpop.f32.mrb[0].mxu0
      %3569 = vmatprep.mubr.bf16.mxu0 0
      %3570 = vmatmul.mubr.bf16.gmra.mrb[0].mxu0 %v3419
      %v3571 = vpop.f32.mrb[0].mxu0
      %v3572 = vadd.f32 0.0, %v3571
      %v3573 = vpop.f32.mrb[0].mxu0
      %v3574 = vpop.f32.mrb[0].mxu0
      %v3575 = vadd.f32 0.0, %v3574
      %v3576 = vpop.f32.mrb[0].mxu0
      %3577 = vmatprep.mubr.bf16.mxu0 0
      %3578 = vmatmul.mubr.bf16.gmra.mrb[0].mxu0 %v3422
      %v3579 = vpop.f32.mrb[0].mxu0
      %v3580 = vadd.f32 0.0, %v3579
      %v3581 = vpop.f32.mrb[0].mxu0
      %v3582 = vpop.f32.mrb[0].mxu0
      %v3583 = vadd.f32 0.0, %v3582
      %v3584 = vpop.f32.mrb[0].mxu0
      %3585 = vmatprep.mubr.bf16.mxu0 0
      %3586 = vmatmul.mubr.bf16.gmra.mrb[0].mxu0 %v3425
      %v3587 = vpop.f32.mrb[0].mxu0
      %v3588 = vadd.f32 0.0, %v3587
      %v3589 = vpop.f32.mrb[0].mxu0
      %v3590 = vpop.f32.mrb[0].mxu0
      %v3591 = vadd.f32 0.0, %v3590
      %v3592 = vpop.f32.mrb[0].mxu0
      %3593 = vmatprep.mubr.bf16.mxu0 0
      %3594 = vmatmul.mubr.bf16.gmra.mrb[0].mxu0 %v3428
      %v3595 = vpop.f32.mrb[0].mxu0
      %v3596 = vadd.f32 0.0, %v3595
      %v3597 = vpop.f32.mrb[0].mxu0
      %v3598 = vpop.f32.mrb[0].mxu0
      %v3599 = vadd.f32 0.0, %v3598
      %v3600 = vpop.f32.mrb[0].mxu0
      %3601 = vmatprep.mubr.bf16.mxu0 0
      %3602 = vmatmul.mubr.bf16.gmra.mrb[0].mxu0 %v3431
      %v3603 = vpop.f32.mrb[0].mxu0
      %v3604 = vadd.f32 0.0, %v3603
      %v3605 = vpop.f32.mrb[0].mxu0
      %v3606 = vpop.f32.mrb[0].mxu0
      %v3607 = vadd.f32 0.0, %v3606
      %v3608 = vpop.f32.mrb[0].mxu0
      %3609 = vmatprep.mubr.bf16.mxu0 0
      %3610 = vmatmul.mubr.bf16.gmra.mrb[0].mxu0 %v3434
      %v3611 = vpop.f32.mrb[0].mxu0
      %v3612 = vadd.f32 0.0, %v3611
      %v3613 = vpop.f32.mrb[0].mxu0
      %v3614 = vpop.f32.mrb[0].mxu0
      %v3615 = vadd.f32 0.0, %v3614
      %v3616 = vpop.f32.mrb[0].mxu0
      %3617 = vmatprep.mubr.bf16.mxu0 0
      %3618 = vmatmul.mubr.bf16.gmra.mrb[0].mxu0 %v3437
      %v3619 = vpop.f32.mrb[0].mxu0
      %v3620 = vadd.f32 0.0, %v3619
      %v3621 = vpop.f32.mrb[0].mxu0
      %v3622 = vpop.f32.mrb[0].mxu0
      %v3623 = vadd.f32 0.0, %v3622
      %v3624 = vpop.f32.mrb[0].mxu0
      %3625 = vmatprep.mubr.bf16.mxu0 0
      %3626 = vmatmul.mubr.bf16.gmra.mrb[0].mxu0 %v3440
      %v3627 = vpop.f32.mrb[0].mxu0
      %v3628 = vadd.f32 0.0, %v3627
      %v3629 = vpop.f32.mrb[0].mxu0
      %v3630 = vpop.f32.mrb[0].mxu0
      %v3631 = vadd.f32 0.0, %v3630
      %v3632 = vpop.f32.mrb[0].mxu0
      %3633 = vmatprep.mubr.bf16.mxu0 0
      %3634 = vmatmul.mubr.bf16.gmra.mrb[0].mxu0 %v3443
      %v3635 = vpop.f32.mrb[0].mxu0
      %v3636 = vadd.f32 0.0, %v3635
      %v3637 = vpop.f32.mrb[0].mxu0
      %v3638 = vpop.f32.mrb[0].mxu0
      %v3639 = vadd.f32 0.0, %v3638
      %v3640 = vpop.f32.mrb[0].mxu0
      %3641 = vmatprep.mubr.bf16.mxu0 0
      %3642 = vmatmul.mubr.bf16.gmra.mrb[0].mxu0 %v3446
      %v3643 = vpop.f32.mrb[0].mxu0
      %v3644 = vadd.f32 0.0, %v3643
      %v3645 = vpop.f32.mrb[0].mxu0
      %v3646 = vpop.f32.mrb[0].mxu0
      %v3647 = vadd.f32 0.0, %v3646
      %v3648 = vpop.f32.mrb[0].mxu0
      %3649 = vmatprep.mubr.bf16.mxu0 0
      %3650 = vmatmul.mubr.bf16.gmra.mrb[0].mxu0 %v3449
      %v3651 = vpop.f32.mrb[0].mxu0
      %v3652 = vadd.f32 0.0, %v3651
      %v3653 = vpop.f32.mrb[0].mxu0
      %v3654 = vpop.f32.mrb[0].mxu0
      %v3655 = vadd.f32 0.0, %v3654
      %v3656 = vpop.f32.mrb[0].mxu0
      %3657 = vmatprep.mubr.bf16.mxu0 0
      %3658 = vmatmul.mubr.bf16.gmra.mrb[0].mxu0 %v3452
      %v3659 = vpop.f32.mrb[0].mxu0
      %v3660 = vadd.f32 0.0, %v3659
      %v3661 = vpop.f32.mrb[0].mxu0
      %v3662 = vpop.f32.mrb[0].mxu0
      %v3663 = vadd.f32 0.0, %v3662
      %v3664 = vpop.f32.mrb[0].mxu0
      %3665 = vmatprep.mubr.bf16.mxu0 0
      %3666 = vmatmul.mubr.bf16.gmra.mrb[0].mxu0 %v3455
      %v3667 = vpop.f32.mrb[0].mxu0
      %v3668 = vadd.f32 0.0, %v3667
      %v3669 = vpop.f32.mrb[0].mxu0
      %v3670 = vpop.f32.mrb[0].mxu0
      %v3671 = vadd.f32 0.0, %v3670
      %v3672 = vpop.f32.mrb[0].mxu0
      %3673 = vmatprep.mubr.bf16.mxu0 0
      %3674 = vmatmul.mubr.bf16.gmra.mrb[0].mxu0 %v3458
      %v3675 = vpop.f32.mrb[0].mxu0
      %v3676 = vadd.f32 0.0, %v3675
      %v3677 = vpop.f32.mrb[0].mxu0
      %v3678 = vpop.f32.mrb[0].mxu0
      %v3679 = vadd.f32 0.0, %v3678
      %v3680 = vpop.f32.mrb[0].mxu0
      %3681 = vmatprep.mubr.bf16.mxu0 0
      %3682 = vmatmul.mubr.bf16.gmra.mrb[0].mxu0 %v3461
      %v3683 = vpop.f32.mrb[0].mxu0
      %v3684 = vadd.f32 0.0, %v3683
      %v3685 = vpop.f32.mrb[0].mxu0
      %v3686 = vpop.f32.mrb[0].mxu0
      %v3687 = vadd.f32 0.0, %v3686
      %v3688 = vpop.f32.mrb[0].mxu0
      %3689 = vmatprep.mubr.bf16.mxu0 0
      %3690 = vmatmul.mubr.bf16.gmra.mrb[0].mxu0 %v3464
      %v3691 = vpop.f32.mrb[0].mxu0
      %v3692 = vadd.f32 0.0, %v3691
      %v3693 = vpop.f32.mrb[0].mxu0
      %v3694 = vpop.f32.mrb[0].mxu0
      %v3695 = vadd.f32 0.0, %v3694
      %v3696 = vpop.f32.mrb[0].mxu0
      %3697 = vmatprep.mubr.bf16.mxu0 0
      %3698 = vmatmul.mubr.bf16.gmra.mrb[0].mxu0 %v3467
      %v3699 = vpop.f32.mrb[0].mxu0
      %v3700 = vadd.f32 0.0, %v3699
      %v3701 = vpop.f32.mrb[0].mxu0
      %v3702 = vpop.f32.mrb[0].mxu0
      %v3703 = vadd.f32 0.0, %v3702
      %v3704 = vpop.f32.mrb[0].mxu0
      %3705 = vmatprep.mubr.bf16.mxu0 0
      %3706 = vmatmul.mubr.bf16.gmra.mrb[0].mxu0 %v3470
      %v3707 = vpop.f32.mrb[0].mxu0
      %v3708 = vadd.f32 0.0, %v3707
      %v3709 = vpop.f32.mrb[0].mxu0
      %v3710 = vpop.f32.mrb[0].mxu0
      %v3711 = vadd.f32 0.0, %v3710
      %v3712 = vpop.f32.mrb[0].mxu0
      %3713 = vmatprep.mubr.bf16.mxu0 0
      %3714 = vmatmul.mubr.bf16.gmra.mrb[0].mxu0 %v3473
      %v3715 = vpop.f32.mrb[0].mxu0
      %v3716 = vadd.f32 0.0, %v3715
      %v3717 = vpop.f32.mrb[0].mxu0
      %v3718 = vpop.f32.mrb[0].mxu0
      %v3719 = vadd.f32 0.0, %v3718
      %v3720 = vpop.f32.mrb[0].mxu0
      %3721 = vmatprep.mubr.bf16.mxu0 0
      %3722 = vmatmul.mubr.bf16.gmra.mrb[0].mxu0 %v3476
      %v3723 = vpop.f32.mrb[0].mxu0
      %v3724 = vadd.f32 0.0, %v3723
      %v3725 = vpop.f32.mrb[0].mxu0
      %v3726 = vpop.f32.mrb[0].mxu0
      %v3727 = vadd.f32 0.0, %v3726
      %v3728 = vpop.f32.mrb[0].mxu0
      %3729 = vdwg.mxu0
      %v3730 = vadd.f32 %v3300, %v3516
      %v3731 = vadd.f32 %v3301, %v3519
      %v3732 = vadd.f32 %v3302, %v3524
      %v3733 = vadd.f32 %v3303, %v3527
      %v3734 = vadd.f32 %v3304, %v3532
      %v3735 = vadd.f32 %v3305, %v3535
      %v3736 = vadd.f32 %v3306, %v3540
      %v3737 = vadd.f32 %v3307, %v3543
      %v3738 = vadd.f32 %v3308, %v3548
      %v3739 = vadd.f32 %v3309, %v3551
      %v3740 = vadd.f32 %v3310, %v3556
      %v3741 = vadd.f32 %v3311, %v3559
      %v3742 = vadd.f32 %v3312, %v3564
      %v3743 = vadd.f32 %v3313, %v3567
      %v3744 = vadd.f32 %v3314, %v3572
      %v3745 = vadd.f32 %v3315, %v3575
      %v3746 = vadd.f32 %v3316, %v3580
      %v3747 = vadd.f32 %v3317, %v3583
      %v3748 = vadd.f32 %v3318, %v3588
      %v3749 = vadd.f32 %v3319, %v3591
      %v3750 = vadd.f32 %v3320, %v3596
      %v3751 = vadd.f32 %v3321, %v3599
      %v3752 = vadd.f32 %v3322, %v3604
      %v3753 = vadd.f32 %v3323, %v3607
      %v3754 = vadd.f32 %v3324, %v3612
      %v3755 = vadd.f32 %v3325, %v3615
      %v3756 = vadd.f32 %v3326, %v3620
      %v3757 = vadd.f32 %v3327, %v3623
      %v3758 = vadd.f32 %v3328, %v3628
      %v3759 = vadd.f32 %v3329, %v3631
      %v3760 = vadd.f32 %v3330, %v3636
      %v3761 = vadd.f32 %v3331, %v3639
      %v3762 = vadd.f32 %v3332, %v3644
      %v3763 = vadd.f32 %v3333, %v3647
      %v3764 = vadd.f32 %v3334, %v3652
      %v3765 = vadd.f32 %v3335, %v3655
      %v3766 = vadd.f32 %v3336, %v3660
      %v3767 = vadd.f32 %v3337, %v3663
      %v3768 = vadd.f32 %v3338, %v3668
      %v3769 = vadd.f32 %v3339, %v3671
      %v3770 = vadd.f32 %v3340, %v3676
      %v3771 = vadd.f32 %v3341, %v3679
      %v3772 = vadd.f32 %v3342, %v3684
      %v3773 = vadd.f32 %v3343, %v3687
      %v3774 = vadd.f32 %v3344, %v3692
      %v3775 = vadd.f32 %v3345, %v3695
      %v3776 = vadd.f32 %v3346, %v3700
      %v3777 = vadd.f32 %v3347, %v3703
      %v3778 = vadd.f32 %v3348, %v3708
      %v3779 = vadd.f32 %v3349, %v3711
      %v3780 = vadd.f32 %v3350, %v3716
      %v3781 = vadd.f32 %v3351, %v3719
      %v3782 = vadd.f32 %v3352, %v3724
      %v3783 = vadd.f32 %v3353, %v3727
      %s3784 = scalar_lea.vmem %s1, 24
      %v3785 = vld [vmem:[%s3784] sm:$0xf]
      %v3789 = vunpack.c.l.b16 %v302
      %v3790 = vunpack.c.l.b16 %v303
      %v3791 = vunpack.c.l.b16 %v304
      %v3792 = vpack.c.b16 %v2485, %v2484
      %v3793 = vpack.c.b16 %v3789, %v2486
      %v3794 = vpack.c.b16 %v3791, %v3790
      %v3796 = vsel %vm1005, %v3792, 0
      %v3799 = vsel %vm1005, %v3793, 0
      %v3802 = vsel %vm1005, %v3794, 0
      %v3805 = vsel %vm1087, %v3785, 0
      %3807 = vmatprep.subr.bf16.mxu0 0
      %3808 = vmatpush1.bf16.msra.mxu0 %v3805
      %3809 = vmatprep.subr.bf16.mxu0 0
      %3810 = vmatpush1.bf16.msra.mxu0 0
      %3811 = vmatprep.subr.bf16.mxu0 0
      %3812 = vmatpush1.bf16.msra.mxu0 0
      %3813 = vmatprep.subr.bf16.mxu0 0
      %3814 = vmatpush1.bf16.msra.mxu0 0
      %3815 = vmatprep.subr.bf16.mxu0 0
      %3816 = vmatpush1.bf16.msra.mxu0 0
      %3817 = vmatprep.subr.bf16.mxu0 0
      %3818 = vmatpush1.bf16.msra.mxu0 0
      %3819 = vmatprep.subr.bf16.mxu0 0
      %3820 = vmatpush1.bf16.msra.mxu0 0
      %3821 = vmatprep.subr.bf16.mxu0 0
      %3822 = vmatpush1.bf16.msra.mxu0 0
      %3823 = vmatprep.subr.bf16.mxu0 0
      %3824 = vmatpush1.bf16.msra.mxu0 0
      %3825 = vmatprep.subr.bf16.mxu0 0
      %3826 = vmatpush1.bf16.msra.mxu0 0
      %3827 = vmatprep.subr.bf16.mxu0 0
      %3828 = vmatpush1.bf16.msra.mxu0 0
      %3829 = vmatprep.subr.bf16.mxu0 0
      %3830 = vmatpush1.bf16.msra.mxu0 0
      %3831 = vmatprep.subr.bf16.mxu0 0
      %3832 = vmatpush1.bf16.msra.mxu0 0
      %3833 = vmatprep.subr.bf16.mxu0 0
      %3834 = vmatpush1.bf16.msra.mxu0 0
      %3835 = vmatprep.subr.bf16.mxu0 0
      %3836 = vmatpush1.bf16.msra.mxu0 0
      %3837 = vmatprep.subr.bf16.mxu0 0
      %3838 = vmatpush1.bf16.msra.mxu0 0
      %3839 = vmatprep.mubr.bf16.mxu0 0
      %3840 = vmatmul.mubr.bf16.gmra.mrb[0].mxu0 %v1485
      %v3841 = vpop.f32.mrb[0].mxu0
      %v3842 = vadd.f32 0.0, %v3841
      %v3843 = vpop.f32.mrb[0].mxu0
      %v3844 = vpop.f32.mrb[0].mxu0
      %v3845 = vadd.f32 0.0, %v3844
      %v3846 = vpop.f32.mrb[0].mxu0
      %3847 = vmatprep.mubr.bf16.mxu0 0
      %3848 = vmatmul.mubr.bf16.gmra.mrb[0].mxu0 %v1488
      %v3849 = vpop.f32.mrb[0].mxu0
      %v3850 = vadd.f32 0.0, %v3849
      %v3851 = vpop.f32.mrb[0].mxu0
      %v3852 = vpop.f32.mrb[0].mxu0
      %v3853 = vadd.f32 0.0, %v3852
      %v3854 = vpop.f32.mrb[0].mxu0
      %3855 = vmatprep.mubr.bf16.mxu0 0
      %3856 = vmatmul.mubr.bf16.gmra.mrb[0].mxu0 %v1491
      %v3857 = vpop.f32.mrb[0].mxu0
      %v3858 = vadd.f32 0.0, %v3857
      %v3859 = vpop.f32.mrb[0].mxu0
      %v3860 = vpop.f32.mrb[0].mxu0
      %v3861 = vadd.f32 0.0, %v3860
      %v3862 = vpop.f32.mrb[0].mxu0
      %3863 = vmatprep.mubr.bf16.mxu0 0
      %3864 = vmatmul.mubr.bf16.gmra.mrb[0].mxu0 %v1494
      %v3865 = vpop.f32.mrb[0].mxu0
      %v3866 = vadd.f32 0.0, %v3865
      %v3867 = vpop.f32.mrb[0].mxu0
      %v3868 = vpop.f32.mrb[0].mxu0
      %v3869 = vadd.f32 0.0, %v3868
      %v3870 = vpop.f32.mrb[0].mxu0
      %3871 = vmatprep.mubr.bf16.mxu0 0
      %3872 = vmatmul.mubr.bf16.gmra.mrb[0].mxu0 %v1497
      %v3873 = vpop.f32.mrb[0].mxu0
      %v3874 = vadd.f32 0.0, %v3873
      %v3875 = vpop.f32.mrb[0].mxu0
      %v3876 = vpop.f32.mrb[0].mxu0
      %v3877 = vadd.f32 0.0, %v3876
      %v3878 = vpop.f32.mrb[0].mxu0
      %3879 = vmatprep.mubr.bf16.mxu0 0
      %3880 = vmatmul.mubr.bf16.gmra.mrb[0].mxu0 %v1500
      %v3881 = vpop.f32.mrb[0].mxu0
      %v3882 = vadd.f32 0.0, %v3881
      %v3883 = vpop.f32.mrb[0].mxu0
      %v3884 = vpop.f32.mrb[0].mxu0
      %v3885 = vadd.f32 0.0, %v3884
      %v3886 = vpop.f32.mrb[0].mxu0
      %3887 = vmatprep.mubr.bf16.mxu0 0
      %3888 = vmatmul.mubr.bf16.gmra.mrb[0].mxu0 %v1503
      %v3889 = vpop.f32.mrb[0].mxu0
      %v3890 = vadd.f32 0.0, %v3889
      %v3891 = vpop.f32.mrb[0].mxu0
      %v3892 = vpop.f32.mrb[0].mxu0
      %v3893 = vadd.f32 0.0, %v3892
      %v3894 = vpop.f32.mrb[0].mxu0
      %3895 = vmatprep.mubr.bf16.mxu0 0
      %3896 = vmatmul.mubr.bf16.gmra.mrb[0].mxu0 %v1506
      %v3897 = vpop.f32.mrb[0].mxu0
      %v3898 = vadd.f32 0.0, %v3897
      %v3899 = vpop.f32.mrb[0].mxu0
      %v3900 = vpop.f32.mrb[0].mxu0
      %v3901 = vadd.f32 0.0, %v3900
      %v3902 = vpop.f32.mrb[0].mxu0
      %3903 = vmatprep.mubr.bf16.mxu0 0
      %3904 = vmatmul.mubr.bf16.gmra.mrb[0].mxu0 %v1509
      %v3905 = vpop.f32.mrb[0].mxu0
      %v3906 = vadd.f32 0.0, %v3905
      %v3907 = vpop.f32.mrb[0].mxu0
      %v3908 = vpop.f32.mrb[0].mxu0
      %v3909 = vadd.f32 0.0, %v3908
      %v3910 = vpop.f32.mrb[0].mxu0
      %3911 = vmatprep.mubr.bf16.mxu0 0
      %3912 = vmatmul.mubr.bf16.gmra.mrb[0].mxu0 %v1512
      %v3913 = vpop.f32.mrb[0].mxu0
      %v3914 = vadd.f32 0.0, %v3913
      %v3915 = vpop.f32.mrb[0].mxu0
      %v3916 = vpop.f32.mrb[0].mxu0
      %v3917 = vadd.f32 0.0, %v3916
      %v3918 = vpop.f32.mrb[0].mxu0
      %3919 = vmatprep.mubr.bf16.mxu0 0
      %3920 = vmatmul.mubr.bf16.gmra.mrb[0].mxu0 %v1515
      %v3921 = vpop.f32.mrb[0].mxu0
      %v3922 = vadd.f32 0.0, %v3921
      %v3923 = vpop.f32.mrb[0].mxu0
      %v3924 = vpop.f32.mrb[0].mxu0
      %v3925 = vadd.f32 0.0, %v3924
      %v3926 = vpop.f32.mrb[0].mxu0
      %3927 = vmatprep.mubr.bf16.mxu0 0
      %3928 = vmatmul.mubr.bf16.gmra.mrb[0].mxu0 %v1518
      %v3929 = vpop.f32.mrb[0].mxu0
      %v3930 = vadd.f32 0.0, %v3929
      %v3931 = vpop.f32.mrb[0].mxu0
      %v3932 = vpop.f32.mrb[0].mxu0
      %v3933 = vadd.f32 0.0, %v3932
      %v3934 = vpop.f32.mrb[0].mxu0
      %3935 = vmatprep.mubr.bf16.mxu0 0
      %3936 = vmatmul.mubr.bf16.gmra.mrb[0].mxu0 %v1521
      %v3937 = vpop.f32.mrb[0].mxu0
      %v3938 = vadd.f32 0.0, %v3937
      %v3939 = vpop.f32.mrb[0].mxu0
      %v3940 = vpop.f32.mrb[0].mxu0
      %v3941 = vadd.f32 0.0, %v3940
      %v3942 = vpop.f32.mrb[0].mxu0
      %3943 = vmatprep.mubr.bf16.mxu0 0
      %3944 = vmatmul.mubr.bf16.gmra.mrb[0].mxu0 %v1524
      %v3945 = vpop.f32.mrb[0].mxu0
      %v3946 = vadd.f32 0.0, %v3945
      %v3947 = vpop.f32.mrb[0].mxu0
      %v3948 = vpop.f32.mrb[0].mxu0
      %v3949 = vadd.f32 0.0, %v3948
      %v3950 = vpop.f32.mrb[0].mxu0
      %3951 = vmatprep.mubr.bf16.mxu0 0
      %3952 = vmatmul.mubr.bf16.gmra.mrb[0].mxu0 %v1527
      %v3953 = vpop.f32.mrb[0].mxu0
      %v3954 = vadd.f32 0.0, %v3953
      %v3955 = vpop.f32.mrb[0].mxu0
      %v3956 = vpop.f32.mrb[0].mxu0
      %v3957 = vadd.f32 0.0, %v3956
      %v3958 = vpop.f32.mrb[0].mxu0
      %3959 = vmatprep.mubr.bf16.mxu0 0
      %3960 = vmatmul.mubr.bf16.gmra.mrb[0].mxu0 %v1530
      %v3961 = vpop.f32.mrb[0].mxu0
      %v3962 = vadd.f32 0.0, %v3961
      %v3963 = vpop.f32.mrb[0].mxu0
      %v3964 = vpop.f32.mrb[0].mxu0
      %v3965 = vadd.f32 0.0, %v3964
      %v3966 = vpop.f32.mrb[0].mxu0
      %3967 = vmatprep.mubr.bf16.mxu0 0
      %3968 = vmatmul.mubr.bf16.gmra.mrb[0].mxu0 %v1533
      %v3969 = vpop.f32.mrb[0].mxu0
      %v3970 = vadd.f32 0.0, %v3969
      %v3971 = vpop.f32.mrb[0].mxu0
      %v3972 = vpop.f32.mrb[0].mxu0
      %v3973 = vadd.f32 0.0, %v3972
      %v3974 = vpop.f32.mrb[0].mxu0
      %3975 = vmatprep.mubr.bf16.mxu0 0
      %3976 = vmatmul.mubr.bf16.gmra.mrb[0].mxu0 %v1536
      %v3977 = vpop.f32.mrb[0].mxu0
      %v3978 = vadd.f32 0.0, %v3977
      %v3979 = vpop.f32.mrb[0].mxu0
      %v3980 = vpop.f32.mrb[0].mxu0
      %v3981 = vadd.f32 0.0, %v3980
      %v3982 = vpop.f32.mrb[0].mxu0
      %3983 = vmatprep.mubr.bf16.mxu0 0
      %3984 = vmatmul.mubr.bf16.gmra.mrb[0].mxu0 %v1539
      %v3985 = vpop.f32.mrb[0].mxu0
      %v3986 = vadd.f32 0.0, %v3985
      %v3987 = vpop.f32.mrb[0].mxu0
      %v3988 = vpop.f32.mrb[0].mxu0
      %v3989 = vadd.f32 0.0, %v3988
      %v3990 = vpop.f32.mrb[0].mxu0
      %3991 = vmatprep.mubr.bf16.mxu0 0
      %3992 = vmatmul.mubr.bf16.gmra.mrb[0].mxu0 %v1542
      %v3993 = vpop.f32.mrb[0].mxu0
      %v3994 = vadd.f32 0.0, %v3993
      %v3995 = vpop.f32.mrb[0].mxu0
      %v3996 = vpop.f32.mrb[0].mxu0
      %v3997 = vadd.f32 0.0, %v3996
      %v3998 = vpop.f32.mrb[0].mxu0
      %3999 = vmatprep.mubr.bf16.mxu0 0
      %4000 = vmatmul.mubr.bf16.gmra.mrb[0].mxu0 %v1545
      %v4001 = vpop.f32.mrb[0].mxu0
      %v4002 = vadd.f32 0.0, %v4001
      %v4003 = vpop.f32.mrb[0].mxu0
      %v4004 = vpop.f32.mrb[0].mxu0
      %v4005 = vadd.f32 0.0, %v4004
      %v4006 = vpop.f32.mrb[0].mxu0
      %4007 = vmatprep.mubr.bf16.mxu0 0
      %4008 = vmatmul.mubr.bf16.gmra.mrb[0].mxu0 %v1548
      %v4009 = vpop.f32.mrb[0].mxu0
      %v4010 = vadd.f32 0.0, %v4009
      %v4011 = vpop.f32.mrb[0].mxu0
      %v4012 = vpop.f32.mrb[0].mxu0
      %v4013 = vadd.f32 0.0, %v4012
      %v4014 = vpop.f32.mrb[0].mxu0
      %4015 = vmatprep.mubr.bf16.mxu0 0
      %4016 = vmatmul.mubr.bf16.gmra.mrb[0].mxu0 %v1551
      %v4017 = vpop.f32.mrb[0].mxu0
      %v4018 = vadd.f32 0.0, %v4017
      %v4019 = vpop.f32.mrb[0].mxu0
      %v4020 = vpop.f32.mrb[0].mxu0
      %v4021 = vadd.f32 0.0, %v4020
      %v4022 = vpop.f32.mrb[0].mxu0
      %4023 = vmatprep.mubr.bf16.mxu0 0
      %4024 = vmatmul.mubr.bf16.gmra.mrb[0].mxu0 %v1554
      %v4025 = vpop.f32.mrb[0].mxu0
      %v4026 = vadd.f32 0.0, %v4025
      %v4027 = vpop.f32.mrb[0].mxu0
      %v4028 = vpop.f32.mrb[0].mxu0
      %v4029 = vadd.f32 0.0, %v4028
      %v4030 = vpop.f32.mrb[0].mxu0
      %4031 = vmatprep.mubr.bf16.mxu0 0
      %4032 = vmatmul.mubr.bf16.gmra.mrb[0].mxu0 %v3796
      %v4033 = vpop.f32.mrb[0].mxu0
      %v4034 = vadd.f32 0.0, %v4033
      %v4035 = vpop.f32.mrb[0].mxu0
      %v4036 = vpop.f32.mrb[0].mxu0
      %v4037 = vadd.f32 0.0, %v4036
      %v4038 = vpop.f32.mrb[0].mxu0
      %4039 = vmatprep.mubr.bf16.mxu0 0
      %4040 = vmatmul.mubr.bf16.gmra.mrb[0].mxu0 %v3799
      %v4041 = vpop.f32.mrb[0].mxu0
      %v4042 = vadd.f32 0.0, %v4041
      %v4043 = vpop.f32.mrb[0].mxu0
      %v4044 = vpop.f32.mrb[0].mxu0
      %v4045 = vadd.f32 0.0, %v4044
      %v4046 = vpop.f32.mrb[0].mxu0
      %4047 = vmatprep.mubr.bf16.mxu0 0
      %4048 = vmatmul.mubr.bf16.gmra.mrb[0].mxu0 %v3802
      %v4049 = vpop.f32.mrb[0].mxu0
      %v4050 = vadd.f32 0.0, %v4049
      %v4051 = vpop.f32.mrb[0].mxu0
      %v4052 = vpop.f32.mrb[0].mxu0
      %v4053 = vadd.f32 0.0, %v4052
      %v4054 = vpop.f32.mrb[0].mxu0
      %4055 = vdwg.mxu0
      %v4056 = vadd.f32 %v3730, %v3842
      %v4057 = vadd.f32 %v3731, %v3845
      %v4058 = vadd.f32 %v3732, %v3850
      %v4059 = vadd.f32 %v3733, %v3853
      %v4060 = vadd.f32 %v3734, %v3858
      %v4061 = vadd.f32 %v3735, %v3861
      %v4062 = vadd.f32 %v3736, %v3866
      %v4063 = vadd.f32 %v3737, %v3869
      %v4064 = vadd.f32 %v3738, %v3874
      %v4065 = vadd.f32 %v3739, %v3877
      %v4066 = vadd.f32 %v3740, %v3882
      %v4067 = vadd.f32 %v3741, %v3885
      %v4068 = vadd.f32 %v3742, %v3890
      %v4069 = vadd.f32 %v3743, %v3893
      %v4070 = vadd.f32 %v3744, %v3898
      %v4071 = vadd.f32 %v3745, %v3901
      %v4072 = vadd.f32 %v3746, %v3906
      %v4073 = vadd.f32 %v3747, %v3909
      %v4074 = vadd.f32 %v3748, %v3914
      %v4075 = vadd.f32 %v3749, %v3917
      %v4076 = vadd.f32 %v3750, %v3922
      %v4077 = vadd.f32 %v3751, %v3925
      %v4078 = vadd.f32 %v3752, %v3930
      %v4079 = vadd.f32 %v3753, %v3933
      %v4080 = vadd.f32 %v3754, %v3938
      %v4081 = vadd.f32 %v3755, %v3941
      %v4082 = vadd.f32 %v3756, %v3946
      %v4083 = vadd.f32 %v3757, %v3949
      %v4084 = vadd.f32 %v3758, %v3954
      %v4085 = vadd.f32 %v3759, %v3957
      %v4086 = vadd.f32 %v3760, %v3962
      %v4087 = vadd.f32 %v3761, %v3965
      %v4088 = vadd.f32 %v3762, %v3970
      %v4089 = vadd.f32 %v3763, %v3973
      %v4090 = vadd.f32 %v3764, %v3978
      %v4091 = vadd.f32 %v3765, %v3981
      %v4092 = vadd.f32 %v3766, %v3986
      %v4093 = vadd.f32 %v3767, %v3989
      %v4094 = vadd.f32 %v3768, %v3994
      %v4095 = vadd.f32 %v3769, %v3997
      %v4096 = vadd.f32 %v3770, %v4002
      %v4097 = vadd.f32 %v3771, %v4005
      %v4098 = vadd.f32 %v3772, %v4010
      %v4099 = vadd.f32 %v3773, %v4013
      %v4100 = vadd.f32 %v3774, %v4018
      %v4101 = vadd.f32 %v3775, %v4021
      %v4102 = vadd.f32 %v3776, %v4026
      %v4103 = vadd.f32 %v3777, %v4029
      %v4104 = vadd.f32 %v3778, %v4034
      %v4105 = vadd.f32 %v3779, %v4037
      %v4106 = vadd.f32 %v3780, %v4042
      %v4107 = vadd.f32 %v3781, %v4045
      %v4108 = vadd.f32 %v3782, %v4050
      %v4109 = vadd.f32 %v3783, %v4053
      %v4111 = vshrl.u32 %v302, 16
      %v4113 = vrot.slane %v4111, 4
      %v4114 = vshll.u32 %v302, 16
      %v4116 = vrot.slane %v4114, 5
      %v4117 = vor.u32 %v4113, %v4116
      %v4118 = vrot.slane %v4117, 4
      %v4120 = vshll.u32 %v303, 16
      %v4122 = vrot.slane %v4120, 5
      %v4123 = vsel %vm309, %v4118, %v4122
      %v4124 = vshrl.u32 %v303, 16
      %v4126 = vrot.slane %v4124, 4
      %v4127 = vor.u32 %v4126, %v4122
      %v4128 = vrot.slane %v4127, 4
      %v4130 = vshll.u32 %v304, 16
      %v4132 = vrot.slane %v4130, 5
      %v4133 = vsel %vm309, %v4128, %v4132
      %v4134 = vshrl.u32 %v304, 16
      %v4136 = vrot.slane %v4134, 4
      %v4137 = vor.u32 %v4136, %v4132
      %v4138 = vrot.slane %v4137, 4
      %v4140 = vshll.u32 %v305, 16
      %v4142 = vrot.slane %v4140, 5
      %v4143 = vsel %vm309, %v4138, %v4142
      %s4144 = scalar_lea.vmem %s1, 28
      %v4145 = vld [vmem:[%s4144] sm:$0xf]
      %v4146 = vunpack.c.l.b16 %v4123
      %v4147 = vunpack.c.l.b16 %v4133
      %v4148 = vunpack.c.l.b16 %v4143
      %v4149 = vpack.c.b16 %v2938, %v2937
      %v4150 = vpack.c.b16 %v4146, %v2939
      %v4151 = vpack.c.b16 %v4148, %v4147
      %v4153 = vsel %vm1005, %v4149, 0
      %v4156 = vsel %vm1005, %v4150, 0
      %v4159 = vsel %vm1005, %v4151, 0
      %v4162 = vsel %vm1087, %v4145, 0
      %4164 = vmatprep.subr.bf16.mxu0 0
      %4165 = vmatpush1.bf16.msra.mxu0 %v4162
      %4166 = vmatprep.subr.bf16.mxu0 0
      %4167 = vmatpush1.bf16.msra.mxu0 0
      %4168 = vmatprep.subr.bf16.mxu0 0
      %4169 = vmatpush1.bf16.msra.mxu0 0
      %4170 = vmatprep.subr.bf16.mxu0 0
      %4171 = vmatpush1.bf16.msra.mxu0 0
      %4172 = vmatprep.subr.bf16.mxu0 0
      %4173 = vmatpush1.bf16.msra.mxu0 0
      %4174 = vmatprep.subr.bf16.mxu0 0
      %4175 = vmatpush1.bf16.msra.mxu0 0
      %4176 = vmatprep.subr.bf16.mxu0 0
      %4177 = vmatpush1.bf16.msra.mxu0 0
      %4178 = vmatprep.subr.bf16.mxu0 0
      %4179 = vmatpush1.bf16.msra.mxu0 0
      %4180 = vmatprep.subr.bf16.mxu0 0
      %4181 = vmatpush1.bf16.msra.mxu0 0
      %4182 = vmatprep.subr.bf16.mxu0 0
      %4183 = vmatpush1.bf16.msra.mxu0 0
      %4184 = vmatprep.subr.bf16.mxu0 0
      %4185 = vmatpush1.bf16.msra.mxu0 0
      %4186 = vmatprep.subr.bf16.mxu0 0
      %4187 = vmatpush1.bf16.msra.mxu0 0
      %4188 = vmatprep.subr.bf16.mxu0 0
      %4189 = vmatpush1.bf16.msra.mxu0 0
      %4190 = vmatprep.subr.bf16.mxu0 0
      %4191 = vmatpush1.bf16.msra.mxu0 0
      %4192 = vmatprep.subr.bf16.mxu0 0
      %4193 = vmatpush1.bf16.msra.mxu0 0
      %4194 = vmatprep.subr.bf16.mxu0 0
      %4195 = vmatpush1.bf16.msra.mxu0 0
      %4196 = vmatprep.mubr.bf16.mxu0 0
      %4197 = vmatmul.mubr.bf16.gmra.mrb[0].mxu0 %v1016
      %v4198 = vpop.f32.mrb[0].mxu0
      %v4199 = vadd.f32 0.0, %v4198
      %v4200 = vpop.f32.mrb[0].mxu0
      %v4201 = vpop.f32.mrb[0].mxu0
      %v4202 = vadd.f32 0.0, %v4201
      %v4203 = vpop.f32.mrb[0].mxu0
      %4204 = vmatprep.mubr.bf16.mxu0 0
      %4205 = vmatmul.mubr.bf16.gmra.mrb[0].mxu0 %v1019
      %v4206 = vpop.f32.mrb[0].mxu0
      %v4207 = vadd.f32 0.0, %v4206
      %v4208 = vpop.f32.mrb[0].mxu0
      %v4209 = vpop.f32.mrb[0].mxu0
      %v4210 = vadd.f32 0.0, %v4209
      %v4211 = vpop.f32.mrb[0].mxu0
      %4212 = vmatprep.mubr.bf16.mxu0 0
      %4213 = vmatmul.mubr.bf16.gmra.mrb[0].mxu0 %v1022
      %v4214 = vpop.f32.mrb[0].mxu0
      %v4215 = vadd.f32 0.0, %v4214
      %v4216 = vpop.f32.mrb[0].mxu0
      %v4217 = vpop.f32.mrb[0].mxu0
      %v4218 = vadd.f32 0.0, %v4217
      %v4219 = vpop.f32.mrb[0].mxu0
      %4220 = vmatprep.mubr.bf16.mxu0 0
      %4221 = vmatmul.mubr.bf16.gmra.mrb[0].mxu0 %v1025
      %v4222 = vpop.f32.mrb[0].mxu0
      %v4223 = vadd.f32 0.0, %v4222
      %v4224 = vpop.f32.mrb[0].mxu0
      %v4225 = vpop.f32.mrb[0].mxu0
      %v4226 = vadd.f32 0.0, %v4225
      %v4227 = vpop.f32.mrb[0].mxu0
      %4228 = vmatprep.mubr.bf16.mxu0 0
      %4229 = vmatmul.mubr.bf16.gmra.mrb[0].mxu0 %v1028
      %v4230 = vpop.f32.mrb[0].mxu0
      %v4231 = vadd.f32 0.0, %v4230
      %v4232 = vpop.f32.mrb[0].mxu0
      %v4233 = vpop.f32.mrb[0].mxu0
      %v4234 = vadd.f32 0.0, %v4233
      %v4235 = vpop.f32.mrb[0].mxu0
      %4236 = vmatprep.mubr.bf16.mxu0 0
      %4237 = vmatmul.mubr.bf16.gmra.mrb[0].mxu0 %v1031
      %v4238 = vpop.f32.mrb[0].mxu0
      %v4239 = vadd.f32 0.0, %v4238
      %v4240 = vpop.f32.mrb[0].mxu0
      %v4241 = vpop.f32.mrb[0].mxu0
      %v4242 = vadd.f32 0.0, %v4241
      %v4243 = vpop.f32.mrb[0].mxu0
      %4244 = vmatprep.mubr.bf16.mxu0 0
      %4245 = vmatmul.mubr.bf16.gmra.mrb[0].mxu0 %v1034
      %v4246 = vpop.f32.mrb[0].mxu0
      %v4247 = vadd.f32 0.0, %v4246
      %v4248 = vpop.f32.mrb[0].mxu0
      %v4249 = vpop.f32.mrb[0].mxu0
      %v4250 = vadd.f32 0.0, %v4249
      %v4251 = vpop.f32.mrb[0].mxu0
      %4252 = vmatprep.mubr.bf16.mxu0 0
      %4253 = vmatmul.mubr.bf16.gmra.mrb[0].mxu0 %v1037
      %v4254 = vpop.f32.mrb[0].mxu0
      %v4255 = vadd.f32 0.0, %v4254
      %v4256 = vpop.f32.mrb[0].mxu0
      %v4257 = vpop.f32.mrb[0].mxu0
      %v4258 = vadd.f32 0.0, %v4257
      %v4259 = vpop.f32.mrb[0].mxu0
      %4260 = vmatprep.mubr.bf16.mxu0 0
      %4261 = vmatmul.mubr.bf16.gmra.mrb[0].mxu0 %v1040
      %v4262 = vpop.f32.mrb[0].mxu0
      %v4263 = vadd.f32 0.0, %v4262
      %v4264 = vpop.f32.mrb[0].mxu0
      %v4265 = vpop.f32.mrb[0].mxu0
      %v4266 = vadd.f32 0.0, %v4265
      %v4267 = vpop.f32.mrb[0].mxu0
      %4268 = vmatprep.mubr.bf16.mxu0 0
      %4269 = vmatmul.mubr.bf16.gmra.mrb[0].mxu0 %v1043
      %v4270 = vpop.f32.mrb[0].mxu0
      %v4271 = vadd.f32 0.0, %v4270
      %v4272 = vpop.f32.mrb[0].mxu0
      %v4273 = vpop.f32.mrb[0].mxu0
      %v4274 = vadd.f32 0.0, %v4273
      %v4275 = vpop.f32.mrb[0].mxu0
      %4276 = vmatprep.mubr.bf16.mxu0 0
      %4277 = vmatmul.mubr.bf16.gmra.mrb[0].mxu0 %v1046
      %v4278 = vpop.f32.mrb[0].mxu0
      %v4279 = vadd.f32 0.0, %v4278
      %v4280 = vpop.f32.mrb[0].mxu0
      %v4281 = vpop.f32.mrb[0].mxu0
      %v4282 = vadd.f32 0.0, %v4281
      %v4283 = vpop.f32.mrb[0].mxu0
      %4284 = vmatprep.mubr.bf16.mxu0 0
      %4285 = vmatmul.mubr.bf16.gmra.mrb[0].mxu0 %v1049
      %v4286 = vpop.f32.mrb[0].mxu0
      %v4287 = vadd.f32 0.0, %v4286
      %v4288 = vpop.f32.mrb[0].mxu0
      %v4289 = vpop.f32.mrb[0].mxu0
      %v4290 = vadd.f32 0.0, %v4289
      %v4291 = vpop.f32.mrb[0].mxu0
      %4292 = vmatprep.mubr.bf16.mxu0 0
      %4293 = vmatmul.mubr.bf16.gmra.mrb[0].mxu0 %v1052
      %v4294 = vpop.f32.mrb[0].mxu0
      %v4295 = vadd.f32 0.0, %v4294
      %v4296 = vpop.f32.mrb[0].mxu0
      %v4297 = vpop.f32.mrb[0].mxu0
      %v4298 = vadd.f32 0.0, %v4297
      %v4299 = vpop.f32.mrb[0].mxu0
      %4300 = vmatprep.mubr.bf16.mxu0 0
      %4301 = vmatmul.mubr.bf16.gmra.mrb[0].mxu0 %v1055
      %v4302 = vpop.f32.mrb[0].mxu0
      %v4303 = vadd.f32 0.0, %v4302
      %v4304 = vpop.f32.mrb[0].mxu0
      %v4305 = vpop.f32.mrb[0].mxu0
      %v4306 = vadd.f32 0.0, %v4305
      %v4307 = vpop.f32.mrb[0].mxu0
      %4308 = vmatprep.mubr.bf16.mxu0 0
      %4309 = vmatmul.mubr.bf16.gmra.mrb[0].mxu0 %v1058
      %v4310 = vpop.f32.mrb[0].mxu0
      %v4311 = vadd.f32 0.0, %v4310
      %v4312 = vpop.f32.mrb[0].mxu0
      %v4313 = vpop.f32.mrb[0].mxu0
      %v4314 = vadd.f32 0.0, %v4313
      %v4315 = vpop.f32.mrb[0].mxu0
      %4316 = vmatprep.mubr.bf16.mxu0 0
      %4317 = vmatmul.mubr.bf16.gmra.mrb[0].mxu0 %v1061
      %v4318 = vpop.f32.mrb[0].mxu0
      %v4319 = vadd.f32 0.0, %v4318
      %v4320 = vpop.f32.mrb[0].mxu0
      %v4321 = vpop.f32.mrb[0].mxu0
      %v4322 = vadd.f32 0.0, %v4321
      %v4323 = vpop.f32.mrb[0].mxu0
      %4324 = vmatprep.mubr.bf16.mxu0 0
      %4325 = vmatmul.mubr.bf16.gmra.mrb[0].mxu0 %v1064
      %v4326 = vpop.f32.mrb[0].mxu0
      %v4327 = vadd.f32 0.0, %v4326
      %v4328 = vpop.f32.mrb[0].mxu0
      %v4329 = vpop.f32.mrb[0].mxu0
      %v4330 = vadd.f32 0.0, %v4329
      %v4331 = vpop.f32.mrb[0].mxu0
      %4332 = vmatprep.mubr.bf16.mxu0 0
      %4333 = vmatmul.mubr.bf16.gmra.mrb[0].mxu0 %v1067
      %v4334 = vpop.f32.mrb[0].mxu0
      %v4335 = vadd.f32 0.0, %v4334
      %v4336 = vpop.f32.mrb[0].mxu0
      %v4337 = vpop.f32.mrb[0].mxu0
      %v4338 = vadd.f32 0.0, %v4337
      %v4339 = vpop.f32.mrb[0].mxu0
      %4340 = vmatprep.mubr.bf16.mxu0 0
      %4341 = vmatmul.mubr.bf16.gmra.mrb[0].mxu0 %v1070
      %v4342 = vpop.f32.mrb[0].mxu0
      %v4343 = vadd.f32 0.0, %v4342
      %v4344 = vpop.f32.mrb[0].mxu0
      %v4345 = vpop.f32.mrb[0].mxu0
      %v4346 = vadd.f32 0.0, %v4345
      %v4347 = vpop.f32.mrb[0].mxu0
      %4348 = vmatprep.mubr.bf16.mxu0 0
      %4349 = vmatmul.mubr.bf16.gmra.mrb[0].mxu0 %v1073
      %v4350 = vpop.f32.mrb[0].mxu0
      %v4351 = vadd.f32 0.0, %v4350
      %v4352 = vpop.f32.mrb[0].mxu0
      %v4353 = vpop.f32.mrb[0].mxu0
      %v4354 = vadd.f32 0.0, %v4353
      %v4355 = vpop.f32.mrb[0].mxu0
      %4356 = vmatprep.mubr.bf16.mxu0 0
      %4357 = vmatmul.mubr.bf16.gmra.mrb[0].mxu0 %v1076
      %v4358 = vpop.f32.mrb[0].mxu0
      %v4359 = vadd.f32 0.0, %v4358
      %v4360 = vpop.f32.mrb[0].mxu0
      %v4361 = vpop.f32.mrb[0].mxu0
      %v4362 = vadd.f32 0.0, %v4361
      %v4363 = vpop.f32.mrb[0].mxu0
      %4364 = vmatprep.mubr.bf16.mxu0 0
      %4365 = vmatmul.mubr.bf16.gmra.mrb[0].mxu0 %v1079
      %v4366 = vpop.f32.mrb[0].mxu0
      %v4367 = vadd.f32 0.0, %v4366
      %v4368 = vpop.f32.mrb[0].mxu0
      %v4369 = vpop.f32.mrb[0].mxu0
      %v4370 = vadd.f32 0.0, %v4369
      %v4371 = vpop.f32.mrb[0].mxu0
      %4372 = vmatprep.mubr.bf16.mxu0 0
      %4373 = vmatmul.mubr.bf16.gmra.mrb[0].mxu0 %v1082
      %v4374 = vpop.f32.mrb[0].mxu0
      %v4375 = vadd.f32 0.0, %v4374
      %v4376 = vpop.f32.mrb[0].mxu0
      %v4377 = vpop.f32.mrb[0].mxu0
      %v4378 = vadd.f32 0.0, %v4377
      %v4379 = vpop.f32.mrb[0].mxu0
      %4380 = vmatprep.mubr.bf16.mxu0 0
      %4381 = vmatmul.mubr.bf16.gmra.mrb[0].mxu0 %v1085
      %v4382 = vpop.f32.mrb[0].mxu0
      %v4383 = vadd.f32 0.0, %v4382
      %v4384 = vpop.f32.mrb[0].mxu0
      %v4385 = vpop.f32.mrb[0].mxu0
      %v4386 = vadd.f32 0.0, %v4385
      %v4387 = vpop.f32.mrb[0].mxu0
      %4388 = vmatprep.mubr.bf16.mxu0 0
      %4389 = vmatmul.mubr.bf16.gmra.mrb[0].mxu0 %v4153
      %v4390 = vpop.f32.mrb[0].mxu0
      %v4391 = vadd.f32 0.0, %v4390
      %v4392 = vpop.f32.mrb[0].mxu0
      %v4393 = vpop.f32.mrb[0].mxu0
      %v4394 = vadd.f32 0.0, %v4393
      %v4395 = vpop.f32.mrb[0].mxu0
      %4396 = vmatprep.mubr.bf16.mxu0 0
      %4397 = vmatmul.mubr.bf16.gmra.mrb[0].mxu0 %v4156
      %v4398 = vpop.f32.mrb[0].mxu0
      %v4399 = vadd.f32 0.0, %v4398
      %v4400 = vpop.f32.mrb[0].mxu0
      %v4401 = vpop.f32.mrb[0].mxu0
      %v4402 = vadd.f32 0.0, %v4401
      %v4403 = vpop.f32.mrb[0].mxu0
      %4404 = vmatprep.mubr.bf16.mxu0 0
      %4405 = vmatmul.mubr.bf16.gmra.mrb[0].mxu0 %v4159
      %v4406 = vpop.f32.mrb[0].mxu0
      %v4407 = vadd.f32 0.0, %v4406
      %v4408 = vpop.f32.mrb[0].mxu0
      %v4409 = vpop.f32.mrb[0].mxu0
      %v4410 = vadd.f32 0.0, %v4409
      %v4411 = vpop.f32.mrb[0].mxu0
      %4412 = vdwg.mxu0
      %v4413 = vadd.f32 %v4056, %v4199
      %v4414 = vadd.f32 %v4057, %v4202
      %v4415 = vadd.f32 %v4058, %v4207
      %v4416 = vadd.f32 %v4059, %v4210
      %v4417 = vadd.f32 %v4060, %v4215
      %v4418 = vadd.f32 %v4061, %v4218
      %v4419 = vadd.f32 %v4062, %v4223
      %v4420 = vadd.f32 %v4063, %v4226
      %v4421 = vadd.f32 %v4064, %v4231
      %v4422 = vadd.f32 %v4065, %v4234
      %v4423 = vadd.f32 %v4066, %v4239
      %v4424 = vadd.f32 %v4067, %v4242
      %v4425 = vadd.f32 %v4068, %v4247
      %v4426 = vadd.f32 %v4069, %v4250
      %v4427 = vadd.f32 %v4070, %v4255
      %v4428 = vadd.f32 %v4071, %v4258
      %v4429 = vadd.f32 %v4072, %v4263
      %v4430 = vadd.f32 %v4073, %v4266
      %v4431 = vadd.f32 %v4074, %v4271
      %v4432 = vadd.f32 %v4075, %v4274
      %v4433 = vadd.f32 %v4076, %v4279
      %v4434 = vadd.f32 %v4077, %v4282
      %v4435 = vadd.f32 %v4078, %v4287
      %v4436 = vadd.f32 %v4079, %v4290
      %v4437 = vadd.f32 %v4080, %v4295
      %v4438 = vadd.f32 %v4081, %v4298
      %v4439 = vadd.f32 %v4082, %v4303
      %v4440 = vadd.f32 %v4083, %v4306
      %v4441 = vadd.f32 %v4084, %v4311
      %v4442 = vadd.f32 %v4085, %v4314
      %v4443 = vadd.f32 %v4086, %v4319
      %v4444 = vadd.f32 %v4087, %v4322
      %v4445 = vadd.f32 %v4088, %v4327
      %v4446 = vadd.f32 %v4089, %v4330
      %v4447 = vadd.f32 %v4090, %v4335
      %v4448 = vadd.f32 %v4091, %v4338
      %v4449 = vadd.f32 %v4092, %v4343
      %v4450 = vadd.f32 %v4093, %v4346
      %v4451 = vadd.f32 %v4094, %v4351
      %v4452 = vadd.f32 %v4095, %v4354
      %v4453 = vadd.f32 %v4096, %v4359
      %v4454 = vadd.f32 %v4097, %v4362
      %v4455 = vadd.f32 %v4098, %v4367
      %v4456 = vadd.f32 %v4099, %v4370
      %v4457 = vadd.f32 %v4100, %v4375
      %v4458 = vadd.f32 %v4101, %v4378
      %v4459 = vadd.f32 %v4102, %v4383
      %v4460 = vadd.f32 %v4103, %v4386
      %v4461 = vadd.f32 %v4104, %v4391
      %v4462 = vadd.f32 %v4105, %v4394
      %v4463 = vadd.f32 %v4106, %v4399
      %v4464 = vadd.f32 %v4107, %v4402
      %v4465 = vadd.f32 %v4108, %v4407
      %v4466 = vadd.f32 %v4109, %v4410
      %v4468 = vrot.slane %v302, 5
      %v4469 = vrot.slane %v4468, 4
      %v4470 = vrot.slane %v303, 5
      %v4471 = vsel %vm1828, %v4469, %v4470
      %v4472 = vrot.slane %v4470, 4
      %v4473 = vrot.slane %v304, 5
      %v4474 = vsel %vm1828, %v4472, %v4473
      %v4475 = vrot.slane %v4473, 4
      %v4476 = vrot.slane %v305, 5
      %v4477 = vsel %vm1828, %v4475, %v4476
      %s4478 = scalar_lea.vmem %s1, 32
      %v4479 = vld [vmem:[%s4478] sm:$0xf]
      %v4480 = vunpack.c.l.b16 %v4471
      %v4481 = vunpack.c.l.b16 %v4474
      %v4482 = vunpack.c.l.b16 %v4477
      %v4483 = vpack.c.b16 %v3368, %v3367
      %v4484 = vpack.c.b16 %v4480, %v3369
      %v4485 = vpack.c.b16 %v4482, %v4481
      %v4487 = vsel %vm1005, %v4483, 0
      %v4490 = vsel %vm1005, %v4484, 0
      %v4493 = vsel %vm1005, %v4485, 0
      %v4496 = vsel %vm1087, %v4479, 0
      %4498 = vmatprep.subr.bf16.mxu0 0
      %4499 = vmatpush1.bf16.msra.mxu0 %v4496
      %4500 = vmatprep.subr.bf16.mxu0 0
      %4501 = vmatpush1.bf16.msra.mxu0 0
      %4502 = vmatprep.subr.bf16.mxu0 0
      %4503 = vmatpush1.bf16.msra.mxu0 0
      %4504 = vmatprep.subr.bf16.mxu0 0
      %4505 = vmatpush1.bf16.msra.mxu0 0
      %4506 = vmatprep.subr.bf16.mxu0 0
      %4507 = vmatpush1.bf16.msra.mxu0 0
      %4508 = vmatprep.subr.bf16.mxu0 0
      %4509 = vmatpush1.bf16.msra.mxu0 0
      %4510 = vmatprep.subr.bf16.mxu0 0
      %4511 = vmatpush1.bf16.msra.mxu0 0
      %4512 = vmatprep.subr.bf16.mxu0 0
      %4513 = vmatpush1.bf16.msra.mxu0 0
      %4514 = vmatprep.subr.bf16.mxu0 0
      %4515 = vmatpush1.bf16.msra.mxu0 0
      %4516 = vmatprep.subr.bf16.mxu0 0
      %4517 = vmatpush1.bf16.msra.mxu0 0
      %4518 = vmatprep.subr.bf16.mxu0 0
      %4519 = vmatpush1.bf16.msra.mxu0 0
      %4520 = vmatprep.subr.bf16.mxu0 0
      %4521 = vmatpush1.bf16.msra.mxu0 0
      %4522 = vmatprep.subr.bf16.mxu0 0
      %4523 = vmatpush1.bf16.msra.mxu0 0
      %4524 = vmatprep.subr.bf16.mxu0 0
      %4525 = vmatpush1.bf16.msra.mxu0 0
      %4526 = vmatprep.subr.bf16.mxu0 0
      %4527 = vmatpush1.bf16.msra.mxu0 0
      %4528 = vmatprep.subr.bf16.mxu0 0
      %4529 = vmatpush1.bf16.msra.mxu0 0
      %4530 = vmatprep.mubr.bf16.mxu0 0
      %4531 = vmatmul.mubr.bf16.gmra.mrb[0].mxu0 %v2102
      %v4532 = vpop.f32.mrb[0].mxu0
      %v4533 = vadd.f32 0.0, %v4532
      %v4534 = vpop.f32.mrb[0].mxu0
      %v4535 = vpop.f32.mrb[0].mxu0
      %v4536 = vadd.f32 0.0, %v4535
      %v4537 = vpop.f32.mrb[0].mxu0
      %4538 = vmatprep.mubr.bf16.mxu0 0
      %4539 = vmatmul.mubr.bf16.gmra.mrb[0].mxu0 %v2105
      %v4540 = vpop.f32.mrb[0].mxu0
      %v4541 = vadd.f32 0.0, %v4540
      %v4542 = vpop.f32.mrb[0].mxu0
      %v4543 = vpop.f32.mrb[0].mxu0
      %v4544 = vadd.f32 0.0, %v4543
      %v4545 = vpop.f32.mrb[0].mxu0
      %4546 = vmatprep.mubr.bf16.mxu0 0
      %4547 = vmatmul.mubr.bf16.gmra.mrb[0].mxu0 %v2108
      %v4548 = vpop.f32.mrb[0].mxu0
      %v4549 = vadd.f32 0.0, %v4548
      %v4550 = vpop.f32.mrb[0].mxu0
      %v4551 = vpop.f32.mrb[0].mxu0
      %v4552 = vadd.f32 0.0, %v4551
      %v4553 = vpop.f32.mrb[0].mxu0
      %4554 = vmatprep.mubr.bf16.mxu0 0
      %4555 = vmatmul.mubr.bf16.gmra.mrb[0].mxu0 %v2111
      %v4556 = vpop.f32.mrb[0].mxu0
      %v4557 = vadd.f32 0.0, %v4556
      %v4558 = vpop.f32.mrb[0].mxu0
      %v4559 = vpop.f32.mrb[0].mxu0
      %v4560 = vadd.f32 0.0, %v4559
      %v4561 = vpop.f32.mrb[0].mxu0
      %4562 = vmatprep.mubr.bf16.mxu0 0
      %4563 = vmatmul.mubr.bf16.gmra.mrb[0].mxu0 %v2114
      %v4564 = vpop.f32.mrb[0].mxu0
      %v4565 = vadd.f32 0.0, %v4564
      %v4566 = vpop.f32.mrb[0].mxu0
      %v4567 = vpop.f32.mrb[0].mxu0
      %v4568 = vadd.f32 0.0, %v4567
      %v4569 = vpop.f32.mrb[0].mxu0
      %4570 = vmatprep.mubr.bf16.mxu0 0
      %4571 = vmatmul.mubr.bf16.gmra.mrb[0].mxu0 %v2117
      %v4572 = vpop.f32.mrb[0].mxu0
      %v4573 = vadd.f32 0.0, %v4572
      %v4574 = vpop.f32.mrb[0].mxu0
      %v4575 = vpop.f32.mrb[0].mxu0
      %v4576 = vadd.f32 0.0, %v4575
      %v4577 = vpop.f32.mrb[0].mxu0
      %4578 = vmatprep.mubr.bf16.mxu0 0
      %4579 = vmatmul.mubr.bf16.gmra.mrb[0].mxu0 %v2120
      %v4580 = vpop.f32.mrb[0].mxu0
      %v4581 = vadd.f32 0.0, %v4580
      %v4582 = vpop.f32.mrb[0].mxu0
      %v4583 = vpop.f32.mrb[0].mxu0
      %v4584 = vadd.f32 0.0, %v4583
      %v4585 = vpop.f32.mrb[0].mxu0
      %4586 = vmatprep.mubr.bf16.mxu0 0
      %4587 = vmatmul.mubr.bf16.gmra.mrb[0].mxu0 %v2123
      %v4588 = vpop.f32.mrb[0].mxu0
      %v4589 = vadd.f32 0.0, %v4588
      %v4590 = vpop.f32.mrb[0].mxu0
      %v4591 = vpop.f32.mrb[0].mxu0
      %v4592 = vadd.f32 0.0, %v4591
      %v4593 = vpop.f32.mrb[0].mxu0
      %4594 = vmatprep.mubr.bf16.mxu0 0
      %4595 = vmatmul.mubr.bf16.gmra.mrb[0].mxu0 %v2126
      %v4596 = vpop.f32.mrb[0].mxu0
      %v4597 = vadd.f32 0.0, %v4596
      %v4598 = vpop.f32.mrb[0].mxu0
      %v4599 = vpop.f32.mrb[0].mxu0
      %v4600 = vadd.f32 0.0, %v4599
      %v4601 = vpop.f32.mrb[0].mxu0
      %4602 = vmatprep.mubr.bf16.mxu0 0
      %4603 = vmatmul.mubr.bf16.gmra.mrb[0].mxu0 %v2129
      %v4604 = vpop.f32.mrb[0].mxu0
      %v4605 = vadd.f32 0.0, %v4604
      %v4606 = vpop.f32.mrb[0].mxu0
      %v4607 = vpop.f32.mrb[0].mxu0
      %v4608 = vadd.f32 0.0, %v4607
      %v4609 = vpop.f32.mrb[0].mxu0
      %4610 = vmatprep.mubr.bf16.mxu0 0
      %4611 = vmatmul.mubr.bf16.gmra.mrb[0].mxu0 %v2132
      %v4612 = vpop.f32.mrb[0].mxu0
      %v4613 = vadd.f32 0.0, %v4612
      %v4614 = vpop.f32.mrb[0].mxu0
      %v4615 = vpop.f32.mrb[0].mxu0
      %v4616 = vadd.f32 0.0, %v4615
      %v4617 = vpop.f32.mrb[0].mxu0
      %4618 = vmatprep.mubr.bf16.mxu0 0
      %4619 = vmatmul.mubr.bf16.gmra.mrb[0].mxu0 %v2135
      %v4620 = vpop.f32.mrb[0].mxu0
      %v4621 = vadd.f32 0.0, %v4620
      %v4622 = vpop.f32.mrb[0].mxu0
      %v4623 = vpop.f32.mrb[0].mxu0
      %v4624 = vadd.f32 0.0, %v4623
      %v4625 = vpop.f32.mrb[0].mxu0
      %4626 = vmatprep.mubr.bf16.mxu0 0
      %4627 = vmatmul.mubr.bf16.gmra.mrb[0].mxu0 %v2138
      %v4628 = vpop.f32.mrb[0].mxu0
      %v4629 = vadd.f32 0.0, %v4628
      %v4630 = vpop.f32.mrb[0].mxu0
      %v4631 = vpop.f32.mrb[0].mxu0
      %v4632 = vadd.f32 0.0, %v4631
      %v4633 = vpop.f32.mrb[0].mxu0
      %4634 = vmatprep.mubr.bf16.mxu0 0
      %4635 = vmatmul.mubr.bf16.gmra.mrb[0].mxu0 %v2141
      %v4636 = vpop.f32.mrb[0].mxu0
      %v4637 = vadd.f32 0.0, %v4636
      %v4638 = vpop.f32.mrb[0].mxu0
      %v4639 = vpop.f32.mrb[0].mxu0
      %v4640 = vadd.f32 0.0, %v4639
      %v4641 = vpop.f32.mrb[0].mxu0
      %4642 = vmatprep.mubr.bf16.mxu0 0
      %4643 = vmatmul.mubr.bf16.gmra.mrb[0].mxu0 %v2144
      %v4644 = vpop.f32.mrb[0].mxu0
      %v4645 = vadd.f32 0.0, %v4644
      %v4646 = vpop.f32.mrb[0].mxu0
      %v4647 = vpop.f32.mrb[0].mxu0
      %v4648 = vadd.f32 0.0, %v4647
      %v4649 = vpop.f32.mrb[0].mxu0
      %4650 = vmatprep.mubr.bf16.mxu0 0
      %4651 = vmatmul.mubr.bf16.gmra.mrb[0].mxu0 %v2147
      %v4652 = vpop.f32.mrb[0].mxu0
      %v4653 = vadd.f32 0.0, %v4652
      %v4654 = vpop.f32.mrb[0].mxu0
      %v4655 = vpop.f32.mrb[0].mxu0
      %v4656 = vadd.f32 0.0, %v4655
      %v4657 = vpop.f32.mrb[0].mxu0
      %4658 = vmatprep.mubr.bf16.mxu0 0
      %4659 = vmatmul.mubr.bf16.gmra.mrb[0].mxu0 %v2150
      %v4660 = vpop.f32.mrb[0].mxu0
      %v4661 = vadd.f32 0.0, %v4660
      %v4662 = vpop.f32.mrb[0].mxu0
      %v4663 = vpop.f32.mrb[0].mxu0
      %v4664 = vadd.f32 0.0, %v4663
      %v4665 = vpop.f32.mrb[0].mxu0
      %4666 = vmatprep.mubr.bf16.mxu0 0
      %4667 = vmatmul.mubr.bf16.gmra.mrb[0].mxu0 %v2153
      %v4668 = vpop.f32.mrb[0].mxu0
      %v4669 = vadd.f32 0.0, %v4668
      %v4670 = vpop.f32.mrb[0].mxu0
      %v4671 = vpop.f32.mrb[0].mxu0
      %v4672 = vadd.f32 0.0, %v4671
      %v4673 = vpop.f32.mrb[0].mxu0
      %4674 = vmatprep.mubr.bf16.mxu0 0
      %4675 = vmatmul.mubr.bf16.gmra.mrb[0].mxu0 %v2156
      %v4676 = vpop.f32.mrb[0].mxu0
      %v4677 = vadd.f32 0.0, %v4676
      %v4678 = vpop.f32.mrb[0].mxu0
      %v4679 = vpop.f32.mrb[0].mxu0
      %v4680 = vadd.f32 0.0, %v4679
      %v4681 = vpop.f32.mrb[0].mxu0
      %4682 = vmatprep.mubr.bf16.mxu0 0
      %4683 = vmatmul.mubr.bf16.gmra.mrb[0].mxu0 %v2159
      %v4684 = vpop.f32.mrb[0].mxu0
      %v4685 = vadd.f32 0.0, %v4684
      %v4686 = vpop.f32.mrb[0].mxu0
      %v4687 = vpop.f32.mrb[0].mxu0
      %v4688 = vadd.f32 0.0, %v4687
      %v4689 = vpop.f32.mrb[0].mxu0
      %4690 = vmatprep.mubr.bf16.mxu0 0
      %4691 = vmatmul.mubr.bf16.gmra.mrb[0].mxu0 %v2162
      %v4692 = vpop.f32.mrb[0].mxu0
      %v4693 = vadd.f32 0.0, %v4692
      %v4694 = vpop.f32.mrb[0].mxu0
      %v4695 = vpop.f32.mrb[0].mxu0
      %v4696 = vadd.f32 0.0, %v4695
      %v4697 = vpop.f32.mrb[0].mxu0
      %4698 = vmatprep.mubr.bf16.mxu0 0
      %4699 = vmatmul.mubr.bf16.gmra.mrb[0].mxu0 %v2165
      %v4700 = vpop.f32.mrb[0].mxu0
      %v4701 = vadd.f32 0.0, %v4700
      %v4702 = vpop.f32.mrb[0].mxu0
      %v4703 = vpop.f32.mrb[0].mxu0
      %v4704 = vadd.f32 0.0, %v4703
      %v4705 = vpop.f32.mrb[0].mxu0
      %4706 = vmatprep.mubr.bf16.mxu0 0
      %4707 = vmatmul.mubr.bf16.gmra.mrb[0].mxu0 %v2168
      %v4708 = vpop.f32.mrb[0].mxu0
      %v4709 = vadd.f32 0.0, %v4708
      %v4710 = vpop.f32.mrb[0].mxu0
      %v4711 = vpop.f32.mrb[0].mxu0
      %v4712 = vadd.f32 0.0, %v4711
      %v4713 = vpop.f32.mrb[0].mxu0
      %4714 = vmatprep.mubr.bf16.mxu0 0
      %4715 = vmatmul.mubr.bf16.gmra.mrb[0].mxu0 %v2171
      %v4716 = vpop.f32.mrb[0].mxu0
      %v4717 = vadd.f32 0.0, %v4716
      %v4718 = vpop.f32.mrb[0].mxu0
      %v4719 = vpop.f32.mrb[0].mxu0
      %v4720 = vadd.f32 0.0, %v4719
      %v4721 = vpop.f32.mrb[0].mxu0
      %4722 = vmatprep.mubr.bf16.mxu0 0
      %4723 = vmatmul.mubr.bf16.gmra.mrb[0].mxu0 %v4487
      %v4724 = vpop.f32.mrb[0].mxu0
      %v4725 = vadd.f32 0.0, %v4724
      %v4726 = vpop.f32.mrb[0].mxu0
      %v4727 = vpop.f32.mrb[0].mxu0
      %v4728 = vadd.f32 0.0, %v4727
      %v4729 = vpop.f32.mrb[0].mxu0
      %4730 = vmatprep.mubr.bf16.mxu0 0
      %4731 = vmatmul.mubr.bf16.gmra.mrb[0].mxu0 %v4490
      %v4732 = vpop.f32.mrb[0].mxu0
      %v4733 = vadd.f32 0.0, %v4732
      %v4734 = vpop.f32.mrb[0].mxu0
      %v4735 = vpop.f32.mrb[0].mxu0
      %v4736 = vadd.f32 0.0, %v4735
      %v4737 = vpop.f32.mrb[0].mxu0
      %4738 = vmatprep.mubr.bf16.mxu0 0
      %4739 = vmatmul.mubr.bf16.gmra.mrb[0].mxu0 %v4493
      %v4740 = vpop.f32.mrb[0].mxu0
      %v4741 = vadd.f32 0.0, %v4740
      %v4742 = vpop.f32.mrb[0].mxu0
      %v4743 = vpop.f32.mrb[0].mxu0
      %v4744 = vadd.f32 0.0, %v4743
      %v4745 = vpop.f32.mrb[0].mxu0
      %4746 = vdwg.mxu0
      %v4747 = vadd.f32 %v4413, %v4533
      %v4748 = vadd.f32 %v4414, %v4536
      %v4749 = vadd.f32 %v4415, %v4541
      %v4750 = vadd.f32 %v4416, %v4544
      %v4751 = vadd.f32 %v4417, %v4549
      %v4752 = vadd.f32 %v4418, %v4552
      %v4753 = vadd.f32 %v4419, %v4557
      %v4754 = vadd.f32 %v4420, %v4560
      %v4755 = vadd.f32 %v4421, %v4565
      %v4756 = vadd.f32 %v4422, %v4568
      %v4757 = vadd.f32 %v4423, %v4573
      %v4758 = vadd.f32 %v4424, %v4576
      %v4759 = vadd.f32 %v4425, %v4581
      %v4760 = vadd.f32 %v4426, %v4584
      %v4761 = vadd.f32 %v4427, %v4589
      %v4762 = vadd.f32 %v4428, %v4592
      %v4763 = vadd.f32 %v4429, %v4597
      %v4764 = vadd.f32 %v4430, %v4600
      %v4765 = vadd.f32 %v4431, %v4605
      %v4766 = vadd.f32 %v4432, %v4608
      %v4767 = vadd.f32 %v4433, %v4613
      %v4768 = vadd.f32 %v4434, %v4616
      %v4769 = vadd.f32 %v4435, %v4621
      %v4770 = vadd.f32 %v4436, %v4624
      %v4771 = vadd.f32 %v4437, %v4629
      %v4772 = vadd.f32 %v4438, %v4632
      %v4773 = vadd.f32 %v4439, %v4637
      %v4774 = vadd.f32 %v4440, %v4640
      %v4775 = vadd.f32 %v4441, %v4645
      %v4776 = vadd.f32 %v4442, %v4648
      %v4777 = vadd.f32 %v4443, %v4653
      %v4778 = vadd.f32 %v4444, %v4656
      %v4779 = vadd.f32 %v4445, %v4661
      %v4780 = vadd.f32 %v4446, %v4664
      %v4781 = vadd.f32 %v4447, %v4669
      %v4782 = vadd.f32 %v4448, %v4672
      %v4783 = vadd.f32 %v4449, %v4677
      %v4784 = vadd.f32 %v4450, %v4680
      %v4785 = vadd.f32 %v4451, %v4685
      %v4786 = vadd.f32 %v4452, %v4688
      %v4787 = vadd.f32 %v4453, %v4693
      %v4788 = vadd.f32 %v4454, %v4696
      %v4789 = vadd.f32 %v4455, %v4701
      %v4790 = vadd.f32 %v4456, %v4704
      %v4791 = vadd.f32 %v4457, %v4709
      %v4792 = vadd.f32 %v4458, %v4712
      %v4793 = vadd.f32 %v4459, %v4717
      %v4794 = vadd.f32 %v4460, %v4720
      %v4795 = vadd.f32 %v4461, %v4725
      %v4796 = vadd.f32 %v4462, %v4728
      %v4797 = vadd.f32 %v4463, %v4733
      %v4798 = vadd.f32 %v4464, %v4736
      %v4799 = vadd.f32 %v4465, %v4741
      %v4800 = vadd.f32 %v4466, %v4744
      %v4801 = vld [vmem:[%s2] sm:$0x1]
      %v4803 = vlaneseq
      %v4804 = vshrl.u32 %v4803, 7
      %v4805 = vsub.s32 0, %v4804
      %v4806 = vrot.slane %v4801, %v4805
      %v4808 = vadd.f32 %v4747, %v4806
      %v4809 = vadd.f32 %v4748, %v4806
      %v4810 = vadd.f32 %v4749, %v4806
      %v4811 = vadd.f32 %v4750, %v4806
      %v4812 = vadd.f32 %v4751, %v4806
      %v4813 = vadd.f32 %v4752, %v4806
      %v4814 = vadd.f32 %v4753, %v4806
      %v4815 = vadd.f32 %v4754, %v4806
      %v4816 = vadd.f32 %v4755, %v4806
      %v4817 = vadd.f32 %v4756, %v4806
      %v4818 = vadd.f32 %v4757, %v4806
      %v4819 = vadd.f32 %v4758, %v4806
      %v4820 = vadd.f32 %v4759, %v4806
      %v4821 = vadd.f32 %v4760, %v4806
      %v4822 = vadd.f32 %v4761, %v4806
      %v4823 = vadd.f32 %v4762, %v4806
      %v4824 = vadd.f32 %v4763, %v4806
      %v4825 = vadd.f32 %v4764, %v4806
      %v4826 = vadd.f32 %v4765, %v4806
      %v4827 = vadd.f32 %v4766, %v4806
      %v4828 = vadd.f32 %v4767, %v4806
      %v4829 = vadd.f32 %v4768, %v4806
      %v4830 = vadd.f32 %v4769, %v4806
      %v4831 = vadd.f32 %v4770, %v4806
      %v4832 = vadd.f32 %v4771, %v4806
      %v4833 = vadd.f32 %v4772, %v4806
      %v4834 = vadd.f32 %v4773, %v4806
      %v4835 = vadd.f32 %v4774, %v4806
      %v4836 = vadd.f32 %v4775, %v4806
      %v4837 = vadd.f32 %v4776, %v4806
      %v4838 = vadd.f32 %v4777, %v4806
      %v4839 = vadd.f32 %v4778, %v4806
      %v4840 = vadd.f32 %v4779, %v4806
      %v4841 = vadd.f32 %v4780, %v4806
      %v4842 = vadd.f32 %v4781, %v4806
      %v4843 = vadd.f32 %v4782, %v4806
      %v4844 = vadd.f32 %v4783, %v4806
      %v4845 = vadd.f32 %v4784, %v4806
      %v4846 = vadd.f32 %v4785, %v4806
      %v4847 = vadd.f32 %v4786, %v4806
      %v4848 = vadd.f32 %v4787, %v4806
      %v4849 = vadd.f32 %v4788, %v4806
      %v4850 = vadd.f32 %v4789, %v4806
      %v4851 = vadd.f32 %v4790, %v4806
      %v4852 = vadd.f32 %v4791, %v4806
      %v4853 = vadd.f32 %v4792, %v4806
      %v4854 = vadd.f32 %v4793, %v4806
      %v4855 = vadd.f32 %v4794, %v4806
      %v4856 = vadd.f32 %v4795, %v4806
      %v4857 = vadd.f32 %v4796, %v4806
      %v4858 = vadd.f32 %v4797, %v4806
      %v4859 = vadd.f32 %v4798, %v4806
      %v4860 = vadd.f32 %v4799, %v4806
      %v4861 = vadd.f32 %v4800, %v4806
      %vm4862 = vcmp.gt.f32.partialorder %v4808, 0.0
      %vm4863 = vcmp.gt.f32.partialorder %v4809, 0.0
      %vm4864 = vcmp.gt.f32.partialorder %v4810, 0.0
      %vm4865 = vcmp.gt.f32.partialorder %v4811, 0.0
      %vm4866 = vcmp.gt.f32.partialorder %v4812, 0.0
      %vm4867 = vcmp.gt.f32.partialorder %v4813, 0.0
      %vm4868 = vcmp.gt.f32.partialorder %v4814, 0.0
      %vm4869 = vcmp.gt.f32.partialorder %v4815, 0.0
      %vm4870 = vcmp.gt.f32.partialorder %v4816, 0.0
      %vm4871 = vcmp.gt.f32.partialorder %v4817, 0.0
      %vm4872 = vcmp.gt.f32.partialorder %v4818, 0.0
      %vm4873 = vcmp.gt.f32.partialorder %v4819, 0.0
      %vm4874 = vcmp.gt.f32.partialorder %v4820, 0.0
      %vm4875 = vcmp.gt.f32.partialorder %v4821, 0.0
      %vm4876 = vcmp.gt.f32.partialorder %v4822, 0.0
      %vm4877 = vcmp.gt.f32.partialorder %v4823, 0.0
      %vm4878 = vcmp.gt.f32.partialorder %v4824, 0.0
      %vm4879 = vcmp.gt.f32.partialorder %v4825, 0.0
      %vm4880 = vcmp.gt.f32.partialorder %v4826, 0.0
      %vm4881 = vcmp.gt.f32.partialorder %v4827, 0.0
      %vm4882 = vcmp.gt.f32.partialorder %v4828, 0.0
      %vm4883 = vcmp.gt.f32.partialorder %v4829, 0.0
      %vm4884 = vcmp.gt.f32.partialorder %v4830, 0.0
      %vm4885 = vcmp.gt.f32.partialorder %v4831, 0.0
      %vm4886 = vcmp.gt.f32.partialorder %v4832, 0.0
      %vm4887 = vcmp.gt.f32.partialorder %v4833, 0.0
      %vm4888 = vcmp.gt.f32.partialorder %v4834, 0.0
      %vm4889 = vcmp.gt.f32.partialorder %v4835, 0.0
      %vm4890 = vcmp.gt.f32.partialorder %v4836, 0.0
      %vm4891 = vcmp.gt.f32.partialorder %v4837, 0.0
      %vm4892 = vcmp.gt.f32.partialorder %v4838, 0.0
      %vm4893 = vcmp.gt.f32.partialorder %v4839, 0.0
      %vm4894 = vcmp.gt.f32.partialorder %v4840, 0.0
      %vm4895 = vcmp.gt.f32.partialorder %v4841, 0.0
      %vm4896 = vcmp.gt.f32.partialorder %v4842, 0.0
      %vm4897 = vcmp.gt.f32.partialorder %v4843, 0.0
      %vm4898 = vcmp.gt.f32.partialorder %v4844, 0.0
      %vm4899 = vcmp.gt.f32.partialorder %v4845, 0.0
      %vm4900 = vcmp.gt.f32.partialorder %v4846, 0.0
      %vm4901 = vcmp.gt.f32.partialorder %v4847, 0.0
      %vm4902 = vcmp.gt.f32.partialorder %v4848, 0.0
      %vm4903 = vcmp.gt.f32.partialorder %v4849, 0.0
      %vm4904 = vcmp.gt.f32.partialorder %v4850, 0.0
      %vm4905 = vcmp.gt.f32.partialorder %v4851, 0.0
      %vm4906 = vcmp.gt.f32.partialorder %v4852, 0.0
      %vm4907 = vcmp.gt.f32.partialorder %v4853, 0.0
      %vm4908 = vcmp.gt.f32.partialorder %v4854, 0.0
      %vm4909 = vcmp.gt.f32.partialorder %v4855, 0.0
      %vm4910 = vcmp.gt.f32.partialorder %v4856, 0.0
      %vm4911 = vcmp.gt.f32.partialorder %v4857, 0.0
      %vm4912 = vcmp.gt.f32.partialorder %v4858, 0.0
      %vm4913 = vcmp.gt.f32.partialorder %v4859, 0.0
      %vm4914 = vcmp.gt.f32.partialorder %v4860, 0.0
      %vm4915 = vcmp.gt.f32.partialorder %v4861, 0.0
      %v4916 = vmul.f32 %v4808, 0.2
      %v4917 = vmul.f32 %v4809, 0.2
      %v4918 = vmul.f32 %v4810, 0.2
      %v4919 = vmul.f32 %v4811, 0.2
      %v4920 = vmul.f32 %v4812, 0.2
      %v4921 = vmul.f32 %v4813, 0.2
      %v4922 = vmul.f32 %v4814, 0.2
      %v4923 = vmul.f32 %v4815, 0.2
      %v4924 = vmul.f32 %v4816, 0.2
      %v4925 = vmul.f32 %v4817, 0.2
      %v4926 = vmul.f32 %v4818, 0.2
      %v4927 = vmul.f32 %v4819, 0.2
      %v4928 = vmul.f32 %v4820, 0.2
      %v4929 = vmul.f32 %v4821, 0.2
      %v4930 = vmul.f32 %v4822, 0.2
      %v4931 = vmul.f32 %v4823, 0.2
      %v4932 = vmul.f32 %v4824, 0.2
      %v4933 = vmul.f32 %v4825, 0.2
      %v4934 = vmul.f32 %v4826, 0.2
      %v4935 = vmul.f32 %v4827, 0.2
      %v4936 = vmul.f32 %v4828, 0.2
      %v4937 = vmul.f32 %v4829, 0.2
      %v4938 = vmul.f32 %v4830, 0.2
      %v4939 = vmul.f32 %v4831, 0.2
      %v4940 = vmul.f32 %v4832, 0.2
      %v4941 = vmul.f32 %v4833, 0.2
      %v4942 = vmul.f32 %v4834, 0.2
      %v4943 = vmul.f32 %v4835, 0.2
      %v4944 = vmul.f32 %v4836, 0.2
      %v4945 = vmul.f32 %v4837, 0.2
      %v4946 = vmul.f32 %v4838, 0.2
      %v4947 = vmul.f32 %v4839, 0.2
      %v4948 = vmul.f32 %v4840, 0.2
      %v4949 = vmul.f32 %v4841, 0.2
      %v4950 = vmul.f32 %v4842, 0.2
      %v4951 = vmul.f32 %v4843, 0.2
      %v4952 = vmul.f32 %v4844, 0.2
      %v4953 = vmul.f32 %v4845, 0.2
      %v4954 = vmul.f32 %v4846, 0.2
      %v4955 = vmul.f32 %v4847, 0.2
      %v4956 = vmul.f32 %v4848, 0.2
      %v4957 = vmul.f32 %v4849, 0.2
      %v4958 = vmul.f32 %v4850, 0.2
      %v4959 = vmul.f32 %v4851, 0.2
      %v4960 = vmul.f32 %v4852, 0.2
      %v4961 = vmul.f32 %v4853, 0.2
      %v4962 = vmul.f32 %v4854, 0.2
      %v4963 = vmul.f32 %v4855, 0.2
      %v4964 = vmul.f32 %v4856, 0.2
      %v4965 = vmul.f32 %v4857, 0.2
      %v4966 = vmul.f32 %v4858, 0.2
      %v4967 = vmul.f32 %v4859, 0.2
      %v4968 = vmul.f32 %v4860, 0.2
      %v4969 = vmul.f32 %v4861, 0.2
      %v4970 = vsel %vm4862, %v4808, %v4916
      %v4971 = vsel %vm4863, %v4809, %v4917
      %v4972 = vsel %vm4864, %v4810, %v4918
      %v4973 = vsel %vm4865, %v4811, %v4919
      %v4974 = vsel %vm4866, %v4812, %v4920
      %v4975 = vsel %vm4867, %v4813, %v4921
      %v4976 = vsel %vm4868, %v4814, %v4922
      %v4977 = vsel %vm4869, %v4815, %v4923
      %v4978 = vsel %vm4870, %v4816, %v4924
      %v4979 = vsel %vm4871, %v4817, %v4925
      %v4980 = vsel %vm4872, %v4818, %v4926
      %v4981 = vsel %vm4873, %v4819, %v4927
      %v4982 = vsel %vm4874, %v4820, %v4928
      %v4983 = vsel %vm4875, %v4821, %v4929
      %v4984 = vsel %vm4876, %v4822, %v4930
      %v4985 = vsel %vm4877, %v4823, %v4931
      %v4986 = vsel %vm4878, %v4824, %v4932
      %v4987 = vsel %vm4879, %v4825, %v4933
      %v4988 = vsel %vm4880, %v4826, %v4934
      %v4989 = vsel %vm4881, %v4827, %v4935
      %v4990 = vsel %vm4882, %v4828, %v4936
      %v4991 = vsel %vm4883, %v4829, %v4937
      %v4992 = vsel %vm4884, %v4830, %v4938
      %v4993 = vsel %vm4885, %v4831, %v4939
      %v4994 = vsel %vm4886, %v4832, %v4940
      %v4995 = vsel %vm4887, %v4833, %v4941
      %v4996 = vsel %vm4888, %v4834, %v4942
      %v4997 = vsel %vm4889, %v4835, %v4943
      %v4998 = vsel %vm4890, %v4836, %v4944
      %v4999 = vsel %vm4891, %v4837, %v4945
      %v5000 = vsel %vm4892, %v4838, %v4946
      %v5001 = vsel %vm4893, %v4839, %v4947
      %v5002 = vsel %vm4894, %v4840, %v4948
      %v5003 = vsel %vm4895, %v4841, %v4949
      %v5004 = vsel %vm4896, %v4842, %v4950
      %v5005 = vsel %vm4897, %v4843, %v4951
      %v5006 = vsel %vm4898, %v4844, %v4952
      %v5007 = vsel %vm4899, %v4845, %v4953
      %v5008 = vsel %vm4900, %v4846, %v4954
      %v5009 = vsel %vm4901, %v4847, %v4955
      %v5010 = vsel %vm4902, %v4848, %v4956
      %v5011 = vsel %vm4903, %v4849, %v4957
      %v5012 = vsel %vm4904, %v4850, %v4958
      %v5013 = vsel %vm4905, %v4851, %v4959
      %v5014 = vsel %vm4906, %v4852, %v4960
      %v5015 = vsel %vm4907, %v4853, %v4961
      %v5016 = vsel %vm4908, %v4854, %v4962
      %v5017 = vsel %vm4909, %v4855, %v4963
      %v5018 = vsel %vm4910, %v4856, %v4964
      %v5019 = vsel %vm4911, %v4857, %v4965
      %v5020 = vsel %vm4912, %v4858, %v4966
      %v5021 = vsel %vm4913, %v4859, %v4967
      %v5022 = vsel %vm4914, %v4860, %v4968
      %v5023 = vsel %vm4915, %v4861, %v4969
      %v5024 = vpack.c.bf16 %v4971, %v4970
      %v5025 = vpack.c.bf16 %v4972, %v4972
      %v5026 = vpack.c.bf16 %v4974, %v4973
      %v5027 = vpack.c.bf16 %v4975, %v4975
      %v5028 = vpack.c.bf16 %v4977, %v4976
      %v5029 = vpack.c.bf16 %v4978, %v4978
      %v5030 = vpack.c.bf16 %v4980, %v4979
      %v5031 = vpack.c.bf16 %v4981, %v4981
      %v5032 = vpack.c.bf16 %v4983, %v4982
      %v5033 = vpack.c.bf16 %v4984, %v4984
      %v5034 = vpack.c.bf16 %v4986, %v4985
      %v5035 = vpack.c.bf16 %v4987, %v4987
      %v5036 = vpack.c.bf16 %v4989, %v4988
      %v5037 = vpack.c.bf16 %v4990, %v4990
      %v5038 = vpack.c.bf16 %v4992, %v4991
      %v5039 = vpack.c.bf16 %v4993, %v4993
      %v5040 = vpack.c.bf16 %v4995, %v4994
      %v5041 = vpack.c.bf16 %v4996, %v4996
      %v5042 = vpack.c.bf16 %v4998, %v4997
      %v5043 = vpack.c.bf16 %v4999, %v4999
      %v5044 = vpack.c.bf16 %v5001, %v5000
      %v5045 = vpack.c.bf16 %v5002, %v5002
      %v5046 = vpack.c.bf16 %v5004, %v5003
      %v5047 = vpack.c.bf16 %v5005, %v5005
      %v5048 = vpack.c.bf16 %v5007, %v5006
      %v5049 = vpack.c.bf16 %v5008, %v5008
      %v5050 = vpack.c.bf16 %v5010, %v5009
      %v5051 = vpack.c.bf16 %v5011, %v5011
      %v5052 = vpack.c.bf16 %v5013, %v5012
      %v5053 = vpack.c.bf16 %v5014, %v5014
      %v5054 = vpack.c.bf16 %v5016, %v5015
      %v5055 = vpack.c.bf16 %v5017, %v5017
      %v5056 = vpack.c.bf16 %v5019, %v5018
      %v5057 = vpack.c.bf16 %v5020, %v5020
      %v5058 = vpack.c.bf16 %v5022, %v5021
      %v5059 = vpack.c.bf16 %v5023, %v5023
      %v5060 = vlaneseq
      %v5061 = vshrl.u32 %v5060, 7
      %v5062 = vadd.s32 %v5061, 8
      %v5063 = vadd.s32 %v5061, 16
      %vm5064 = vcmp.ge.s32.totalorder %v5061, 1
      %vm5065 = vcmp.ge.s32.totalorder %v5062, 1
      %vm5066 = vcmp.ge.s32.totalorder %v5063, 1
      %vm5067 = vmand 0, %vm5064
      %vm5068 = vmand 0, %vm5065
      %vm5069 = vmand 0, %vm5066
      %vm5070 = vmand 1, %vm5064
      %vm5071 = vmand 1, %vm5065
      %vm5072 = vmand 1, %vm5066
      %vm5073 = vcmp.le.s32.totalorder %v5061, 16
      %vm5074 = vcmp.le.s32.totalorder %v5062, 16
      %vm5075 = vcmp.le.s32.totalorder %v5063, 16
      %vm5076 = vmand %vm5067, %vm5073
      %vm5077 = vmand %vm5068, %vm5074
      %vm5078 = vmand %vm5069, %vm5075
      %vm5079 = vmand %vm5070, %vm5073
      %vm5080 = vmand %vm5071, %vm5074
      %vm5081 = vmand %vm5072, %vm5075
      %v5082 = vsel %vm5076, 1, 0
      %v5083 = vsel %vm5077, 1, 0
      %v5084 = vsel %vm5078, 1, 0
      %v5085 = vsel %vm5079, 1, 0
      %v5086 = vsel %vm5080, 1, 0
      %v5087 = vsel %vm5081, 1, 0
      %v5088 = vcvt.s32.f32 %v5082
      %v5089 = vcvt.s32.f32 %v5083
      %v5090 = vcvt.s32.f32 %v5084
      %v5091 = vcvt.s32.f32 %v5085
      %v5092 = vcvt.s32.f32 %v5086
      %v5093 = vcvt.s32.f32 %v5087
      %v5094 = vpack.c.bf16 %v5089, %v5088
      %v5095 = vpack.c.bf16 %v5090, %v5090
      %v5096 = vpack.c.bf16 %v5092, %v5091
      %v5097 = vpack.c.bf16 %v5093, %v5093
      %v5098 = vmul.bf16 %v5024, %v5094
      %v5099 = vmul.bf16 %v5025, %v5095
      %v5100 = vmul.bf16 %v5026, %v5096
      %v5101 = vmul.bf16 %v5027, %v5097
      %v5102 = vmul.bf16 %v5028, %v5096
      %v5103 = vmul.bf16 %v5029, %v5097
      %v5104 = vmul.bf16 %v5030, %v5096
      %v5105 = vmul.bf16 %v5031, %v5097
      %v5106 = vmul.bf16 %v5032, %v5096
      %v5107 = vmul.bf16 %v5033, %v5097
      %v5108 = vmul.bf16 %v5034, %v5096
      %v5109 = vmul.bf16 %v5035, %v5097
      %v5110 = vmul.bf16 %v5036, %v5096
      %v5111 = vmul.bf16 %v5037, %v5097
      %v5112 = vmul.bf16 %v5038, %v5096
      %v5113 = vmul.bf16 %v5039, %v5097
      %v5114 = vmul.bf16 %v5040, %v5096
      %v5115 = vmul.bf16 %v5041, %v5097
      %v5116 = vmul.bf16 %v5042, %v5096
      %v5117 = vmul.bf16 %v5043, %v5097
      %v5118 = vmul.bf16 %v5044, %v5096
      %v5119 = vmul.bf16 %v5045, %v5097
      %v5120 = vmul.bf16 %v5046, %v5096
      %v5121 = vmul.bf16 %v5047, %v5097
      %v5122 = vmul.bf16 %v5048, %v5096
      %v5123 = vmul.bf16 %v5049, %v5097
      %v5124 = vmul.bf16 %v5050, %v5096
      %v5125 = vmul.bf16 %v5051, %v5097
      %v5126 = vmul.bf16 %v5052, %v5096
      %v5127 = vmul.bf16 %v5053, %v5097
      %v5128 = vmul.bf16 %v5054, %v5096
      %v5129 = vmul.bf16 %v5055, %v5097
      %v5130 = vmul.bf16 %v5056, %v5096
      %v5131 = vmul.bf16 %v5057, %v5097
      %v5132 = vmul.bf16 %v5058, %v5094
      %v5133 = vmul.bf16 %v5059, %v5095
      %v5134 = vld [vmem:[%s3] sm:$0xf]
      %vm5135 = vsmask.f32 7424
      %v5137 = vshrl.u32 %v5098, 16
      %v5139 = vshll.u32 %v5098, 16
      %v5141 = vrot.slane %v5139, 1
      %v5142 = vor.u32 %v5137, %v5141
      %v5144 = vshll.u32 %v5099, 16
      %v5146 = vrot.slane %v5144, 1
      %v5147 = vsel %vm5135, %v5142, %v5146
      %v5149 = vshrl.u32 %v5100, 16
      %v5151 = vshll.u32 %v5100, 16
      %v5153 = vrot.slane %v5151, 1
      %v5154 = vor.u32 %v5149, %v5153
      %v5156 = vshll.u32 %v5101, 16
      %v5158 = vrot.slane %v5156, 1
      %v5159 = vsel %vm5135, %v5154, %v5158
      %v5161 = vshrl.u32 %v5102, 16
      %v5163 = vshll.u32 %v5102, 16
      %v5165 = vrot.slane %v5163, 1
      %v5166 = vor.u32 %v5161, %v5165
      %v5168 = vshll.u32 %v5103, 16
      %v5170 = vrot.slane %v5168, 1
      %v5171 = vsel %vm5135, %v5166, %v5170
      %v5173 = vshrl.u32 %v5104, 16
      %v5175 = vshll.u32 %v5104, 16
      %v5177 = vrot.slane %v5175, 1
      %v5178 = vor.u32 %v5173, %v5177
      %v5180 = vshll.u32 %v5105, 16
      %v5182 = vrot.slane %v5180, 1
      %v5183 = vsel %vm5135, %v5178, %v5182
      %v5185 = vshrl.u32 %v5106, 16
      %v5187 = vshll.u32 %v5106, 16
      %v5189 = vrot.slane %v5187, 1
      %v5190 = vor.u32 %v5185, %v5189
      %v5192 = vshll.u32 %v5107, 16
      %v5194 = vrot.slane %v5192, 1
      %v5195 = vsel %vm5135, %v5190, %v5194
      %v5197 = vshrl.u32 %v5108, 16
      %v5199 = vshll.u32 %v5108, 16
      %v5201 = vrot.slane %v5199, 1
      %v5202 = vor.u32 %v5197, %v5201
      %v5204 = vshll.u32 %v5109, 16
      %v5206 = vrot.slane %v5204, 1
      %v5207 = vsel %vm5135, %v5202, %v5206
      %v5209 = vshrl.u32 %v5110, 16
      %v5211 = vshll.u32 %v5110, 16
      %v5213 = vrot.slane %v5211, 1
      %v5214 = vor.u32 %v5209, %v5213
      %v5216 = vshll.u32 %v5111, 16
      %v5218 = vrot.slane %v5216, 1
      %v5219 = vsel %vm5135, %v5214, %v5218
      %v5221 = vshrl.u32 %v5112, 16
      %v5223 = vshll.u32 %v5112, 16
      %v5225 = vrot.slane %v5223, 1
      %v5226 = vor.u32 %v5221, %v5225
      %v5228 = vshll.u32 %v5113, 16
      %v5230 = vrot.slane %v5228, 1
      %v5231 = vsel %vm5135, %v5226, %v5230
      %v5233 = vshrl.u32 %v5114, 16
      %v5235 = vshll.u32 %v5114, 16
      %v5237 = vrot.slane %v5235, 1
      %v5238 = vor.u32 %v5233, %v5237
      %v5240 = vshll.u32 %v5115, 16
      %v5242 = vrot.slane %v5240, 1
      %v5243 = vsel %vm5135, %v5238, %v5242
      %v5245 = vshrl.u32 %v5116, 16
      %v5247 = vshll.u32 %v5116, 16
      %v5249 = vrot.slane %v5247, 1
      %v5250 = vor.u32 %v5245, %v5249
      %v5252 = vshll.u32 %v5117, 16
      %v5254 = vrot.slane %v5252, 1
      %v5255 = vsel %vm5135, %v5250, %v5254
      %v5257 = vshrl.u32 %v5118, 16
      %v5259 = vshll.u32 %v5118, 16
      %v5261 = vrot.slane %v5259, 1
      %v5262 = vor.u32 %v5257, %v5261
      %v5264 = vshll.u32 %v5119, 16
      %v5266 = vrot.slane %v5264, 1
      %v5267 = vsel %vm5135, %v5262, %v5266
      %v5269 = vshrl.u32 %v5120, 16
      %v5271 = vshll.u32 %v5120, 16
      %v5273 = vrot.slane %v5271, 1
      %v5274 = vor.u32 %v5269, %v5273
      %v5276 = vshll.u32 %v5121, 16
      %v5278 = vrot.slane %v5276, 1
      %v5279 = vsel %vm5135, %v5274, %v5278
      %v5281 = vshrl.u32 %v5122, 16
      %v5283 = vshll.u32 %v5122, 16
      %v5285 = vrot.slane %v5283, 1
      %v5286 = vor.u32 %v5281, %v5285
      %v5288 = vshll.u32 %v5123, 16
      %v5290 = vrot.slane %v5288, 1
      %v5291 = vsel %vm5135, %v5286, %v5290
      %v5293 = vshrl.u32 %v5124, 16
      %v5295 = vshll.u32 %v5124, 16
      %v5297 = vrot.slane %v5295, 1
      %v5298 = vor.u32 %v5293, %v5297
      %v5300 = vshll.u32 %v5125, 16
      %v5302 = vrot.slane %v5300, 1
      %v5303 = vsel %vm5135, %v5298, %v5302
      %v5305 = vshrl.u32 %v5126, 16
      %v5307 = vshll.u32 %v5126, 16
      %v5309 = vrot.slane %v5307, 1
      %v5310 = vor.u32 %v5305, %v5309
      %v5312 = vshll.u32 %v5127, 16
      %v5314 = vrot.slane %v5312, 1
      %v5315 = vsel %vm5135, %v5310, %v5314
      %v5317 = vshrl.u32 %v5128, 16
      %v5319 = vshll.u32 %v5128, 16
      %v5321 = vrot.slane %v5319, 1
      %v5322 = vor.u32 %v5317, %v5321
      %v5324 = vshll.u32 %v5129, 16
      %v5326 = vrot.slane %v5324, 1
      %v5327 = vsel %vm5135, %v5322, %v5326
      %s5328 = scalar_lea.vmem %s3, 4
      %v5329 = vld [vmem:[%s5328] sm:$0xf]
      %v5331 = vsel %vm1005, %v5147, 0
      %v5334 = vsel %vm1005, %v5159, 0
      %v5337 = vsel %vm1005, %v5171, 0
      %v5340 = vsel %vm1005, %v5183, 0
      %v5343 = vsel %vm1005, %v5195, 0
      %v5346 = vsel %vm1005, %v5207, 0
      %v5349 = vsel %vm1005, %v5219, 0
      %v5352 = vsel %vm1005, %v5231, 0
      %v5355 = vsel %vm1005, %v5243, 0
      %v5358 = vsel %vm1005, %v5255, 0
      %v5361 = vsel %vm1005, %v5267, 0
      %v5364 = vsel %vm1005, %v5279, 0
      %v5367 = vsel %vm1005, %v5291, 0
      %v5370 = vsel %vm1005, %v5303, 0
      %v5373 = vsel %vm1005, %v5315, 0
      %v5376 = vsel %vm1005, %v5327, 0
      %v5379 = vsel %vm1087, %v5329, 0
      %5381 = vmatprep.subr.bf16.mxu0 0
      %5382 = vmatpush1.bf16.msra.mxu0 %v5379
      %5383 = vmatprep.subr.bf16.mxu0 0
      %5384 = vmatpush1.bf16.msra.mxu0 0
      %5385 = vmatprep.subr.bf16.mxu0 0
      %5386 = vmatpush1.bf16.msra.mxu0 0
      %5387 = vmatprep.subr.bf16.mxu0 0
      %5388 = vmatpush1.bf16.msra.mxu0 0
      %5389 = vmatprep.subr.bf16.mxu0 0
      %5390 = vmatpush1.bf16.msra.mxu0 0
      %5391 = vmatprep.subr.bf16.mxu0 0
      %5392 = vmatpush1.bf16.msra.mxu0 0
      %5393 = vmatprep.subr.bf16.mxu0 0
      %5394 = vmatpush1.bf16.msra.mxu0 0
      %5395 = vmatprep.subr.bf16.mxu0 0
      %5396 = vmatpush1.bf16.msra.mxu0 0
      %5397 = vmatprep.subr.bf16.mxu0 0
      %5398 = vmatpush1.bf16.msra.mxu0 0
      %5399 = vmatprep.subr.bf16.mxu0 0
      %5400 = vmatpush1.bf16.msra.mxu0 0
      %5401 = vmatprep.subr.bf16.mxu0 0
      %5402 = vmatpush1.bf16.msra.mxu0 0
      %5403 = vmatprep.subr.bf16.mxu0 0
      %5404 = vmatpush1.bf16.msra.mxu0 0
      %5405 = vmatprep.subr.bf16.mxu0 0
      %5406 = vmatpush1.bf16.msra.mxu0 0
      %5407 = vmatprep.subr.bf16.mxu0 0
      %5408 = vmatpush1.bf16.msra.mxu0 0
      %5409 = vmatprep.subr.bf16.mxu0 0
      %5410 = vmatpush1.bf16.msra.mxu0 0
      %5411 = vmatprep.subr.bf16.mxu0 0
      %5412 = vmatpush1.bf16.msra.mxu0 0
      %5413 = vmatprep.mubr.bf16.mxu0 0
      %5414 = vmatmul.mubr.bf16.gmra.mrb[0].mxu0 %v5331
      %v5415 = vpop.f32.mrb[0].mxu0
      %v5416 = vadd.f32 0.0, %v5415
      %v5417 = vpop.f32.mrb[0].mxu0
      %v5418 = vpop.f32.mrb[0].mxu0
      %v5419 = vadd.f32 0.0, %v5418
      %v5420 = vpop.f32.mrb[0].mxu0
      %5421 = vmatprep.mubr.bf16.mxu0 0
      %5422 = vmatmul.mubr.bf16.gmra.mrb[0].mxu0 %v5334
      %v5423 = vpop.f32.mrb[0].mxu0
      %v5424 = vadd.f32 0.0, %v5423
      %v5425 = vpop.f32.mrb[0].mxu0
      %v5426 = vpop.f32.mrb[0].mxu0
      %v5427 = vadd.f32 0.0, %v5426
      %v5428 = vpop.f32.mrb[0].mxu0
      %5429 = vmatprep.mubr.bf16.mxu0 0
      %5430 = vmatmul.mubr.bf16.gmra.mrb[0].mxu0 %v5337
      %v5431 = vpop.f32.mrb[0].mxu0
      %v5432 = vadd.f32 0.0, %v5431
      %v5433 = vpop.f32.mrb[0].mxu0
      %v5434 = vpop.f32.mrb[0].mxu0
      %v5435 = vadd.f32 0.0, %v5434
      %v5436 = vpop.f32.mrb[0].mxu0
      %5437 = vmatprep.mubr.bf16.mxu0 0
      %5438 = vmatmul.mubr.bf16.gmra.mrb[0].mxu0 %v5340
      %v5439 = vpop.f32.mrb[0].mxu0
      %v5440 = vadd.f32 0.0, %v5439
      %v5441 = vpop.f32.mrb[0].mxu0
      %v5442 = vpop.f32.mrb[0].mxu0
      %v5443 = vadd.f32 0.0, %v5442
      %v5444 = vpop.f32.mrb[0].mxu0
      %5445 = vmatprep.mubr.bf16.mxu0 0
      %5446 = vmatmul.mubr.bf16.gmra.mrb[0].mxu0 %v5343
      %v5447 = vpop.f32.mrb[0].mxu0
      %v5448 = vadd.f32 0.0, %v5447
      %v5449 = vpop.f32.mrb[0].mxu0
      %v5450 = vpop.f32.mrb[0].mxu0
      %v5451 = vadd.f32 0.0, %v5450
      %v5452 = vpop.f32.mrb[0].mxu0
      %5453 = vmatprep.mubr.bf16.mxu0 0
      %5454 = vmatmul.mubr.bf16.gmra.mrb[0].mxu0 %v5346
      %v5455 = vpop.f32.mrb[0].mxu0
      %v5456 = vadd.f32 0.0, %v5455
      %v5457 = vpop.f32.mrb[0].mxu0
      %v5458 = vpop.f32.mrb[0].mxu0
      %v5459 = vadd.f32 0.0, %v5458
      %v5460 = vpop.f32.mrb[0].mxu0
      %5461 = vmatprep.mubr.bf16.mxu0 0
      %5462 = vmatmul.mubr.bf16.gmra.mrb[0].mxu0 %v5349
      %v5463 = vpop.f32.mrb[0].mxu0
      %v5464 = vadd.f32 0.0, %v5463
      %v5465 = vpop.f32.mrb[0].mxu0
      %v5466 = vpop.f32.mrb[0].mxu0
      %v5467 = vadd.f32 0.0, %v5466
      %v5468 = vpop.f32.mrb[0].mxu0
      %5469 = vmatprep.mubr.bf16.mxu0 0
      %5470 = vmatmul.mubr.bf16.gmra.mrb[0].mxu0 %v5352
      %v5471 = vpop.f32.mrb[0].mxu0
      %v5472 = vadd.f32 0.0, %v5471
      %v5473 = vpop.f32.mrb[0].mxu0
      %v5474 = vpop.f32.mrb[0].mxu0
      %v5475 = vadd.f32 0.0, %v5474
      %v5476 = vpop.f32.mrb[0].mxu0
      %5477 = vmatprep.mubr.bf16.mxu0 0
      %5478 = vmatmul.mubr.bf16.gmra.mrb[0].mxu0 %v5355
      %v5479 = vpop.f32.mrb[0].mxu0
      %v5480 = vadd.f32 0.0, %v5479
      %v5481 = vpop.f32.mrb[0].mxu0
      %v5482 = vpop.f32.mrb[0].mxu0
      %v5483 = vadd.f32 0.0, %v5482
      %v5484 = vpop.f32.mrb[0].mxu0
      %5485 = vmatprep.mubr.bf16.mxu0 0
      %5486 = vmatmul.mubr.bf16.gmra.mrb[0].mxu0 %v5358
      %v5487 = vpop.f32.mrb[0].mxu0
      %v5488 = vadd.f32 0.0, %v5487
      %v5489 = vpop.f32.mrb[0].mxu0
      %v5490 = vpop.f32.mrb[0].mxu0
      %v5491 = vadd.f32 0.0, %v5490
      %v5492 = vpop.f32.mrb[0].mxu0
      %5493 = vmatprep.mubr.bf16.mxu0 0
      %5494 = vmatmul.mubr.bf16.gmra.mrb[0].mxu0 %v5361
      %v5495 = vpop.f32.mrb[0].mxu0
      %v5496 = vadd.f32 0.0, %v5495
      %v5497 = vpop.f32.mrb[0].mxu0
      %v5498 = vpop.f32.mrb[0].mxu0
      %v5499 = vadd.f32 0.0, %v5498
      %v5500 = vpop.f32.mrb[0].mxu0
      %5501 = vmatprep.mubr.bf16.mxu0 0
      %5502 = vmatmul.mubr.bf16.gmra.mrb[0].mxu0 %v5364
      %v5503 = vpop.f32.mrb[0].mxu0
      %v5504 = vadd.f32 0.0, %v5503
      %v5505 = vpop.f32.mrb[0].mxu0
      %v5506 = vpop.f32.mrb[0].mxu0
      %v5507 = vadd.f32 0.0, %v5506
      %v5508 = vpop.f32.mrb[0].mxu0
      %5509 = vmatprep.mubr.bf16.mxu0 0
      %5510 = vmatmul.mubr.bf16.gmra.mrb[0].mxu0 %v5367
      %v5511 = vpop.f32.mrb[0].mxu0
      %v5512 = vadd.f32 0.0, %v5511
      %v5513 = vpop.f32.mrb[0].mxu0
      %v5514 = vpop.f32.mrb[0].mxu0
      %v5515 = vadd.f32 0.0, %v5514
      %v5516 = vpop.f32.mrb[0].mxu0
      %5517 = vmatprep.mubr.bf16.mxu0 0
      %5518 = vmatmul.mubr.bf16.gmra.mrb[0].mxu0 %v5370
      %v5519 = vpop.f32.mrb[0].mxu0
      %v5520 = vadd.f32 0.0, %v5519
      %v5521 = vpop.f32.mrb[0].mxu0
      %v5522 = vpop.f32.mrb[0].mxu0
      %v5523 = vadd.f32 0.0, %v5522
      %v5524 = vpop.f32.mrb[0].mxu0
      %5525 = vmatprep.mubr.bf16.mxu0 0
      %5526 = vmatmul.mubr.bf16.gmra.mrb[0].mxu0 %v5373
      %v5527 = vpop.f32.mrb[0].mxu0
      %v5528 = vadd.f32 0.0, %v5527
      %v5529 = vpop.f32.mrb[0].mxu0
      %v5530 = vpop.f32.mrb[0].mxu0
      %v5531 = vadd.f32 0.0, %v5530
      %v5532 = vpop.f32.mrb[0].mxu0
      %5533 = vmatprep.mubr.bf16.mxu0 0
      %5534 = vmatmul.mubr.bf16.gmra.mrb[0].mxu0 %v5376
      %v5535 = vpop.f32.mrb[0].mxu0
      %v5536 = vadd.f32 0.0, %v5535
      %v5537 = vpop.f32.mrb[0].mxu0
      %v5538 = vpop.f32.mrb[0].mxu0
      %v5539 = vadd.f32 0.0, %v5538
      %v5540 = vpop.f32.mrb[0].mxu0
      %5541 = vdwg.mxu0
      %v5542 = vsel %vm1005, %v5098, 0
      %v5544 = vsel %vm1005, %v5100, 0
      %v5546 = vsel %vm1005, %v5102, 0
      %v5548 = vsel %vm1005, %v5104, 0
      %v5550 = vsel %vm1005, %v5106, 0
      %v5552 = vsel %vm1005, %v5108, 0
      %v5554 = vsel %vm1005, %v5110, 0
      %v5556 = vsel %vm1005, %v5112, 0
      %v5558 = vsel %vm1005, %v5114, 0
      %v5560 = vsel %vm1005, %v5116, 0
      %v5562 = vsel %vm1005, %v5118, 0
      %v5564 = vsel %vm1005, %v5120, 0
      %v5566 = vsel %vm1005, %v5122, 0
      %v5568 = vsel %vm1005, %v5124, 0
      %v5570 = vsel %vm1005, %v5126, 0
      %v5572 = vsel %vm1005, %v5128, 0
      %v5575 = vsel %vm1087, %v5134, 0
      %5577 = vmatprep.subr.bf16.mxu0 0
      %5578 = vmatpush1.bf16.msra.mxu0 %v5575
      %5579 = vmatprep.subr.bf16.mxu0 0
      %5580 = vmatpush1.bf16.msra.mxu0 0
      %5581 = vmatprep.subr.bf16.mxu0 0
      %5582 = vmatpush1.bf16.msra.mxu0 0
      %5583 = vmatprep.subr.bf16.mxu0 0
      %5584 = vmatpush1.bf16.msra.mxu0 0
      %5585 = vmatprep.subr.bf16.mxu0 0
      %5586 = vmatpush1.bf16.msra.mxu0 0
      %5587 = vmatprep.subr.bf16.mxu0 0
      %5588 = vmatpush1.bf16.msra.mxu0 0
      %5589 = vmatprep.subr.bf16.mxu0 0
      %5590 = vmatpush1.bf16.msra.mxu0 0
      %5591 = vmatprep.subr.bf16.mxu0 0
      %5592 = vmatpush1.bf16.msra.mxu0 0
      %5593 = vmatprep.subr.bf16.mxu0 0
      %5594 = vmatpush1.bf16.msra.mxu0 0
      %5595 = vmatprep.subr.bf16.mxu0 0
      %5596 = vmatpush1.bf16.msra.mxu0 0
      %5597 = vmatprep.subr.bf16.mxu0 0
      %5598 = vmatpush1.bf16.msra.mxu0 0
      %5599 = vmatprep.subr.bf16.mxu0 0
      %5600 = vmatpush1.bf16.msra.mxu0 0
      %5601 = vmatprep.subr.bf16.mxu0 0
      %5602 = vmatpush1.bf16.msra.mxu0 0
      %5603 = vmatprep.subr.bf16.mxu0 0
      %5604 = vmatpush1.bf16.msra.mxu0 0
      %5605 = vmatprep.subr.bf16.mxu0 0
      %5606 = vmatpush1.bf16.msra.mxu0 0
      %5607 = vmatprep.subr.bf16.mxu0 0
      %5608 = vmatpush1.bf16.msra.mxu0 0
      %5609 = vmatprep.mubr.bf16.mxu0 0
      %5610 = vmatmul.mubr.bf16.gmra.mrb[0].mxu0 %v5542
      %v5611 = vpop.f32.mrb[0].mxu0
      %v5612 = vadd.f32 %v5416, %v5611
      %v5613 = vpop.f32.mrb[0].mxu0
      %v5614 = vpop.f32.mrb[0].mxu0
      %v5615 = vadd.f32 %v5419, %v5614
      %v5616 = vpop.f32.mrb[0].mxu0
      %5617 = vmatprep.mubr.bf16.mxu0 0
      %5618 = vmatmul.mubr.bf16.gmra.mrb[0].mxu0 %v5544
      %v5619 = vpop.f32.mrb[0].mxu0
      %v5620 = vadd.f32 %v5424, %v5619
      %v5621 = vpop.f32.mrb[0].mxu0
      %v5622 = vpop.f32.mrb[0].mxu0
      %v5623 = vadd.f32 %v5427, %v5622
      %v5624 = vpop.f32.mrb[0].mxu0
      %5625 = vmatprep.mubr.bf16.mxu0 0
      %5626 = vmatmul.mubr.bf16.gmra.mrb[0].mxu0 %v5546
      %v5627 = vpop.f32.mrb[0].mxu0
      %v5628 = vadd.f32 %v5432, %v5627
      %v5629 = vpop.f32.mrb[0].mxu0
      %v5630 = vpop.f32.mrb[0].mxu0
      %v5631 = vadd.f32 %v5435, %v5630
      %v5632 = vpop.f32.mrb[0].mxu0
      %5633 = vmatprep.mubr.bf16.mxu0 0
      %5634 = vmatmul.mubr.bf16.gmra.mrb[0].mxu0 %v5548
      %v5635 = vpop.f32.mrb[0].mxu0
      %v5636 = vadd.f32 %v5440, %v5635
      %v5637 = vpop.f32.mrb[0].mxu0
      %v5638 = vpop.f32.mrb[0].mxu0
      %v5639 = vadd.f32 %v5443, %v5638
      %v5640 = vpop.f32.mrb[0].mxu0
      %5641 = vmatprep.mubr.bf16.mxu0 0
      %5642 = vmatmul.mubr.bf16.gmra.mrb[0].mxu0 %v5550
      %v5643 = vpop.f32.mrb[0].mxu0
      %v5644 = vadd.f32 %v5448, %v5643
      %v5645 = vpop.f32.mrb[0].mxu0
      %v5646 = vpop.f32.mrb[0].mxu0
      %v5647 = vadd.f32 %v5451, %v5646
      %v5648 = vpop.f32.mrb[0].mxu0
      %5649 = vmatprep.mubr.bf16.mxu0 0
      %5650 = vmatmul.mubr.bf16.gmra.mrb[0].mxu0 %v5552
      %v5651 = vpop.f32.mrb[0].mxu0
      %v5652 = vadd.f32 %v5456, %v5651
      %v5653 = vpop.f32.mrb[0].mxu0
      %v5654 = vpop.f32.mrb[0].mxu0
      %v5655 = vadd.f32 %v5459, %v5654
      %v5656 = vpop.f32.mrb[0].mxu0
      %5657 = vmatprep.mubr.bf16.mxu0 0
      %5658 = vmatmul.mubr.bf16.gmra.mrb[0].mxu0 %v5554
      %v5659 = vpop.f32.mrb[0].mxu0
      %v5660 = vadd.f32 %v5464, %v5659
      %v5661 = vpop.f32.mrb[0].mxu0
      %v5662 = vpop.f32.mrb[0].mxu0
      %v5663 = vadd.f32 %v5467, %v5662
      %v5664 = vpop.f32.mrb[0].mxu0
      %5665 = vmatprep.mubr.bf16.mxu0 0
      %5666 = vmatmul.mubr.bf16.gmra.mrb[0].mxu0 %v5556
      %v5667 = vpop.f32.mrb[0].mxu0
      %v5668 = vadd.f32 %v5472, %v5667
      %v5669 = vpop.f32.mrb[0].mxu0
      %v5670 = vpop.f32.mrb[0].mxu0
      %v5671 = vadd.f32 %v5475, %v5670
      %v5672 = vpop.f32.mrb[0].mxu0
      %5673 = vmatprep.mubr.bf16.mxu0 0
      %5674 = vmatmul.mubr.bf16.gmra.mrb[0].mxu0 %v5558
      %v5675 = vpop.f32.mrb[0].mxu0
      %v5676 = vadd.f32 %v5480, %v5675
      %v5677 = vpop.f32.mrb[0].mxu0
      %v5678 = vpop.f32.mrb[0].mxu0
      %v5679 = vadd.f32 %v5483, %v5678
      %v5680 = vpop.f32.mrb[0].mxu0
      %5681 = vmatprep.mubr.bf16.mxu0 0
      %5682 = vmatmul.mubr.bf16.gmra.mrb[0].mxu0 %v5560
      %v5683 = vpop.f32.mrb[0].mxu0
      %v5684 = vadd.f32 %v5488, %v5683
      %v5685 = vpop.f32.mrb[0].mxu0
      %v5686 = vpop.f32.mrb[0].mxu0
      %v5687 = vadd.f32 %v5491, %v5686
      %v5688 = vpop.f32.mrb[0].mxu0
      %5689 = vmatprep.mubr.bf16.mxu0 0
      %5690 = vmatmul.mubr.bf16.gmra.mrb[0].mxu0 %v5562
      %v5691 = vpop.f32.mrb[0].mxu0
      %v5692 = vadd.f32 %v5496, %v5691
      %v5693 = vpop.f32.mrb[0].mxu0
      %v5694 = vpop.f32.mrb[0].mxu0
      %v5695 = vadd.f32 %v5499, %v5694
      %v5696 = vpop.f32.mrb[0].mxu0
      %5697 = vmatprep.mubr.bf16.mxu0 0
      %5698 = vmatmul.mubr.bf16.gmra.mrb[0].mxu0 %v5564
      %v5699 = vpop.f32.mrb[0].mxu0
      %v5700 = vadd.f32 %v5504, %v5699
      %v5701 = vpop.f32.mrb[0].mxu0
      %v5702 = vpop.f32.mrb[0].mxu0
      %v5703 = vadd.f32 %v5507, %v5702
      %v5704 = vpop.f32.mrb[0].mxu0
      %5705 = vmatprep.mubr.bf16.mxu0 0
      %5706 = vmatmul.mubr.bf16.gmra.mrb[0].mxu0 %v5566
      %v5707 = vpop.f32.mrb[0].mxu0
      %v5708 = vadd.f32 %v5512, %v5707
      %v5709 = vpop.f32.mrb[0].mxu0
      %v5710 = vpop.f32.mrb[0].mxu0
      %v5711 = vadd.f32 %v5515, %v5710
      %v5712 = vpop.f32.mrb[0].mxu0
      %5713 = vmatprep.mubr.bf16.mxu0 0
      %5714 = vmatmul.mubr.bf16.gmra.mrb[0].mxu0 %v5568
      %v5715 = vpop.f32.mrb[0].mxu0
      %v5716 = vadd.f32 %v5520, %v5715
      %v5717 = vpop.f32.mrb[0].mxu0
      %v5718 = vpop.f32.mrb[0].mxu0
      %v5719 = vadd.f32 %v5523, %v5718
      %v5720 = vpop.f32.mrb[0].mxu0
      %5721 = vmatprep.mubr.bf16.mxu0 0
      %5722 = vmatmul.mubr.bf16.gmra.mrb[0].mxu0 %v5570
      %v5723 = vpop.f32.mrb[0].mxu0
      %v5724 = vadd.f32 %v5528, %v5723
      %v5725 = vpop.f32.mrb[0].mxu0
      %v5726 = vpop.f32.mrb[0].mxu0
      %v5727 = vadd.f32 %v5531, %v5726
      %v5728 = vpop.f32.mrb[0].mxu0
      %5729 = vmatprep.mubr.bf16.mxu0 0
      %5730 = vmatmul.mubr.bf16.gmra.mrb[0].mxu0 %v5572
      %v5731 = vpop.f32.mrb[0].mxu0
      %v5732 = vadd.f32 %v5536, %v5731
      %v5733 = vpop.f32.mrb[0].mxu0
      %v5734 = vpop.f32.mrb[0].mxu0
      %v5735 = vadd.f32 %v5539, %v5734
      %v5736 = vpop.f32.mrb[0].mxu0
      %5737 = vdwg.mxu0
      %vm5770 = vcmask 1046528
      %v5771 = vrot.slane %v5098, 1
      %v5772 = vrot.slane %v5099, 1
      %v5773 = vsel %vm5770, %v5771, %v5772
      %v5774 = vrot.slane %v5100, 1
      %v5775 = vrot.slane %v5101, 1
      %v5776 = vsel %vm5770, %v5774, %v5775
      %v5777 = vrot.slane %v5102, 1
      %v5778 = vrot.slane %v5103, 1
      %v5779 = vsel %vm5770, %v5777, %v5778
      %v5780 = vrot.slane %v5104, 1
      %v5781 = vrot.slane %v5105, 1
      %v5782 = vsel %vm5770, %v5780, %v5781
      %v5783 = vrot.slane %v5106, 1
      %v5784 = vrot.slane %v5107, 1
      %v5785 = vsel %vm5770, %v5783, %v5784
      %v5786 = vrot.slane %v5108, 1
      %v5787 = vrot.slane %v5109, 1
      %v5788 = vsel %vm5770, %v5786, %v5787
      %v5789 = vrot.slane %v5110, 1
      %v5790 = vrot.slane %v5111, 1
      %v5791 = vsel %vm5770, %v5789, %v5790
      %v5792 = vrot.slane %v5112, 1
      %v5793 = vrot.slane %v5113, 1
      %v5794 = vsel %vm5770, %v5792, %v5793
      %v5795 = vrot.slane %v5114, 1
      %v5796 = vrot.slane %v5115, 1
      %v5797 = vsel %vm5770, %v5795, %v5796
      %v5798 = vrot.slane %v5116, 1
      %v5799 = vrot.slane %v5117, 1
      %v5800 = vsel %vm5770, %v5798, %v5799
      %v5801 = vrot.slane %v5118, 1
      %v5802 = vrot.slane %v5119, 1
      %v5803 = vsel %vm5770, %v5801, %v5802
      %v5804 = vrot.slane %v5120, 1
      %v5805 = vrot.slane %v5121, 1
      %v5806 = vsel %vm5770, %v5804, %v5805
      %v5807 = vrot.slane %v5122, 1
      %v5808 = vrot.slane %v5123, 1
      %v5809 = vsel %vm5770, %v5807, %v5808
      %v5810 = vrot.slane %v5124, 1
      %v5811 = vrot.slane %v5125, 1
      %v5812 = vsel %vm5770, %v5810, %v5811
      %v5813 = vrot.slane %v5126, 1
      %v5814 = vrot.slane %v5127, 1
      %v5815 = vsel %vm5770, %v5813, %v5814
      %v5816 = vrot.slane %v5128, 1
      %v5817 = vrot.slane %v5129, 1
      %v5818 = vsel %vm5770, %v5816, %v5817
      %s5819 = scalar_lea.vmem %s3, 8
      %v5820 = vld [vmem:[%s5819] sm:$0xf]
      %v5822 = vsel %vm1005, %v5773, 0
      %v5825 = vsel %vm1005, %v5776, 0
      %v5828 = vsel %vm1005, %v5779, 0
      %v5831 = vsel %vm1005, %v5782, 0
      %v5834 = vsel %vm1005, %v5785, 0
      %v5837 = vsel %vm1005, %v5788, 0
      %v5840 = vsel %vm1005, %v5791, 0
      %v5843 = vsel %vm1005, %v5794, 0
      %v5846 = vsel %vm1005, %v5797, 0
      %v5849 = vsel %vm1005, %v5800, 0
      %v5852 = vsel %vm1005, %v5803, 0
      %v5855 = vsel %vm1005, %v5806, 0
      %v5858 = vsel %vm1005, %v5809, 0
      %v5861 = vsel %vm1005, %v5812, 0
      %v5864 = vsel %vm1005, %v5815, 0
      %v5867 = vsel %vm1005, %v5818, 0
      %v5870 = vsel %vm1087, %v5820, 0
      %5872 = vmatprep.subr.bf16.mxu0 0
      %5873 = vmatpush1.bf16.msra.mxu0 %v5870
      %5874 = vmatprep.subr.bf16.mxu0 0
      %5875 = vmatpush1.bf16.msra.mxu0 0
      %5876 = vmatprep.subr.bf16.mxu0 0
      %5877 = vmatpush1.bf16.msra.mxu0 0
      %5878 = vmatprep.subr.bf16.mxu0 0
      %5879 = vmatpush1.bf16.msra.mxu0 0
      %5880 = vmatprep.subr.bf16.mxu0 0
      %5881 = vmatpush1.bf16.msra.mxu0 0
      %5882 = vmatprep.subr.bf16.mxu0 0
      %5883 = vmatpush1.bf16.msra.mxu0 0
      %5884 = vmatprep.subr.bf16.mxu0 0
      %5885 = vmatpush1.bf16.msra.mxu0 0
      %5886 = vmatprep.subr.bf16.mxu0 0
      %5887 = vmatpush1.bf16.msra.mxu0 0
      %5888 = vmatprep.subr.bf16.mxu0 0
      %5889 = vmatpush1.bf16.msra.mxu0 0
      %5890 = vmatprep.subr.bf16.mxu0 0
      %5891 = vmatpush1.bf16.msra.mxu0 0
      %5892 = vmatprep.subr.bf16.mxu0 0
      %5893 = vmatpush1.bf16.msra.mxu0 0
      %5894 = vmatprep.subr.bf16.mxu0 0
      %5895 = vmatpush1.bf16.msra.mxu0 0
      %5896 = vmatprep.subr.bf16.mxu0 0
      %5897 = vmatpush1.bf16.msra.mxu0 0
      %5898 = vmatprep.subr.bf16.mxu0 0
      %5899 = vmatpush1.bf16.msra.mxu0 0
      %5900 = vmatprep.subr.bf16.mxu0 0
      %5901 = vmatpush1.bf16.msra.mxu0 0
      %5902 = vmatprep.subr.bf16.mxu0 0
      %5903 = vmatpush1.bf16.msra.mxu0 0
      %5904 = vmatprep.mubr.bf16.mxu0 0
      %5905 = vmatmul.mubr.bf16.gmra.mrb[0].mxu0 %v5822
      %v5906 = vpop.f32.mrb[0].mxu0
      %v5907 = vadd.f32 0.0, %v5906
      %v5908 = vpop.f32.mrb[0].mxu0
      %v5909 = vpop.f32.mrb[0].mxu0
      %v5910 = vadd.f32 0.0, %v5909
      %v5911 = vpop.f32.mrb[0].mxu0
      %5912 = vmatprep.mubr.bf16.mxu0 0
      %5913 = vmatmul.mubr.bf16.gmra.mrb[0].mxu0 %v5825
      %v5914 = vpop.f32.mrb[0].mxu0
      %v5915 = vadd.f32 0.0, %v5914
      %v5916 = vpop.f32.mrb[0].mxu0
      %v5917 = vpop.f32.mrb[0].mxu0
      %v5918 = vadd.f32 0.0, %v5917
      %v5919 = vpop.f32.mrb[0].mxu0
      %5920 = vmatprep.mubr.bf16.mxu0 0
      %5921 = vmatmul.mubr.bf16.gmra.mrb[0].mxu0 %v5828
      %v5922 = vpop.f32.mrb[0].mxu0
      %v5923 = vadd.f32 0.0, %v5922
      %v5924 = vpop.f32.mrb[0].mxu0
      %v5925 = vpop.f32.mrb[0].mxu0
      %v5926 = vadd.f32 0.0, %v5925
      %v5927 = vpop.f32.mrb[0].mxu0
      %5928 = vmatprep.mubr.bf16.mxu0 0
      %5929 = vmatmul.mubr.bf16.gmra.mrb[0].mxu0 %v5831
      %v5930 = vpop.f32.mrb[0].mxu0
      %v5931 = vadd.f32 0.0, %v5930
      %v5932 = vpop.f32.mrb[0].mxu0
      %v5933 = vpop.f32.mrb[0].mxu0
      %v5934 = vadd.f32 0.0, %v5933
      %v5935 = vpop.f32.mrb[0].mxu0
      %5936 = vmatprep.mubr.bf16.mxu0 0
      %5937 = vmatmul.mubr.bf16.gmra.mrb[0].mxu0 %v5834
      %v5938 = vpop.f32.mrb[0].mxu0
      %v5939 = vadd.f32 0.0, %v5938
      %v5940 = vpop.f32.mrb[0].mxu0
      %v5941 = vpop.f32.mrb[0].mxu0
      %v5942 = vadd.f32 0.0, %v5941
      %v5943 = vpop.f32.mrb[0].mxu0
      %5944 = vmatprep.mubr.bf16.mxu0 0
      %5945 = vmatmul.mubr.bf16.gmra.mrb[0].mxu0 %v5837
      %v5946 = vpop.f32.mrb[0].mxu0
      %v5947 = vadd.f32 0.0, %v5946
      %v5948 = vpop.f32.mrb[0].mxu0
      %v5949 = vpop.f32.mrb[0].mxu0
      %v5950 = vadd.f32 0.0, %v5949
      %v5951 = vpop.f32.mrb[0].mxu0
      %5952 = vmatprep.mubr.bf16.mxu0 0
      %5953 = vmatmul.mubr.bf16.gmra.mrb[0].mxu0 %v5840
      %v5954 = vpop.f32.mrb[0].mxu0
      %v5955 = vadd.f32 0.0, %v5954
      %v5956 = vpop.f32.mrb[0].mxu0
      %v5957 = vpop.f32.mrb[0].mxu0
      %v5958 = vadd.f32 0.0, %v5957
      %v5959 = vpop.f32.mrb[0].mxu0
      %5960 = vmatprep.mubr.bf16.mxu0 0
      %5961 = vmatmul.mubr.bf16.gmra.mrb[0].mxu0 %v5843
      %v5962 = vpop.f32.mrb[0].mxu0
      %v5963 = vadd.f32 0.0, %v5962
      %v5964 = vpop.f32.mrb[0].mxu0
      %v5965 = vpop.f32.mrb[0].mxu0
      %v5966 = vadd.f32 0.0, %v5965
      %v5967 = vpop.f32.mrb[0].mxu0
      %5968 = vmatprep.mubr.bf16.mxu0 0
      %5969 = vmatmul.mubr.bf16.gmra.mrb[0].mxu0 %v5846
      %v5970 = vpop.f32.mrb[0].mxu0
      %v5971 = vadd.f32 0.0, %v5970
      %v5972 = vpop.f32.mrb[0].mxu0
      %v5973 = vpop.f32.mrb[0].mxu0
      %v5974 = vadd.f32 0.0, %v5973
      %v5975 = vpop.f32.mrb[0].mxu0
      %5976 = vmatprep.mubr.bf16.mxu0 0
      %5977 = vmatmul.mubr.bf16.gmra.mrb[0].mxu0 %v5849
      %v5978 = vpop.f32.mrb[0].mxu0
      %v5979 = vadd.f32 0.0, %v5978
      %v5980 = vpop.f32.mrb[0].mxu0
      %v5981 = vpop.f32.mrb[0].mxu0
      %v5982 = vadd.f32 0.0, %v5981
      %v5983 = vpop.f32.mrb[0].mxu0
      %5984 = vmatprep.mubr.bf16.mxu0 0
      %5985 = vmatmul.mubr.bf16.gmra.mrb[0].mxu0 %v5852
      %v5986 = vpop.f32.mrb[0].mxu0
      %v5987 = vadd.f32 0.0, %v5986
      %v5988 = vpop.f32.mrb[0].mxu0
      %v5989 = vpop.f32.mrb[0].mxu0
      %v5990 = vadd.f32 0.0, %v5989
      %v5991 = vpop.f32.mrb[0].mxu0
      %5992 = vmatprep.mubr.bf16.mxu0 0
      %5993 = vmatmul.mubr.bf16.gmra.mrb[0].mxu0 %v5855
      %v5994 = vpop.f32.mrb[0].mxu0
      %v5995 = vadd.f32 0.0, %v5994
      %v5996 = vpop.f32.mrb[0].mxu0
      %v5997 = vpop.f32.mrb[0].mxu0
      %v5998 = vadd.f32 0.0, %v5997
      %v5999 = vpop.f32.mrb[0].mxu0
      %6000 = vmatprep.mubr.bf16.mxu0 0
      %6001 = vmatmul.mubr.bf16.gmra.mrb[0].mxu0 %v5858
      %v6002 = vpop.f32.mrb[0].mxu0
      %v6003 = vadd.f32 0.0, %v6002
      %v6004 = vpop.f32.mrb[0].mxu0
      %v6005 = vpop.f32.mrb[0].mxu0
      %v6006 = vadd.f32 0.0, %v6005
      %v6007 = vpop.f32.mrb[0].mxu0
      %6008 = vmatprep.mubr.bf16.mxu0 0
      %6009 = vmatmul.mubr.bf16.gmra.mrb[0].mxu0 %v5861
      %v6010 = vpop.f32.mrb[0].mxu0
      %v6011 = vadd.f32 0.0, %v6010
      %v6012 = vpop.f32.mrb[0].mxu0
      %v6013 = vpop.f32.mrb[0].mxu0
      %v6014 = vadd.f32 0.0, %v6013
      %v6015 = vpop.f32.mrb[0].mxu0
      %6016 = vmatprep.mubr.bf16.mxu0 0
      %6017 = vmatmul.mubr.bf16.gmra.mrb[0].mxu0 %v5864
      %v6018 = vpop.f32.mrb[0].mxu0
      %v6019 = vadd.f32 0.0, %v6018
      %v6020 = vpop.f32.mrb[0].mxu0
      %v6021 = vpop.f32.mrb[0].mxu0
      %v6022 = vadd.f32 0.0, %v6021
      %v6023 = vpop.f32.mrb[0].mxu0
      %6024 = vmatprep.mubr.bf16.mxu0 0
      %6025 = vmatmul.mubr.bf16.gmra.mrb[0].mxu0 %v5867
      %v6026 = vpop.f32.mrb[0].mxu0
      %v6027 = vadd.f32 0.0, %v6026
      %v6028 = vpop.f32.mrb[0].mxu0
      %v6029 = vpop.f32.mrb[0].mxu0
      %v6030 = vadd.f32 0.0, %v6029
      %v6031 = vpop.f32.mrb[0].mxu0
      %6032 = vdwg.mxu0
      %v6033 = vadd.f32 %v5612, %v5907
      %v6034 = vadd.f32 %v5615, %v5910
      %v6035 = vadd.f32 %v5620, %v5915
      %v6036 = vadd.f32 %v5623, %v5918
      %v6037 = vadd.f32 %v5628, %v5923
      %v6038 = vadd.f32 %v5631, %v5926
      %v6039 = vadd.f32 %v5636, %v5931
      %v6040 = vadd.f32 %v5639, %v5934
      %v6041 = vadd.f32 %v5644, %v5939
      %v6042 = vadd.f32 %v5647, %v5942
      %v6043 = vadd.f32 %v5652, %v5947
      %v6044 = vadd.f32 %v5655, %v5950
      %v6045 = vadd.f32 %v5660, %v5955
      %v6046 = vadd.f32 %v5663, %v5958
      %v6047 = vadd.f32 %v5668, %v5963
      %v6048 = vadd.f32 %v5671, %v5966
      %v6049 = vadd.f32 %v5676, %v5971
      %v6050 = vadd.f32 %v5679, %v5974
      %v6051 = vadd.f32 %v5684, %v5979
      %v6052 = vadd.f32 %v5687, %v5982
      %v6053 = vadd.f32 %v5692, %v5987
      %v6054 = vadd.f32 %v5695, %v5990
      %v6055 = vadd.f32 %v5700, %v5995
      %v6056 = vadd.f32 %v5703, %v5998
      %v6057 = vadd.f32 %v5708, %v6003
      %v6058 = vadd.f32 %v5711, %v6006
      %v6059 = vadd.f32 %v5716, %v6011
      %v6060 = vadd.f32 %v5719, %v6014
      %v6061 = vadd.f32 %v5724, %v6019
      %v6062 = vadd.f32 %v5727, %v6022
      %v6063 = vadd.f32 %v5732, %v6027
      %v6064 = vadd.f32 %v5735, %v6030
      %s6065 = scalar_lea.vmem %s3, 12
      %v6066 = vld [vmem:[%s6065] sm:$0xf]
      %v6068 = vsel %vm1005, %v5130, 0
      %v6071 = vsel %vm1087, %v6066, 0
      %6073 = vmatprep.subr.bf16.mxu0 0
      %6074 = vmatpush1.bf16.msra.mxu0 %v6071
      %6075 = vmatprep.subr.bf16.mxu0 0
      %6076 = vmatpush1.bf16.msra.mxu0 0
      %6077 = vmatprep.subr.bf16.mxu0 0
      %6078 = vmatpush1.bf16.msra.mxu0 0
      %6079 = vmatprep.subr.bf16.mxu0 0
      %6080 = vmatpush1.bf16.msra.mxu0 0
      %6081 = vmatprep.subr.bf16.mxu0 0
      %6082 = vmatpush1.bf16.msra.mxu0 0
      %6083 = vmatprep.subr.bf16.mxu0 0
      %6084 = vmatpush1.bf16.msra.mxu0 0
      %6085 = vmatprep.subr.bf16.mxu0 0
      %6086 = vmatpush1.bf16.msra.mxu0 0
      %6087 = vmatprep.subr.bf16.mxu0 0
      %6088 = vmatpush1.bf16.msra.mxu0 0
      %6089 = vmatprep.subr.bf16.mxu0 0
      %6090 = vmatpush1.bf16.msra.mxu0 0
      %6091 = vmatprep.subr.bf16.mxu0 0
      %6092 = vmatpush1.bf16.msra.mxu0 0
      %6093 = vmatprep.subr.bf16.mxu0 0
      %6094 = vmatpush1.bf16.msra.mxu0 0
      %6095 = vmatprep.subr.bf16.mxu0 0
      %6096 = vmatpush1.bf16.msra.mxu0 0
      %6097 = vmatprep.subr.bf16.mxu0 0
      %6098 = vmatpush1.bf16.msra.mxu0 0
      %6099 = vmatprep.subr.bf16.mxu0 0
      %6100 = vmatpush1.bf16.msra.mxu0 0
      %6101 = vmatprep.subr.bf16.mxu0 0
      %6102 = vmatpush1.bf16.msra.mxu0 0
      %6103 = vmatprep.subr.bf16.mxu0 0
      %6104 = vmatpush1.bf16.msra.mxu0 0
      %6105 = vmatprep.mubr.bf16.mxu0 0
      %6106 = vmatmul.mubr.bf16.gmra.mrb[0].mxu0 %v5544
      %v6107 = vpop.f32.mrb[0].mxu0
      %v6108 = vadd.f32 0.0, %v6107
      %v6109 = vpop.f32.mrb[0].mxu0
      %v6110 = vpop.f32.mrb[0].mxu0
      %v6111 = vadd.f32 0.0, %v6110
      %v6112 = vpop.f32.mrb[0].mxu0
      %6113 = vmatprep.mubr.bf16.mxu0 0
      %6114 = vmatmul.mubr.bf16.gmra.mrb[0].mxu0 %v5546
      %v6115 = vpop.f32.mrb[0].mxu0
      %v6116 = vadd.f32 0.0, %v6115
      %v6117 = vpop.f32.mrb[0].mxu0
      %v6118 = vpop.f32.mrb[0].mxu0
      %v6119 = vadd.f32 0.0, %v6118
      %v6120 = vpop.f32.mrb[0].mxu0
      %6121 = vmatprep.mubr.bf16.mxu0 0
      %6122 = vmatmul.mubr.bf16.gmra.mrb[0].mxu0 %v5548
      %v6123 = vpop.f32.mrb[0].mxu0
      %v6124 = vadd.f32 0.0, %v6123
      %v6125 = vpop.f32.mrb[0].mxu0
      %v6126 = vpop.f32.mrb[0].mxu0
      %v6127 = vadd.f32 0.0, %v6126
      %v6128 = vpop.f32.mrb[0].mxu0
      %6129 = vmatprep.mubr.bf16.mxu0 0
      %6130 = vmatmul.mubr.bf16.gmra.mrb[0].mxu0 %v5550
      %v6131 = vpop.f32.mrb[0].mxu0
      %v6132 = vadd.f32 0.0, %v6131
      %v6133 = vpop.f32.mrb[0].mxu0
      %v6134 = vpop.f32.mrb[0].mxu0
      %v6135 = vadd.f32 0.0, %v6134
      %v6136 = vpop.f32.mrb[0].mxu0
      %6137 = vmatprep.mubr.bf16.mxu0 0
      %6138 = vmatmul.mubr.bf16.gmra.mrb[0].mxu0 %v5552
      %v6139 = vpop.f32.mrb[0].mxu0
      %v6140 = vadd.f32 0.0, %v6139
      %v6141 = vpop.f32.mrb[0].mxu0
      %v6142 = vpop.f32.mrb[0].mxu0
      %v6143 = vadd.f32 0.0, %v6142
      %v6144 = vpop.f32.mrb[0].mxu0
      %6145 = vmatprep.mubr.bf16.mxu0 0
      %6146 = vmatmul.mubr.bf16.gmra.mrb[0].mxu0 %v5554
      %v6147 = vpop.f32.mrb[0].mxu0
      %v6148 = vadd.f32 0.0, %v6147
      %v6149 = vpop.f32.mrb[0].mxu0
      %v6150 = vpop.f32.mrb[0].mxu0
      %v6151 = vadd.f32 0.0, %v6150
      %v6152 = vpop.f32.mrb[0].mxu0
      %6153 = vmatprep.mubr.bf16.mxu0 0
      %6154 = vmatmul.mubr.bf16.gmra.mrb[0].mxu0 %v5556
      %v6155 = vpop.f32.mrb[0].mxu0
      %v6156 = vadd.f32 0.0, %v6155
      %v6157 = vpop.f32.mrb[0].mxu0
      %v6158 = vpop.f32.mrb[0].mxu0
      %v6159 = vadd.f32 0.0, %v6158
      %v6160 = vpop.f32.mrb[0].mxu0
      %6161 = vmatprep.mubr.bf16.mxu0 0
      %6162 = vmatmul.mubr.bf16.gmra.mrb[0].mxu0 %v5558
      %v6163 = vpop.f32.mrb[0].mxu0
      %v6164 = vadd.f32 0.0, %v6163
      %v6165 = vpop.f32.mrb[0].mxu0
      %v6166 = vpop.f32.mrb[0].mxu0
      %v6167 = vadd.f32 0.0, %v6166
      %v6168 = vpop.f32.mrb[0].mxu0
      %6169 = vmatprep.mubr.bf16.mxu0 0
      %6170 = vmatmul.mubr.bf16.gmra.mrb[0].mxu0 %v5560
      %v6171 = vpop.f32.mrb[0].mxu0
      %v6172 = vadd.f32 0.0, %v6171
      %v6173 = vpop.f32.mrb[0].mxu0
      %v6174 = vpop.f32.mrb[0].mxu0
      %v6175 = vadd.f32 0.0, %v6174
      %v6176 = vpop.f32.mrb[0].mxu0
      %6177 = vmatprep.mubr.bf16.mxu0 0
      %6178 = vmatmul.mubr.bf16.gmra.mrb[0].mxu0 %v5562
      %v6179 = vpop.f32.mrb[0].mxu0
      %v6180 = vadd.f32 0.0, %v6179
      %v6181 = vpop.f32.mrb[0].mxu0
      %v6182 = vpop.f32.mrb[0].mxu0
      %v6183 = vadd.f32 0.0, %v6182
      %v6184 = vpop.f32.mrb[0].mxu0
      %6185 = vmatprep.mubr.bf16.mxu0 0
      %6186 = vmatmul.mubr.bf16.gmra.mrb[0].mxu0 %v5564
      %v6187 = vpop.f32.mrb[0].mxu0
      %v6188 = vadd.f32 0.0, %v6187
      %v6189 = vpop.f32.mrb[0].mxu0
      %v6190 = vpop.f32.mrb[0].mxu0
      %v6191 = vadd.f32 0.0, %v6190
      %v6192 = vpop.f32.mrb[0].mxu0
      %6193 = vmatprep.mubr.bf16.mxu0 0
      %6194 = vmatmul.mubr.bf16.gmra.mrb[0].mxu0 %v5566
      %v6195 = vpop.f32.mrb[0].mxu0
      %v6196 = vadd.f32 0.0, %v6195
      %v6197 = vpop.f32.mrb[0].mxu0
      %v6198 = vpop.f32.mrb[0].mxu0
      %v6199 = vadd.f32 0.0, %v6198
      %v6200 = vpop.f32.mrb[0].mxu0
      %6201 = vmatprep.mubr.bf16.mxu0 0
      %6202 = vmatmul.mubr.bf16.gmra.mrb[0].mxu0 %v5568
      %v6203 = vpop.f32.mrb[0].mxu0
      %v6204 = vadd.f32 0.0, %v6203
      %v6205 = vpop.f32.mrb[0].mxu0
      %v6206 = vpop.f32.mrb[0].mxu0
      %v6207 = vadd.f32 0.0, %v6206
      %v6208 = vpop.f32.mrb[0].mxu0
      %6209 = vmatprep.mubr.bf16.mxu0 0
      %6210 = vmatmul.mubr.bf16.gmra.mrb[0].mxu0 %v5570
      %v6211 = vpop.f32.mrb[0].mxu0
      %v6212 = vadd.f32 0.0, %v6211
      %v6213 = vpop.f32.mrb[0].mxu0
      %v6214 = vpop.f32.mrb[0].mxu0
      %v6215 = vadd.f32 0.0, %v6214
      %v6216 = vpop.f32.mrb[0].mxu0
      %6217 = vmatprep.mubr.bf16.mxu0 0
      %6218 = vmatmul.mubr.bf16.gmra.mrb[0].mxu0 %v5572
      %v6219 = vpop.f32.mrb[0].mxu0
      %v6220 = vadd.f32 0.0, %v6219
      %v6221 = vpop.f32.mrb[0].mxu0
      %v6222 = vpop.f32.mrb[0].mxu0
      %v6223 = vadd.f32 0.0, %v6222
      %v6224 = vpop.f32.mrb[0].mxu0
      %6225 = vmatprep.mubr.bf16.mxu0 0
      %6226 = vmatmul.mubr.bf16.gmra.mrb[0].mxu0 %v6068
      %v6227 = vpop.f32.mrb[0].mxu0
      %v6228 = vadd.f32 0.0, %v6227
      %v6229 = vpop.f32.mrb[0].mxu0
      %v6230 = vpop.f32.mrb[0].mxu0
      %v6231 = vadd.f32 0.0, %v6230
      %v6232 = vpop.f32.mrb[0].mxu0
      %6233 = vdwg.mxu0
      %v6234 = vadd.f32 %v6033, %v6108
      %v6235 = vadd.f32 %v6034, %v6111
      %v6236 = vadd.f32 %v6035, %v6116
      %v6237 = vadd.f32 %v6036, %v6119
      %v6238 = vadd.f32 %v6037, %v6124
      %v6239 = vadd.f32 %v6038, %v6127
      %v6240 = vadd.f32 %v6039, %v6132
      %v6241 = vadd.f32 %v6040, %v6135
      %v6242 = vadd.f32 %v6041, %v6140
      %v6243 = vadd.f32 %v6042, %v6143
      %v6244 = vadd.f32 %v6043, %v6148
      %v6245 = vadd.f32 %v6044, %v6151
      %v6246 = vadd.f32 %v6045, %v6156
      %v6247 = vadd.f32 %v6046, %v6159
      %v6248 = vadd.f32 %v6047, %v6164
      %v6249 = vadd.f32 %v6048, %v6167
      %v6250 = vadd.f32 %v6049, %v6172
      %v6251 = vadd.f32 %v6050, %v6175
      %v6252 = vadd.f32 %v6051, %v6180
      %v6253 = vadd.f32 %v6052, %v6183
      %v6254 = vadd.f32 %v6053, %v6188
      %v6255 = vadd.f32 %v6054, %v6191
      %v6256 = vadd.f32 %v6055, %v6196
      %v6257 = vadd.f32 %v6056, %v6199
      %v6258 = vadd.f32 %v6057, %v6204
      %v6259 = vadd.f32 %v6058, %v6207
      %v6260 = vadd.f32 %v6059, %v6212
      %v6261 = vadd.f32 %v6060, %v6215
      %v6262 = vadd.f32 %v6061, %v6220
      %v6263 = vadd.f32 %v6062, %v6223
      %v6264 = vadd.f32 %v6063, %v6228
      %v6265 = vadd.f32 %v6064, %v6231
      %v6266 = vshrl.u32 %v5130, 16
      %v6268 = vshll.u32 %v5130, 16
      %v6270 = vrot.slane %v6268, 1
      %v6271 = vor.u32 %v6266, %v6270
      %v6273 = vshll.u32 %v5131, 16
      %v6275 = vrot.slane %v6273, 1
      %v6276 = vsel %vm5135, %v6271, %v6275
      %s6277 = scalar_lea.vmem %s3, 16
      %v6278 = vld [vmem:[%s6277] sm:$0xf]
      %v6280 = vsel %vm1005, %v6276, 0
      %v6283 = vsel %vm1087, %v6278, 0
      %6285 = vmatprep.subr.bf16.mxu0 0
      %6286 = vmatpush1.bf16.msra.mxu0 %v6283
      %6287 = vmatprep.subr.bf16.mxu0 0
      %6288 = vmatpush1.bf16.msra.mxu0 0
      %6289 = vmatprep.subr.bf16.mxu0 0
      %6290 = vmatpush1.bf16.msra.mxu0 0
      %6291 = vmatprep.subr.bf16.mxu0 0
      %6292 = vmatpush1.bf16.msra.mxu0 0
      %6293 = vmatprep.subr.bf16.mxu0 0
      %6294 = vmatpush1.bf16.msra.mxu0 0
      %6295 = vmatprep.subr.bf16.mxu0 0
      %6296 = vmatpush1.bf16.msra.mxu0 0
      %6297 = vmatprep.subr.bf16.mxu0 0
      %6298 = vmatpush1.bf16.msra.mxu0 0
      %6299 = vmatprep.subr.bf16.mxu0 0
      %6300 = vmatpush1.bf16.msra.mxu0 0
      %6301 = vmatprep.subr.bf16.mxu0 0
      %6302 = vmatpush1.bf16.msra.mxu0 0
      %6303 = vmatprep.subr.bf16.mxu0 0
      %6304 = vmatpush1.bf16.msra.mxu0 0
      %6305 = vmatprep.subr.bf16.mxu0 0
      %6306 = vmatpush1.bf16.msra.mxu0 0
      %6307 = vmatprep.subr.bf16.mxu0 0
      %6308 = vmatpush1.bf16.msra.mxu0 0
      %6309 = vmatprep.subr.bf16.mxu0 0
      %6310 = vmatpush1.bf16.msra.mxu0 0
      %6311 = vmatprep.subr.bf16.mxu0 0
      %6312 = vmatpush1.bf16.msra.mxu0 0
      %6313 = vmatprep.subr.bf16.mxu0 0
      %6314 = vmatpush1.bf16.msra.mxu0 0
      %6315 = vmatprep.subr.bf16.mxu0 0
      %6316 = vmatpush1.bf16.msra.mxu0 0
      %6317 = vmatprep.mubr.bf16.mxu0 0
      %6318 = vmatmul.mubr.bf16.gmra.mrb[0].mxu0 %v5334
      %v6319 = vpop.f32.mrb[0].mxu0
      %v6320 = vadd.f32 0.0, %v6319
      %v6321 = vpop.f32.mrb[0].mxu0
      %v6322 = vpop.f32.mrb[0].mxu0
      %v6323 = vadd.f32 0.0, %v6322
      %v6324 = vpop.f32.mrb[0].mxu0
      %6325 = vmatprep.mubr.bf16.mxu0 0
      %6326 = vmatmul.mubr.bf16.gmra.mrb[0].mxu0 %v5337
      %v6327 = vpop.f32.mrb[0].mxu0
      %v6328 = vadd.f32 0.0, %v6327
      %v6329 = vpop.f32.mrb[0].mxu0
      %v6330 = vpop.f32.mrb[0].mxu0
      %v6331 = vadd.f32 0.0, %v6330
      %v6332 = vpop.f32.mrb[0].mxu0
      %6333 = vmatprep.mubr.bf16.mxu0 0
      %6334 = vmatmul.mubr.bf16.gmra.mrb[0].mxu0 %v5340
      %v6335 = vpop.f32.mrb[0].mxu0
      %v6336 = vadd.f32 0.0, %v6335
      %v6337 = vpop.f32.mrb[0].mxu0
      %v6338 = vpop.f32.mrb[0].mxu0
      %v6339 = vadd.f32 0.0, %v6338
      %v6340 = vpop.f32.mrb[0].mxu0
      %6341 = vmatprep.mubr.bf16.mxu0 0
      %6342 = vmatmul.mubr.bf16.gmra.mrb[0].mxu0 %v5343
      %v6343 = vpop.f32.mrb[0].mxu0
      %v6344 = vadd.f32 0.0, %v6343
      %v6345 = vpop.f32.mrb[0].mxu0
      %v6346 = vpop.f32.mrb[0].mxu0
      %v6347 = vadd.f32 0.0, %v6346
      %v6348 = vpop.f32.mrb[0].mxu0
      %6349 = vmatprep.mubr.bf16.mxu0 0
      %6350 = vmatmul.mubr.bf16.gmra.mrb[0].mxu0 %v5346
      %v6351 = vpop.f32.mrb[0].mxu0
      %v6352 = vadd.f32 0.0, %v6351
      %v6353 = vpop.f32.mrb[0].mxu0
      %v6354 = vpop.f32.mrb[0].mxu0
      %v6355 = vadd.f32 0.0, %v6354
      %v6356 = vpop.f32.mrb[0].mxu0
      %6357 = vmatprep.mubr.bf16.mxu0 0
      %6358 = vmatmul.mubr.bf16.gmra.mrb[0].mxu0 %v5349
      %v6359 = vpop.f32.mrb[0].mxu0
      %v6360 = vadd.f32 0.0, %v6359
      %v6361 = vpop.f32.mrb[0].mxu0
      %v6362 = vpop.f32.mrb[0].mxu0
      %v6363 = vadd.f32 0.0, %v6362
      %v6364 = vpop.f32.mrb[0].mxu0
      %6365 = vmatprep.mubr.bf16.mxu0 0
      %6366 = vmatmul.mubr.bf16.gmra.mrb[0].mxu0 %v5352
      %v6367 = vpop.f32.mrb[0].mxu0
      %v6368 = vadd.f32 0.0, %v6367
      %v6369 = vpop.f32.mrb[0].mxu0
      %v6370 = vpop.f32.mrb[0].mxu0
      %v6371 = vadd.f32 0.0, %v6370
      %v6372 = vpop.f32.mrb[0].mxu0
      %6373 = vmatprep.mubr.bf16.mxu0 0
      %6374 = vmatmul.mubr.bf16.gmra.mrb[0].mxu0 %v5355
      %v6375 = vpop.f32.mrb[0].mxu0
      %v6376 = vadd.f32 0.0, %v6375
      %v6377 = vpop.f32.mrb[0].mxu0
      %v6378 = vpop.f32.mrb[0].mxu0
      %v6379 = vadd.f32 0.0, %v6378
      %v6380 = vpop.f32.mrb[0].mxu0
      %6381 = vmatprep.mubr.bf16.mxu0 0
      %6382 = vmatmul.mubr.bf16.gmra.mrb[0].mxu0 %v5358
      %v6383 = vpop.f32.mrb[0].mxu0
      %v6384 = vadd.f32 0.0, %v6383
      %v6385 = vpop.f32.mrb[0].mxu0
      %v6386 = vpop.f32.mrb[0].mxu0
      %v6387 = vadd.f32 0.0, %v6386
      %v6388 = vpop.f32.mrb[0].mxu0
      %6389 = vmatprep.mubr.bf16.mxu0 0
      %6390 = vmatmul.mubr.bf16.gmra.mrb[0].mxu0 %v5361
      %v6391 = vpop.f32.mrb[0].mxu0
      %v6392 = vadd.f32 0.0, %v6391
      %v6393 = vpop.f32.mrb[0].mxu0
      %v6394 = vpop.f32.mrb[0].mxu0
      %v6395 = vadd.f32 0.0, %v6394
      %v6396 = vpop.f32.mrb[0].mxu0
      %6397 = vmatprep.mubr.bf16.mxu0 0
      %6398 = vmatmul.mubr.bf16.gmra.mrb[0].mxu0 %v5364
      %v6399 = vpop.f32.mrb[0].mxu0
      %v6400 = vadd.f32 0.0, %v6399
      %v6401 = vpop.f32.mrb[0].mxu0
      %v6402 = vpop.f32.mrb[0].mxu0
      %v6403 = vadd.f32 0.0, %v6402
      %v6404 = vpop.f32.mrb[0].mxu0
      %6405 = vmatprep.mubr.bf16.mxu0 0
      %6406 = vmatmul.mubr.bf16.gmra.mrb[0].mxu0 %v5367
      %v6407 = vpop.f32.mrb[0].mxu0
      %v6408 = vadd.f32 0.0, %v6407
      %v6409 = vpop.f32.mrb[0].mxu0
      %v6410 = vpop.f32.mrb[0].mxu0
      %v6411 = vadd.f32 0.0, %v6410
      %v6412 = vpop.f32.mrb[0].mxu0
      %6413 = vmatprep.mubr.bf16.mxu0 0
      %6414 = vmatmul.mubr.bf16.gmra.mrb[0].mxu0 %v5370
      %v6415 = vpop.f32.mrb[0].mxu0
      %v6416 = vadd.f32 0.0, %v6415
      %v6417 = vpop.f32.mrb[0].mxu0
      %v6418 = vpop.f32.mrb[0].mxu0
      %v6419 = vadd.f32 0.0, %v6418
      %v6420 = vpop.f32.mrb[0].mxu0
      %6421 = vmatprep.mubr.bf16.mxu0 0
      %6422 = vmatmul.mubr.bf16.gmra.mrb[0].mxu0 %v5373
      %v6423 = vpop.f32.mrb[0].mxu0
      %v6424 = vadd.f32 0.0, %v6423
      %v6425 = vpop.f32.mrb[0].mxu0
      %v6426 = vpop.f32.mrb[0].mxu0
      %v6427 = vadd.f32 0.0, %v6426
      %v6428 = vpop.f32.mrb[0].mxu0
      %6429 = vmatprep.mubr.bf16.mxu0 0
      %6430 = vmatmul.mubr.bf16.gmra.mrb[0].mxu0 %v5376
      %v6431 = vpop.f32.mrb[0].mxu0
      %v6432 = vadd.f32 0.0, %v6431
      %v6433 = vpop.f32.mrb[0].mxu0
      %v6434 = vpop.f32.mrb[0].mxu0
      %v6435 = vadd.f32 0.0, %v6434
      %v6436 = vpop.f32.mrb[0].mxu0
      %6437 = vmatprep.mubr.bf16.mxu0 0
      %6438 = vmatmul.mubr.bf16.gmra.mrb[0].mxu0 %v6280
      %v6439 = vpop.f32.mrb[0].mxu0
      %v6440 = vadd.f32 0.0, %v6439
      %v6441 = vpop.f32.mrb[0].mxu0
      %v6442 = vpop.f32.mrb[0].mxu0
      %v6443 = vadd.f32 0.0, %v6442
      %v6444 = vpop.f32.mrb[0].mxu0
      %6445 = vdwg.mxu0
      %v6446 = vadd.f32 %v6234, %v6320
      %v6447 = vadd.f32 %v6235, %v6323
      %v6448 = vadd.f32 %v6236, %v6328
      %v6449 = vadd.f32 %v6237, %v6331
      %v6450 = vadd.f32 %v6238, %v6336
      %v6451 = vadd.f32 %v6239, %v6339
      %v6452 = vadd.f32 %v6240, %v6344
      %v6453 = vadd.f32 %v6241, %v6347
      %v6454 = vadd.f32 %v6242, %v6352
      %v6455 = vadd.f32 %v6243, %v6355
      %v6456 = vadd.f32 %v6244, %v6360
      %v6457 = vadd.f32 %v6245, %v6363
      %v6458 = vadd.f32 %v6246, %v6368
      %v6459 = vadd.f32 %v6247, %v6371
      %v6460 = vadd.f32 %v6248, %v6376
      %v6461 = vadd.f32 %v6249, %v6379
      %v6462 = vadd.f32 %v6250, %v6384
      %v6463 = vadd.f32 %v6251, %v6387
      %v6464 = vadd.f32 %v6252, %v6392
      %v6465 = vadd.f32 %v6253, %v6395
      %v6466 = vadd.f32 %v6254, %v6400
      %v6467 = vadd.f32 %v6255, %v6403
      %v6468 = vadd.f32 %v6256, %v6408
      %v6469 = vadd.f32 %v6257, %v6411
      %v6470 = vadd.f32 %v6258, %v6416
      %v6471 = vadd.f32 %v6259, %v6419
      %v6472 = vadd.f32 %v6260, %v6424
      %v6473 = vadd.f32 %v6261, %v6427
      %v6474 = vadd.f32 %v6262, %v6432
      %v6475 = vadd.f32 %v6263, %v6435
      %v6476 = vadd.f32 %v6264, %v6440
      %v6477 = vadd.f32 %v6265, %v6443
      %v6480 = vrot.slane %v5130, 1
      %v6481 = vrot.slane %v5131, 1
      %v6482 = vsel %vm5770, %v6480, %v6481
      %s6483 = scalar_lea.vmem %s3, 20
      %v6484 = vld [vmem:[%s6483] sm:$0xf]
      %v6486 = vsel %vm1005, %v6482, 0
      %v6489 = vsel %vm1087, %v6484, 0
      %6491 = vmatprep.subr.bf16.mxu0 0
      %6492 = vmatpush1.bf16.msra.mxu0 %v6489
      %6493 = vmatprep.subr.bf16.mxu0 0
      %6494 = vmatpush1.bf16.msra.mxu0 0
      %6495 = vmatprep.subr.bf16.mxu0 0
      %6496 = vmatpush1.bf16.msra.mxu0 0
      %6497 = vmatprep.subr.bf16.mxu0 0
      %6498 = vmatpush1.bf16.msra.mxu0 0
      %6499 = vmatprep.subr.bf16.mxu0 0
      %6500 = vmatpush1.bf16.msra.mxu0 0
      %6501 = vmatprep.subr.bf16.mxu0 0
      %6502 = vmatpush1.bf16.msra.mxu0 0
      %6503 = vmatprep.subr.bf16.mxu0 0
      %6504 = vmatpush1.bf16.msra.mxu0 0
      %6505 = vmatprep.subr.bf16.mxu0 0
      %6506 = vmatpush1.bf16.msra.mxu0 0
      %6507 = vmatprep.subr.bf16.mxu0 0
      %6508 = vmatpush1.bf16.msra.mxu0 0
      %6509 = vmatprep.subr.bf16.mxu0 0
      %6510 = vmatpush1.bf16.msra.mxu0 0
      %6511 = vmatprep.subr.bf16.mxu0 0
      %6512 = vmatpush1.bf16.msra.mxu0 0
      %6513 = vmatprep.subr.bf16.mxu0 0
      %6514 = vmatpush1.bf16.msra.mxu0 0
      %6515 = vmatprep.subr.bf16.mxu0 0
      %6516 = vmatpush1.bf16.msra.mxu0 0
      %6517 = vmatprep.subr.bf16.mxu0 0
      %6518 = vmatpush1.bf16.msra.mxu0 0
      %6519 = vmatprep.subr.bf16.mxu0 0
      %6520 = vmatpush1.bf16.msra.mxu0 0
      %6521 = vmatprep.subr.bf16.mxu0 0
      %6522 = vmatpush1.bf16.msra.mxu0 0
      %6523 = vmatprep.mubr.bf16.mxu0 0
      %6524 = vmatmul.mubr.bf16.gmra.mrb[0].mxu0 %v5825
      %v6525 = vpop.f32.mrb[0].mxu0
      %v6526 = vadd.f32 0.0, %v6525
      %v6527 = vpop.f32.mrb[0].mxu0
      %v6528 = vpop.f32.mrb[0].mxu0
      %v6529 = vadd.f32 0.0, %v6528
      %v6530 = vpop.f32.mrb[0].mxu0
      %6531 = vmatprep.mubr.bf16.mxu0 0
      %6532 = vmatmul.mubr.bf16.gmra.mrb[0].mxu0 %v5828
      %v6533 = vpop.f32.mrb[0].mxu0
      %v6534 = vadd.f32 0.0, %v6533
      %v6535 = vpop.f32.mrb[0].mxu0
      %v6536 = vpop.f32.mrb[0].mxu0
      %v6537 = vadd.f32 0.0, %v6536
      %v6538 = vpop.f32.mrb[0].mxu0
      %6539 = vmatprep.mubr.bf16.mxu0 0
      %6540 = vmatmul.mubr.bf16.gmra.mrb[0].mxu0 %v5831
      %v6541 = vpop.f32.mrb[0].mxu0
      %v6542 = vadd.f32 0.0, %v6541
      %v6543 = vpop.f32.mrb[0].mxu0
      %v6544 = vpop.f32.mrb[0].mxu0
      %v6545 = vadd.f32 0.0, %v6544
      %v6546 = vpop.f32.mrb[0].mxu0
      %6547 = vmatprep.mubr.bf16.mxu0 0
      %6548 = vmatmul.mubr.bf16.gmra.mrb[0].mxu0 %v5834
      %v6549 = vpop.f32.mrb[0].mxu0
      %v6550 = vadd.f32 0.0, %v6549
      %v6551 = vpop.f32.mrb[0].mxu0
      %v6552 = vpop.f32.mrb[0].mxu0
      %v6553 = vadd.f32 0.0, %v6552
      %v6554 = vpop.f32.mrb[0].mxu0
      %6555 = vmatprep.mubr.bf16.mxu0 0
      %6556 = vmatmul.mubr.bf16.gmra.mrb[0].mxu0 %v5837
      %v6557 = vpop.f32.mrb[0].mxu0
      %v6558 = vadd.f32 0.0, %v6557
      %v6559 = vpop.f32.mrb[0].mxu0
      %v6560 = vpop.f32.mrb[0].mxu0
      %v6561 = vadd.f32 0.0, %v6560
      %v6562 = vpop.f32.mrb[0].mxu0
      %6563 = vmatprep.mubr.bf16.mxu0 0
      %6564 = vmatmul.mubr.bf16.gmra.mrb[0].mxu0 %v5840
      %v6565 = vpop.f32.mrb[0].mxu0
      %v6566 = vadd.f32 0.0, %v6565
      %v6567 = vpop.f32.mrb[0].mxu0
      %v6568 = vpop.f32.mrb[0].mxu0
      %v6569 = vadd.f32 0.0, %v6568
      %v6570 = vpop.f32.mrb[0].mxu0
      %6571 = vmatprep.mubr.bf16.mxu0 0
      %6572 = vmatmul.mubr.bf16.gmra.mrb[0].mxu0 %v5843
      %v6573 = vpop.f32.mrb[0].mxu0
      %v6574 = vadd.f32 0.0, %v6573
      %v6575 = vpop.f32.mrb[0].mxu0
      %v6576 = vpop.f32.mrb[0].mxu0
      %v6577 = vadd.f32 0.0, %v6576
      %v6578 = vpop.f32.mrb[0].mxu0
      %6579 = vmatprep.mubr.bf16.mxu0 0
      %6580 = vmatmul.mubr.bf16.gmra.mrb[0].mxu0 %v5846
      %v6581 = vpop.f32.mrb[0].mxu0
      %v6582 = vadd.f32 0.0, %v6581
      %v6583 = vpop.f32.mrb[0].mxu0
      %v6584 = vpop.f32.mrb[0].mxu0
      %v6585 = vadd.f32 0.0, %v6584
      %v6586 = vpop.f32.mrb[0].mxu0
      %6587 = vmatprep.mubr.bf16.mxu0 0
      %6588 = vmatmul.mubr.bf16.gmra.mrb[0].mxu0 %v5849
      %v6589 = vpop.f32.mrb[0].mxu0
      %v6590 = vadd.f32 0.0, %v6589
      %v6591 = vpop.f32.mrb[0].mxu0
      %v6592 = vpop.f32.mrb[0].mxu0
      %v6593 = vadd.f32 0.0, %v6592
      %v6594 = vpop.f32.mrb[0].mxu0
      %6595 = vmatprep.mubr.bf16.mxu0 0
      %6596 = vmatmul.mubr.bf16.gmra.mrb[0].mxu0 %v5852
      %v6597 = vpop.f32.mrb[0].mxu0
      %v6598 = vadd.f32 0.0, %v6597
      %v6599 = vpop.f32.mrb[0].mxu0
      %v6600 = vpop.f32.mrb[0].mxu0
      %v6601 = vadd.f32 0.0, %v6600
      %v6602 = vpop.f32.mrb[0].mxu0
      %6603 = vmatprep.mubr.bf16.mxu0 0
      %6604 = vmatmul.mubr.bf16.gmra.mrb[0].mxu0 %v5855
      %v6605 = vpop.f32.mrb[0].mxu0
      %v6606 = vadd.f32 0.0, %v6605
      %v6607 = vpop.f32.mrb[0].mxu0
      %v6608 = vpop.f32.mrb[0].mxu0
      %v6609 = vadd.f32 0.0, %v6608
      %v6610 = vpop.f32.mrb[0].mxu0
      %6611 = vmatprep.mubr.bf16.mxu0 0
      %6612 = vmatmul.mubr.bf16.gmra.mrb[0].mxu0 %v5858
      %v6613 = vpop.f32.mrb[0].mxu0
      %v6614 = vadd.f32 0.0, %v6613
      %v6615 = vpop.f32.mrb[0].mxu0
      %v6616 = vpop.f32.mrb[0].mxu0
      %v6617 = vadd.f32 0.0, %v6616
      %v6618 = vpop.f32.mrb[0].mxu0
      %6619 = vmatprep.mubr.bf16.mxu0 0
      %6620 = vmatmul.mubr.bf16.gmra.mrb[0].mxu0 %v5861
      %v6621 = vpop.f32.mrb[0].mxu0
      %v6622 = vadd.f32 0.0, %v6621
      %v6623 = vpop.f32.mrb[0].mxu0
      %v6624 = vpop.f32.mrb[0].mxu0
      %v6625 = vadd.f32 0.0, %v6624
      %v6626 = vpop.f32.mrb[0].mxu0
      %6627 = vmatprep.mubr.bf16.mxu0 0
      %6628 = vmatmul.mubr.bf16.gmra.mrb[0].mxu0 %v5864
      %v6629 = vpop.f32.mrb[0].mxu0
      %v6630 = vadd.f32 0.0, %v6629
      %v6631 = vpop.f32.mrb[0].mxu0
      %v6632 = vpop.f32.mrb[0].mxu0
      %v6633 = vadd.f32 0.0, %v6632
      %v6634 = vpop.f32.mrb[0].mxu0
      %6635 = vmatprep.mubr.bf16.mxu0 0
      %6636 = vmatmul.mubr.bf16.gmra.mrb[0].mxu0 %v5867
      %v6637 = vpop.f32.mrb[0].mxu0
      %v6638 = vadd.f32 0.0, %v6637
      %v6639 = vpop.f32.mrb[0].mxu0
      %v6640 = vpop.f32.mrb[0].mxu0
      %v6641 = vadd.f32 0.0, %v6640
      %v6642 = vpop.f32.mrb[0].mxu0
      %6643 = vmatprep.mubr.bf16.mxu0 0
      %6644 = vmatmul.mubr.bf16.gmra.mrb[0].mxu0 %v6486
      %v6645 = vpop.f32.mrb[0].mxu0
      %v6646 = vadd.f32 0.0, %v6645
      %v6647 = vpop.f32.mrb[0].mxu0
      %v6648 = vpop.f32.mrb[0].mxu0
      %v6649 = vadd.f32 0.0, %v6648
      %v6650 = vpop.f32.mrb[0].mxu0
      %6651 = vdwg.mxu0
      %v6652 = vadd.f32 %v6446, %v6526
      %v6653 = vadd.f32 %v6447, %v6529
      %v6654 = vadd.f32 %v6448, %v6534
      %v6655 = vadd.f32 %v6449, %v6537
      %v6656 = vadd.f32 %v6450, %v6542
      %v6657 = vadd.f32 %v6451, %v6545
      %v6658 = vadd.f32 %v6452, %v6550
      %v6659 = vadd.f32 %v6453, %v6553
      %v6660 = vadd.f32 %v6454, %v6558
      %v6661 = vadd.f32 %v6455, %v6561
      %v6662 = vadd.f32 %v6456, %v6566
      %v6663 = vadd.f32 %v6457, %v6569
      %v6664 = vadd.f32 %v6458, %v6574
      %v6665 = vadd.f32 %v6459, %v6577
      %v6666 = vadd.f32 %v6460, %v6582
      %v6667 = vadd.f32 %v6461, %v6585
      %v6668 = vadd.f32 %v6462, %v6590
      %v6669 = vadd.f32 %v6463, %v6593
      %v6670 = vadd.f32 %v6464, %v6598
      %v6671 = vadd.f32 %v6465, %v6601
      %v6672 = vadd.f32 %v6466, %v6606
      %v6673 = vadd.f32 %v6467, %v6609
      %v6674 = vadd.f32 %v6468, %v6614
      %v6675 = vadd.f32 %v6469, %v6617
      %v6676 = vadd.f32 %v6470, %v6622
      %v6677 = vadd.f32 %v6471, %v6625
      %v6678 = vadd.f32 %v6472, %v6630
      %v6679 = vadd.f32 %v6473, %v6633
      %v6680 = vadd.f32 %v6474, %v6638
      %v6681 = vadd.f32 %v6475, %v6641
      %v6682 = vadd.f32 %v6476, %v6646
      %v6683 = vadd.f32 %v6477, %v6649
      %s6684 = scalar_lea.vmem %s3, 24
      %v6685 = vld [vmem:[%s6684] sm:$0xf]
      %v6687 = vsel %vm1005, %v5132, 0
      %v6690 = vsel %vm1087, %v6685, 0
      %6692 = vmatprep.subr.bf16.mxu0 0
      %6693 = vmatpush1.bf16.msra.mxu0 %v6690
      %6694 = vmatprep.subr.bf16.mxu0 0
      %6695 = vmatpush1.bf16.msra.mxu0 0
      %6696 = vmatprep.subr.bf16.mxu0 0
      %6697 = vmatpush1.bf16.msra.mxu0 0
      %6698 = vmatprep.subr.bf16.mxu0 0
      %6699 = vmatpush1.bf16.msra.mxu0 0
      %6700 = vmatprep.subr.bf16.mxu0 0
      %6701 = vmatpush1.bf16.msra.mxu0 0
      %6702 = vmatprep.subr.bf16.mxu0 0
      %6703 = vmatpush1.bf16.msra.mxu0 0
      %6704 = vmatprep.subr.bf16.mxu0 0
      %6705 = vmatpush1.bf16.msra.mxu0 0
      %6706 = vmatprep.subr.bf16.mxu0 0
      %6707 = vmatpush1.bf16.msra.mxu0 0
      %6708 = vmatprep.subr.bf16.mxu0 0
      %6709 = vmatpush1.bf16.msra.mxu0 0
      %6710 = vmatprep.subr.bf16.mxu0 0
      %6711 = vmatpush1.bf16.msra.mxu0 0
      %6712 = vmatprep.subr.bf16.mxu0 0
      %6713 = vmatpush1.bf16.msra.mxu0 0
      %6714 = vmatprep.subr.bf16.mxu0 0
      %6715 = vmatpush1.bf16.msra.mxu0 0
      %6716 = vmatprep.subr.bf16.mxu0 0
      %6717 = vmatpush1.bf16.msra.mxu0 0
      %6718 = vmatprep.subr.bf16.mxu0 0
      %6719 = vmatpush1.bf16.msra.mxu0 0
      %6720 = vmatprep.subr.bf16.mxu0 0
      %6721 = vmatpush1.bf16.msra.mxu0 0
      %6722 = vmatprep.subr.bf16.mxu0 0
      %6723 = vmatpush1.bf16.msra.mxu0 0
      %6724 = vmatprep.mubr.bf16.mxu0 0
      %6725 = vmatmul.mubr.bf16.gmra.mrb[0].mxu0 %v5546
      %v6726 = vpop.f32.mrb[0].mxu0
      %v6727 = vadd.f32 0.0, %v6726
      %v6728 = vpop.f32.mrb[0].mxu0
      %v6729 = vpop.f32.mrb[0].mxu0
      %v6730 = vadd.f32 0.0, %v6729
      %v6731 = vpop.f32.mrb[0].mxu0
      %6732 = vmatprep.mubr.bf16.mxu0 0
      %6733 = vmatmul.mubr.bf16.gmra.mrb[0].mxu0 %v5548
      %v6734 = vpop.f32.mrb[0].mxu0
      %v6735 = vadd.f32 0.0, %v6734
      %v6736 = vpop.f32.mrb[0].mxu0
      %v6737 = vpop.f32.mrb[0].mxu0
      %v6738 = vadd.f32 0.0, %v6737
      %v6739 = vpop.f32.mrb[0].mxu0
      %6740 = vmatprep.mubr.bf16.mxu0 0
      %6741 = vmatmul.mubr.bf16.gmra.mrb[0].mxu0 %v5550
      %v6742 = vpop.f32.mrb[0].mxu0
      %v6743 = vadd.f32 0.0, %v6742
      %v6744 = vpop.f32.mrb[0].mxu0
      %v6745 = vpop.f32.mrb[0].mxu0
      %v6746 = vadd.f32 0.0, %v6745
      %v6747 = vpop.f32.mrb[0].mxu0
      %6748 = vmatprep.mubr.bf16.mxu0 0
      %6749 = vmatmul.mubr.bf16.gmra.mrb[0].mxu0 %v5552
      %v6750 = vpop.f32.mrb[0].mxu0
      %v6751 = vadd.f32 0.0, %v6750
      %v6752 = vpop.f32.mrb[0].mxu0
      %v6753 = vpop.f32.mrb[0].mxu0
      %v6754 = vadd.f32 0.0, %v6753
      %v6755 = vpop.f32.mrb[0].mxu0
      %6756 = vmatprep.mubr.bf16.mxu0 0
      %6757 = vmatmul.mubr.bf16.gmra.mrb[0].mxu0 %v5554
      %v6758 = vpop.f32.mrb[0].mxu0
      %v6759 = vadd.f32 0.0, %v6758
      %v6760 = vpop.f32.mrb[0].mxu0
      %v6761 = vpop.f32.mrb[0].mxu0
      %v6762 = vadd.f32 0.0, %v6761
      %v6763 = vpop.f32.mrb[0].mxu0
      %6764 = vmatprep.mubr.bf16.mxu0 0
      %6765 = vmatmul.mubr.bf16.gmra.mrb[0].mxu0 %v5556
      %v6766 = vpop.f32.mrb[0].mxu0
      %v6767 = vadd.f32 0.0, %v6766
      %v6768 = vpop.f32.mrb[0].mxu0
      %v6769 = vpop.f32.mrb[0].mxu0
      %v6770 = vadd.f32 0.0, %v6769
      %v6771 = vpop.f32.mrb[0].mxu0
      %6772 = vmatprep.mubr.bf16.mxu0 0
      %6773 = vmatmul.mubr.bf16.gmra.mrb[0].mxu0 %v5558
      %v6774 = vpop.f32.mrb[0].mxu0
      %v6775 = vadd.f32 0.0, %v6774
      %v6776 = vpop.f32.mrb[0].mxu0
      %v6777 = vpop.f32.mrb[0].mxu0
      %v6778 = vadd.f32 0.0, %v6777
      %v6779 = vpop.f32.mrb[0].mxu0
      %6780 = vmatprep.mubr.bf16.mxu0 0
      %6781 = vmatmul.mubr.bf16.gmra.mrb[0].mxu0 %v5560
      %v6782 = vpop.f32.mrb[0].mxu0
      %v6783 = vadd.f32 0.0, %v6782
      %v6784 = vpop.f32.mrb[0].mxu0
      %v6785 = vpop.f32.mrb[0].mxu0
      %v6786 = vadd.f32 0.0, %v6785
      %v6787 = vpop.f32.mrb[0].mxu0
      %6788 = vmatprep.mubr.bf16.mxu0 0
      %6789 = vmatmul.mubr.bf16.gmra.mrb[0].mxu0 %v5562
      %v6790 = vpop.f32.mrb[0].mxu0
      %v6791 = vadd.f32 0.0, %v6790
      %v6792 = vpop.f32.mrb[0].mxu0
      %v6793 = vpop.f32.mrb[0].mxu0
      %v6794 = vadd.f32 0.0, %v6793
      %v6795 = vpop.f32.mrb[0].mxu0
      %6796 = vmatprep.mubr.bf16.mxu0 0
      %6797 = vmatmul.mubr.bf16.gmra.mrb[0].mxu0 %v5564
      %v6798 = vpop.f32.mrb[0].mxu0
      %v6799 = vadd.f32 0.0, %v6798
      %v6800 = vpop.f32.mrb[0].mxu0
      %v6801 = vpop.f32.mrb[0].mxu0
      %v6802 = vadd.f32 0.0, %v6801
      %v6803 = vpop.f32.mrb[0].mxu0
      %6804 = vmatprep.mubr.bf16.mxu0 0
      %6805 = vmatmul.mubr.bf16.gmra.mrb[0].mxu0 %v5566
      %v6806 = vpop.f32.mrb[0].mxu0
      %v6807 = vadd.f32 0.0, %v6806
      %v6808 = vpop.f32.mrb[0].mxu0
      %v6809 = vpop.f32.mrb[0].mxu0
      %v6810 = vadd.f32 0.0, %v6809
      %v6811 = vpop.f32.mrb[0].mxu0
      %6812 = vmatprep.mubr.bf16.mxu0 0
      %6813 = vmatmul.mubr.bf16.gmra.mrb[0].mxu0 %v5568
      %v6814 = vpop.f32.mrb[0].mxu0
      %v6815 = vadd.f32 0.0, %v6814
      %v6816 = vpop.f32.mrb[0].mxu0
      %v6817 = vpop.f32.mrb[0].mxu0
      %v6818 = vadd.f32 0.0, %v6817
      %v6819 = vpop.f32.mrb[0].mxu0
      %6820 = vmatprep.mubr.bf16.mxu0 0
      %6821 = vmatmul.mubr.bf16.gmra.mrb[0].mxu0 %v5570
      %v6822 = vpop.f32.mrb[0].mxu0
      %v6823 = vadd.f32 0.0, %v6822
      %v6824 = vpop.f32.mrb[0].mxu0
      %v6825 = vpop.f32.mrb[0].mxu0
      %v6826 = vadd.f32 0.0, %v6825
      %v6827 = vpop.f32.mrb[0].mxu0
      %6828 = vmatprep.mubr.bf16.mxu0 0
      %6829 = vmatmul.mubr.bf16.gmra.mrb[0].mxu0 %v5572
      %v6830 = vpop.f32.mrb[0].mxu0
      %v6831 = vadd.f32 0.0, %v6830
      %v6832 = vpop.f32.mrb[0].mxu0
      %v6833 = vpop.f32.mrb[0].mxu0
      %v6834 = vadd.f32 0.0, %v6833
      %v6835 = vpop.f32.mrb[0].mxu0
      %6836 = vmatprep.mubr.bf16.mxu0 0
      %6837 = vmatmul.mubr.bf16.gmra.mrb[0].mxu0 %v6068
      %v6838 = vpop.f32.mrb[0].mxu0
      %v6839 = vadd.f32 0.0, %v6838
      %v6840 = vpop.f32.mrb[0].mxu0
      %v6841 = vpop.f32.mrb[0].mxu0
      %v6842 = vadd.f32 0.0, %v6841
      %v6843 = vpop.f32.mrb[0].mxu0
      %6844 = vmatprep.mubr.bf16.mxu0 0
      %6845 = vmatmul.mubr.bf16.gmra.mrb[0].mxu0 %v6687
      %v6846 = vpop.f32.mrb[0].mxu0
      %v6847 = vadd.f32 0.0, %v6846
      %v6848 = vpop.f32.mrb[0].mxu0
      %v6849 = vpop.f32.mrb[0].mxu0
      %v6850 = vadd.f32 0.0, %v6849
      %v6851 = vpop.f32.mrb[0].mxu0
      %6852 = vdwg.mxu0
      %v6853 = vadd.f32 %v6652, %v6727
      %v6854 = vadd.f32 %v6653, %v6730
      %v6855 = vadd.f32 %v6654, %v6735
      %v6856 = vadd.f32 %v6655, %v6738
      %v6857 = vadd.f32 %v6656, %v6743
      %v6858 = vadd.f32 %v6657, %v6746
      %v6859 = vadd.f32 %v6658, %v6751
      %v6860 = vadd.f32 %v6659, %v6754
      %v6861 = vadd.f32 %v6660, %v6759
      %v6862 = vadd.f32 %v6661, %v6762
      %v6863 = vadd.f32 %v6662, %v6767
      %v6864 = vadd.f32 %v6663, %v6770
      %v6865 = vadd.f32 %v6664, %v6775
      %v6866 = vadd.f32 %v6665, %v6778
      %v6867 = vadd.f32 %v6666, %v6783
      %v6868 = vadd.f32 %v6667, %v6786
      %v6869 = vadd.f32 %v6668, %v6791
      %v6870 = vadd.f32 %v6669, %v6794
      %v6871 = vadd.f32 %v6670, %v6799
      %v6872 = vadd.f32 %v6671, %v6802
      %v6873 = vadd.f32 %v6672, %v6807
      %v6874 = vadd.f32 %v6673, %v6810
      %v6875 = vadd.f32 %v6674, %v6815
      %v6876 = vadd.f32 %v6675, %v6818
      %v6877 = vadd.f32 %v6676, %v6823
      %v6878 = vadd.f32 %v6677, %v6826
      %v6879 = vadd.f32 %v6678, %v6831
      %v6880 = vadd.f32 %v6679, %v6834
      %v6881 = vadd.f32 %v6680, %v6839
      %v6882 = vadd.f32 %v6681, %v6842
      %v6883 = vadd.f32 %v6682, %v6847
      %v6884 = vadd.f32 %v6683, %v6850
      %v6885 = vshrl.u32 %v5132, 16
      %v6887 = vshll.u32 %v5132, 16
      %v6889 = vrot.slane %v6887, 1
      %v6890 = vor.u32 %v6885, %v6889
      %v6892 = vshll.u32 %v5133, 16
      %v6894 = vrot.slane %v6892, 1
      %v6895 = vsel %vm5135, %v6890, %v6894
      %s6896 = scalar_lea.vmem %s3, 28
      %v6897 = vld [vmem:[%s6896] sm:$0xf]
      %v6899 = vsel %vm1005, %v6895, 0
      %v6902 = vsel %vm1087, %v6897, 0
      %6904 = vmatprep.subr.bf16.mxu0 0
      %6905 = vmatpush1.bf16.msra.mxu0 %v6902
      %6906 = vmatprep.subr.bf16.mxu0 0
      %6907 = vmatpush1.bf16.msra.mxu0 0
      %6908 = vmatprep.subr.bf16.mxu0 0
      %6909 = vmatpush1.bf16.msra.mxu0 0
      %6910 = vmatprep.subr.bf16.mxu0 0
      %6911 = vmatpush1.bf16.msra.mxu0 0
      %6912 = vmatprep.subr.bf16.mxu0 0
      %6913 = vmatpush1.bf16.msra.mxu0 0
      %6914 = vmatprep.subr.bf16.mxu0 0
      %6915 = vmatpush1.bf16.msra.mxu0 0
      %6916 = vmatprep.subr.bf16.mxu0 0
      %6917 = vmatpush1.bf16.msra.mxu0 0
      %6918 = vmatprep.subr.bf16.mxu0 0
      %6919 = vmatpush1.bf16.msra.mxu0 0
      %6920 = vmatprep.subr.bf16.mxu0 0
      %6921 = vmatpush1.bf16.msra.mxu0 0
      %6922 = vmatprep.subr.bf16.mxu0 0
      %6923 = vmatpush1.bf16.msra.mxu0 0
      %6924 = vmatprep.subr.bf16.mxu0 0
      %6925 = vmatpush1.bf16.msra.mxu0 0
      %6926 = vmatprep.subr.bf16.mxu0 0
      %6927 = vmatpush1.bf16.msra.mxu0 0
      %6928 = vmatprep.subr.bf16.mxu0 0
      %6929 = vmatpush1.bf16.msra.mxu0 0
      %6930 = vmatprep.subr.bf16.mxu0 0
      %6931 = vmatpush1.bf16.msra.mxu0 0
      %6932 = vmatprep.subr.bf16.mxu0 0
      %6933 = vmatpush1.bf16.msra.mxu0 0
      %6934 = vmatprep.subr.bf16.mxu0 0
      %6935 = vmatpush1.bf16.msra.mxu0 0
      %6936 = vmatprep.mubr.bf16.mxu0 0
      %6937 = vmatmul.mubr.bf16.gmra.mrb[0].mxu0 %v5337
      %v6938 = vpop.f32.mrb[0].mxu0
      %v6939 = vadd.f32 0.0, %v6938
      %v6940 = vpop.f32.mrb[0].mxu0
      %v6941 = vpop.f32.mrb[0].mxu0
      %v6942 = vadd.f32 0.0, %v6941
      %v6943 = vpop.f32.mrb[0].mxu0
      %6944 = vmatprep.mubr.bf16.mxu0 0
      %6945 = vmatmul.mubr.bf16.gmra.mrb[0].mxu0 %v5340
      %v6946 = vpop.f32.mrb[0].mxu0
      %v6947 = vadd.f32 0.0, %v6946
      %v6948 = vpop.f32.mrb[0].mxu0
      %v6949 = vpop.f32.mrb[0].mxu0
      %v6950 = vadd.f32 0.0, %v6949
      %v6951 = vpop.f32.mrb[0].mxu0
      %6952 = vmatprep.mubr.bf16.mxu0 0
      %6953 = vmatmul.mubr.bf16.gmra.mrb[0].mxu0 %v5343
      %v6954 = vpop.f32.mrb[0].mxu0
      %v6955 = vadd.f32 0.0, %v6954
      %v6956 = vpop.f32.mrb[0].mxu0
      %v6957 = vpop.f32.mrb[0].mxu0
      %v6958 = vadd.f32 0.0, %v6957
      %v6959 = vpop.f32.mrb[0].mxu0
      %6960 = vmatprep.mubr.bf16.mxu0 0
      %6961 = vmatmul.mubr.bf16.gmra.mrb[0].mxu0 %v5346
      %v6962 = vpop.f32.mrb[0].mxu0
      %v6963 = vadd.f32 0.0, %v6962
      %v6964 = vpop.f32.mrb[0].mxu0
      %v6965 = vpop.f32.mrb[0].mxu0
      %v6966 = vadd.f32 0.0, %v6965
      %v6967 = vpop.f32.mrb[0].mxu0
      %6968 = vmatprep.mubr.bf16.mxu0 0
      %6969 = vmatmul.mubr.bf16.gmra.mrb[0].mxu0 %v5349
      %v6970 = vpop.f32.mrb[0].mxu0
      %v6971 = vadd.f32 0.0, %v6970
      %v6972 = vpop.f32.mrb[0].mxu0
      %v6973 = vpop.f32.mrb[0].mxu0
      %v6974 = vadd.f32 0.0, %v6973
      %v6975 = vpop.f32.mrb[0].mxu0
      %6976 = vmatprep.mubr.bf16.mxu0 0
      %6977 = vmatmul.mubr.bf16.gmra.mrb[0].mxu0 %v5352
      %v6978 = vpop.f32.mrb[0].mxu0
      %v6979 = vadd.f32 0.0, %v6978
      %v6980 = vpop.f32.mrb[0].mxu0
      %v6981 = vpop.f32.mrb[0].mxu0
      %v6982 = vadd.f32 0.0, %v6981
      %v6983 = vpop.f32.mrb[0].mxu0
      %6984 = vmatprep.mubr.bf16.mxu0 0
      %6985 = vmatmul.mubr.bf16.gmra.mrb[0].mxu0 %v5355
      %v6986 = vpop.f32.mrb[0].mxu0
      %v6987 = vadd.f32 0.0, %v6986
      %v6988 = vpop.f32.mrb[0].mxu0
      %v6989 = vpop.f32.mrb[0].mxu0
      %v6990 = vadd.f32 0.0, %v6989
      %v6991 = vpop.f32.mrb[0].mxu0
      %6992 = vmatprep.mubr.bf16.mxu0 0
      %6993 = vmatmul.mubr.bf16.gmra.mrb[0].mxu0 %v5358
      %v6994 = vpop.f32.mrb[0].mxu0
      %v6995 = vadd.f32 0.0, %v6994
      %v6996 = vpop.f32.mrb[0].mxu0
      %v6997 = vpop.f32.mrb[0].mxu0
      %v6998 = vadd.f32 0.0, %v6997
      %v6999 = vpop.f32.mrb[0].mxu0
      %7000 = vmatprep.mubr.bf16.mxu0 0
      %7001 = vmatmul.mubr.bf16.gmra.mrb[0].mxu0 %v5361
      %v7002 = vpop.f32.mrb[0].mxu0
      %v7003 = vadd.f32 0.0, %v7002
      %v7004 = vpop.f32.mrb[0].mxu0
      %v7005 = vpop.f32.mrb[0].mxu0
      %v7006 = vadd.f32 0.0, %v7005
      %v7007 = vpop.f32.mrb[0].mxu0
      %7008 = vmatprep.mubr.bf16.mxu0 0
      %7009 = vmatmul.mubr.bf16.gmra.mrb[0].mxu0 %v5364
      %v7010 = vpop.f32.mrb[0].mxu0
      %v7011 = vadd.f32 0.0, %v7010
      %v7012 = vpop.f32.mrb[0].mxu0
      %v7013 = vpop.f32.mrb[0].mxu0
      %v7014 = vadd.f32 0.0, %v7013
      %v7015 = vpop.f32.mrb[0].mxu0
      %7016 = vmatprep.mubr.bf16.mxu0 0
      %7017 = vmatmul.mubr.bf16.gmra.mrb[0].mxu0 %v5367
      %v7018 = vpop.f32.mrb[0].mxu0
      %v7019 = vadd.f32 0.0, %v7018
      %v7020 = vpop.f32.mrb[0].mxu0
      %v7021 = vpop.f32.mrb[0].mxu0
      %v7022 = vadd.f32 0.0, %v7021
      %v7023 = vpop.f32.mrb[0].mxu0
      %7024 = vmatprep.mubr.bf16.mxu0 0
      %7025 = vmatmul.mubr.bf16.gmra.mrb[0].mxu0 %v5370
      %v7026 = vpop.f32.mrb[0].mxu0
      %v7027 = vadd.f32 0.0, %v7026
      %v7028 = vpop.f32.mrb[0].mxu0
      %v7029 = vpop.f32.mrb[0].mxu0
      %v7030 = vadd.f32 0.0, %v7029
      %v7031 = vpop.f32.mrb[0].mxu0
      %7032 = vmatprep.mubr.bf16.mxu0 0
      %7033 = vmatmul.mubr.bf16.gmra.mrb[0].mxu0 %v5373
      %v7034 = vpop.f32.mrb[0].mxu0
      %v7035 = vadd.f32 0.0, %v7034
      %v7036 = vpop.f32.mrb[0].mxu0
      %v7037 = vpop.f32.mrb[0].mxu0
      %v7038 = vadd.f32 0.0, %v7037
      %v7039 = vpop.f32.mrb[0].mxu0
      %7040 = vmatprep.mubr.bf16.mxu0 0
      %7041 = vmatmul.mubr.bf16.gmra.mrb[0].mxu0 %v5376
      %v7042 = vpop.f32.mrb[0].mxu0
      %v7043 = vadd.f32 0.0, %v7042
      %v7044 = vpop.f32.mrb[0].mxu0
      %v7045 = vpop.f32.mrb[0].mxu0
      %v7046 = vadd.f32 0.0, %v7045
      %v7047 = vpop.f32.mrb[0].mxu0
      %7048 = vmatprep.mubr.bf16.mxu0 0
      %7049 = vmatmul.mubr.bf16.gmra.mrb[0].mxu0 %v6280
      %v7050 = vpop.f32.mrb[0].mxu0
      %v7051 = vadd.f32 0.0, %v7050
      %v7052 = vpop.f32.mrb[0].mxu0
      %v7053 = vpop.f32.mrb[0].mxu0
      %v7054 = vadd.f32 0.0, %v7053
      %v7055 = vpop.f32.mrb[0].mxu0
      %7056 = vmatprep.mubr.bf16.mxu0 0
      %7057 = vmatmul.mubr.bf16.gmra.mrb[0].mxu0 %v6899
      %v7058 = vpop.f32.mrb[0].mxu0
      %v7059 = vadd.f32 0.0, %v7058
      %v7060 = vpop.f32.mrb[0].mxu0
      %v7061 = vpop.f32.mrb[0].mxu0
      %v7062 = vadd.f32 0.0, %v7061
      %v7063 = vpop.f32.mrb[0].mxu0
      %7064 = vdwg.mxu0
      %v7065 = vadd.f32 %v6853, %v6939
      %v7066 = vadd.f32 %v6854, %v6942
      %v7067 = vadd.f32 %v6855, %v6947
      %v7068 = vadd.f32 %v6856, %v6950
      %v7069 = vadd.f32 %v6857, %v6955
      %v7070 = vadd.f32 %v6858, %v6958
      %v7071 = vadd.f32 %v6859, %v6963
      %v7072 = vadd.f32 %v6860, %v6966
      %v7073 = vadd.f32 %v6861, %v6971
      %v7074 = vadd.f32 %v6862, %v6974
      %v7075 = vadd.f32 %v6863, %v6979
      %v7076 = vadd.f32 %v6864, %v6982
      %v7077 = vadd.f32 %v6865, %v6987
      %v7078 = vadd.f32 %v6866, %v6990
      %v7079 = vadd.f32 %v6867, %v6995
      %v7080 = vadd.f32 %v6868, %v6998
      %v7081 = vadd.f32 %v6869, %v7003
      %v7082 = vadd.f32 %v6870, %v7006
      %v7083 = vadd.f32 %v6871, %v7011
      %v7084 = vadd.f32 %v6872, %v7014
      %v7085 = vadd.f32 %v6873, %v7019
      %v7086 = vadd.f32 %v6874, %v7022
      %v7087 = vadd.f32 %v6875, %v7027
      %v7088 = vadd.f32 %v6876, %v7030
      %v7089 = vadd.f32 %v6877, %v7035
      %v7090 = vadd.f32 %v6878, %v7038
      %v7091 = vadd.f32 %v6879, %v7043
      %v7092 = vadd.f32 %v6880, %v7046
      %v7093 = vadd.f32 %v6881, %v7051
      %v7094 = vadd.f32 %v6882, %v7054
      %v7095 = vadd.f32 %v6883, %v7059
      %v7096 = vadd.f32 %v6884, %v7062
      %v7099 = vrot.slane %v5132, 1
      %v7100 = vrot.slane %v5133, 1
      %v7101 = vsel %vm5770, %v7099, %v7100
      %s7102 = scalar_lea.vmem %s3, 32
      %v7103 = vld [vmem:[%s7102] sm:$0xf]
      %v7105 = vsel %vm1005, %v7101, 0
      %v7108 = vsel %vm1087, %v7103, 0
      %7110 = vmatprep.subr.bf16.mxu0 0
      %7111 = vmatpush1.bf16.msra.mxu0 %v7108
      %7112 = vmatprep.subr.bf16.mxu0 0
      %7113 = vmatpush1.bf16.msra.mxu0 0
      %7114 = vmatprep.subr.bf16.mxu0 0
      %7115 = vmatpush1.bf16.msra.mxu0 0
      %7116 = vmatprep.subr.bf16.mxu0 0
      %7117 = vmatpush1.bf16.msra.mxu0 0
      %7118 = vmatprep.subr.bf16.mxu0 0
      %7119 = vmatpush1.bf16.msra.mxu0 0
      %7120 = vmatprep.subr.bf16.mxu0 0
      %7121 = vmatpush1.bf16.msra.mxu0 0
      %7122 = vmatprep.subr.bf16.mxu0 0
      %7123 = vmatpush1.bf16.msra.mxu0 0
      %7124 = vmatprep.subr.bf16.mxu0 0
      %7125 = vmatpush1.bf16.msra.mxu0 0
      %7126 = vmatprep.subr.bf16.mxu0 0
      %7127 = vmatpush1.bf16.msra.mxu0 0
      %7128 = vmatprep.subr.bf16.mxu0 0
      %7129 = vmatpush1.bf16.msra.mxu0 0
      %7130 = vmatprep.subr.bf16.mxu0 0
      %7131 = vmatpush1.bf16.msra.mxu0 0
      %7132 = vmatprep.subr.bf16.mxu0 0
      %7133 = vmatpush1.bf16.msra.mxu0 0
      %7134 = vmatprep.subr.bf16.mxu0 0
      %7135 = vmatpush1.bf16.msra.mxu0 0
      %7136 = vmatprep.subr.bf16.mxu0 0
      %7137 = vmatpush1.bf16.msra.mxu0 0
      %7138 = vmatprep.subr.bf16.mxu0 0
      %7139 = vmatpush1.bf16.msra.mxu0 0
      %7140 = vmatprep.subr.bf16.mxu0 0
      %7141 = vmatpush1.bf16.msra.mxu0 0
      %7142 = vmatprep.mubr.bf16.mxu0 0
      %7143 = vmatmul.mubr.bf16.gmra.mrb[0].mxu0 %v5828
      %v7144 = vpop.f32.mrb[0].mxu0
      %v7145 = vadd.f32 0.0, %v7144
      %v7146 = vpop.f32.mrb[0].mxu0
      %v7147 = vpop.f32.mrb[0].mxu0
      %v7148 = vadd.f32 0.0, %v7147
      %v7149 = vpop.f32.mrb[0].mxu0
      %7150 = vmatprep.mubr.bf16.mxu0 0
      %7151 = vmatmul.mubr.bf16.gmra.mrb[0].mxu0 %v5831
      %v7152 = vpop.f32.mrb[0].mxu0
      %v7153 = vadd.f32 0.0, %v7152
      %v7154 = vpop.f32.mrb[0].mxu0
      %v7155 = vpop.f32.mrb[0].mxu0
      %v7156 = vadd.f32 0.0, %v7155
      %v7157 = vpop.f32.mrb[0].mxu0
      %7158 = vmatprep.mubr.bf16.mxu0 0
      %7159 = vmatmul.mubr.bf16.gmra.mrb[0].mxu0 %v5834
      %v7160 = vpop.f32.mrb[0].mxu0
      %v7161 = vadd.f32 0.0, %v7160
      %v7162 = vpop.f32.mrb[0].mxu0
      %v7163 = vpop.f32.mrb[0].mxu0
      %v7164 = vadd.f32 0.0, %v7163
      %v7165 = vpop.f32.mrb[0].mxu0
      %7166 = vmatprep.mubr.bf16.mxu0 0
      %7167 = vmatmul.mubr.bf16.gmra.mrb[0].mxu0 %v5837
      %v7168 = vpop.f32.mrb[0].mxu0
      %v7169 = vadd.f32 0.0, %v7168
      %v7170 = vpop.f32.mrb[0].mxu0
      %v7171 = vpop.f32.mrb[0].mxu0
      %v7172 = vadd.f32 0.0, %v7171
      %v7173 = vpop.f32.mrb[0].mxu0
      %7174 = vmatprep.mubr.bf16.mxu0 0
      %7175 = vmatmul.mubr.bf16.gmra.mrb[0].mxu0 %v5840
      %v7176 = vpop.f32.mrb[0].mxu0
      %v7177 = vadd.f32 0.0, %v7176
      %v7178 = vpop.f32.mrb[0].mxu0
      %v7179 = vpop.f32.mrb[0].mxu0
      %v7180 = vadd.f32 0.0, %v7179
      %v7181 = vpop.f32.mrb[0].mxu0
      %7182 = vmatprep.mubr.bf16.mxu0 0
      %7183 = vmatmul.mubr.bf16.gmra.mrb[0].mxu0 %v5843
      %v7184 = vpop.f32.mrb[0].mxu0
      %v7185 = vadd.f32 0.0, %v7184
      %v7186 = vpop.f32.mrb[0].mxu0
      %v7187 = vpop.f32.mrb[0].mxu0
      %v7188 = vadd.f32 0.0, %v7187
      %v7189 = vpop.f32.mrb[0].mxu0
      %7190 = vmatprep.mubr.bf16.mxu0 0
      %7191 = vmatmul.mubr.bf16.gmra.mrb[0].mxu0 %v5846
      %v7192 = vpop.f32.mrb[0].mxu0
      %v7193 = vadd.f32 0.0, %v7192
      %v7194 = vpop.f32.mrb[0].mxu0
      %v7195 = vpop.f32.mrb[0].mxu0
      %v7196 = vadd.f32 0.0, %v7195
      %v7197 = vpop.f32.mrb[0].mxu0
      %7198 = vmatprep.mubr.bf16.mxu0 0
      %7199 = vmatmul.mubr.bf16.gmra.mrb[0].mxu0 %v5849
      %v7200 = vpop.f32.mrb[0].mxu0
      %v7201 = vadd.f32 0.0, %v7200
      %v7202 = vpop.f32.mrb[0].mxu0
      %v7203 = vpop.f32.mrb[0].mxu0
      %v7204 = vadd.f32 0.0, %v7203
      %v7205 = vpop.f32.mrb[0].mxu0
      %7206 = vmatprep.mubr.bf16.mxu0 0
      %7207 = vmatmul.mubr.bf16.gmra.mrb[0].mxu0 %v5852
      %v7208 = vpop.f32.mrb[0].mxu0
      %v7209 = vadd.f32 0.0, %v7208
      %v7210 = vpop.f32.mrb[0].mxu0
      %v7211 = vpop.f32.mrb[0].mxu0
      %v7212 = vadd.f32 0.0, %v7211
      %v7213 = vpop.f32.mrb[0].mxu0
      %7214 = vmatprep.mubr.bf16.mxu0 0
      %7215 = vmatmul.mubr.bf16.gmra.mrb[0].mxu0 %v5855
      %v7216 = vpop.f32.mrb[0].mxu0
      %v7217 = vadd.f32 0.0, %v7216
      %v7218 = vpop.f32.mrb[0].mxu0
      %v7219 = vpop.f32.mrb[0].mxu0
      %v7220 = vadd.f32 0.0, %v7219
      %v7221 = vpop.f32.mrb[0].mxu0
      %7222 = vmatprep.mubr.bf16.mxu0 0
      %7223 = vmatmul.mubr.bf16.gmra.mrb[0].mxu0 %v5858
      %v7224 = vpop.f32.mrb[0].mxu0
      %v7225 = vadd.f32 0.0, %v7224
      %v7226 = vpop.f32.mrb[0].mxu0
      %v7227 = vpop.f32.mrb[0].mxu0
      %v7228 = vadd.f32 0.0, %v7227
      %v7229 = vpop.f32.mrb[0].mxu0
      %7230 = vmatprep.mubr.bf16.mxu0 0
      %7231 = vmatmul.mubr.bf16.gmra.mrb[0].mxu0 %v5861
      %v7232 = vpop.f32.mrb[0].mxu0
      %v7233 = vadd.f32 0.0, %v7232
      %v7234 = vpop.f32.mrb[0].mxu0
      %v7235 = vpop.f32.mrb[0].mxu0
      %v7236 = vadd.f32 0.0, %v7235
      %v7237 = vpop.f32.mrb[0].mxu0
      %7238 = vmatprep.mubr.bf16.mxu0 0
      %7239 = vmatmul.mubr.bf16.gmra.mrb[0].mxu0 %v5864
      %v7240 = vpop.f32.mrb[0].mxu0
      %v7241 = vadd.f32 0.0, %v7240
      %v7242 = vpop.f32.mrb[0].mxu0
      %v7243 = vpop.f32.mrb[0].mxu0
      %v7244 = vadd.f32 0.0, %v7243
      %v7245 = vpop.f32.mrb[0].mxu0
      %7246 = vmatprep.mubr.bf16.mxu0 0
      %7247 = vmatmul.mubr.bf16.gmra.mrb[0].mxu0 %v5867
      %v7248 = vpop.f32.mrb[0].mxu0
      %v7249 = vadd.f32 0.0, %v7248
      %v7250 = vpop.f32.mrb[0].mxu0
      %v7251 = vpop.f32.mrb[0].mxu0
      %v7252 = vadd.f32 0.0, %v7251
      %v7253 = vpop.f32.mrb[0].mxu0
      %7254 = vmatprep.mubr.bf16.mxu0 0
      %7255 = vmatmul.mubr.bf16.gmra.mrb[0].mxu0 %v6486
      %v7256 = vpop.f32.mrb[0].mxu0
      %v7257 = vadd.f32 0.0, %v7256
      %v7258 = vpop.f32.mrb[0].mxu0
      %v7259 = vpop.f32.mrb[0].mxu0
      %v7260 = vadd.f32 0.0, %v7259
      %v7261 = vpop.f32.mrb[0].mxu0
      %7262 = vmatprep.mubr.bf16.mxu0 0
      %7263 = vmatmul.mubr.bf16.gmra.mrb[0].mxu0 %v7105
      %v7264 = vpop.f32.mrb[0].mxu0
      %v7265 = vadd.f32 0.0, %v7264
      %v7266 = vpop.f32.mrb[0].mxu0
      %v7267 = vpop.f32.mrb[0].mxu0
      %v7268 = vadd.f32 0.0, %v7267
      %v7269 = vpop.f32.mrb[0].mxu0
      %7270 = vdwg.mxu0
      %v7271 = vadd.f32 %v7065, %v7145
      %v7272 = vadd.f32 %v7066, %v7148
      %v7273 = vadd.f32 %v7067, %v7153
      %v7274 = vadd.f32 %v7068, %v7156
      %v7275 = vadd.f32 %v7069, %v7161
      %v7276 = vadd.f32 %v7070, %v7164
      %v7277 = vadd.f32 %v7071, %v7169
      %v7278 = vadd.f32 %v7072, %v7172
      %v7279 = vadd.f32 %v7073, %v7177
      %v7280 = vadd.f32 %v7074, %v7180
      %v7281 = vadd.f32 %v7075, %v7185
      %v7282 = vadd.f32 %v7076, %v7188
      %v7283 = vadd.f32 %v7077, %v7193
      %v7284 = vadd.f32 %v7078, %v7196
      %v7285 = vadd.f32 %v7079, %v7201
      %v7286 = vadd.f32 %v7080, %v7204
      %v7287 = vadd.f32 %v7081, %v7209
      %v7288 = vadd.f32 %v7082, %v7212
      %v7289 = vadd.f32 %v7083, %v7217
      %v7290 = vadd.f32 %v7084, %v7220
      %v7291 = vadd.f32 %v7085, %v7225
      %v7292 = vadd.f32 %v7086, %v7228
      %v7293 = vadd.f32 %v7087, %v7233
      %v7294 = vadd.f32 %v7088, %v7236
      %v7295 = vadd.f32 %v7089, %v7241
      %v7296 = vadd.f32 %v7090, %v7244
      %v7297 = vadd.f32 %v7091, %v7249
      %v7298 = vadd.f32 %v7092, %v7252
      %v7299 = vadd.f32 %v7093, %v7257
      %v7300 = vadd.f32 %v7094, %v7260
      %v7301 = vadd.f32 %v7095, %v7265
      %v7302 = vadd.f32 %v7096, %v7268
      %v7303 = vld [vmem:[%s4] sm:$0x1]
      %v7305 = vlaneseq
      %v7306 = vshrl.u32 %v7305, 7
      %v7307 = vsub.s32 0, %v7306
      %v7308 = vrot.slane %v7303, %v7307
      %v7310 = vadd.f32 %v7271, %v7308
      %v7311 = vadd.f32 %v7272, %v7308
      %v7312 = vadd.f32 %v7273, %v7308
      %v7313 = vadd.f32 %v7274, %v7308
      %v7314 = vadd.f32 %v7275, %v7308
      %v7315 = vadd.f32 %v7276, %v7308
      %v7316 = vadd.f32 %v7277, %v7308
      %v7317 = vadd.f32 %v7278, %v7308
      %v7318 = vadd.f32 %v7279, %v7308
      %v7319 = vadd.f32 %v7280, %v7308
      %v7320 = vadd.f32 %v7281, %v7308
      %v7321 = vadd.f32 %v7282, %v7308
      %v7322 = vadd.f32 %v7283, %v7308
      %v7323 = vadd.f32 %v7284, %v7308
      %v7324 = vadd.f32 %v7285, %v7308
      %v7325 = vadd.f32 %v7286, %v7308
      %v7326 = vadd.f32 %v7287, %v7308
      %v7327 = vadd.f32 %v7288, %v7308
      %v7328 = vadd.f32 %v7289, %v7308
      %v7329 = vadd.f32 %v7290, %v7308
      %v7330 = vadd.f32 %v7291, %v7308
      %v7331 = vadd.f32 %v7292, %v7308
      %v7332 = vadd.f32 %v7293, %v7308
      %v7333 = vadd.f32 %v7294, %v7308
      %v7334 = vadd.f32 %v7295, %v7308
      %v7335 = vadd.f32 %v7296, %v7308
      %v7336 = vadd.f32 %v7297, %v7308
      %v7337 = vadd.f32 %v7298, %v7308
      %v7338 = vadd.f32 %v7299, %v7308
      %v7339 = vadd.f32 %v7300, %v7308
      %v7340 = vadd.f32 %v7301, %v7308
      %v7341 = vadd.f32 %v7302, %v7308
      %vm7342 = vcmp.gt.f32.partialorder %v7310, 0.0
      %vm7343 = vcmp.gt.f32.partialorder %v7311, 0.0
      %vm7344 = vcmp.gt.f32.partialorder %v7312, 0.0
      %vm7345 = vcmp.gt.f32.partialorder %v7313, 0.0
      %vm7346 = vcmp.gt.f32.partialorder %v7314, 0.0
      %vm7347 = vcmp.gt.f32.partialorder %v7315, 0.0
      %vm7348 = vcmp.gt.f32.partialorder %v7316, 0.0
      %vm7349 = vcmp.gt.f32.partialorder %v7317, 0.0
      %vm7350 = vcmp.gt.f32.partialorder %v7318, 0.0
      %vm7351 = vcmp.gt.f32.partialorder %v7319, 0.0
      %vm7352 = vcmp.gt.f32.partialorder %v7320, 0.0
      %vm7353 = vcmp.gt.f32.partialorder %v7321, 0.0
      %vm7354 = vcmp.gt.f32.partialorder %v7322, 0.0
      %vm7355 = vcmp.gt.f32.partialorder %v7323, 0.0
      %vm7356 = vcmp.gt.f32.partialorder %v7324, 0.0
      %vm7357 = vcmp.gt.f32.partialorder %v7325, 0.0
      %vm7358 = vcmp.gt.f32.partialorder %v7326, 0.0
      %vm7359 = vcmp.gt.f32.partialorder %v7327, 0.0
      %vm7360 = vcmp.gt.f32.partialorder %v7328, 0.0
      %vm7361 = vcmp.gt.f32.partialorder %v7329, 0.0
      %vm7362 = vcmp.gt.f32.partialorder %v7330, 0.0
      %vm7363 = vcmp.gt.f32.partialorder %v7331, 0.0
      %vm7364 = vcmp.gt.f32.partialorder %v7332, 0.0
      %vm7365 = vcmp.gt.f32.partialorder %v7333, 0.0
      %vm7366 = vcmp.gt.f32.partialorder %v7334, 0.0
      %vm7367 = vcmp.gt.f32.partialorder %v7335, 0.0
      %vm7368 = vcmp.gt.f32.partialorder %v7336, 0.0
      %vm7369 = vcmp.gt.f32.partialorder %v7337, 0.0
      %vm7370 = vcmp.gt.f32.partialorder %v7338, 0.0
      %vm7371 = vcmp.gt.f32.partialorder %v7339, 0.0
      %vm7372 = vcmp.gt.f32.partialorder %v7340, 0.0
      %vm7373 = vcmp.gt.f32.partialorder %v7341, 0.0
      %v7374 = vmul.f32 %v7310, 0.2
      %v7375 = vmul.f32 %v7311, 0.2
      %v7376 = vmul.f32 %v7312, 0.2
      %v7377 = vmul.f32 %v7313, 0.2
      %v7378 = vmul.f32 %v7314, 0.2
      %v7379 = vmul.f32 %v7315, 0.2
      %v7380 = vmul.f32 %v7316, 0.2
      %v7381 = vmul.f32 %v7317, 0.2
      %v7382 = vmul.f32 %v7318, 0.2
      %v7383 = vmul.f32 %v7319, 0.2
      %v7384 = vmul.f32 %v7320, 0.2
      %v7385 = vmul.f32 %v7321, 0.2
      %v7386 = vmul.f32 %v7322, 0.2
      %v7387 = vmul.f32 %v7323, 0.2
      %v7388 = vmul.f32 %v7324, 0.2
      %v7389 = vmul.f32 %v7325, 0.2
      %v7390 = vmul.f32 %v7326, 0.2
      %v7391 = vmul.f32 %v7327, 0.2
      %v7392 = vmul.f32 %v7328, 0.2
      %v7393 = vmul.f32 %v7329, 0.2
      %v7394 = vmul.f32 %v7330, 0.2
      %v7395 = vmul.f32 %v7331, 0.2
      %v7396 = vmul.f32 %v7332, 0.2
      %v7397 = vmul.f32 %v7333, 0.2
      %v7398 = vmul.f32 %v7334, 0.2
      %v7399 = vmul.f32 %v7335, 0.2
      %v7400 = vmul.f32 %v7336, 0.2
      %v7401 = vmul.f32 %v7337, 0.2
      %v7402 = vmul.f32 %v7338, 0.2
      %v7403 = vmul.f32 %v7339, 0.2
      %v7404 = vmul.f32 %v7340, 0.2
      %v7405 = vmul.f32 %v7341, 0.2
      %v7406 = vsel %vm7342, %v7310, %v7374
      %v7407 = vsel %vm7343, %v7311, %v7375
      %v7408 = vsel %vm7344, %v7312, %v7376
      %v7409 = vsel %vm7345, %v7313, %v7377
      %v7410 = vsel %vm7346, %v7314, %v7378
      %v7411 = vsel %vm7347, %v7315, %v7379
      %v7412 = vsel %vm7348, %v7316, %v7380
      %v7413 = vsel %vm7349, %v7317, %v7381
      %v7414 = vsel %vm7350, %v7318, %v7382
      %v7415 = vsel %vm7351, %v7319, %v7383
      %v7416 = vsel %vm7352, %v7320, %v7384
      %v7417 = vsel %vm7353, %v7321, %v7385
      %v7418 = vsel %vm7354, %v7322, %v7386
      %v7419 = vsel %vm7355, %v7323, %v7387
      %v7420 = vsel %vm7356, %v7324, %v7388
      %v7421 = vsel %vm7357, %v7325, %v7389
      %v7422 = vsel %vm7358, %v7326, %v7390
      %v7423 = vsel %vm7359, %v7327, %v7391
      %v7424 = vsel %vm7360, %v7328, %v7392
      %v7425 = vsel %vm7361, %v7329, %v7393
      %v7426 = vsel %vm7362, %v7330, %v7394
      %v7427 = vsel %vm7363, %v7331, %v7395
      %v7428 = vsel %vm7364, %v7332, %v7396
      %v7429 = vsel %vm7365, %v7333, %v7397
      %v7430 = vsel %vm7366, %v7334, %v7398
      %v7431 = vsel %vm7367, %v7335, %v7399
      %v7432 = vsel %vm7368, %v7336, %v7400
      %v7433 = vsel %vm7369, %v7337, %v7401
      %v7434 = vsel %vm7370, %v7338, %v7402
      %v7435 = vsel %vm7371, %v7339, %v7403
      %v7436 = vsel %vm7372, %v7340, %v7404
      %v7437 = vsel %vm7373, %v7341, %v7405
      %v7438 = vpack.c.bf16 %v7407, %v7406
      %v7439 = vpack.c.bf16 %v7409, %v7408
      %v7440 = vpack.c.bf16 %v7411, %v7410
      %v7441 = vpack.c.bf16 %v7413, %v7412
      %v7442 = vpack.c.bf16 %v7415, %v7414
      %v7443 = vpack.c.bf16 %v7417, %v7416
      %v7444 = vpack.c.bf16 %v7419, %v7418
      %v7445 = vpack.c.bf16 %v7421, %v7420
      %v7446 = vpack.c.bf16 %v7423, %v7422
      %v7447 = vpack.c.bf16 %v7425, %v7424
      %v7448 = vpack.c.bf16 %v7427, %v7426
      %v7449 = vpack.c.bf16 %v7429, %v7428
      %v7450 = vpack.c.bf16 %v7431, %v7430
      %v7451 = vpack.c.bf16 %v7433, %v7432
      %v7452 = vpack.c.bf16 %v7435, %v7434
      %v7453 = vpack.c.bf16 %v7437, %v7436
      %v7470 = vunpack.c.l.b16 %v7438
      %v7471 = vunpack.c.h.b16 %v7438
      %v7472 = vunpack.c.l.b16 %v7439
      %v7473 = vunpack.c.h.b16 %v7439
      %v7474 = vunpack.c.l.b16 %v7440
      %v7475 = vunpack.c.h.b16 %v7440
      %v7476 = vunpack.c.l.b16 %v7441
      %v7477 = vunpack.c.h.b16 %v7441
      %v7478 = vunpack.c.l.b16 %v7442
      %v7479 = vunpack.c.h.b16 %v7442
      %v7480 = vunpack.c.l.b16 %v7443
      %v7481 = vunpack.c.h.b16 %v7443
      %v7482 = vunpack.c.l.b16 %v7444
      %v7483 = vunpack.c.h.b16 %v7444
      %v7484 = vunpack.c.l.b16 %v7445
      %v7485 = vunpack.c.h.b16 %v7445
      %v7486 = vunpack.c.l.b16 %v7446
      %v7487 = vunpack.c.h.b16 %v7446
      %v7488 = vunpack.c.l.b16 %v7447
      %v7489 = vunpack.c.h.b16 %v7447
      %v7490 = vunpack.c.l.b16 %v7448
      %v7491 = vunpack.c.h.b16 %v7448
      %v7492 = vunpack.c.l.b16 %v7449
      %v7493 = vunpack.c.h.b16 %v7449
      %v7494 = vunpack.c.l.b16 %v7450
      %v7495 = vunpack.c.h.b16 %v7450
      %v7496 = vunpack.c.l.b16 %v7451
      %v7497 = vunpack.c.h.b16 %v7451
      %v7498 = vunpack.c.l.b16 %v7452
      %v7499 = vunpack.c.h.b16 %v7452
      %v7500 = vunpack.c.l.b16 %v7453
      %v7501 = vunpack.c.h.b16 %v7453
      %v7502 = vpack.c.b16 %v7470, %v7470
      %v7503 = vpack.c.b16 %v7471, %v7471
      %v7504 = vpack.c.b16 %v7472, %v7472
      %v7505 = vpack.c.b16 %v7473, %v7473
      %v7506 = vpack.c.b16 %v7474, %v7474
      %v7507 = vpack.c.b16 %v7475, %v7475
      %v7508 = vpack.c.b16 %v7476, %v7476
      %v7509 = vpack.c.b16 %v7477, %v7477
      %v7510 = vpack.c.b16 %v7478, %v7478
      %v7511 = vpack.c.b16 %v7479, %v7479
      %v7512 = vpack.c.b16 %v7480, %v7480
      %v7513 = vpack.c.b16 %v7481, %v7481
      %v7514 = vpack.c.b16 %v7482, %v7482
      %v7515 = vpack.c.b16 %v7483, %v7483
      %v7516 = vpack.c.b16 %v7484, %v7484
      %v7517 = vpack.c.b16 %v7485, %v7485
      %v7518 = vpack.c.b16 %v7486, %v7486
      %v7519 = vpack.c.b16 %v7487, %v7487
      %v7520 = vpack.c.b16 %v7488, %v7488
      %v7521 = vpack.c.b16 %v7489, %v7489
      %v7522 = vpack.c.b16 %v7490, %v7490
      %v7523 = vpack.c.b16 %v7491, %v7491
      %v7524 = vpack.c.b16 %v7492, %v7492
      %v7525 = vpack.c.b16 %v7493, %v7493
      %v7526 = vpack.c.b16 %v7494, %v7494
      %v7527 = vpack.c.b16 %v7495, %v7495
      %v7528 = vpack.c.b16 %v7496, %v7496
      %v7529 = vpack.c.b16 %v7497, %v7497
      %v7530 = vpack.c.b16 %v7498, %v7498
      %v7531 = vpack.c.b16 %v7499, %v7499
      %v7532 = vpack.c.b16 %v7500, %v7500
      %v7533 = vpack.c.b16 %v7501, %v7501
      %vm7566 = vcmask 60416
      %7567 = vst.msk [vmem:[%s224] sm:$0xf] %vm7566, %v7502
      %7568 = vst.msk [vmem:[%s224 + $0x4] sm:$0xf] %vm7566, %v7503
      %7569 = vst.msk [vmem:[%s224 + $0x8] sm:$0xf] %vm7566, %v7504
      %7570 = vst.msk [vmem:[%s224 + $0xc] sm:$0xf] %vm7566, %v7505
      %7571 = vst.msk [vmem:[%s224 + $0x10] sm:$0xf] %vm7566, %v7506
      %7572 = vst.msk [vmem:[%s224 + $0x14] sm:$0xf] %vm7566, %v7507
      %7573 = vst.msk [vmem:[%s224 + $0x18] sm:$0xf] %vm7566, %v7508
      %7574 = vst.msk [vmem:[%s224 + $0x1c] sm:$0xf] %vm7566, %v7509
      %7575 = vst.msk [vmem:[%s224 + $0x20] sm:$0xf] %vm7566, %v7510
      %7576 = vst.msk [vmem:[%s224 + $0x24] sm:$0xf] %vm7566, %v7511
      %7577 = vst.msk [vmem:[%s224 + $0x28] sm:$0xf] %vm7566, %v7512
      %7578 = vst.msk [vmem:[%s224 + $0x2c] sm:$0xf] %vm7566, %v7513
      %7579 = vst.msk [vmem:[%s224 + $0x30] sm:$0xf] %vm7566, %v7514
      %7580 = vst.msk [vmem:[%s224 + $0x34] sm:$0xf] %vm7566, %v7515
      %7581 = vst.msk [vmem:[%s224 + $0x38] sm:$0xf] %vm7566, %v7516
      %7582 = vst.msk [vmem:[%s224 + $0x3c] sm:$0xf] %vm7566, %v7517
      %7583 = vst.msk [vmem:[%s224 + $0x40] sm:$0xf] %vm7566, %v7518
      %7584 = vst.msk [vmem:[%s224 + $0x44] sm:$0xf] %vm7566, %v7519
      %7585 = vst.msk [vmem:[%s224 + $0x48] sm:$0xf] %vm7566, %v7520
      %7586 = vst.msk [vmem:[%s224 + $0x4c] sm:$0xf] %vm7566, %v7521
      %7587 = vst.msk [vmem:[%s224 + $0x50] sm:$0xf] %vm7566, %v7522
      %7588 = vst.msk [vmem:[%s224 + $0x54] sm:$0xf] %vm7566, %v7523
      %7589 = vst.msk [vmem:[%s224 + $0x58] sm:$0xf] %vm7566, %v7524
      %7590 = vst.msk [vmem:[%s224 + $0x5c] sm:$0xf] %vm7566, %v7525
      %7591 = vst.msk [vmem:[%s224 + $0x60] sm:$0xf] %vm7566, %v7526
      %7592 = vst.msk [vmem:[%s224 + $0x64] sm:$0xf] %vm7566, %v7527
      %7593 = vst.msk [vmem:[%s224 + $0x68] sm:$0xf] %vm7566, %v7528
      %7594 = vst.msk [vmem:[%s224 + $0x6c] sm:$0xf] %vm7566, %v7529
      %7595 = vst.msk [vmem:[%s224 + $0x70] sm:$0xf] %vm7566, %v7530
      %7596 = vst.msk [vmem:[%s224 + $0x74] sm:$0xf] %vm7566, %v7531
      %7597 = vst.msk [vmem:[%s224 + $0x78] sm:$0xf] %vm7566, %v7532
      %7598 = vst.msk [vmem:[%s224 + $0x7c] sm:$0xf] %vm7566, %v7533
      %p7599 = scmp.lt.s32.totalorder %s16, 1
      %s7600 = scalar_select %p7599, %s16, 1
      %s7601 = smul.addr %s7600, 32
      %s7602 = smul.addr %s7601, 4
      %s7603 = scalar_lea.vmem %s5, %s7602
      // Predicated region
      $region41: #{_lambda_.1} parent=39 // pred_check
        %p7604 = pneg %p144
      $region42: #{_lambda_.1} parent=39 // pred_check_branch
        %7606 = sbr.rel (%p7604) target = $region44
      $region43: #{_lambda_.1} parent=39 // pred_region
        _
      $region44: #{_lambda_.1} parent=39 // pred_fallthru
        _
    $region40: #{_lambda_.1} parent=5 // pred_fallthru
      _
    %p7607 = scmp.le.s32.totalorder 2, %s11
    // Predicated region
    $region45: #{_lambda_.1} parent=5 // pred_check
      %p7608 = pneg %p7607
    $region46: #{_lambda_.1} parent=5 // pred_check_branch
      %7610 = sbr.rel (%p7608) target = $region48
    $region47: #{_lambda_.1} parent=5 // pred_region
      %s7611 = ssub.s32 %s11, 2
      // Predicated region
      $region49: #{_lambda_.1} parent=47 // pred_check
        %p7612 = pneg %p150
      $region50: #{_lambda_.1} parent=47 // pred_check_branch
        %7614 = sbr.rel (%p7612) target = $region52
      $region51: #{_lambda_.1} parent=47 // pred_region
        %p7615 = scmp.lt.s32.totalorder %s17, 1
        %s7616 = scalar_select %p7615, %s17, 1
        %s7617 = smul.addr %s7616, 32
        %s7618 = smul.addr %s7617, 4
        %s7619 = scalar_lea.vmem %s5, %s7618
      $region52: #{_lambda_.1} parent=47 // pred_fallthru
        _
    $region48: #{_lambda_.1} parent=5 // pred_fallthru
      _
  $region6: #{_lambda_.1} parent=0 // loop_footer
    %s15 = sadd.s32 1, %s11
  $region7: #{_lambda_.1} parent=0 // loop_footer_branch
    %10 = sbr.rel target = $region3
  $region8: #{_lambda_.1} parent=0 // loop_exit
    _

</llo_original>
